<compile_context>
chip_gen: v7x
topology: tpu7x:2x2x1
jax: 0.10.0
libtpu: 0.0.40
codegen_flags: <defaults>
</compile_context>

<pallas_src>
import functools
import math

import jax
import jax.numpy as jnp
from jax.experimental import pallas as pl
from jax.experimental.pallas import tpu as pltpu


# ---------------------- fused EResidualBlock Pallas kernel ----------------------

def _eresidual_kernel(x_ref, w1_ref, b1_ref, w2_ref, b2_ref, w3_ref, b3_ref,
                      o_ref, h_ref, *, H, W, C):
    """ReLU( conv1x1( ReLU(conv3x3( ReLU(conv3x3(x)) )) ) + x ) for one image.

    x_ref : (1, H+2, W+2, C) f32   zero-padded input tile
    w1/w2 : (9, C, C) bf16         3x3 weights, w[ky*3+kx, cin, cout]
    w3    : (C, C)   bf16          1x1 weight
    b*    : (1, C)   f32
    o_ref : (1, H, W, C) f32
    h_ref : VMEM scratch (H+2, W+16, C) bf16 — padded intermediate, never leaves VMEM
    """
    f32, bf16 = jnp.float32, jnp.bfloat16

    # ---- conv 3x3 (pad=1) + ReLU : taps built in-kernel from the haloed tile ----
    acc = jnp.zeros((H * W, C), f32) + b1_ref[...]
    for dy in range(3):
        for dx in range(3):
            tap = x_ref[0, dy:dy + H, dx:dx + W, :].astype(bf16).reshape(H * W, C)
            acc = acc + jnp.dot(tap, w1_ref[dy * 3 + dx],
                                preferred_element_type=f32)
    h1 = jnp.maximum(acc, 0.0).astype(bf16).reshape(H, W, C)

    # Zero-padded intermediate kept in VMEM scratch.  h1 is placed at column
    # offset 8 so the store stays sublane-aligned.
    h_ref[...] = jnp.zeros_like(h_ref)
    h_ref[1:H + 1, 8:8 + W, :] = h1

    # ---- conv 3x3 (pad=1) + ReLU on the in-VMEM intermediate ----
    acc = jnp.zeros((H * W, C), f32) + b2_ref[...]
    for dy in range(3):
        for dx in range(3):
            tap = h_ref[dy:dy + H, 7 + dx:7 + dx + W, :].reshape(H * W, C)
            acc = acc + jnp.dot(tap, w2_ref[dy * 3 + dx],
                                preferred_element_type=f32)
    h2 = jnp.maximum(acc, 0.0).astype(bf16)

    # ---- conv 1x1 + residual + ReLU (residual kept in f32) ----
    acc = jnp.dot(h2, w3_ref[...], preferred_element_type=f32) + b3_ref[...]
    resid = x_ref[0, 1:H + 1, 1:W + 1, :].reshape(H * W, C)
    out = jnp.maximum(acc + resid, 0.0)
    o_ref[0] = out.reshape(H, W, C).astype(o_ref.dtype)


def eresidual_block(p, x_nhwc):
    """One fused pallas_call per EResidualBlock invocation; grid over batch (parallel)."""
    B, H, W, C = x_nhwc.shape
    assert H % 8 == 0 and W % 8 == 0, "H, W must be multiples of 8 (sublane tiling)"
    xp = jnp.pad(x_nhwc, ((0, 0), (1, 1), (1, 1), (0, 0)))
    kernel = functools.partial(_eresidual_kernel, H=H, W=W, C=C)
    wspec = pl.BlockSpec((9, C, C), lambda b: (0, 0, 0))
    bspec = pl.BlockSpec((1, C), lambda b: (0, 0))
    return pl.pallas_call(
        kernel,
        out_shape=jax.ShapeDtypeStruct((B, H, W, C), jnp.float32),
        grid=(B,),
        in_specs=[pl.BlockSpec((1, H + 2, W + 2, C), lambda b: (b, 0, 0, 0)),
                  wspec, bspec, wspec, bspec,
                  pl.BlockSpec((C, C), lambda b: (0, 0)), bspec],
        out_specs=pl.BlockSpec((1, H, W, C), lambda b: (b, 0, 0, 0)),
        scratch_shapes=[pltpu.VMEM((H + 2, W + 16, C), jnp.bfloat16)],
        compiler_params=pltpu.CompilerParams(
            dimension_semantics=("parallel",),
            vmem_limit_bytes=32 * 1024 * 1024),
    )(xp, p['w1'], p['b1'], p['w2'], p['b2'], p['w3'], p['b3'])


# ------------- fused "concat + 1x1 conv + ReLU" (BasicBlock) kernel --------------

def _cat_matmul_kernel(*refs, n_parts, relu):
    part_refs = refs[:n_parts]
    w_ref = refs[n_parts]
    b_ref = refs[n_parts + 1]
    o_ref = refs[n_parts + 2]
    acc = jnp.zeros(o_ref.shape, jnp.float32) + b_ref[...]
    off = 0
    for p_ref in part_refs:
        k = p_ref.shape[-1]
        acc = acc + jnp.dot(p_ref[...].astype(jnp.bfloat16),
                            w_ref[off:off + k, :],
                            preferred_element_type=jnp.float32)
        off += k
    if relu:
        acc = jnp.maximum(acc, 0.0)
    o_ref[...] = acc.astype(o_ref.dtype)


def _pick_tile_m(m, target=256):
    """Largest M-tile <= target that divides m and keeps the sublane dim 8-aligned."""
    if m <= target:
        return m
    for t in range(target, 7, -1):
        if m % t == 0 and t % 8 == 0:
            return t
    return m


def cat_matmul(parts, w, b, *, relu=True):
    """ReLU( concat(parts, -1) @ w + b ) without materializing the concat in HBM.

    parts: list of (M, Ki) f32; w: (sum Ki, N) bf16 (resident); b: (1, N) f32.
    Tiled over M with a parallel grid (megacore-friendly)."""
    M = parts[0].shape[0]
    K, N = w.shape
    tm = _pick_tile_m(M)
    kernel = functools.partial(_cat_matmul_kernel, n_parts=len(parts), relu=relu)
    in_specs = [pl.BlockSpec((tm, p.shape[1]), lambda i: (i, 0)) for p in parts]
    in_specs.append(pl.BlockSpec((K, N), lambda i: (0, 0)))
    in_specs.append(pl.BlockSpec((1, N), lambda i: (0, 0)))
    return pl.pallas_call(
        kernel,
        out_shape=jax.ShapeDtypeStruct((M, N), jnp.float32),
        grid=(M // tm,),
        in_specs=in_specs,
        out_specs=pl.BlockSpec((tm, N), lambda i: (i, 0)),
        compiler_params=pltpu.CompilerParams(
            dimension_semantics=("parallel",),
            vmem_limit_bytes=32 * 1024 * 1024),
    )(*parts, w, b)


# ------------------------------- Block.forward -----------------------------------

def block_forward(params, x_nchw):
    """PyTorch Block.forward (NCHW in / NCHW out)."""
    B, C, H, W = x_nchw.shape
    assert C == 64, "Block is hard-wired to 64 channels"
    x = jnp.transpose(x_nchw, (0, 2, 3, 1))                    # NHWC
    x_flat = x.reshape(B * H * W, C)

    b1 = eresidual_block(params['b1'], x)                      # shared-weight block
    b1_flat = b1.reshape(B * H * W, C)
    o1 = cat_matmul([x_flat, b1_flat], params['c1_w'], params['c1_b'])

    b2 = eresidual_block(params['b1'], o1.reshape(B, H, W, C))
    b2_flat = b2.reshape(B * H * W, C)
    o2 = cat_matmul([x_flat, b1_flat, b2_flat], params['c2_w'], params['c2_b'])

    b3 = eresidual_block(params['b1'], o2.reshape(B, H, W, C))
    b3_flat = b3.reshape(B * H * W, C)
    o3 = cat_matmul([x_flat, b1_flat, b2_flat, b3_flat],
                    params['c3_w'], params['c3_b'])

    return jnp.transpose(o3.reshape(B, H, W, C), (0, 3, 1, 2))


# ------------------------------ parameter init -----------------------------------

def init_params(key, C=64):
    ks = iter(jax.random.split(key, 16))

    def conv3x3_w():
        # torch weight (Cout,Cin,3,3) -> ours w[ky*3+kx, Cin, Cout], stored bf16 for MXU
        w = jax.random.normal(next(ks), (9, C, C), jnp.float32) / math.sqrt(9 * C)
        return w.astype(jnp.bfloat16)

    def conv1x1_w(cin, cout):
        # torch weight (Cout,Cin,1,1) -> ours (Cin, Cout), stored bf16 for MXU
        w = jax.random.normal(next(ks), (cin, cout), jnp.float32) / math.sqrt(cin)
        return w.astype(jnp.bfloat16)

    def bias(c):
        return jax.random.normal(next(ks), (1, c), jnp.float32) * 0.05

    b1 = {'w1': conv3x3_w(), 'b1': bias(C),
          'w2': conv3x3_w(), 'b2': bias(C),
          'w3': conv1x1_w(C, C), 'b3': bias(C)}
    return {'b1': b1,
            'c1_w': conv1x1_w(2 * C, C), 'c1_b': bias(C),
            'c2_w': conv1x1_w(3 * C, C), 'c2_b': bias(C),
            'c3_w': conv1x1_w(4 * C, C), 'c3_b': bias(C)}


# --------------------------- pure-JAX reference (XLA) -----------------------------

def _conv3x3_ref(x, w9, b):
    w = w9.astype(jnp.float32).reshape(3, 3, w9.shape[1], w9.shape[2])
    y = jax.lax.conv_general_dilated(x, w, window_strides=(1, 1), padding='SAME',
                                     dimension_numbers=('NHWC', 'HWIO', 'NHWC'))
    return y + b.reshape(1, 1, 1, -1)


def _eresidual_ref(p, x):
    h = jax.nn.relu(_conv3x3_ref(x, p['w1'], p['b1']))
    h = jax.nn.relu(_conv3x3_ref(h, p['w2'], p['b2']))
    h = jnp.einsum('bhwc,cd->bhwd', h, p['w3'].astype(jnp.float32)) + p['b3'].reshape(1, 1, 1, -1)
    return jax.nn.relu(h + x)


def block_ref(params, x_nchw):
    x = jnp.transpose(x_nchw, (0, 2, 3, 1))

    def basic(c, w, b):
        y = jnp.einsum('bhwc,cd->bhwd', c, w.astype(jnp.float32)) + b.reshape(1, 1, 1, -1)
        return jax.nn.relu(y)

    b1 = _eresidual_ref(params['b1'], x)
    c1 = jnp.concatenate([x, b1], axis=-1)
    o1 = basic(c1, params['c1_w'], params['c1_b'])
    b2 = _eresidual_ref(params['b1'], o1)
    c2 = jnp.concatenate([c1, b2], axis=-1)
    o2 = basic(c2, params['c2_w'], params['c2_b'])
    b3 = _eresidual_ref(params['b1'], o2)
    c3 = jnp.concatenate([c2, b3], axis=-1)
    o3 = basic(c3, params['c3_w'], params['c3_b'])
    return jnp.transpose(o3, (0, 3, 1, 2))


# ------------------------------------- main ---------------------------------------

if __name__ == "__main__":
    B, C, H, W = 2, 64, 16, 16            # Block is hard-wired to 64 channels
    key = jax.random.PRNGKey(0)
    kx, kp = jax.random.split(key)
    x = jax.random.normal(kx, (B, C, H, W), jnp.float32)
    params = init_params(kp, C)

    out = jax.block_until_ready(jax.jit(block_forward)(params, x))
    assert out.shape == (B, C, H, W)
    assert bool(jnp.all(jnp.isfinite(out)))

    # Accuracy check vs. pure-JAX reference (bf16 MXU operands -> loose tolerance).
    ref = jax.block_until_ready(jax.jit(block_ref)(params, x))
    rel_err = jnp.linalg.norm(out - ref) / jnp.linalg.norm(ref)
    assert float(rel_err) < 5e-2, f"relative error too large: {float(rel_err)}"

    print("KERNEL_OK")
</pallas_src>

<mosaic_0001>
module attributes {stable_mosaic.version = 11 : i64} {
  func.func @_eresidual_kernel(%arg0: i32, %arg1: memref<1x18x18x64xf32, #tpu.memory_space<vmem>>, %arg2: memref<9x64x64xbf16, #tpu.memory_space<vmem>>, %arg3: memref<1x64xf32, #tpu.memory_space<vmem>>, %arg4: memref<9x64x64xbf16, #tpu.memory_space<vmem>>, %arg5: memref<1x64xf32, #tpu.memory_space<vmem>>, %arg6: memref<64x64xbf16, #tpu.memory_space<vmem>>, %arg7: memref<1x64xf32, #tpu.memory_space<vmem>>, %arg8: memref<1x16x16x64xf32, #tpu.memory_space<vmem>>, %arg9: memref<18x32x64xbf16, #tpu.memory_space<vmem>>) attributes {dimension_semantics = [#tpu.dimension_semantics<parallel>], iteration_bounds = array<i64: 2>, scalar_prefetch = 0 : i64, scratch_operands = 1 : i64, tpu.core_type = #tpu.core_type<tc>, window_params = [{transform_indices = @transform_0, window_bounds = array<i64: 1, 18, 18, 64>}, {pipeline_mode = #tpu.pipeline_mode<synchronous>, transform_indices = @transform_1, window_bounds = array<i64: 9, 64, 64>}, {pipeline_mode = #tpu.pipeline_mode<synchronous>, transform_indices = @transform_2, window_bounds = array<i64: 1, 64>}, {pipeline_mode = #tpu.pipeline_mode<synchronous>, transform_indices = @transform_3, window_bounds = array<i64: 9, 64, 64>}, {pipeline_mode = #tpu.pipeline_mode<synchronous>, transform_indices = @transform_4, window_bounds = array<i64: 1, 64>}, {pipeline_mode = #tpu.pipeline_mode<synchronous>, transform_indices = @transform_5, window_bounds = array<i64: 64, 64>}, {pipeline_mode = #tpu.pipeline_mode<synchronous>, transform_indices = @transform_6, window_bounds = array<i64: 1, 64>}, {transform_indices = @transform_7, window_bounds = array<i64: 1, 16, 16, 64>}]} {
    %cst = arith.constant 0.000000e+00 : f32
    %0 = vector.broadcast %cst : f32 to vector<256x64xf32>
    %c0 = arith.constant 0 : index
    %c0_0 = arith.constant 0 : index
    %1 = vector.load %arg3[%c0, %c0_0] : memref<1x64xf32, #tpu.memory_space<vmem>>, vector<1x64xf32>
    %2 = vector.broadcast %1 : vector<1x64xf32> to vector<256x64xf32>
    %3 = arith.addf %0, %2 : vector<256x64xf32>
    %c0_1 = arith.constant 0 : index
    %c0_2 = arith.constant 0 : index
    %c0_3 = arith.constant 0 : index
    %c0_4 = arith.constant 0 : index
    %4 = vector.load %arg1[%c0_1, %c0_2, %c0_3, %c0_4] : memref<1x18x18x64xf32, #tpu.memory_space<vmem>>, vector<1x16x16x64xf32>
    %5 = vector.shape_cast %4 : vector<1x16x16x64xf32> to vector<16x16x64xf32>
    %6 = arith.truncf %5 : vector<16x16x64xf32> to vector<16x16x64xbf16>
    %7 = vector.shape_cast %6 : vector<16x16x64xbf16> to vector<256x64xbf16>
    %c0_5 = arith.constant 0 : index
    %c0_6 = arith.constant 0 : index
    %c0_7 = arith.constant 0 : index
    %8 = vector.load %arg2[%c0_5, %c0_6, %c0_7] : memref<9x64x64xbf16, #tpu.memory_space<vmem>>, vector<1x64x64xbf16>
    %9 = vector.shape_cast %8 : vector<1x64x64xbf16> to vector<64x64xbf16>
    %cst_8 = arith.constant dense<0.000000e+00> : vector<256x64xf32>
    %10 = tpu.matmul %7, %9, %cst_8 {dimension_numbers = #tpu.dot_dimension_numbers<[1], [0], [0], [1], [0, 0, 1, 1], [], []>} : vector<256x64xbf16>, vector<64x64xbf16>, vector<256x64xf32> -> vector<256x64xf32>
    %11 = arith.addf %3, %10 : vector<256x64xf32>
    %c0_9 = arith.constant 0 : index
    %c0_10 = arith.constant 0 : index
    %c1 = arith.constant 1 : index
    %c0_11 = arith.constant 0 : index
    %12 = vector.load %arg1[%c0_9, %c0_10, %c1, %c0_11] : memref<1x18x18x64xf32, #tpu.memory_space<vmem>>, vector<1x16x16x64xf32>
    %13 = vector.shape_cast %12 : vector<1x16x16x64xf32> to vector<16x16x64xf32>
    %14 = arith.truncf %13 : vector<16x16x64xf32> to vector<16x16x64xbf16>
    %15 = vector.shape_cast %14 : vector<16x16x64xbf16> to vector<256x64xbf16>
    %c1_12 = arith.constant 1 : index
    %c0_13 = arith.constant 0 : index
    %c0_14 = arith.constant 0 : index
    %16 = vector.load %arg2[%c1_12, %c0_13, %c0_14] : memref<9x64x64xbf16, #tpu.memory_space<vmem>>, vector<1x64x64xbf16>
    %17 = vector.shape_cast %16 : vector<1x64x64xbf16> to vector<64x64xbf16>
    %cst_15 = arith.constant dense<0.000000e+00> : vector<256x64xf32>
    %18 = tpu.matmul %15, %17, %cst_15 {dimension_numbers = #tpu.dot_dimension_numbers<[1], [0], [0], [1], [0, 0, 1, 1], [], []>} : vector<256x64xbf16>, vector<64x64xbf16>, vector<256x64xf32> -> vector<256x64xf32>
    %19 = arith.addf %11, %18 : vector<256x64xf32>
    %c0_16 = arith.constant 0 : index
    %c0_17 = arith.constant 0 : index
    %c2 = arith.constant 2 : index
    %c0_18 = arith.constant 0 : index
    %20 = vector.load %arg1[%c0_16, %c0_17, %c2, %c0_18] : memref<1x18x18x64xf32, #tpu.memory_space<vmem>>, vector<1x16x16x64xf32>
    %21 = vector.shape_cast %20 : vector<1x16x16x64xf32> to vector<16x16x64xf32>
    %22 = arith.truncf %21 : vector<16x16x64xf32> to vector<16x16x64xbf16>
    %23 = vector.shape_cast %22 : vector<16x16x64xbf16> to vector<256x64xbf16>
    %c2_19 = arith.constant 2 : index
    %c0_20 = arith.constant 0 : index
    %c0_21 = arith.constant 0 : index
    %24 = vector.load %arg2[%c2_19, %c0_20, %c0_21] : memref<9x64x64xbf16, #tpu.memory_space<vmem>>, vector<1x64x64xbf16>
    %25 = vector.shape_cast %24 : vector<1x64x64xbf16> to vector<64x64xbf16>
    %cst_22 = arith.constant dense<0.000000e+00> : vector<256x64xf32>
    %26 = tpu.matmul %23, %25, %cst_22 {dimension_numbers = #tpu.dot_dimension_numbers<[1], [0], [0], [1], [0, 0, 1, 1], [], []>} : vector<256x64xbf16>, vector<64x64xbf16>, vector<256x64xf32> -> vector<256x64xf32>
    %27 = arith.addf %19, %26 : vector<256x64xf32>
    %c0_23 = arith.constant 0 : index
    %c1_24 = arith.constant 1 : index
    %c0_25 = arith.constant 0 : index
    %c0_26 = arith.constant 0 : index
    %28 = vector.load %arg1[%c0_23, %c1_24, %c0_25, %c0_26] : memref<1x18x18x64xf32, #tpu.memory_space<vmem>>, vector<1x16x16x64xf32>
    %29 = vector.shape_cast %28 : vector<1x16x16x64xf32> to vector<16x16x64xf32>
    %30 = arith.truncf %29 : vector<16x16x64xf32> to vector<16x16x64xbf16>
    %31 = vector.shape_cast %30 : vector<16x16x64xbf16> to vector<256x64xbf16>
    %c3 = arith.constant 3 : index
    %c0_27 = arith.constant 0 : index
    %c0_28 = arith.constant 0 : index
    %32 = vector.load %arg2[%c3, %c0_27, %c0_28] : memref<9x64x64xbf16, #tpu.memory_space<vmem>>, vector<1x64x64xbf16>
    %33 = vector.shape_cast %32 : vector<1x64x64xbf16> to vector<64x64xbf16>
    %cst_29 = arith.constant dense<0.000000e+00> : vector<256x64xf32>
    %34 = tpu.matmul %31, %33, %cst_29 {dimension_numbers = #tpu.dot_dimension_numbers<[1], [0], [0], [1], [0, 0, 1, 1], [], []>} : vector<256x64xbf16>, vector<64x64xbf16>, vector<256x64xf32> -> vector<256x64xf32>
    %35 = arith.addf %27, %34 : vector<256x64xf32>
    %c0_30 = arith.constant 0 : index
    %c1_31 = arith.constant 1 : index
    %c1_32 = arith.constant 1 : index
    %c0_33 = arith.constant 0 : index
    %36 = vector.load %arg1[%c0_30, %c1_31, %c1_32, %c0_33] : memref<1x18x18x64xf32, #tpu.memory_space<vmem>>, vector<1x16x16x64xf32>
    %37 = vector.shape_cast %36 : vector<1x16x16x64xf32> to vector<16x16x64xf32>
    %38 = arith.truncf %37 : vector<16x16x64xf32> to vector<16x16x64xbf16>
    %39 = vector.shape_cast %38 : vector<16x16x64xbf16> to vector<256x64xbf16>
    %c4 = arith.constant 4 : index
    %c0_34 = arith.constant 0 : index
    %c0_35 = arith.constant 0 : index
    %40 = vector.load %arg2[%c4, %c0_34, %c0_35] : memref<9x64x64xbf16, #tpu.memory_space<vmem>>, vector<1x64x64xbf16>
    %41 = vector.shape_cast %40 : vector<1x64x64xbf16> to vector<64x64xbf16>
    %cst_36 = arith.constant dense<0.000000e+00> : vector<256x64xf32>
    %42 = tpu.matmul %39, %41, %cst_36 {dimension_numbers = #tpu.dot_dimension_numbers<[1], [0], [0], [1], [0, 0, 1, 1], [], []>} : vector<256x64xbf16>, vector<64x64xbf16>, vector<256x64xf32> -> vector<256x64xf32>
    %43 = arith.addf %35, %42 : vector<256x64xf32>
    %c0_37 = arith.constant 0 : index
    %c1_38 = arith.constant 1 : index
    %c2_39 = arith.constant 2 : index
    %c0_40 = arith.constant 0 : index
    %44 = vector.load %arg1[%c0_37, %c1_38, %c2_39, %c0_40] : memref<1x18x18x64xf32, #tpu.memory_space<vmem>>, vector<1x16x16x64xf32>
    %45 = vector.shape_cast %44 : vector<1x16x16x64xf32> to vector<16x16x64xf32>
    %46 = arith.truncf %45 : vector<16x16x64xf32> to vector<16x16x64xbf16>
    %47 = vector.shape_cast %46 : vector<16x16x64xbf16> to vector<256x64xbf16>
    %c5 = arith.constant 5 : index
    %c0_41 = arith.constant 0 : index
    %c0_42 = arith.constant 0 : index
    %48 = vector.load %arg2[%c5, %c0_41, %c0_42] : memref<9x64x64xbf16, #tpu.memory_space<vmem>>, vector<1x64x64xbf16>
    %49 = vector.shape_cast %48 : vector<1x64x64xbf16> to vector<64x64xbf16>
    %cst_43 = arith.constant dense<0.000000e+00> : vector<256x64xf32>
    %50 = tpu.matmul %47, %49, %cst_43 {dimension_numbers = #tpu.dot_dimension_numbers<[1], [0], [0], [1], [0, 0, 1, 1], [], []>} : vector<256x64xbf16>, vector<64x64xbf16>, vector<256x64xf32> -> vector<256x64xf32>
    %51 = arith.addf %43, %50 : vector<256x64xf32>
    %c0_44 = arith.constant 0 : index
    %c2_45 = arith.constant 2 : index
    %c0_46 = arith.constant 0 : index
    %c0_47 = arith.constant 0 : index
    %52 = vector.load %arg1[%c0_44, %c2_45, %c0_46, %c0_47] : memref<1x18x18x64xf32, #tpu.memory_space<vmem>>, vector<1x16x16x64xf32>
    %53 = vector.shape_cast %52 : vector<1x16x16x64xf32> to vector<16x16x64xf32>
    %54 = arith.truncf %53 : vector<16x16x64xf32> to vector<16x16x64xbf16>
    %55 = vector.shape_cast %54 : vector<16x16x64xbf16> to vector<256x64xbf16>
    %c6 = arith.constant 6 : index
    %c0_48 = arith.constant 0 : index
    %c0_49 = arith.constant 0 : index
    %56 = vector.load %arg2[%c6, %c0_48, %c0_49] : memref<9x64x64xbf16, #tpu.memory_space<vmem>>, vector<1x64x64xbf16>
    %57 = vector.shape_cast %56 : vector<1x64x64xbf16> to vector<64x64xbf16>
    %cst_50 = arith.constant dense<0.000000e+00> : vector<256x64xf32>
    %58 = tpu.matmul %55, %57, %cst_50 {dimension_numbers = #tpu.dot_dimension_numbers<[1], [0], [0], [1], [0, 0, 1, 1], [], []>} : vector<256x64xbf16>, vector<64x64xbf16>, vector<256x64xf32> -> vector<256x64xf32>
    %59 = arith.addf %51, %58 : vector<256x64xf32>
    %c0_51 = arith.constant 0 : index
    %c2_52 = arith.constant 2 : index
    %c1_53 = arith.constant 1 : index
    %c0_54 = arith.constant 0 : index
    %60 = vector.load %arg1[%c0_51, %c2_52, %c1_53, %c0_54] : memref<1x18x18x64xf32, #tpu.memory_space<vmem>>, vector<1x16x16x64xf32>
    %61 = vector.shape_cast %60 : vector<1x16x16x64xf32> to vector<16x16x64xf32>
    %62 = arith.truncf %61 : vector<16x16x64xf32> to vector<16x16x64xbf16>
    %63 = vector.shape_cast %62 : vector<16x16x64xbf16> to vector<256x64xbf16>
    %c7 = arith.constant 7 : index
    %c0_55 = arith.constant 0 : index
    %c0_56 = arith.constant 0 : index
    %64 = vector.load %arg2[%c7, %c0_55, %c0_56] : memref<9x64x64xbf16, #tpu.memory_space<vmem>>, vector<1x64x64xbf16>
    %65 = vector.shape_cast %64 : vector<1x64x64xbf16> to vector<64x64xbf16>
    %cst_57 = arith.constant dense<0.000000e+00> : vector<256x64xf32>
    %66 = tpu.matmul %63, %65, %cst_57 {dimension_numbers = #tpu.dot_dimension_numbers<[1], [0], [0], [1], [0, 0, 1, 1], [], []>} : vector<256x64xbf16>, vector<64x64xbf16>, vector<256x64xf32> -> vector<256x64xf32>
    %67 = arith.addf %59, %66 : vector<256x64xf32>
    %c0_58 = arith.constant 0 : index
    %c2_59 = arith.constant 2 : index
    %c2_60 = arith.constant 2 : index
    %c0_61 = arith.constant 0 : index
    %68 = vector.load %arg1[%c0_58, %c2_59, %c2_60, %c0_61] : memref<1x18x18x64xf32, #tpu.memory_space<vmem>>, vector<1x16x16x64xf32>
    %69 = vector.shape_cast %68 : vector<1x16x16x64xf32> to vector<16x16x64xf32>
    %70 = arith.truncf %69 : vector<16x16x64xf32> to vector<16x16x64xbf16>
    %71 = vector.shape_cast %70 : vector<16x16x64xbf16> to vector<256x64xbf16>
    %c8 = arith.constant 8 : index
    %c0_62 = arith.constant 0 : index
    %c0_63 = arith.constant 0 : index
    %72 = vector.load %arg2[%c8, %c0_62, %c0_63] : memref<9x64x64xbf16, #tpu.memory_space<vmem>>, vector<1x64x64xbf16>
    %73 = vector.shape_cast %72 : vector<1x64x64xbf16> to vector<64x64xbf16>
    %cst_64 = arith.constant dense<0.000000e+00> : vector<256x64xf32>
    %74 = tpu.matmul %71, %73, %cst_64 {dimension_numbers = #tpu.dot_dimension_numbers<[1], [0], [0], [1], [0, 0, 1, 1], [], []>} : vector<256x64xbf16>, vector<64x64xbf16>, vector<256x64xf32> -> vector<256x64xf32>
    %75 = arith.addf %67, %74 : vector<256x64xf32>
    %cst_65 = arith.constant 0.000000e+00 : f32
    %76 = vector.broadcast %cst_65 : f32 to vector<256x64xf32>
    %77 = arith.maximumf %75, %76 : vector<256x64xf32>
    %78 = arith.truncf %77 : vector<256x64xf32> to vector<256x64xbf16>
    %79 = vector.shape_cast %78 : vector<256x64xbf16> to vector<16x16x64xbf16>
    %cst_66 = arith.constant 0.000000e+00 : bf16
    %80 = vector.broadcast %cst_66 : bf16 to vector<18x32x64xbf16>
    %c0_67 = arith.constant 0 : index
    %c0_68 = arith.constant 0 : index
    %c0_69 = arith.constant 0 : index
    %81 = vector.load %arg9[%c0_67, %c0_68, %c0_69] : memref<18x32x64xbf16, #tpu.memory_space<vmem>>, vector<18x32x64xbf16>
    tpu.vector_store %arg9[%c0_67, %c0_68, %c0_69], %80 {strides = array<i32>} : memref<18x32x64xbf16, #tpu.memory_space<vmem>>, vector<18x32x64xbf16>,
    %c1_70 = arith.constant 1 : index
    %c8_71 = arith.constant 8 : index
    %c0_72 = arith.constant 0 : index
    %82 = vector.load %arg9[%c1_70, %c8_71, %c0_72] : memref<18x32x64xbf16, #tpu.memory_space<vmem>>, vector<16x16x64xbf16>
    tpu.vector_store %arg9[%c1_70, %c8_71, %c0_72], %79 {strides = array<i32>} : memref<18x32x64xbf16, #tpu.memory_space<vmem>>, vector<16x16x64xbf16>,
    %cst_73 = arith.constant 0.000000e+00 : f32
    %83 = vector.broadcast %cst_73 : f32 to vector<256x64xf32>
    %c0_74 = arith.constant 0 : index
    %c0_75 = arith.constant 0 : index
    %84 = vector.load %arg5[%c0_74, %c0_75] : memref<1x64xf32, #tpu.memory_space<vmem>>, vector<1x64xf32>
    %85 = vector.broadcast %84 : vector<1x64xf32> to vector<256x64xf32>
    %86 = arith.addf %83, %85 : vector<256x64xf32>
    %c0_76 = arith.constant 0 : index
    %c7_77 = arith.constant 7 : index
    %c0_78 = arith.constant 0 : index
    %87 = vector.load %arg9[%c0_76, %c7_77, %c0_78] : memref<18x32x64xbf16, #tpu.memory_space<vmem>>, vector<16x16x64xbf16>
    %88 = vector.shape_cast %87 : vector<16x16x64xbf16> to vector<256x64xbf16>
    %c0_79 = arith.constant 0 : index
    %c0_80 = arith.constant 0 : index
    %c0_81 = arith.constant 0 : index
    %89 = vector.load %arg4[%c0_79, %c0_80, %c0_81] : memref<9x64x64xbf16, #tpu.memory_space<vmem>>, vector<1x64x64xbf16>
    %90 = vector.shape_cast %89 : vector<1x64x64xbf16> to vector<64x64xbf16>
    %cst_82 = arith.constant dense<0.000000e+00> : vector<256x64xf32>
    %91 = tpu.matmul %88, %90, %cst_82 {dimension_numbers = #tpu.dot_dimension_numbers<[1], [0], [0], [1], [0, 0, 1, 1], [], []>} : vector<256x64xbf16>, vector<64x64xbf16>, vector<256x64xf32> -> vector<256x64xf32>
    %92 = arith.addf %86, %91 : vector<256x64xf32>
    %c0_83 = arith.constant 0 : index
    %c8_84 = arith.constant 8 : index
    %c0_85 = arith.constant 0 : index
    %93 = vector.load %arg9[%c0_83, %c8_84, %c0_85] : memref<18x32x64xbf16, #tpu.memory_space<vmem>>, vector<16x16x64xbf16>
    %94 = vector.shape_cast %93 : vector<16x16x64xbf16> to vector<256x64xbf16>
    %c1_86 = arith.constant 1 : index
    %c0_87 = arith.constant 0 : index
    %c0_88 = arith.constant 0 : index
    %95 = vector.load %arg4[%c1_86, %c0_87, %c0_88] : memref<9x64x64xbf16, #tpu.memory_space<vmem>>, vector<1x64x64xbf16>
    %96 = vector.shape_cast %95 : vector<1x64x64xbf16> to vector<64x64xbf16>
    %cst_89 = arith.constant dense<0.000000e+00> : vector<256x64xf32>
    %97 = tpu.matmul %94, %96, %cst_89 {dimension_numbers = #tpu.dot_dimension_numbers<[1], [0], [0], [1], [0, 0, 1, 1], [], []>} : vector<256x64xbf16>, vector<64x64xbf16>, vector<256x64xf32> -> vector<256x64xf32>
    %98 = arith.addf %92, %97 : vector<256x64xf32>
    %c0_90 = arith.constant 0 : index
    %c9 = arith.constant 9 : index
    %c0_91 = arith.constant 0 : index
    %99 = vector.load %arg9[%c0_90, %c9, %c0_91] : memref<18x32x64xbf16, #tpu.memory_space<vmem>>, vector<16x16x64xbf16>
    %100 = vector.shape_cast %99 : vector<16x16x64xbf16> to vector<256x64xbf16>
    %c2_92 = arith.constant 2 : index
    %c0_93 = arith.constant 0 : index
    %c0_94 = arith.constant 0 : index
    %101 = vector.load %arg4[%c2_92, %c0_93, %c0_94] : memref<9x64x64xbf16, #tpu.memory_space<vmem>>, vector<1x64x64xbf16>
    %102 = vector.shape_cast %101 : vector<1x64x64xbf16> to vector<64x64xbf16>
    %cst_95 = arith.constant dense<0.000000e+00> : vector<256x64xf32>
    %103 = tpu.matmul %100, %102, %cst_95 {dimension_numbers = #tpu.dot_dimension_numbers<[1], [0], [0], [1], [0, 0, 1, 1], [], []>} : vector<256x64xbf16>, vector<64x64xbf16>, vector<256x64xf32> -> vector<256x64xf32>
    %104 = arith.addf %98, %103 : vector<256x64xf32>
    %c1_96 = arith.constant 1 : index
    %c7_97 = arith.constant 7 : index
    %c0_98 = arith.constant 0 : index
    %105 = vector.load %arg9[%c1_96, %c7_97, %c0_98] : memref<18x32x64xbf16, #tpu.memory_space<vmem>>, vector<16x16x64xbf16>
    %106 = vector.shape_cast %105 : vector<16x16x64xbf16> to vector<256x64xbf16>
    %c3_99 = arith.constant 3 : index
    %c0_100 = arith.constant 0 : index
    %c0_101 = arith.constant 0 : index
    %107 = vector.load %arg4[%c3_99, %c0_100, %c0_101] : memref<9x64x64xbf16, #tpu.memory_space<vmem>>, vector<1x64x64xbf16>
    %108 = vector.shape_cast %107 : vector<1x64x64xbf16> to vector<64x64xbf16>
    %cst_102 = arith.constant dense<0.000000e+00> : vector<256x64xf32>
    %109 = tpu.matmul %106, %108, %cst_102 {dimension_numbers = #tpu.dot_dimension_numbers<[1], [0], [0], [1], [0, 0, 1, 1], [], []>} : vector<256x64xbf16>, vector<64x64xbf16>, vector<256x64xf32> -> vector<256x64xf32>
    %110 = arith.addf %104, %109 : vector<256x64xf32>
    %c1_103 = arith.constant 1 : index
    %c8_104 = arith.constant 8 : index
    %c0_105 = arith.constant 0 : index
    %111 = vector.load %arg9[%c1_103, %c8_104, %c0_105] : memref<18x32x64xbf16, #tpu.memory_space<vmem>>, vector<16x16x64xbf16>
    %112 = vector.shape_cast %111 : vector<16x16x64xbf16> to vector<256x64xbf16>
    %c4_106 = arith.constant 4 : index
    %c0_107 = arith.constant 0 : index
    %c0_108 = arith.constant 0 : index
    %113 = vector.load %arg4[%c4_106, %c0_107, %c0_108] : memref<9x64x64xbf16, #tpu.memory_space<vmem>>, vector<1x64x64xbf16>
    %114 = vector.shape_cast %113 : vector<1x64x64xbf16> to vector<64x64xbf16>
    %cst_109 = arith.constant dense<0.000000e+00> : vector<256x64xf32>
    %115 = tpu.matmul %112, %114, %cst_109 {dimension_numbers = #tpu.dot_dimension_numbers<[1], [0], [0], [1], [0, 0, 1, 1], [], []>} : vector<256x64xbf16>, vector<64x64xbf16>, vector<256x64xf32> -> vector<256x64xf32>
    %116 = arith.addf %110, %115 : vector<256x64xf32>
    %c1_110 = arith.constant 1 : index
    %c9_111 = arith.constant 9 : index
    %c0_112 = arith.constant 0 : index
    %117 = vector.load %arg9[%c1_110, %c9_111, %c0_112] : memref<18x32x64xbf16, #tpu.memory_space<vmem>>, vector<16x16x64xbf16>
    %118 = vector.shape_cast %117 : vector<16x16x64xbf16> to vector<256x64xbf16>
    %c5_113 = arith.constant 5 : index
    %c0_114 = arith.constant 0 : index
    %c0_115 = arith.constant 0 : index
    %119 = vector.load %arg4[%c5_113, %c0_114, %c0_115] : memref<9x64x64xbf16, #tpu.memory_space<vmem>>, vector<1x64x64xbf16>
    %120 = vector.shape_cast %119 : vector<1x64x64xbf16> to vector<64x64xbf16>
    %cst_116 = arith.constant dense<0.000000e+00> : vector<256x64xf32>
    %121 = tpu.matmul %118, %120, %cst_116 {dimension_numbers = #tpu.dot_dimension_numbers<[1], [0], [0], [1], [0, 0, 1, 1], [], []>} : vector<256x64xbf16>, vector<64x64xbf16>, vector<256x64xf32> -> vector<256x64xf32>
    %122 = arith.addf %116, %121 : vector<256x64xf32>
    %c2_117 = arith.constant 2 : index
    %c7_118 = arith.constant 7 : index
    %c0_119 = arith.constant 0 : index
    %123 = vector.load %arg9[%c2_117, %c7_118, %c0_119] : memref<18x32x64xbf16, #tpu.memory_space<vmem>>, vector<16x16x64xbf16>
    %124 = vector.shape_cast %123 : vector<16x16x64xbf16> to vector<256x64xbf16>
    %c6_120 = arith.constant 6 : index
    %c0_121 = arith.constant 0 : index
    %c0_122 = arith.constant 0 : index
    %125 = vector.load %arg4[%c6_120, %c0_121, %c0_122] : memref<9x64x64xbf16, #tpu.memory_space<vmem>>, vector<1x64x64xbf16>
    %126 = vector.shape_cast %125 : vector<1x64x64xbf16> to vector<64x64xbf16>
    %cst_123 = arith.constant dense<0.000000e+00> : vector<256x64xf32>
    %127 = tpu.matmul %124, %126, %cst_123 {dimension_numbers = #tpu.dot_dimension_numbers<[1], [0], [0], [1], [0, 0, 1, 1], [], []>} : vector<256x64xbf16>, vector<64x64xbf16>, vector<256x64xf32> -> vector<256x64xf32>
    %128 = arith.addf %122, %127 : vector<256x64xf32>
    %c2_124 = arith.constant 2 : index
    %c8_125 = arith.constant 8 : index
    %c0_126 = arith.constant 0 : index
    %129 = vector.load %arg9[%c2_124, %c8_125, %c0_126] : memref<18x32x64xbf16, #tpu.memory_space<vmem>>, vector<16x16x64xbf16>
    %130 = vector.shape_cast %129 : vector<16x16x64xbf16> to vector<256x64xbf16>
    %c7_127 = arith.constant 7 : index
    %c0_128 = arith.constant 0 : index
    %c0_129 = arith.constant 0 : index
    %131 = vector.load %arg4[%c7_127, %c0_128, %c0_129] : memref<9x64x64xbf16, #tpu.memory_space<vmem>>, vector<1x64x64xbf16>
    %132 = vector.shape_cast %131 : vector<1x64x64xbf16> to vector<64x64xbf16>
    %cst_130 = arith.constant dense<0.000000e+00> : vector<256x64xf32>
    %133 = tpu.matmul %130, %132, %cst_130 {dimension_numbers = #tpu.dot_dimension_numbers<[1], [0], [0], [1], [0, 0, 1, 1], [], []>} : vector<256x64xbf16>, vector<64x64xbf16>, vector<256x64xf32> -> vector<256x64xf32>
    %134 = arith.addf %128, %133 : vector<256x64xf32>
    %c2_131 = arith.constant 2 : index
    %c9_132 = arith.constant 9 : index
    %c0_133 = arith.constant 0 : index
    %135 = vector.load %arg9[%c2_131, %c9_132, %c0_133] : memref<18x32x64xbf16, #tpu.memory_space<vmem>>, vector<16x16x64xbf16>
    %136 = vector.shape_cast %135 : vector<16x16x64xbf16> to vector<256x64xbf16>
    %c8_134 = arith.constant 8 : index
    %c0_135 = arith.constant 0 : index
    %c0_136 = arith.constant 0 : index
    %137 = vector.load %arg4[%c8_134, %c0_135, %c0_136] : memref<9x64x64xbf16, #tpu.memory_space<vmem>>, vector<1x64x64xbf16>
    %138 = vector.shape_cast %137 : vector<1x64x64xbf16> to vector<64x64xbf16>
    %cst_137 = arith.constant dense<0.000000e+00> : vector<256x64xf32>
    %139 = tpu.matmul %136, %138, %cst_137 {dimension_numbers = #tpu.dot_dimension_numbers<[1], [0], [0], [1], [0, 0, 1, 1], [], []>} : vector<256x64xbf16>, vector<64x64xbf16>, vector<256x64xf32> -> vector<256x64xf32>
    %140 = arith.addf %134, %139 : vector<256x64xf32>
    %cst_138 = arith.constant 0.000000e+00 : f32
    %141 = vector.broadcast %cst_138 : f32 to vector<256x64xf32>
    %142 = arith.maximumf %140, %141 : vector<256x64xf32>
    %143 = arith.truncf %142 : vector<256x64xf32> to vector<256x64xbf16>
    %c0_139 = arith.constant 0 : index
    %c0_140 = arith.constant 0 : index
    %144 = vector.load %arg6[%c0_139, %c0_140] : memref<64x64xbf16, #tpu.memory_space<vmem>>, vector<64x64xbf16>
    %cst_141 = arith.constant dense<0.000000e+00> : vector<256x64xf32>
    %145 = tpu.matmul %143, %144, %cst_141 {dimension_numbers = #tpu.dot_dimension_numbers<[1], [0], [0], [1], [0, 0, 1, 1], [], []>} : vector<256x64xbf16>, vector<64x64xbf16>, vector<256x64xf32> -> vector<256x64xf32>
    %c0_142 = arith.constant 0 : index
    %c0_143 = arith.constant 0 : index
    %146 = vector.load %arg7[%c0_142, %c0_143] : memref<1x64xf32, #tpu.memory_space<vmem>>, vector<1x64xf32>
    %147 = vector.broadcast %146 : vector<1x64xf32> to vector<256x64xf32>
    %148 = arith.addf %145, %147 : vector<256x64xf32>
    %c0_144 = arith.constant 0 : index
    %c1_145 = arith.constant 1 : index
    %c1_146 = arith.constant 1 : index
    %c0_147 = arith.constant 0 : index
    %149 = vector.load %arg1[%c0_144, %c1_145, %c1_146, %c0_147] : memref<1x18x18x64xf32, #tpu.memory_space<vmem>>, vector<1x16x16x64xf32>
    %150 = vector.shape_cast %149 : vector<1x16x16x64xf32> to vector<16x16x64xf32>
    %151 = vector.shape_cast %150 : vector<16x16x64xf32> to vector<256x64xf32>
    %152 = arith.addf %148, %151 : vector<256x64xf32>
    %cst_148 = arith.constant 0.000000e+00 : f32
    %153 = vector.broadcast %cst_148 : f32 to vector<256x64xf32>
    %154 = arith.maximumf %152, %153 : vector<256x64xf32>
    %155 = vector.shape_cast %154 : vector<256x64xf32> to vector<16x16x64xf32>
    %c0_149 = arith.constant 0 : index
    %c0_150 = arith.constant 0 : index
    %c0_151 = arith.constant 0 : index
    %c0_152 = arith.constant 0 : index
    %156 = vector.load %arg8[%c0_149, %c0_150, %c0_151, %c0_152] : memref<1x16x16x64xf32, #tpu.memory_space<vmem>>, vector<1x16x16x64xf32>
    %157 = vector.shape_cast %156 : vector<1x16x16x64xf32> to vector<16x16x64xf32>
    %158 = vector.shape_cast %155 : vector<16x16x64xf32> to vector<1x16x16x64xf32>
    tpu.vector_store %arg8[%c0_149, %c0_150, %c0_151, %c0_152], %158 {strides = array<i32>} : memref<1x16x16x64xf32, #tpu.memory_space<vmem>>, vector<1x16x16x64xf32>,
    return
  }
  func.func @transform_0(%arg0: i32) -> (i32, i32, i32, i32) {
    %c0_i32 = arith.constant 0 : i32
    %c0_i32_0 = arith.constant 0 : i32
    %c0_i32_1 = arith.constant 0 : i32
    %c0_i32_2 = arith.constant 0 : i32
    return %arg0, %c0_i32, %c0_i32_0, %c0_i32_1 : i32, i32, i32, i32
  }
  func.func @transform_1(%arg0: i32) -> (i32, i32, i32) {
    %c0_i32 = arith.constant 0 : i32
    %c0_i32_0 = arith.constant 0 : i32
    %c0_i32_1 = arith.constant 0 : i32
    %c0_i32_2 = arith.constant 0 : i32
    return %c0_i32, %c0_i32_0, %c0_i32_1 : i32, i32, i32
  }
  func.func @transform_2(%arg0: i32) -> (i32, i32) {
    %c0_i32 = arith.constant 0 : i32
    %c0_i32_0 = arith.constant 0 : i32
    %c0_i32_1 = arith.constant 0 : i32
    return %c0_i32, %c0_i32_0 : i32, i32
  }
  func.func @transform_3(%arg0: i32) -> (i32, i32, i32) {
    %c0_i32 = arith.constant 0 : i32
    %c0_i32_0 = arith.constant 0 : i32
    %c0_i32_1 = arith.constant 0 : i32
    %c0_i32_2 = arith.constant 0 : i32
    return %c0_i32, %c0_i32_0, %c0_i32_1 : i32, i32, i32
  }
  func.func @transform_4(%arg0: i32) -> (i32, i32) {
    %c0_i32 = arith.constant 0 : i32
    %c0_i32_0 = arith.constant 0 : i32
    %c0_i32_1 = arith.constant 0 : i32
    return %c0_i32, %c0_i32_0 : i32, i32
  }
  func.func @transform_5(%arg0: i32) -> (i32, i32) {
    %c0_i32 = arith.constant 0 : i32
    %c0_i32_0 = arith.constant 0 : i32
    %c0_i32_1 = arith.constant 0 : i32
    return %c0_i32, %c0_i32_0 : i32, i32
  }
  func.func @transform_6(%arg0: i32) -> (i32, i32) {
    %c0_i32 = arith.constant 0 : i32
    %c0_i32_0 = arith.constant 0 : i32
    %c0_i32_1 = arith.constant 0 : i32
    return %c0_i32, %c0_i32_0 : i32, i32
  }
  func.func @transform_7(%arg0: i32) -> (i32, i32, i32, i32) {
    %c0_i32 = arith.constant 0 : i32
    %c0_i32_0 = arith.constant 0 : i32
    %c0_i32_1 = arith.constant 0 : i32
    %c0_i32_2 = arith.constant 0 : i32
    return %arg0, %c0_i32, %c0_i32_0, %c0_i32_1 : i32, i32, i32, i32
  }
}

module attributes {stable_mosaic.version = 11 : i64} {
  func.func @_cat_matmul_kernel(%arg0: i32, %arg1: memref<256x64xf32, #tpu.memory_space<vmem>>, %arg2: memref<256x64xf32, #tpu.memory_space<vmem>>, %arg3: memref<128x64xbf16, #tpu.memory_space<vmem>>, %arg4: memref<1x64xf32, #tpu.memory_space<vmem>>, %arg5: memref<256x64xf32, #tpu.memory_space<vmem>>) attributes {dimension_semantics = [#tpu.dimension_semantics<parallel>], iteration_bounds = array<i64: 2>, scalar_prefetch = 0 : i64, scratch_operands = 0 : i64, tpu.core_type = #tpu.core_type<tc>, window_params = [{transform_indices = @transform_0, window_bounds = array<i64: 256, 64>}, {transform_indices = @transform_1, window_bounds = array<i64: 256, 64>}, {pipeline_mode = #tpu.pipeline_mode<synchronous>, transform_indices = @transform_2, window_bounds = array<i64: 128, 64>}, {pipeline_mode = #tpu.pipeline_mode<synchronous>, transform_indices = @transform_3, window_bounds = array<i64: 1, 64>}, {transform_indices = @transform_4, window_bounds = array<i64: 256, 64>}]} {
    %cst = arith.constant 0.000000e+00 : f32
    %0 = vector.broadcast %cst : f32 to vector<256x64xf32>
    %c0 = arith.constant 0 : index
    %c0_0 = arith.constant 0 : index
    %1 = vector.load %arg4[%c0, %c0_0] : memref<1x64xf32, #tpu.memory_space<vmem>>, vector<1x64xf32>
    %2 = vector.broadcast %1 : vector<1x64xf32> to vector<256x64xf32>
    %3 = arith.addf %0, %2 : vector<256x64xf32>
    %c0_1 = arith.constant 0 : index
    %c0_2 = arith.constant 0 : index
    %4 = vector.load %arg1[%c0_1, %c0_2] : memref<256x64xf32, #tpu.memory_space<vmem>>, vector<256x64xf32>
    %5 = arith.truncf %4 : vector<256x64xf32> to vector<256x64xbf16>
    %c0_3 = arith.constant 0 : index
    %c0_4 = arith.constant 0 : index
    %6 = vector.load %arg3[%c0_3, %c0_4] : memref<128x64xbf16, #tpu.memory_space<vmem>>, vector<64x64xbf16>
    %cst_5 = arith.constant dense<0.000000e+00> : vector<256x64xf32>
    %7 = tpu.matmul %5, %6, %cst_5 {dimension_numbers = #tpu.dot_dimension_numbers<[1], [0], [0], [1], [0, 0, 1, 1], [], []>} : vector<256x64xbf16>, vector<64x64xbf16>, vector<256x64xf32> -> vector<256x64xf32>
    %8 = arith.addf %3, %7 : vector<256x64xf32>
    %c0_6 = arith.constant 0 : index
    %c0_7 = arith.constant 0 : index
    %9 = vector.load %arg2[%c0_6, %c0_7] : memref<256x64xf32, #tpu.memory_space<vmem>>, vector<256x64xf32>
    %10 = arith.truncf %9 : vector<256x64xf32> to vector<256x64xbf16>
    %c64 = arith.constant 64 : index
    %c0_8 = arith.constant 0 : index
    %11 = vector.load %arg3[%c64, %c0_8] : memref<128x64xbf16, #tpu.memory_space<vmem>>, vector<64x64xbf16>
    %cst_9 = arith.constant dense<0.000000e+00> : vector<256x64xf32>
    %12 = tpu.matmul %10, %11, %cst_9 {dimension_numbers = #tpu.dot_dimension_numbers<[1], [0], [0], [1], [0, 0, 1, 1], [], []>} : vector<256x64xbf16>, vector<64x64xbf16>, vector<256x64xf32> -> vector<256x64xf32>
    %13 = arith.addf %8, %12 : vector<256x64xf32>
    %cst_10 = arith.constant 0.000000e+00 : f32
    %14 = vector.broadcast %cst_10 : f32 to vector<256x64xf32>
    %15 = arith.maximumf %13, %14 : vector<256x64xf32>
    %c0_11 = arith.constant 0 : index
    %c0_12 = arith.constant 0 : index
    %16 = vector.load %arg5[%c0_11, %c0_12] : memref<256x64xf32, #tpu.memory_space<vmem>>, vector<256x64xf32>
    tpu.vector_store %arg5[%c0_11, %c0_12], %15 {strides = array<i32>} : memref<256x64xf32, #tpu.memory_space<vmem>>, vector<256x64xf32>,
    return
  }
  func.func @transform_0(%arg0: i32) -> (i32, i32) {
    %c0_i32 = arith.constant 0 : i32
    %c0_i32_0 = arith.constant 0 : i32
    return %arg0, %c0_i32 : i32, i32
  }
  func.func @transform_1(%arg0: i32) -> (i32, i32) {
    %c0_i32 = arith.constant 0 : i32
    %c0_i32_0 = arith.constant 0 : i32
    return %arg0, %c0_i32 : i32, i32
  }
  func.func @transform_2(%arg0: i32) -> (i32, i32) {
    %c0_i32 = arith.constant 0 : i32
    %c0_i32_0 = arith.constant 0 : i32
    %c0_i32_1 = arith.constant 0 : i32
    return %c0_i32, %c0_i32_0 : i32, i32
  }
  func.func @transform_3(%arg0: i32) -> (i32, i32) {
    %c0_i32 = arith.constant 0 : i32
    %c0_i32_0 = arith.constant 0 : i32
    %c0_i32_1 = arith.constant 0 : i32
    return %c0_i32, %c0_i32_0 : i32, i32
  }
  func.func @transform_4(%arg0: i32) -> (i32, i32) {
    %c0_i32 = arith.constant 0 : i32
    %c0_i32_0 = arith.constant 0 : i32
    return %arg0, %c0_i32 : i32, i32
  }
}

module attributes {stable_mosaic.version = 11 : i64} {
  func.func @_cat_matmul_kernel(%arg0: i32, %arg1: memref<256x64xf32, #tpu.memory_space<vmem>>, %arg2: memref<256x64xf32, #tpu.memory_space<vmem>>, %arg3: memref<256x64xf32, #tpu.memory_space<vmem>>, %arg4: memref<192x64xbf16, #tpu.memory_space<vmem>>, %arg5: memref<1x64xf32, #tpu.memory_space<vmem>>, %arg6: memref<256x64xf32, #tpu.memory_space<vmem>>) attributes {dimension_semantics = [#tpu.dimension_semantics<parallel>], iteration_bounds = array<i64: 2>, scalar_prefetch = 0 : i64, scratch_operands = 0 : i64, tpu.core_type = #tpu.core_type<tc>, window_params = [{transform_indices = @transform_0, window_bounds = array<i64: 256, 64>}, {transform_indices = @transform_1, window_bounds = array<i64: 256, 64>}, {transform_indices = @transform_2, window_bounds = array<i64: 256, 64>}, {pipeline_mode = #tpu.pipeline_mode<synchronous>, transform_indices = @transform_3, window_bounds = array<i64: 192, 64>}, {pipeline_mode = #tpu.pipeline_mode<synchronous>, transform_indices = @transform_4, window_bounds = array<i64: 1, 64>}, {transform_indices = @transform_5, window_bounds = array<i64: 256, 64>}]} {
    %cst = arith.constant 0.000000e+00 : f32
    %0 = vector.broadcast %cst : f32 to vector<256x64xf32>
    %c0 = arith.constant 0 : index
    %c0_0 = arith.constant 0 : index
    %1 = vector.load %arg5[%c0, %c0_0] : memref<1x64xf32, #tpu.memory_space<vmem>>, vector<1x64xf32>
    %2 = vector.broadcast %1 : vector<1x64xf32> to vector<256x64xf32>
    %3 = arith.addf %0, %2 : vector<256x64xf32>
    %c0_1 = arith.constant 0 : index
    %c0_2 = arith.constant 0 : index
    %4 = vector.load %arg1[%c0_1, %c0_2] : memref<256x64xf32, #tpu.memory_space<vmem>>, vector<256x64xf32>
    %5 = arith.truncf %4 : vector<256x64xf32> to vector<256x64xbf16>
    %c0_3 = arith.constant 0 : index
    %c0_4 = arith.constant 0 : index
    %6 = vector.load %arg4[%c0_3, %c0_4] : memref<192x64xbf16, #tpu.memory_space<vmem>>, vector<64x64xbf16>
    %cst_5 = arith.constant dense<0.000000e+00> : vector<256x64xf32>
    %7 = tpu.matmul %5, %6, %cst_5 {dimension_numbers = #tpu.dot_dimension_numbers<[1], [0], [0], [1], [0, 0, 1, 1], [], []>} : vector<256x64xbf16>, vector<64x64xbf16>, vector<256x64xf32> -> vector<256x64xf32>
    %8 = arith.addf %3, %7 : vector<256x64xf32>
    %c0_6 = arith.constant 0 : index
    %c0_7 = arith.constant 0 : index
    %9 = vector.load %arg2[%c0_6, %c0_7] : memref<256x64xf32, #tpu.memory_space<vmem>>, vector<256x64xf32>
    %10 = arith.truncf %9 : vector<256x64xf32> to vector<256x64xbf16>
    %c64 = arith.constant 64 : index
    %c0_8 = arith.constant 0 : index
    %11 = vector.load %arg4[%c64, %c0_8] : memref<192x64xbf16, #tpu.memory_space<vmem>>, vector<64x64xbf16>
    %cst_9 = arith.constant dense<0.000000e+00> : vector<256x64xf32>
    %12 = tpu.matmul %10, %11, %cst_9 {dimension_numbers = #tpu.dot_dimension_numbers<[1], [0], [0], [1], [0, 0, 1, 1], [], []>} : vector<256x64xbf16>, vector<64x64xbf16>, vector<256x64xf32> -> vector<256x64xf32>
    %13 = arith.addf %8, %12 : vector<256x64xf32>
    %c0_10 = arith.constant 0 : index
    %c0_11 = arith.constant 0 : index
    %14 = vector.load %arg3[%c0_10, %c0_11] : memref<256x64xf32, #tpu.memory_space<vmem>>, vector<256x64xf32>
    %15 = arith.truncf %14 : vector<256x64xf32> to vector<256x64xbf16>
    %c128 = arith.constant 128 : index
    %c0_12 = arith.constant 0 : index
    %16 = vector.load %arg4[%c128, %c0_12] : memref<192x64xbf16, #tpu.memory_space<vmem>>, vector<64x64xbf16>
    %cst_13 = arith.constant dense<0.000000e+00> : vector<256x64xf32>
    %17 = tpu.matmul %15, %16, %cst_13 {dimension_numbers = #tpu.dot_dimension_numbers<[1], [0], [0], [1], [0, 0, 1, 1], [], []>} : vector<256x64xbf16>, vector<64x64xbf16>, vector<256x64xf32> -> vector<256x64xf32>
    %18 = arith.addf %13, %17 : vector<256x64xf32>
    %cst_14 = arith.constant 0.000000e+00 : f32
    %19 = vector.broadcast %cst_14 : f32 to vector<256x64xf32>
    %20 = arith.maximumf %18, %19 : vector<256x64xf32>
    %c0_15 = arith.constant 0 : index
    %c0_16 = arith.constant 0 : index
    %21 = vector.load %arg6[%c0_15, %c0_16] : memref<256x64xf32, #tpu.memory_space<vmem>>, vector<256x64xf32>
    tpu.vector_store %arg6[%c0_15, %c0_16], %20 {strides = array<i32>} : memref<256x64xf32, #tpu.memory_space<vmem>>, vector<256x64xf32>,
    return
  }
  func.func @transform_0(%arg0: i32) -> (i32, i32) {
    %c0_i32 = arith.constant 0 : i32
    %c0_i32_0 = arith.constant 0 : i32
    return %arg0, %c0_i32 : i32, i32
  }
  func.func @transform_1(%arg0: i32) -> (i32, i32) {
    %c0_i32 = arith.constant 0 : i32
    %c0_i32_0 = arith.constant 0 : i32
    return %arg0, %c0_i32 : i32, i32
  }
  func.func @transform_2(%arg0: i32) -> (i32, i32) {
    %c0_i32 = arith.constant 0 : i32
    %c0_i32_0 = arith.constant 0 : i32
    return %arg0, %c0_i32 : i32, i32
  }
  func.func @transform_3(%arg0: i32) -> (i32, i32) {
    %c0_i32 = arith.constant 0 : i32
    %c0_i32_0 = arith.constant 0 : i32
    %c0_i32_1 = arith.constant 0 : i32
    return %c0_i32, %c0_i32_0 : i32, i32
  }
  func.func @transform_4(%arg0: i32) -> (i32, i32) {
    %c0_i32 = arith.constant 0 : i32
    %c0_i32_0 = arith.constant 0 : i32
    %c0_i32_1 = arith.constant 0 : i32
    return %c0_i32, %c0_i32_0 : i32, i32
  }
  func.func @transform_5(%arg0: i32) -> (i32, i32) {
    %c0_i32 = arith.constant 0 : i32
    %c0_i32_0 = arith.constant 0 : i32
    return %arg0, %c0_i32 : i32, i32
  }
}

module attributes {stable_mosaic.version = 11 : i64} {
  func.func @_cat_matmul_kernel(%arg0: i32, %arg1: memref<256x64xf32, #tpu.memory_space<vmem>>, %arg2: memref<256x64xf32, #tpu.memory_space<vmem>>, %arg3: memref<256x64xf32, #tpu.memory_space<vmem>>, %arg4: memref<256x64xf32, #tpu.memory_space<vmem>>, %arg5: memref<256x64xbf16, #tpu.memory_space<vmem>>, %arg6: memref<1x64xf32, #tpu.memory_space<vmem>>, %arg7: memref<256x64xf32, #tpu.memory_space<vmem>>) attributes {dimension_semantics = [#tpu.dimension_semantics<parallel>], iteration_bounds = array<i64: 2>, scalar_prefetch = 0 : i64, scratch_operands = 0 : i64, tpu.core_type = #tpu.core_type<tc>, window_params = [{transform_indices = @transform_0, window_bounds = array<i64: 256, 64>}, {transform_indices = @transform_1, window_bounds = array<i64: 256, 64>}, {transform_indices = @transform_2, window_bounds = array<i64: 256, 64>}, {transform_indices = @transform_3, window_bounds = array<i64: 256, 64>}, {pipeline_mode = #tpu.pipeline_mode<synchronous>, transform_indices = @transform_4, window_bounds = array<i64: 256, 64>}, {pipeline_mode = #tpu.pipeline_mode<synchronous>, transform_indices = @transform_5, window_bounds = array<i64: 1, 64>}, {transform_indices = @transform_6, window_bounds = array<i64: 256, 64>}]} {
    %cst = arith.constant 0.000000e+00 : f32
    %0 = vector.broadcast %cst : f32 to vector<256x64xf32>
    %c0 = arith.constant 0 : index
    %c0_0 = arith.constant 0 : index
    %1 = vector.load %arg6[%c0, %c0_0] : memref<1x64xf32, #tpu.memory_space<vmem>>, vector<1x64xf32>
    %2 = vector.broadcast %1 : vector<1x64xf32> to vector<256x64xf32>
    %3 = arith.addf %0, %2 : vector<256x64xf32>
    %c0_1 = arith.constant 0 : index
    %c0_2 = arith.constant 0 : index
    %4 = vector.load %arg1[%c0_1, %c0_2] : memref<256x64xf32, #tpu.memory_space<vmem>>, vector<256x64xf32>
    %5 = arith.truncf %4 : vector<256x64xf32> to vector<256x64xbf16>
    %c0_3 = arith.constant 0 : index
    %c0_4 = arith.constant 0 : index
    %6 = vector.load %arg5[%c0_3, %c0_4] : memref<256x64xbf16, #tpu.memory_space<vmem>>, vector<64x64xbf16>
    %cst_5 = arith.constant dense<0.000000e+00> : vector<256x64xf32>
    %7 = tpu.matmul %5, %6, %cst_5 {dimension_numbers = #tpu.dot_dimension_numbers<[1], [0], [0], [1], [0, 0, 1, 1], [], []>} : vector<256x64xbf16>, vector<64x64xbf16>, vector<256x64xf32> -> vector<256x64xf32>
    %8 = arith.addf %3, %7 : vector<256x64xf32>
    %c0_6 = arith.constant 0 : index
    %c0_7 = arith.constant 0 : index
    %9 = vector.load %arg2[%c0_6, %c0_7] : memref<256x64xf32, #tpu.memory_space<vmem>>, vector<256x64xf32>
    %10 = arith.truncf %9 : vector<256x64xf32> to vector<256x64xbf16>
    %c64 = arith.constant 64 : index
    %c0_8 = arith.constant 0 : index
    %11 = vector.load %arg5[%c64, %c0_8] : memref<256x64xbf16, #tpu.memory_space<vmem>>, vector<64x64xbf16>
    %cst_9 = arith.constant dense<0.000000e+00> : vector<256x64xf32>
    %12 = tpu.matmul %10, %11, %cst_9 {dimension_numbers = #tpu.dot_dimension_numbers<[1], [0], [0], [1], [0, 0, 1, 1], [], []>} : vector<256x64xbf16>, vector<64x64xbf16>, vector<256x64xf32> -> vector<256x64xf32>
    %13 = arith.addf %8, %12 : vector<256x64xf32>
    %c0_10 = arith.constant 0 : index
    %c0_11 = arith.constant 0 : index
    %14 = vector.load %arg3[%c0_10, %c0_11] : memref<256x64xf32, #tpu.memory_space<vmem>>, vector<256x64xf32>
    %15 = arith.truncf %14 : vector<256x64xf32> to vector<256x64xbf16>
    %c128 = arith.constant 128 : index
    %c0_12 = arith.constant 0 : index
    %16 = vector.load %arg5[%c128, %c0_12] : memref<256x64xbf16, #tpu.memory_space<vmem>>, vector<64x64xbf16>
    %cst_13 = arith.constant dense<0.000000e+00> : vector<256x64xf32>
    %17 = tpu.matmul %15, %16, %cst_13 {dimension_numbers = #tpu.dot_dimension_numbers<[1], [0], [0], [1], [0, 0, 1, 1], [], []>} : vector<256x64xbf16>, vector<64x64xbf16>, vector<256x64xf32> -> vector<256x64xf32>
    %18 = arith.addf %13, %17 : vector<256x64xf32>
    %c0_14 = arith.constant 0 : index
    %c0_15 = arith.constant 0 : index
    %19 = vector.load %arg4[%c0_14, %c0_15] : memref<256x64xf32, #tpu.memory_space<vmem>>, vector<256x64xf32>
    %20 = arith.truncf %19 : vector<256x64xf32> to vector<256x64xbf16>
    %c192 = arith.constant 192 : index
    %c0_16 = arith.constant 0 : index
    %21 = vector.load %arg5[%c192, %c0_16] : memref<256x64xbf16, #tpu.memory_space<vmem>>, vector<64x64xbf16>
    %cst_17 = arith.constant dense<0.000000e+00> : vector<256x64xf32>
    %22 = tpu.matmul %20, %21, %cst_17 {dimension_numbers = #tpu.dot_dimension_numbers<[1], [0], [0], [1], [0, 0, 1, 1], [], []>} : vector<256x64xbf16>, vector<64x64xbf16>, vector<256x64xf32> -> vector<256x64xf32>
    %23 = arith.addf %18, %22 : vector<256x64xf32>
    %cst_18 = arith.constant 0.000000e+00 : f32
    %24 = vector.broadcast %cst_18 : f32 to vector<256x64xf32>
    %25 = arith.maximumf %23, %24 : vector<256x64xf32>
    %c0_19 = arith.constant 0 : index
    %c0_20 = arith.constant 0 : index
    %26 = vector.load %arg7[%c0_19, %c0_20] : memref<256x64xf32, #tpu.memory_space<vmem>>, vector<256x64xf32>
    tpu.vector_store %arg7[%c0_19, %c0_20], %25 {strides = array<i32>} : memref<256x64xf32, #tpu.memory_space<vmem>>, vector<256x64xf32>,
    return
  }
  func.func @transform_0(%arg0: i32) -> (i32, i32) {
    %c0_i32 = arith.constant 0 : i32
    %c0_i32_0 = arith.constant 0 : i32
    return %arg0, %c0_i32 : i32, i32
  }
  func.func @transform_1(%arg0: i32) -> (i32, i32) {
    %c0_i32 = arith.constant 0 : i32
    %c0_i32_0 = arith.constant 0 : i32
    return %arg0, %c0_i32 : i32, i32
  }
  func.func @transform_2(%arg0: i32) -> (i32, i32) {
    %c0_i32 = arith.constant 0 : i32
    %c0_i32_0 = arith.constant 0 : i32
    return %arg0, %c0_i32 : i32, i32
  }
  func.func @transform_3(%arg0: i32) -> (i32, i32) {
    %c0_i32 = arith.constant 0 : i32
    %c0_i32_0 = arith.constant 0 : i32
    return %arg0, %c0_i32 : i32, i32
  }
  func.func @transform_4(%arg0: i32) -> (i32, i32) {
    %c0_i32 = arith.constant 0 : i32
    %c0_i32_0 = arith.constant 0 : i32
    %c0_i32_1 = arith.constant 0 : i32
    return %c0_i32, %c0_i32_0 : i32, i32
  }
  func.func @transform_5(%arg0: i32) -> (i32, i32) {
    %c0_i32 = arith.constant 0 : i32
    %c0_i32_0 = arith.constant 0 : i32
    %c0_i32_1 = arith.constant 0 : i32
    return %c0_i32, %c0_i32_0 : i32, i32
  }
  func.func @transform_6(%arg0: i32) -> (i32, i32) {
    %c0_i32 = arith.constant 0 : i32
    %c0_i32_0 = arith.constant 0 : i32
    return %arg0, %c0_i32 : i32, i32
  }
}

</mosaic_0001>

<llo_original>
// kernel: block_forward.7
$region0: #{block_forward.7}
  #allocation0 [shape = 'u32[]', space=smem, size = 0x4, offset = 0x4, fixed_abs, tag = 'smem constant byte address 0x4 - core index']
  #allocation1 [shape = 'u32[144,128]{1,0:T(1,128)}', space=vmem, size = 0x12000, scoped, tag = 'internal scratch']
  %s0 = inlined_call_operand.vmem [shape: f32[512,64], index: 0, kind: input, shape index: {}]
  %s1 = inlined_call_operand.vmem [shape: f32[512,64], index: 1, kind: input, shape index: {}]
  %s2 = inlined_call_operand.vmem [shape: bf16[128,64], index: 2, kind: input, shape index: {}]
  %s3 = inlined_call_operand.vmem [shape: f32[1,64], index: 3, kind: input, shape index: {}]
  %s4 = inlined_call_operand.vmem [shape: f32[512,64], index: 4, kind: output, shape index: {}]
  %s5 = sld [smem:[#allocation0]]
  $region49: #{block_forward.7} parent=0
    _
  %s7 = ssub.s32 1, %s5
  %s8 = scalar_select 0, %s7, %s5
  loop: start=0, step=1, limit=4
  $region2: #{block_forward.7} parent=0 // loop_pre_header
    _
  $region3: #{block_forward.7} parent=0 // loop_header
    %s10 = sphi 0, %s14
    %p11 = scmp.ge.s32.totalorder %s10, 4
    %s20 = sphi 0, %s22
    %s23 = sphi 0, %s20
    %s24 = sphi 0, %s23
    %s40 = sphi 0, %s24
    %s46 = sphi 0, %s48
    %s49 = sphi 0, %s46
    %s50 = sphi 0, %s49
    %s66 = sphi 0, %s50
    %s70 = sphi 0, %s70
    %s72 = sphi 0, %s70
    %s73 = sphi 0, %s72
    %s87 = sphi 0, %s73
    %s91 = sphi 0, %s91
    %s93 = sphi 0, %s91
    %s94 = sphi 0, %s93
    %s108 = sphi 0, %s94
    %s114 = sphi 0, %s116
    %s117 = sphi 0, %s114
    %s118 = sphi 0, %s117
    %s134 = sphi 0, %s118
  $region4: #{block_forward.7} parent=0 // loop_header_branch
    %13 = sbr.rel (%p11) target = $region8
  $region5: #{block_forward.7} parent=0 // loop_body
    %s15 = ssub.s32 %s10, 1
    %s16 = ssub.s32 %s10, 2
    %s17 = sadd.s32 %s10, 1
    %s18 = ssub.s32 %s10, %s17
    %p19 = scmp.eq.s32.totalorder %s18, 0
    %s21 = sadd.s32 %s20, 1
    %s22 = scalar_select %p19, %s20, %s21
    %p25 = pneg %p19
    %p26 = scmp.eq.s32.totalorder %s10, 1
    %p27 = por %p25, %p26
    %p28 = scmp.ne.s32.totalorder %s20, %s23
    %p29 = scmp.eq.s32.totalorder %s10, 0
    %p30 = por %p28, %p29
    %p31 = scmp.ne.s32.totalorder %s20, %s23
    %p32 = scmp.eq.s32.totalorder %s15, 1
    %p33 = por %p31, %p32
    %p34 = scmp.ne.s32.totalorder %s23, %s24
    %p35 = scmp.eq.s32.totalorder %s15, 0
    %p36 = por %p34, %p35
    %p37 = scmp.ne.s32.totalorder %s23, %s24
    %p38 = scmp.eq.s32.totalorder %s16, 1
    %p39 = por %p37, %p38
    %p41 = scmp.ne.s32.totalorder %s24, %s40
    %p42 = scmp.eq.s32.totalorder %s16, 0
    %p43 = por %p41, %p42
    %s44 = ssub.s32 %s10, %s17
    %p45 = scmp.eq.s32.totalorder %s44, 0
    %s47 = sadd.s32 %s46, 1
    %s48 = scalar_select %p45, %s46, %s47
    %p51 = pneg %p45
    %p52 = scmp.eq.s32.totalorder %s10, 1
    %p53 = por %p51, %p52
    %p54 = scmp.ne.s32.totalorder %s46, %s49
    %p55 = scmp.eq.s32.totalorder %s10, 0
    %p56 = por %p54, %p55
    %p57 = scmp.ne.s32.totalorder %s46, %s49
    %p58 = scmp.eq.s32.totalorder %s15, 1
    %p59 = por %p57, %p58
    %p60 = scmp.ne.s32.totalorder %s49, %s50
    %p61 = scmp.eq.s32.totalorder %s15, 0
    %p62 = por %p60, %p61
    %p63 = scmp.ne.s32.totalorder %s49, %s50
    %p64 = scmp.eq.s32.totalorder %s16, 1
    %p65 = por %p63, %p64
    %p67 = scmp.ne.s32.totalorder %s50, %s66
    %p68 = scmp.eq.s32.totalorder %s16, 0
    %p69 = por %p67, %p68
    %s71 = sadd.s32 %s70, 1
    %p74 = scmp.eq.s32.totalorder %s10, 1
    %p75 = scmp.ne.s32.totalorder %s70, %s72
    %p76 = scmp.eq.s32.totalorder %s10, 0
    %p77 = por %p75, %p76
    %p78 = scmp.ne.s32.totalorder %s70, %s72
    %p79 = scmp.eq.s32.totalorder %s15, 1
    %p80 = por %p78, %p79
    %p81 = scmp.ne.s32.totalorder %s72, %s73
    %p82 = scmp.eq.s32.totalorder %s15, 0
    %p83 = por %p81, %p82
    %p84 = scmp.ne.s32.totalorder %s72, %s73
    %p85 = scmp.eq.s32.totalorder %s16, 1
    %p86 = por %p84, %p85
    %p88 = scmp.ne.s32.totalorder %s73, %s87
    %p89 = scmp.eq.s32.totalorder %s16, 0
    %p90 = por %p88, %p89
    %s92 = sadd.s32 %s91, 1
    %p95 = scmp.eq.s32.totalorder %s10, 1
    %p96 = scmp.ne.s32.totalorder %s91, %s93
    %p97 = scmp.eq.s32.totalorder %s10, 0
    %p98 = por %p96, %p97
    %p99 = scmp.ne.s32.totalorder %s91, %s93
    %p100 = scmp.eq.s32.totalorder %s15, 1
    %p101 = por %p99, %p100
    %p102 = scmp.ne.s32.totalorder %s93, %s94
    %p103 = scmp.eq.s32.totalorder %s15, 0
    %p104 = por %p102, %p103
    %p105 = scmp.ne.s32.totalorder %s93, %s94
    %p106 = scmp.eq.s32.totalorder %s16, 1
    %p107 = por %p105, %p106
    %p109 = scmp.ne.s32.totalorder %s94, %s108
    %p110 = scmp.eq.s32.totalorder %s16, 0
    %p111 = por %p109, %p110
    %s112 = ssub.s32 %s10, %s17
    %p113 = scmp.eq.s32.totalorder %s112, 0
    %s115 = sadd.s32 %s114, 1
    %s116 = scalar_select %p113, %s114, %s115
    %p119 = pneg %p113
    %p120 = scmp.eq.s32.totalorder %s10, 1
    %p121 = por %p119, %p120
    %p122 = scmp.ne.s32.totalorder %s114, %s117
    %p123 = scmp.eq.s32.totalorder %s10, 0
    %p124 = por %p122, %p123
    %p125 = scmp.ne.s32.totalorder %s114, %s117
    %p126 = scmp.eq.s32.totalorder %s15, 1
    %p127 = por %p125, %p126
    %p128 = scmp.ne.s32.totalorder %s117, %s118
    %p129 = scmp.eq.s32.totalorder %s15, 0
    %p130 = por %p128, %p129
    %p131 = scmp.ne.s32.totalorder %s117, %s118
    %p132 = scmp.eq.s32.totalorder %s16, 1
    %p133 = por %p131, %p132
    %p135 = scmp.ne.s32.totalorder %s118, %s134
    %p136 = scmp.eq.s32.totalorder %s16, 0
    %p137 = por %p135, %p136
    %p138 = scmp.le.s32.totalorder 1, %s10
    %p139 = scmp.lt.s32.totalorder %s10, 3
    %p140 = pnand %p138, %p139
    %p141 = pneg %p140
    // Predicated region
    $region9: #{block_forward.7} parent=5 // pred_check
      _
    $region10: #{block_forward.7} parent=5 // pred_check_branch
      %143 = sbr.rel (%p140) target = $region12
    $region11: #{block_forward.7} parent=5 // pred_region
      %s144 = ssub.s32 %s10, 1
      // Predicated region
      $region13: #{block_forward.7} parent=11 // pred_check
        %p145 = pneg %p83
      $region14: #{block_forward.7} parent=11 // pred_check_branch
        %147 = sbr.rel (%p145) target = $region16
      $region15: #{block_forward.7} parent=11 // pred_region
        _
      $region16: #{block_forward.7} parent=11 // pred_fallthru
        _
      // Predicated region
      $region17: #{block_forward.7} parent=11 // pred_check
        %p148 = pneg %p104
      $region18: #{block_forward.7} parent=11 // pred_check_branch
        %150 = sbr.rel (%p148) target = $region20
      $region19: #{block_forward.7} parent=11 // pred_region
        _
      $region20: #{block_forward.7} parent=11 // pred_fallthru
        _
    $region12: #{block_forward.7} parent=5 // pred_fallthru
      _
    %p151 = scmp.lt.s32.totalorder %s10, 2
    // Predicated region
    $region21: #{block_forward.7} parent=5 // pred_check
      %p152 = pneg %p151
    $region22: #{block_forward.7} parent=5 // pred_check_branch
      %154 = sbr.rel (%p152) target = $region24
    $region23: #{block_forward.7} parent=5 // pred_region
      // Predicated region
      $region25: #{block_forward.7} parent=23 // pred_check
        %p155 = pneg %p30
      $region26: #{block_forward.7} parent=23 // pred_check_branch
        %157 = sbr.rel (%p155) target = $region28
      $region27: #{block_forward.7} parent=23 // pred_region
        %s158 = smul.u32 32, %s10
        %p159 = scmp.lt.s32.totalorder %s158, 63
        %s160 = scalar_select %p159, %s158, 63
        %s161 = smul.addr %s160, 8
        %s162 = scalar_lea.vmem %s0, %s161
        %s163 = smul.u32 32, %s10
      $region28: #{block_forward.7} parent=23 // pred_fallthru
        _
      // Predicated region
      $region29: #{block_forward.7} parent=23 // pred_check
        %p164 = pneg %p56
      $region30: #{block_forward.7} parent=23 // pred_check_branch
        %166 = sbr.rel (%p164) target = $region32
      $region31: #{block_forward.7} parent=23 // pred_region
        %s167 = smul.u32 32, %s10
        %p168 = scmp.lt.s32.totalorder %s167, 63
        %s169 = scalar_select %p168, %s167, 63
        %s170 = smul.addr %s169, 8
        %s171 = scalar_lea.vmem %s1, %s170
        %s172 = smul.u32 32, %s10
      $region32: #{block_forward.7} parent=23 // pred_fallthru
        _
    $region24: #{block_forward.7} parent=5 // pred_fallthru
      _
    %p173 = scmp.le.s32.totalorder 1, %s10
    %p174 = scmp.lt.s32.totalorder %s10, 3
    %p175 = pnand %p173, %p174
    %p176 = pneg %p175
    // Predicated region
    $region33: #{block_forward.7} parent=5 // pred_check
      _
    $region34: #{block_forward.7} parent=5 // pred_check_branch
      %178 = sbr.rel (%p175) target = $region36
    $region35: #{block_forward.7} parent=5 // pred_region
      %s179 = ssub.s32 %s10, 1
      %s180 = smul.u32 32, %s15
      %p181 = scmp.lt.s32.totalorder %s180, 63
      %s182 = scalar_select %p181, %s180, 63
      %s183 = smul.addr %s182, 8
      %s184 = scalar_lea.vmem %s0, %s183
      %p185 = pneg %p36
      %p186 = pneg %p33
      %s187 = smul.u32 32, %s15
      %p188 = scmp.lt.s32.totalorder %s187, 63
      %s189 = scalar_select %p188, %s187, 63
      %s190 = smul.addr %s189, 8
      %s191 = scalar_lea.vmem %s1, %s190
      %p192 = pneg %p62
      %p193 = pneg %p59
      %p194 = pneg %p83
      %p195 = pneg %p80
      %p196 = pneg %p104
      %p197 = pneg %p101
      %p198 = pneg %p130
      %p199 = pneg %p127
      %s200 = smul.u32 32, %s15
      %p201 = scmp.lt.s32.totalorder %s200, 63
      %s202 = scalar_select %p201, %s200, 63
      %s203 = smul.addr %s202, 8
      %s204 = scalar_lea.vmem %s4, %s203
      %s205 = smul.u32 32, %s15
      %p206 = scmp.lt.s32.totalorder %s205, 63
      %s207 = scalar_select %p206, %s205, 63
      %s208 = smul.addr %s207, 8
      %s209 = scalar_lea.vmem %s0, %s208
      %s210 = smul.u32 32, %s15
      %s211 = smul.u32 32, %s15
      %p212 = scmp.lt.s32.totalorder %s211, 63
      %s213 = scalar_select %p212, %s211, 63
      %s214 = smul.addr %s213, 8
      %s215 = scalar_lea.vmem %s1, %s214
      %s216 = smul.u32 32, %s15
      %s217 = smul.u32 32, %s15
      %p218 = scmp.lt.s32.totalorder %s217, 63
      %s219 = scalar_select %p218, %s217, 63
      %s220 = smul.addr %s219, 8
      %s221 = scalar_lea.vmem %s4, %s220
      %s222 = smul.u32 32, %s15
      %v224 = vld [vmem:[%s3] sm:$0x1]
      %v226 = vlaneseq
      %v227 = vshrl.u32 %v226, 7
      %v228 = vsub.s32 0, %v227
      %v229 = vrot.slane %v224, %v228
      %v231 = vadd.f32 %v229, 0.0
      %v232 = vld [vmem:[%s209] sm:$0xff]
      %v233 = vld [vmem:[%s209 + $0x8] sm:$0xff]
      %v234 = vld [vmem:[%s209 + $0x10] sm:$0xff]
      %v235 = vld [vmem:[%s209 + $0x18] sm:$0xff]
      %v236 = vld [vmem:[%s209 + $0x20] sm:$0xff]
      %v237 = vld [vmem:[%s209 + $0x28] sm:$0xff]
      %v238 = vld [vmem:[%s209 + $0x30] sm:$0xff]
      %v239 = vld [vmem:[%s209 + $0x38] sm:$0xff]
      %v240 = vld [vmem:[%s209 + $0x40] sm:$0xff]
      %v241 = vld [vmem:[%s209 + $0x48] sm:$0xff]
      %v242 = vld [vmem:[%s209 + $0x50] sm:$0xff]
      %v243 = vld [vmem:[%s209 + $0x58] sm:$0xff]
      %v244 = vld [vmem:[%s209 + $0x60] sm:$0xff]
      %v245 = vld [vmem:[%s209 + $0x68] sm:$0xff]
      %v246 = vld [vmem:[%s209 + $0x70] sm:$0xff]
      %v247 = vld [vmem:[%s209 + $0x78] sm:$0xff]
      %v248 = vld [vmem:[%s209 + $0x80] sm:$0xff]
      %v249 = vld [vmem:[%s209 + $0x88] sm:$0xff]
      %v250 = vld [vmem:[%s209 + $0x90] sm:$0xff]
      %v251 = vld [vmem:[%s209 + $0x98] sm:$0xff]
      %v252 = vld [vmem:[%s209 + $0xa0] sm:$0xff]
      %v253 = vld [vmem:[%s209 + $0xa8] sm:$0xff]
      %v254 = vld [vmem:[%s209 + $0xb0] sm:$0xff]
      %v255 = vld [vmem:[%s209 + $0xb8] sm:$0xff]
      %v256 = vld [vmem:[%s209 + $0xc0] sm:$0xff]
      %v257 = vld [vmem:[%s209 + $0xc8] sm:$0xff]
      %v258 = vld [vmem:[%s209 + $0xd0] sm:$0xff]
      %v259 = vld [vmem:[%s209 + $0xd8] sm:$0xff]
      %v260 = vld [vmem:[%s209 + $0xe0] sm:$0xff]
      %v261 = vld [vmem:[%s209 + $0xe8] sm:$0xff]
      %v262 = vld [vmem:[%s209 + $0xf0] sm:$0xff]
      %v263 = vld [vmem:[%s209 + $0xf8] sm:$0xff]
      %v264 = vpack.c.bf16 %v233, %v232
      %v265 = vpack.c.bf16 %v235, %v234
      %v266 = vpack.c.bf16 %v237, %v236
      %v267 = vpack.c.bf16 %v239, %v238
      %v268 = vpack.c.bf16 %v241, %v240
      %v269 = vpack.c.bf16 %v243, %v242
      %v270 = vpack.c.bf16 %v245, %v244
      %v271 = vpack.c.bf16 %v247, %v246
      %v272 = vpack.c.bf16 %v249, %v248
      %v273 = vpack.c.bf16 %v251, %v250
      %v274 = vpack.c.bf16 %v253, %v252
      %v275 = vpack.c.bf16 %v255, %v254
      %v276 = vpack.c.bf16 %v257, %v256
      %v277 = vpack.c.bf16 %v259, %v258
      %v278 = vpack.c.bf16 %v261, %v260
      %v279 = vpack.c.bf16 %v263, %v262
      %v280 = vld [vmem:[%s2] sm:$0xf]
      %v281 = vld [vmem:[%s2 + $0x4] sm:$0xf]
      %v282 = vld [vmem:[%s2 + $0x8] sm:$0xf]
      %v283 = vld [vmem:[%s2 + $0xc] sm:$0xf]
      %v284 = vld [vmem:[%s2 + $0x10] sm:$0xf]
      %v285 = vld [vmem:[%s2 + $0x14] sm:$0xf]
      %v286 = vld [vmem:[%s2 + $0x18] sm:$0xf]
      %v287 = vld [vmem:[%s2 + $0x1c] sm:$0xf]
      %v296 = vunpack.c.l.b16 %v280
      %v297 = vunpack.c.l.b16 %v281
      %v298 = vunpack.c.l.b16 %v282
      %v299 = vunpack.c.l.b16 %v283
      %v300 = vunpack.c.l.b16 %v284
      %v301 = vunpack.c.l.b16 %v285
      %v302 = vunpack.c.l.b16 %v286
      %v303 = vunpack.c.l.b16 %v287
      %v304 = vpack.c.b16 %v297, %v296
      %v305 = vpack.c.b16 %v299, %v298
      %v306 = vpack.c.b16 %v301, %v300
      %v307 = vpack.c.b16 %v303, %v302
      %vm312 = vcmask 523264
      %v314 = vsel %vm312, %v264, 0
      %v317 = vsel %vm312, %v265, 0
      %v320 = vsel %vm312, %v266, 0
      %v323 = vsel %vm312, %v267, 0
      %v326 = vsel %vm312, %v268, 0
      %v329 = vsel %vm312, %v269, 0
      %v332 = vsel %vm312, %v270, 0
      %v335 = vsel %vm312, %v271, 0
      %v338 = vsel %vm312, %v272, 0
      %v341 = vsel %vm312, %v273, 0
      %v344 = vsel %vm312, %v274, 0
      %v347 = vsel %vm312, %v275, 0
      %v350 = vsel %vm312, %v276, 0
      %v353 = vsel %vm312, %v277, 0
      %v356 = vsel %vm312, %v278, 0
      %v359 = vsel %vm312, %v279, 0
      %361 = vmatprep.subr.bf16.mxu0 0
      %362 = vmatpush1.bf16.msra.mxu0 %v304
      %363 = vmatprep.subr.bf16.mxu0 0
      %364 = vmatpush1.bf16.msra.mxu0 %v305
      %365 = vmatprep.subr.bf16.mxu0 0
      %366 = vmatpush1.bf16.msra.mxu0 %v306
      %367 = vmatprep.subr.bf16.mxu0 0
      %368 = vmatpush1.bf16.msra.mxu0 %v307
      %369 = vmatprep.subr.bf16.mxu0 0
      %370 = vmatpush1.bf16.msra.mxu0 0
      %371 = vmatprep.subr.bf16.mxu0 0
      %372 = vmatpush1.bf16.msra.mxu0 0
      %373 = vmatprep.subr.bf16.mxu0 0
      %374 = vmatpush1.bf16.msra.mxu0 0
      %375 = vmatprep.subr.bf16.mxu0 0
      %376 = vmatpush1.bf16.msra.mxu0 0
      %377 = vmatprep.subr.bf16.mxu0 0
      %378 = vmatpush1.bf16.msra.mxu0 0
      %379 = vmatprep.subr.bf16.mxu0 0
      %380 = vmatpush1.bf16.msra.mxu0 0
      %381 = vmatprep.subr.bf16.mxu0 0
      %382 = vmatpush1.bf16.msra.mxu0 0
      %383 = vmatprep.subr.bf16.mxu0 0
      %384 = vmatpush1.bf16.msra.mxu0 0
      %385 = vmatprep.subr.bf16.mxu0 0
      %386 = vmatpush1.bf16.msra.mxu0 0
      %387 = vmatprep.subr.bf16.mxu0 0
      %388 = vmatpush1.bf16.msra.mxu0 0
      %389 = vmatprep.subr.bf16.mxu0 0
      %390 = vmatpush1.bf16.msra.mxu0 0
      %391 = vmatprep.subr.bf16.mxu0 0
      %392 = vmatpush1.bf16.msra.mxu0 0
      %393 = vmatprep.mubr.bf16.mxu0 0
      %394 = vmatmul.mubr.bf16.gmra.mrb[0].mxu0 %v314
      %v395 = vpop.f32.mrb[0].mxu0
      %v396 = vadd.f32 0.0, %v395
      %v397 = vpop.f32.mrb[0].mxu0
      %v398 = vpop.f32.mrb[0].mxu0
      %v399 = vadd.f32 0.0, %v398
      %v400 = vpop.f32.mrb[0].mxu0
      %401 = vmatprep.mubr.bf16.mxu0 0
      %402 = vmatmul.mubr.bf16.gmra.mrb[0].mxu0 %v317
      %v403 = vpop.f32.mrb[0].mxu0
      %v404 = vadd.f32 0.0, %v403
      %v405 = vpop.f32.mrb[0].mxu0
      %v406 = vpop.f32.mrb[0].mxu0
      %v407 = vadd.f32 0.0, %v406
      %v408 = vpop.f32.mrb[0].mxu0
      %409 = vmatprep.mubr.bf16.mxu0 0
      %410 = vmatmul.mubr.bf16.gmra.mrb[0].mxu0 %v320
      %v411 = vpop.f32.mrb[0].mxu0
      %v412 = vadd.f32 0.0, %v411
      %v413 = vpop.f32.mrb[0].mxu0
      %v414 = vpop.f32.mrb[0].mxu0
      %v415 = vadd.f32 0.0, %v414
      %v416 = vpop.f32.mrb[0].mxu0
      %417 = vmatprep.mubr.bf16.mxu0 0
      %418 = vmatmul.mubr.bf16.gmra.mrb[0].mxu0 %v323
      %v419 = vpop.f32.mrb[0].mxu0
      %v420 = vadd.f32 0.0, %v419
      %v421 = vpop.f32.mrb[0].mxu0
      %v422 = vpop.f32.mrb[0].mxu0
      %v423 = vadd.f32 0.0, %v422
      %v424 = vpop.f32.mrb[0].mxu0
      %425 = vmatprep.mubr.bf16.mxu0 0
      %426 = vmatmul.mubr.bf16.gmra.mrb[0].mxu0 %v326
      %v427 = vpop.f32.mrb[0].mxu0
      %v428 = vadd.f32 0.0, %v427
      %v429 = vpop.f32.mrb[0].mxu0
      %v430 = vpop.f32.mrb[0].mxu0
      %v431 = vadd.f32 0.0, %v430
      %v432 = vpop.f32.mrb[0].mxu0
      %433 = vmatprep.mubr.bf16.mxu0 0
      %434 = vmatmul.mubr.bf16.gmra.mrb[0].mxu0 %v329
      %v435 = vpop.f32.mrb[0].mxu0
      %v436 = vadd.f32 0.0, %v435
      %v437 = vpop.f32.mrb[0].mxu0
      %v438 = vpop.f32.mrb[0].mxu0
      %v439 = vadd.f32 0.0, %v438
      %v440 = vpop.f32.mrb[0].mxu0
      %441 = vmatprep.mubr.bf16.mxu0 0
      %442 = vmatmul.mubr.bf16.gmra.mrb[0].mxu0 %v332
      %v443 = vpop.f32.mrb[0].mxu0
      %v444 = vadd.f32 0.0, %v443
      %v445 = vpop.f32.mrb[0].mxu0
      %v446 = vpop.f32.mrb[0].mxu0
      %v447 = vadd.f32 0.0, %v446
      %v448 = vpop.f32.mrb[0].mxu0
      %449 = vmatprep.mubr.bf16.mxu0 0
      %450 = vmatmul.mubr.bf16.gmra.mrb[0].mxu0 %v335
      %v451 = vpop.f32.mrb[0].mxu0
      %v452 = vadd.f32 0.0, %v451
      %v453 = vpop.f32.mrb[0].mxu0
      %v454 = vpop.f32.mrb[0].mxu0
      %v455 = vadd.f32 0.0, %v454
      %v456 = vpop.f32.mrb[0].mxu0
      %457 = vmatprep.mubr.bf16.mxu0 0
      %458 = vmatmul.mubr.bf16.gmra.mrb[0].mxu0 %v338
      %v459 = vpop.f32.mrb[0].mxu0
      %v460 = vadd.f32 0.0, %v459
      %v461 = vpop.f32.mrb[0].mxu0
      %v462 = vpop.f32.mrb[0].mxu0
      %v463 = vadd.f32 0.0, %v462
      %v464 = vpop.f32.mrb[0].mxu0
      %465 = vmatprep.mubr.bf16.mxu0 0
      %466 = vmatmul.mubr.bf16.gmra.mrb[0].mxu0 %v341
      %v467 = vpop.f32.mrb[0].mxu0
      %v468 = vadd.f32 0.0, %v467
      %v469 = vpop.f32.mrb[0].mxu0
      %v470 = vpop.f32.mrb[0].mxu0
      %v471 = vadd.f32 0.0, %v470
      %v472 = vpop.f32.mrb[0].mxu0
      %473 = vmatprep.mubr.bf16.mxu0 0
      %474 = vmatmul.mubr.bf16.gmra.mrb[0].mxu0 %v344
      %v475 = vpop.f32.mrb[0].mxu0
      %v476 = vadd.f32 0.0, %v475
      %v477 = vpop.f32.mrb[0].mxu0
      %v478 = vpop.f32.mrb[0].mxu0
      %v479 = vadd.f32 0.0, %v478
      %v480 = vpop.f32.mrb[0].mxu0
      %481 = vmatprep.mubr.bf16.mxu0 0
      %482 = vmatmul.mubr.bf16.gmra.mrb[0].mxu0 %v347
      %v483 = vpop.f32.mrb[0].mxu0
      %v484 = vadd.f32 0.0, %v483
      %v485 = vpop.f32.mrb[0].mxu0
      %v486 = vpop.f32.mrb[0].mxu0
      %v487 = vadd.f32 0.0, %v486
      %v488 = vpop.f32.mrb[0].mxu0
      %489 = vmatprep.mubr.bf16.mxu0 0
      %490 = vmatmul.mubr.bf16.gmra.mrb[0].mxu0 %v350
      %v491 = vpop.f32.mrb[0].mxu0
      %v492 = vadd.f32 0.0, %v491
      %v493 = vpop.f32.mrb[0].mxu0
      %v494 = vpop.f32.mrb[0].mxu0
      %v495 = vadd.f32 0.0, %v494
      %v496 = vpop.f32.mrb[0].mxu0
      %497 = vmatprep.mubr.bf16.mxu0 0
      %498 = vmatmul.mubr.bf16.gmra.mrb[0].mxu0 %v353
      %v499 = vpop.f32.mrb[0].mxu0
      %v500 = vadd.f32 0.0, %v499
      %v501 = vpop.f32.mrb[0].mxu0
      %v502 = vpop.f32.mrb[0].mxu0
      %v503 = vadd.f32 0.0, %v502
      %v504 = vpop.f32.mrb[0].mxu0
      %505 = vmatprep.mubr.bf16.mxu0 0
      %506 = vmatmul.mubr.bf16.gmra.mrb[0].mxu0 %v356
      %v507 = vpop.f32.mrb[0].mxu0
      %v508 = vadd.f32 0.0, %v507
      %v509 = vpop.f32.mrb[0].mxu0
      %v510 = vpop.f32.mrb[0].mxu0
      %v511 = vadd.f32 0.0, %v510
      %v512 = vpop.f32.mrb[0].mxu0
      %513 = vmatprep.mubr.bf16.mxu0 0
      %514 = vmatmul.mubr.bf16.gmra.mrb[0].mxu0 %v359
      %v515 = vpop.f32.mrb[0].mxu0
      %v516 = vadd.f32 0.0, %v515
      %v517 = vpop.f32.mrb[0].mxu0
      %v518 = vpop.f32.mrb[0].mxu0
      %v519 = vadd.f32 0.0, %v518
      %v520 = vpop.f32.mrb[0].mxu0
      %521 = vdwg.mxu0
      %v522 = vadd.f32 %v231, %v396
      %v523 = vadd.f32 %v231, %v399
      %v524 = vadd.f32 %v231, %v404
      %v525 = vadd.f32 %v231, %v407
      %v526 = vadd.f32 %v231, %v412
      %v527 = vadd.f32 %v231, %v415
      %v528 = vadd.f32 %v231, %v420
      %v529 = vadd.f32 %v231, %v423
      %v530 = vadd.f32 %v231, %v428
      %v531 = vadd.f32 %v231, %v431
      %v532 = vadd.f32 %v231, %v436
      %v533 = vadd.f32 %v231, %v439
      %v534 = vadd.f32 %v231, %v444
      %v535 = vadd.f32 %v231, %v447
      %v536 = vadd.f32 %v231, %v452
      %v537 = vadd.f32 %v231, %v455
      %v538 = vadd.f32 %v231, %v460
      %v539 = vadd.f32 %v231, %v463
      %v540 = vadd.f32 %v231, %v468
      %v541 = vadd.f32 %v231, %v471
      %v542 = vadd.f32 %v231, %v476
      %v543 = vadd.f32 %v231, %v479
      %v544 = vadd.f32 %v231, %v484
      %v545 = vadd.f32 %v231, %v487
      %v546 = vadd.f32 %v231, %v492
      %v547 = vadd.f32 %v231, %v495
      %v548 = vadd.f32 %v231, %v500
      %v549 = vadd.f32 %v231, %v503
      %v550 = vadd.f32 %v231, %v508
      %v551 = vadd.f32 %v231, %v511
      %v552 = vadd.f32 %v231, %v516
      %v553 = vadd.f32 %v231, %v519
      %v554 = vld [vmem:[%s215] sm:$0xff]
      %v555 = vld [vmem:[%s215 + $0x8] sm:$0xff]
      %v556 = vld [vmem:[%s215 + $0x10] sm:$0xff]
      %v557 = vld [vmem:[%s215 + $0x18] sm:$0xff]
      %v558 = vld [vmem:[%s215 + $0x20] sm:$0xff]
      %v559 = vld [vmem:[%s215 + $0x28] sm:$0xff]
      %v560 = vld [vmem:[%s215 + $0x30] sm:$0xff]
      %v561 = vld [vmem:[%s215 + $0x38] sm:$0xff]
      %v562 = vld [vmem:[%s215 + $0x40] sm:$0xff]
      %v563 = vld [vmem:[%s215 + $0x48] sm:$0xff]
      %v564 = vld [vmem:[%s215 + $0x50] sm:$0xff]
      %v565 = vld [vmem:[%s215 + $0x58] sm:$0xff]
      %v566 = vld [vmem:[%s215 + $0x60] sm:$0xff]
      %v567 = vld [vmem:[%s215 + $0x68] sm:$0xff]
      %v568 = vld [vmem:[%s215 + $0x70] sm:$0xff]
      %v569 = vld [vmem:[%s215 + $0x78] sm:$0xff]
      %v570 = vld [vmem:[%s215 + $0x80] sm:$0xff]
      %v571 = vld [vmem:[%s215 + $0x88] sm:$0xff]
      %v572 = vld [vmem:[%s215 + $0x90] sm:$0xff]
      %v573 = vld [vmem:[%s215 + $0x98] sm:$0xff]
      %v574 = vld [vmem:[%s215 + $0xa0] sm:$0xff]
      %v575 = vld [vmem:[%s215 + $0xa8] sm:$0xff]
      %v576 = vld [vmem:[%s215 + $0xb0] sm:$0xff]
      %v577 = vld [vmem:[%s215 + $0xb8] sm:$0xff]
      %v578 = vld [vmem:[%s215 + $0xc0] sm:$0xff]
      %v579 = vld [vmem:[%s215 + $0xc8] sm:$0xff]
      %v580 = vld [vmem:[%s215 + $0xd0] sm:$0xff]
      %v581 = vld [vmem:[%s215 + $0xd8] sm:$0xff]
      %v582 = vld [vmem:[%s215 + $0xe0] sm:$0xff]
      %v583 = vld [vmem:[%s215 + $0xe8] sm:$0xff]
      %v584 = vld [vmem:[%s215 + $0xf0] sm:$0xff]
      %v585 = vld [vmem:[%s215 + $0xf8] sm:$0xff]
      %v586 = vpack.c.bf16 %v555, %v554
      %v587 = vpack.c.bf16 %v557, %v556
      %v588 = vpack.c.bf16 %v559, %v558
      %v589 = vpack.c.bf16 %v561, %v560
      %v590 = vpack.c.bf16 %v563, %v562
      %v591 = vpack.c.bf16 %v565, %v564
      %v592 = vpack.c.bf16 %v567, %v566
      %v593 = vpack.c.bf16 %v569, %v568
      %v594 = vpack.c.bf16 %v571, %v570
      %v595 = vpack.c.bf16 %v573, %v572
      %v596 = vpack.c.bf16 %v575, %v574
      %v597 = vpack.c.bf16 %v577, %v576
      %v598 = vpack.c.bf16 %v579, %v578
      %v599 = vpack.c.bf16 %v581, %v580
      %v600 = vpack.c.bf16 %v583, %v582
      %v601 = vpack.c.bf16 %v585, %v584
      %v602 = vld [vmem:[%s2 + $0x20] sm:$0xf]
      %v603 = vld [vmem:[%s2 + $0x24] sm:$0xf]
      %v604 = vld [vmem:[%s2 + $0x28] sm:$0xf]
      %v605 = vld [vmem:[%s2 + $0x2c] sm:$0xf]
      %v606 = vld [vmem:[%s2 + $0x30] sm:$0xf]
      %v607 = vld [vmem:[%s2 + $0x34] sm:$0xf]
      %v608 = vld [vmem:[%s2 + $0x38] sm:$0xf]
      %v609 = vld [vmem:[%s2 + $0x3c] sm:$0xf]
      %v618 = vunpack.c.l.b16 %v602
      %v619 = vunpack.c.l.b16 %v603
      %v620 = vunpack.c.l.b16 %v604
      %v621 = vunpack.c.l.b16 %v605
      %v622 = vunpack.c.l.b16 %v606
      %v623 = vunpack.c.l.b16 %v607
      %v624 = vunpack.c.l.b16 %v608
      %v625 = vunpack.c.l.b16 %v609
      %v626 = vpack.c.b16 %v619, %v618
      %v627 = vpack.c.b16 %v621, %v620
      %v628 = vpack.c.b16 %v623, %v622
      %v629 = vpack.c.b16 %v625, %v624
      %v635 = vsel %vm312, %v586, 0
      %v638 = vsel %vm312, %v587, 0
      %v641 = vsel %vm312, %v588, 0
      %v644 = vsel %vm312, %v589, 0
      %v647 = vsel %vm312, %v590, 0
      %v650 = vsel %vm312, %v591, 0
      %v653 = vsel %vm312, %v592, 0
      %v656 = vsel %vm312, %v593, 0
      %v659 = vsel %vm312, %v594, 0
      %v662 = vsel %vm312, %v595, 0
      %v665 = vsel %vm312, %v596, 0
      %v668 = vsel %vm312, %v597, 0
      %v671 = vsel %vm312, %v598, 0
      %v674 = vsel %vm312, %v599, 0
      %v677 = vsel %vm312, %v600, 0
      %v680 = vsel %vm312, %v601, 0
      %682 = vmatprep.subr.bf16.mxu0 0
      %683 = vmatpush1.bf16.msra.mxu0 %v626
      %684 = vmatprep.subr.bf16.mxu0 0
      %685 = vmatpush1.bf16.msra.mxu0 %v627
      %686 = vmatprep.subr.bf16.mxu0 0
      %687 = vmatpush1.bf16.msra.mxu0 %v628
      %688 = vmatprep.subr.bf16.mxu0 0
      %689 = vmatpush1.bf16.msra.mxu0 %v629
      %690 = vmatprep.subr.bf16.mxu0 0
      %691 = vmatpush1.bf16.msra.mxu0 0
      %692 = vmatprep.subr.bf16.mxu0 0
      %693 = vmatpush1.bf16.msra.mxu0 0
      %694 = vmatprep.subr.bf16.mxu0 0
      %695 = vmatpush1.bf16.msra.mxu0 0
      %696 = vmatprep.subr.bf16.mxu0 0
      %697 = vmatpush1.bf16.msra.mxu0 0
      %698 = vmatprep.subr.bf16.mxu0 0
      %699 = vmatpush1.bf16.msra.mxu0 0
      %700 = vmatprep.subr.bf16.mxu0 0
      %701 = vmatpush1.bf16.msra.mxu0 0
      %702 = vmatprep.subr.bf16.mxu0 0
      %703 = vmatpush1.bf16.msra.mxu0 0
      %704 = vmatprep.subr.bf16.mxu0 0
      %705 = vmatpush1.bf16.msra.mxu0 0
      %706 = vmatprep.subr.bf16.mxu0 0
      %707 = vmatpush1.bf16.msra.mxu0 0
      %708 = vmatprep.subr.bf16.mxu0 0
      %709 = vmatpush1.bf16.msra.mxu0 0
      %710 = vmatprep.subr.bf16.mxu0 0
      %711 = vmatpush1.bf16.msra.mxu0 0
      %712 = vmatprep.subr.bf16.mxu0 0
      %713 = vmatpush1.bf16.msra.mxu0 0
      %714 = vmatprep.mubr.bf16.mxu0 0
      %715 = vmatmul.mubr.bf16.gmra.mrb[0].mxu0 %v635
      %v716 = vpop.f32.mrb[0].mxu0
      %v717 = vadd.f32 0.0, %v716
      %v718 = vpop.f32.mrb[0].mxu0
      %v719 = vpop.f32.mrb[0].mxu0
      %v720 = vadd.f32 0.0, %v719
      %v721 = vpop.f32.mrb[0].mxu0
      %722 = vmatprep.mubr.bf16.mxu0 0
      %723 = vmatmul.mubr.bf16.gmra.mrb[0].mxu0 %v638
      %v724 = vpop.f32.mrb[0].mxu0
      %v725 = vadd.f32 0.0, %v724
      %v726 = vpop.f32.mrb[0].mxu0
      %v727 = vpop.f32.mrb[0].mxu0
      %v728 = vadd.f32 0.0, %v727
      %v729 = vpop.f32.mrb[0].mxu0
      %730 = vmatprep.mubr.bf16.mxu0 0
      %731 = vmatmul.mubr.bf16.gmra.mrb[0].mxu0 %v641
      %v732 = vpop.f32.mrb[0].mxu0
      %v733 = vadd.f32 0.0, %v732
      %v734 = vpop.f32.mrb[0].mxu0
      %v735 = vpop.f32.mrb[0].mxu0
      %v736 = vadd.f32 0.0, %v735
      %v737 = vpop.f32.mrb[0].mxu0
      %738 = vmatprep.mubr.bf16.mxu0 0
      %739 = vmatmul.mubr.bf16.gmra.mrb[0].mxu0 %v644
      %v740 = vpop.f32.mrb[0].mxu0
      %v741 = vadd.f32 0.0, %v740
      %v742 = vpop.f32.mrb[0].mxu0
      %v743 = vpop.f32.mrb[0].mxu0
      %v744 = vadd.f32 0.0, %v743
      %v745 = vpop.f32.mrb[0].mxu0
      %746 = vmatprep.mubr.bf16.mxu0 0
      %747 = vmatmul.mubr.bf16.gmra.mrb[0].mxu0 %v647
      %v748 = vpop.f32.mrb[0].mxu0
      %v749 = vadd.f32 0.0, %v748
      %v750 = vpop.f32.mrb[0].mxu0
      %v751 = vpop.f32.mrb[0].mxu0
      %v752 = vadd.f32 0.0, %v751
      %v753 = vpop.f32.mrb[0].mxu0
      %754 = vmatprep.mubr.bf16.mxu0 0
      %755 = vmatmul.mubr.bf16.gmra.mrb[0].mxu0 %v650
      %v756 = vpop.f32.mrb[0].mxu0
      %v757 = vadd.f32 0.0, %v756
      %v758 = vpop.f32.mrb[0].mxu0
      %v759 = vpop.f32.mrb[0].mxu0
      %v760 = vadd.f32 0.0, %v759
      %v761 = vpop.f32.mrb[0].mxu0
      %762 = vmatprep.mubr.bf16.mxu0 0
      %763 = vmatmul.mubr.bf16.gmra.mrb[0].mxu0 %v653
      %v764 = vpop.f32.mrb[0].mxu0
      %v765 = vadd.f32 0.0, %v764
      %v766 = vpop.f32.mrb[0].mxu0
      %v767 = vpop.f32.mrb[0].mxu0
      %v768 = vadd.f32 0.0, %v767
      %v769 = vpop.f32.mrb[0].mxu0
      %770 = vmatprep.mubr.bf16.mxu0 0
      %771 = vmatmul.mubr.bf16.gmra.mrb[0].mxu0 %v656
      %v772 = vpop.f32.mrb[0].mxu0
      %v773 = vadd.f32 0.0, %v772
      %v774 = vpop.f32.mrb[0].mxu0
      %v775 = vpop.f32.mrb[0].mxu0
      %v776 = vadd.f32 0.0, %v775
      %v777 = vpop.f32.mrb[0].mxu0
      %778 = vmatprep.mubr.bf16.mxu0 0
      %779 = vmatmul.mubr.bf16.gmra.mrb[0].mxu0 %v659
      %v780 = vpop.f32.mrb[0].mxu0
      %v781 = vadd.f32 0.0, %v780
      %v782 = vpop.f32.mrb[0].mxu0
      %v783 = vpop.f32.mrb[0].mxu0
      %v784 = vadd.f32 0.0, %v783
      %v785 = vpop.f32.mrb[0].mxu0
      %786 = vmatprep.mubr.bf16.mxu0 0
      %787 = vmatmul.mubr.bf16.gmra.mrb[0].mxu0 %v662
      %v788 = vpop.f32.mrb[0].mxu0
      %v789 = vadd.f32 0.0, %v788
      %v790 = vpop.f32.mrb[0].mxu0
      %v791 = vpop.f32.mrb[0].mxu0
      %v792 = vadd.f32 0.0, %v791
      %v793 = vpop.f32.mrb[0].mxu0
      %794 = vmatprep.mubr.bf16.mxu0 0
      %795 = vmatmul.mubr.bf16.gmra.mrb[0].mxu0 %v665
      %v796 = vpop.f32.mrb[0].mxu0
      %v797 = vadd.f32 0.0, %v796
      %v798 = vpop.f32.mrb[0].mxu0
      %v799 = vpop.f32.mrb[0].mxu0
      %v800 = vadd.f32 0.0, %v799
      %v801 = vpop.f32.mrb[0].mxu0
      %802 = vmatprep.mubr.bf16.mxu0 0
      %803 = vmatmul.mubr.bf16.gmra.mrb[0].mxu0 %v668
      %v804 = vpop.f32.mrb[0].mxu0
      %v805 = vadd.f32 0.0, %v804
      %v806 = vpop.f32.mrb[0].mxu0
      %v807 = vpop.f32.mrb[0].mxu0
      %v808 = vadd.f32 0.0, %v807
      %v809 = vpop.f32.mrb[0].mxu0
      %810 = vmatprep.mubr.bf16.mxu0 0
      %811 = vmatmul.mubr.bf16.gmra.mrb[0].mxu0 %v671
      %v812 = vpop.f32.mrb[0].mxu0
      %v813 = vadd.f32 0.0, %v812
      %v814 = vpop.f32.mrb[0].mxu0
      %v815 = vpop.f32.mrb[0].mxu0
      %v816 = vadd.f32 0.0, %v815
      %v817 = vpop.f32.mrb[0].mxu0
      %818 = vmatprep.mubr.bf16.mxu0 0
      %819 = vmatmul.mubr.bf16.gmra.mrb[0].mxu0 %v674
      %v820 = vpop.f32.mrb[0].mxu0
      %v821 = vadd.f32 0.0, %v820
      %v822 = vpop.f32.mrb[0].mxu0
      %v823 = vpop.f32.mrb[0].mxu0
      %v824 = vadd.f32 0.0, %v823
      %v825 = vpop.f32.mrb[0].mxu0
      %826 = vmatprep.mubr.bf16.mxu0 0
      %827 = vmatmul.mubr.bf16.gmra.mrb[0].mxu0 %v677
      %v828 = vpop.f32.mrb[0].mxu0
      %v829 = vadd.f32 0.0, %v828
      %v830 = vpop.f32.mrb[0].mxu0
      %v831 = vpop.f32.mrb[0].mxu0
      %v832 = vadd.f32 0.0, %v831
      %v833 = vpop.f32.mrb[0].mxu0
      %834 = vmatprep.mubr.bf16.mxu0 0
      %835 = vmatmul.mubr.bf16.gmra.mrb[0].mxu0 %v680
      %v836 = vpop.f32.mrb[0].mxu0
      %v837 = vadd.f32 0.0, %v836
      %v838 = vpop.f32.mrb[0].mxu0
      %v839 = vpop.f32.mrb[0].mxu0
      %v840 = vadd.f32 0.0, %v839
      %v841 = vpop.f32.mrb[0].mxu0
      %842 = vdwg.mxu0
      %v843 = vadd.f32 %v522, %v717
      %v844 = vadd.f32 %v523, %v720
      %v845 = vadd.f32 %v524, %v725
      %v846 = vadd.f32 %v525, %v728
      %v847 = vadd.f32 %v526, %v733
      %v848 = vadd.f32 %v527, %v736
      %v849 = vadd.f32 %v528, %v741
      %v850 = vadd.f32 %v529, %v744
      %v851 = vadd.f32 %v530, %v749
      %v852 = vadd.f32 %v531, %v752
      %v853 = vadd.f32 %v532, %v757
      %v854 = vadd.f32 %v533, %v760
      %v855 = vadd.f32 %v534, %v765
      %v856 = vadd.f32 %v535, %v768
      %v857 = vadd.f32 %v536, %v773
      %v858 = vadd.f32 %v537, %v776
      %v859 = vadd.f32 %v538, %v781
      %v860 = vadd.f32 %v539, %v784
      %v861 = vadd.f32 %v540, %v789
      %v862 = vadd.f32 %v541, %v792
      %v863 = vadd.f32 %v542, %v797
      %v864 = vadd.f32 %v543, %v800
      %v865 = vadd.f32 %v544, %v805
      %v866 = vadd.f32 %v545, %v808
      %v867 = vadd.f32 %v546, %v813
      %v868 = vadd.f32 %v547, %v816
      %v869 = vadd.f32 %v548, %v821
      %v870 = vadd.f32 %v549, %v824
      %v871 = vadd.f32 %v550, %v829
      %v872 = vadd.f32 %v551, %v832
      %v873 = vadd.f32 %v552, %v837
      %v874 = vadd.f32 %v553, %v840
      %v875 = vmax.f32 %v843, 0.0
      %v876 = vmax.f32 %v844, 0.0
      %v877 = vmax.f32 %v845, 0.0
      %v878 = vmax.f32 %v846, 0.0
      %v879 = vmax.f32 %v847, 0.0
      %v880 = vmax.f32 %v848, 0.0
      %v881 = vmax.f32 %v849, 0.0
      %v882 = vmax.f32 %v850, 0.0
      %v883 = vmax.f32 %v851, 0.0
      %v884 = vmax.f32 %v852, 0.0
      %v885 = vmax.f32 %v853, 0.0
      %v886 = vmax.f32 %v854, 0.0
      %v887 = vmax.f32 %v855, 0.0
      %v888 = vmax.f32 %v856, 0.0
      %v889 = vmax.f32 %v857, 0.0
      %v890 = vmax.f32 %v858, 0.0
      %v891 = vmax.f32 %v859, 0.0
      %v892 = vmax.f32 %v860, 0.0
      %v893 = vmax.f32 %v861, 0.0
      %v894 = vmax.f32 %v862, 0.0
      %v895 = vmax.f32 %v863, 0.0
      %v896 = vmax.f32 %v864, 0.0
      %v897 = vmax.f32 %v865, 0.0
      %v898 = vmax.f32 %v866, 0.0
      %v899 = vmax.f32 %v867, 0.0
      %v900 = vmax.f32 %v868, 0.0
      %v901 = vmax.f32 %v869, 0.0
      %v902 = vmax.f32 %v870, 0.0
      %v903 = vmax.f32 %v871, 0.0
      %v904 = vmax.f32 %v872, 0.0
      %v905 = vmax.f32 %v873, 0.0
      %v906 = vmax.f32 %v874, 0.0
      %907 = vst.msk [vmem:[%s221] sm:$0xff] %vm312, %v875
      %908 = vst.msk [vmem:[%s221 + $0x8] sm:$0xff] %vm312, %v876
      %909 = vst.msk [vmem:[%s221 + $0x10] sm:$0xff] %vm312, %v877
      %910 = vst.msk [vmem:[%s221 + $0x18] sm:$0xff] %vm312, %v878
      %911 = vst.msk [vmem:[%s221 + $0x20] sm:$0xff] %vm312, %v879
      %912 = vst.msk [vmem:[%s221 + $0x28] sm:$0xff] %vm312, %v880
      %913 = vst.msk [vmem:[%s221 + $0x30] sm:$0xff] %vm312, %v881
      %914 = vst.msk [vmem:[%s221 + $0x38] sm:$0xff] %vm312, %v882
      %915 = vst.msk [vmem:[%s221 + $0x40] sm:$0xff] %vm312, %v883
      %916 = vst.msk [vmem:[%s221 + $0x48] sm:$0xff] %vm312, %v884
      %917 = vst.msk [vmem:[%s221 + $0x50] sm:$0xff] %vm312, %v885
      %918 = vst.msk [vmem:[%s221 + $0x58] sm:$0xff] %vm312, %v886
      %919 = vst.msk [vmem:[%s221 + $0x60] sm:$0xff] %vm312, %v887
      %920 = vst.msk [vmem:[%s221 + $0x68] sm:$0xff] %vm312, %v888
      %921 = vst.msk [vmem:[%s221 + $0x70] sm:$0xff] %vm312, %v889
      %922 = vst.msk [vmem:[%s221 + $0x78] sm:$0xff] %vm312, %v890
      %923 = vst.msk [vmem:[%s221 + $0x80] sm:$0xff] %vm312, %v891
      %924 = vst.msk [vmem:[%s221 + $0x88] sm:$0xff] %vm312, %v892
      %925 = vst.msk [vmem:[%s221 + $0x90] sm:$0xff] %vm312, %v893
      %926 = vst.msk [vmem:[%s221 + $0x98] sm:$0xff] %vm312, %v894
      %927 = vst.msk [vmem:[%s221 + $0xa0] sm:$0xff] %vm312, %v895
      %928 = vst.msk [vmem:[%s221 + $0xa8] sm:$0xff] %vm312, %v896
      %929 = vst.msk [vmem:[%s221 + $0xb0] sm:$0xff] %vm312, %v897
      %930 = vst.msk [vmem:[%s221 + $0xb8] sm:$0xff] %vm312, %v898
      %931 = vst.msk [vmem:[%s221 + $0xc0] sm:$0xff] %vm312, %v899
      %932 = vst.msk [vmem:[%s221 + $0xc8] sm:$0xff] %vm312, %v900
      %933 = vst.msk [vmem:[%s221 + $0xd0] sm:$0xff] %vm312, %v901
      %934 = vst.msk [vmem:[%s221 + $0xd8] sm:$0xff] %vm312, %v902
      %935 = vst.msk [vmem:[%s221 + $0xe0] sm:$0xff] %vm312, %v903
      %936 = vst.msk [vmem:[%s221 + $0xe8] sm:$0xff] %vm312, %v904
      %937 = vst.msk [vmem:[%s221 + $0xf0] sm:$0xff] %vm312, %v905
      %938 = vst.msk [vmem:[%s221 + $0xf8] sm:$0xff] %vm312, %v906
      %s939 = smul.u32 32, %s15
      %p940 = scmp.lt.s32.totalorder %s939, 63
      %s941 = scalar_select %p940, %s939, 63
      %s942 = smul.addr %s941, 8
      %s943 = scalar_lea.vmem %s4, %s942
      // Predicated region
      $region37: #{block_forward.7} parent=35 // pred_check
        %p944 = pneg %p127
      $region38: #{block_forward.7} parent=35 // pred_check_branch
        %946 = sbr.rel (%p944) target = $region40
      $region39: #{block_forward.7} parent=35 // pred_region
        %s947 = smul.u32 32, %s15
      $region40: #{block_forward.7} parent=35 // pred_fallthru
        _
    $region36: #{block_forward.7} parent=5 // pred_fallthru
      _
    %p948 = scmp.le.s32.totalorder 2, %s10
    // Predicated region
    $region41: #{block_forward.7} parent=5 // pred_check
      %p949 = pneg %p948
    $region42: #{block_forward.7} parent=5 // pred_check_branch
      %951 = sbr.rel (%p949) target = $region44
    $region43: #{block_forward.7} parent=5 // pred_region
      %s952 = ssub.s32 %s10, 2
      // Predicated region
      $region45: #{block_forward.7} parent=43 // pred_check
        %p953 = pneg %p133
      $region46: #{block_forward.7} parent=43 // pred_check_branch
        %955 = sbr.rel (%p953) target = $region48
      $region47: #{block_forward.7} parent=43 // pred_region
        %s956 = smul.u32 32, %s16
        %p957 = scmp.lt.s32.totalorder %s956, 63
        %s958 = scalar_select %p957, %s956, 63
        %s959 = smul.addr %s958, 8
        %s960 = scalar_lea.vmem %s4, %s959
      $region48: #{block_forward.7} parent=43 // pred_fallthru
        _
    $region44: #{block_forward.7} parent=5 // pred_fallthru
      _
  $region6: #{block_forward.7} parent=0 // loop_footer
    %s14 = sadd.s32 1, %s10
  $region7: #{block_forward.7} parent=0 // loop_footer_branch
    %9 = sbr.rel target = $region3
  $region8: #{block_forward.7} parent=0 // loop_exit
    _

// kernel: block_forward.9
$region0: #{block_forward.9}
  #allocation0 [shape = 'u32[]', space=smem, size = 0x4, offset = 0x4, fixed_abs, tag = 'smem constant byte address 0x4 - core index']
  #allocation1 [shape = 'u32[144,128]{1,0:T(1,128)}', space=vmem, size = 0x12000, scoped, tag = 'internal scratch']
  %s0 = inlined_call_operand.vmem [shape: f32[512,64], index: 0, kind: input, shape index: {}]
  %s1 = inlined_call_operand.vmem [shape: f32[512,64], index: 1, kind: input, shape index: {}]
  %s2 = inlined_call_operand.vmem [shape: f32[512,64], index: 2, kind: input, shape index: {}]
  %s3 = inlined_call_operand.vmem [shape: bf16[192,64], index: 3, kind: input, shape index: {}]
  %s4 = inlined_call_operand.vmem [shape: f32[1,64], index: 4, kind: input, shape index: {}]
  %s5 = inlined_call_operand.vmem [shape: f32[512,64], index: 5, kind: output, shape index: {}]
  %s6 = sld [smem:[#allocation0]]
  $region53: #{block_forward.9} parent=0
    _
  %s8 = ssub.s32 1, %s6
  %s9 = scalar_select 0, %s8, %s6
  loop: start=0, step=1, limit=4
  $region2: #{block_forward.9} parent=0 // loop_pre_header
    _
  $region3: #{block_forward.9} parent=0 // loop_header
    %s11 = sphi 0, %s15
    %p12 = scmp.ge.s32.totalorder %s11, 4
    %s21 = sphi 0, %s23
    %s24 = sphi 0, %s21
    %s25 = sphi 0, %s24
    %s41 = sphi 0, %s25
    %s47 = sphi 0, %s49
    %s50 = sphi 0, %s47
    %s51 = sphi 0, %s50
    %s67 = sphi 0, %s51
    %s73 = sphi 0, %s75
    %s76 = sphi 0, %s73
    %s77 = sphi 0, %s76
    %s93 = sphi 0, %s77
    %s97 = sphi 0, %s97
    %s99 = sphi 0, %s97
    %s100 = sphi 0, %s99
    %s114 = sphi 0, %s100
    %s118 = sphi 0, %s118
    %s120 = sphi 0, %s118
    %s121 = sphi 0, %s120
    %s135 = sphi 0, %s121
    %s141 = sphi 0, %s143
    %s144 = sphi 0, %s141
    %s145 = sphi 0, %s144
    %s161 = sphi 0, %s145
  $region4: #{block_forward.9} parent=0 // loop_header_branch
    %14 = sbr.rel (%p12) target = $region8
  $region5: #{block_forward.9} parent=0 // loop_body
    %s16 = ssub.s32 %s11, 1
    %s17 = ssub.s32 %s11, 2
    %s18 = sadd.s32 %s11, 1
    %s19 = ssub.s32 %s11, %s18
    %p20 = scmp.eq.s32.totalorder %s19, 0
    %s22 = sadd.s32 %s21, 1
    %s23 = scalar_select %p20, %s21, %s22
    %p26 = pneg %p20
    %p27 = scmp.eq.s32.totalorder %s11, 1
    %p28 = por %p26, %p27
    %p29 = scmp.ne.s32.totalorder %s21, %s24
    %p30 = scmp.eq.s32.totalorder %s11, 0
    %p31 = por %p29, %p30
    %p32 = scmp.ne.s32.totalorder %s21, %s24
    %p33 = scmp.eq.s32.totalorder %s16, 1
    %p34 = por %p32, %p33
    %p35 = scmp.ne.s32.totalorder %s24, %s25
    %p36 = scmp.eq.s32.totalorder %s16, 0
    %p37 = por %p35, %p36
    %p38 = scmp.ne.s32.totalorder %s24, %s25
    %p39 = scmp.eq.s32.totalorder %s17, 1
    %p40 = por %p38, %p39
    %p42 = scmp.ne.s32.totalorder %s25, %s41
    %p43 = scmp.eq.s32.totalorder %s17, 0
    %p44 = por %p42, %p43
    %s45 = ssub.s32 %s11, %s18
    %p46 = scmp.eq.s32.totalorder %s45, 0
    %s48 = sadd.s32 %s47, 1
    %s49 = scalar_select %p46, %s47, %s48
    %p52 = pneg %p46
    %p53 = scmp.eq.s32.totalorder %s11, 1
    %p54 = por %p52, %p53
    %p55 = scmp.ne.s32.totalorder %s47, %s50
    %p56 = scmp.eq.s32.totalorder %s11, 0
    %p57 = por %p55, %p56
    %p58 = scmp.ne.s32.totalorder %s47, %s50
    %p59 = scmp.eq.s32.totalorder %s16, 1
    %p60 = por %p58, %p59
    %p61 = scmp.ne.s32.totalorder %s50, %s51
    %p62 = scmp.eq.s32.totalorder %s16, 0
    %p63 = por %p61, %p62
    %p64 = scmp.ne.s32.totalorder %s50, %s51
    %p65 = scmp.eq.s32.totalorder %s17, 1
    %p66 = por %p64, %p65
    %p68 = scmp.ne.s32.totalorder %s51, %s67
    %p69 = scmp.eq.s32.totalorder %s17, 0
    %p70 = por %p68, %p69
    %s71 = ssub.s32 %s11, %s18
    %p72 = scmp.eq.s32.totalorder %s71, 0
    %s74 = sadd.s32 %s73, 1
    %s75 = scalar_select %p72, %s73, %s74
    %p78 = pneg %p72
    %p79 = scmp.eq.s32.totalorder %s11, 1
    %p80 = por %p78, %p79
    %p81 = scmp.ne.s32.totalorder %s73, %s76
    %p82 = scmp.eq.s32.totalorder %s11, 0
    %p83 = por %p81, %p82
    %p84 = scmp.ne.s32.totalorder %s73, %s76
    %p85 = scmp.eq.s32.totalorder %s16, 1
    %p86 = por %p84, %p85
    %p87 = scmp.ne.s32.totalorder %s76, %s77
    %p88 = scmp.eq.s32.totalorder %s16, 0
    %p89 = por %p87, %p88
    %p90 = scmp.ne.s32.totalorder %s76, %s77
    %p91 = scmp.eq.s32.totalorder %s17, 1
    %p92 = por %p90, %p91
    %p94 = scmp.ne.s32.totalorder %s77, %s93
    %p95 = scmp.eq.s32.totalorder %s17, 0
    %p96 = por %p94, %p95
    %s98 = sadd.s32 %s97, 1
    %p101 = scmp.eq.s32.totalorder %s11, 1
    %p102 = scmp.ne.s32.totalorder %s97, %s99
    %p103 = scmp.eq.s32.totalorder %s11, 0
    %p104 = por %p102, %p103
    %p105 = scmp.ne.s32.totalorder %s97, %s99
    %p106 = scmp.eq.s32.totalorder %s16, 1
    %p107 = por %p105, %p106
    %p108 = scmp.ne.s32.totalorder %s99, %s100
    %p109 = scmp.eq.s32.totalorder %s16, 0
    %p110 = por %p108, %p109
    %p111 = scmp.ne.s32.totalorder %s99, %s100
    %p112 = scmp.eq.s32.totalorder %s17, 1
    %p113 = por %p111, %p112
    %p115 = scmp.ne.s32.totalorder %s100, %s114
    %p116 = scmp.eq.s32.totalorder %s17, 0
    %p117 = por %p115, %p116
    %s119 = sadd.s32 %s118, 1
    %p122 = scmp.eq.s32.totalorder %s11, 1
    %p123 = scmp.ne.s32.totalorder %s118, %s120
    %p124 = scmp.eq.s32.totalorder %s11, 0
    %p125 = por %p123, %p124
    %p126 = scmp.ne.s32.totalorder %s118, %s120
    %p127 = scmp.eq.s32.totalorder %s16, 1
    %p128 = por %p126, %p127
    %p129 = scmp.ne.s32.totalorder %s120, %s121
    %p130 = scmp.eq.s32.totalorder %s16, 0
    %p131 = por %p129, %p130
    %p132 = scmp.ne.s32.totalorder %s120, %s121
    %p133 = scmp.eq.s32.totalorder %s17, 1
    %p134 = por %p132, %p133
    %p136 = scmp.ne.s32.totalorder %s121, %s135
    %p137 = scmp.eq.s32.totalorder %s17, 0
    %p138 = por %p136, %p137
    %s139 = ssub.s32 %s11, %s18
    %p140 = scmp.eq.s32.totalorder %s139, 0
    %s142 = sadd.s32 %s141, 1
    %s143 = scalar_select %p140, %s141, %s142
    %p146 = pneg %p140
    %p147 = scmp.eq.s32.totalorder %s11, 1
    %p148 = por %p146, %p147
    %p149 = scmp.ne.s32.totalorder %s141, %s144
    %p150 = scmp.eq.s32.totalorder %s11, 0
    %p151 = por %p149, %p150
    %p152 = scmp.ne.s32.totalorder %s141, %s144
    %p153 = scmp.eq.s32.totalorder %s16, 1
    %p154 = por %p152, %p153
    %p155 = scmp.ne.s32.totalorder %s144, %s145
    %p156 = scmp.eq.s32.totalorder %s16, 0
    %p157 = por %p155, %p156
    %p158 = scmp.ne.s32.totalorder %s144, %s145
    %p159 = scmp.eq.s32.totalorder %s17, 1
    %p160 = por %p158, %p159
    %p162 = scmp.ne.s32.totalorder %s145, %s161
    %p163 = scmp.eq.s32.totalorder %s17, 0
    %p164 = por %p162, %p163
    %p165 = scmp.le.s32.totalorder 1, %s11
    %p166 = scmp.lt.s32.totalorder %s11, 3
    %p167 = pnand %p165, %p166
    %p168 = pneg %p167
    // Predicated region
    $region9: #{block_forward.9} parent=5 // pred_check
      _
    $region10: #{block_forward.9} parent=5 // pred_check_branch
      %170 = sbr.rel (%p167) target = $region12
    $region11: #{block_forward.9} parent=5 // pred_region
      %s171 = ssub.s32 %s11, 1
      // Predicated region
      $region13: #{block_forward.9} parent=11 // pred_check
        %p172 = pneg %p110
      $region14: #{block_forward.9} parent=11 // pred_check_branch
        %174 = sbr.rel (%p172) target = $region16
      $region15: #{block_forward.9} parent=11 // pred_region
        _
      $region16: #{block_forward.9} parent=11 // pred_fallthru
        _
      // Predicated region
      $region17: #{block_forward.9} parent=11 // pred_check
        %p175 = pneg %p131
      $region18: #{block_forward.9} parent=11 // pred_check_branch
        %177 = sbr.rel (%p175) target = $region20
      $region19: #{block_forward.9} parent=11 // pred_region
        _
      $region20: #{block_forward.9} parent=11 // pred_fallthru
        _
    $region12: #{block_forward.9} parent=5 // pred_fallthru
      _
    %p178 = scmp.lt.s32.totalorder %s11, 2
    // Predicated region
    $region21: #{block_forward.9} parent=5 // pred_check
      %p179 = pneg %p178
    $region22: #{block_forward.9} parent=5 // pred_check_branch
      %181 = sbr.rel (%p179) target = $region24
    $region23: #{block_forward.9} parent=5 // pred_region
      // Predicated region
      $region25: #{block_forward.9} parent=23 // pred_check
        %p182 = pneg %p31
      $region26: #{block_forward.9} parent=23 // pred_check_branch
        %184 = sbr.rel (%p182) target = $region28
      $region27: #{block_forward.9} parent=23 // pred_region
        %s185 = smul.u32 32, %s11
        %p186 = scmp.lt.s32.totalorder %s185, 63
        %s187 = scalar_select %p186, %s185, 63
        %s188 = smul.addr %s187, 8
        %s189 = scalar_lea.vmem %s0, %s188
        %s190 = smul.u32 32, %s11
      $region28: #{block_forward.9} parent=23 // pred_fallthru
        _
      // Predicated region
      $region29: #{block_forward.9} parent=23 // pred_check
        %p191 = pneg %p57
      $region30: #{block_forward.9} parent=23 // pred_check_branch
        %193 = sbr.rel (%p191) target = $region32
      $region31: #{block_forward.9} parent=23 // pred_region
        %s194 = smul.u32 32, %s11
        %p195 = scmp.lt.s32.totalorder %s194, 63
        %s196 = scalar_select %p195, %s194, 63
        %s197 = smul.addr %s196, 8
        %s198 = scalar_lea.vmem %s1, %s197
        %s199 = smul.u32 32, %s11
      $region32: #{block_forward.9} parent=23 // pred_fallthru
        _
      // Predicated region
      $region33: #{block_forward.9} parent=23 // pred_check
        %p200 = pneg %p83
      $region34: #{block_forward.9} parent=23 // pred_check_branch
        %202 = sbr.rel (%p200) target = $region36
      $region35: #{block_forward.9} parent=23 // pred_region
        %s203 = smul.u32 32, %s11
        %p204 = scmp.lt.s32.totalorder %s203, 63
        %s205 = scalar_select %p204, %s203, 63
        %s206 = smul.addr %s205, 8
        %s207 = scalar_lea.vmem %s2, %s206
        %s208 = smul.u32 32, %s11
      $region36: #{block_forward.9} parent=23 // pred_fallthru
        _
    $region24: #{block_forward.9} parent=5 // pred_fallthru
      _
    %p209 = scmp.le.s32.totalorder 1, %s11
    %p210 = scmp.lt.s32.totalorder %s11, 3
    %p211 = pnand %p209, %p210
    %p212 = pneg %p211
    // Predicated region
    $region37: #{block_forward.9} parent=5 // pred_check
      _
    $region38: #{block_forward.9} parent=5 // pred_check_branch
      %214 = sbr.rel (%p211) target = $region40
    $region39: #{block_forward.9} parent=5 // pred_region
      %s215 = ssub.s32 %s11, 1
      %s216 = smul.u32 32, %s16
      %p217 = scmp.lt.s32.totalorder %s216, 63
      %s218 = scalar_select %p217, %s216, 63
      %s219 = smul.addr %s218, 8
      %s220 = scalar_lea.vmem %s0, %s219
      %p221 = pneg %p37
      %p222 = pneg %p34
      %s223 = smul.u32 32, %s16
      %p224 = scmp.lt.s32.totalorder %s223, 63
      %s225 = scalar_select %p224, %s223, 63
      %s226 = smul.addr %s225, 8
      %s227 = scalar_lea.vmem %s1, %s226
      %p228 = pneg %p63
      %p229 = pneg %p60
      %s230 = smul.u32 32, %s16
      %p231 = scmp.lt.s32.totalorder %s230, 63
      %s232 = scalar_select %p231, %s230, 63
      %s233 = smul.addr %s232, 8
      %s234 = scalar_lea.vmem %s2, %s233
      %p235 = pneg %p89
      %p236 = pneg %p86
      %p237 = pneg %p110
      %p238 = pneg %p107
      %p239 = pneg %p131
      %p240 = pneg %p128
      %p241 = pneg %p157
      %p242 = pneg %p154
      %s243 = smul.u32 32, %s16
      %p244 = scmp.lt.s32.totalorder %s243, 63
      %s245 = scalar_select %p244, %s243, 63
      %s246 = smul.addr %s245, 8
      %s247 = scalar_lea.vmem %s5, %s246
      %s248 = smul.u32 32, %s16
      %p249 = scmp.lt.s32.totalorder %s248, 63
      %s250 = scalar_select %p249, %s248, 63
      %s251 = smul.addr %s250, 8
      %s252 = scalar_lea.vmem %s0, %s251
      %s253 = smul.u32 32, %s16
      %s254 = smul.u32 32, %s16
      %p255 = scmp.lt.s32.totalorder %s254, 63
      %s256 = scalar_select %p255, %s254, 63
      %s257 = smul.addr %s256, 8
      %s258 = scalar_lea.vmem %s1, %s257
      %s259 = smul.u32 32, %s16
      %s260 = smul.u32 32, %s16
      %p261 = scmp.lt.s32.totalorder %s260, 63
      %s262 = scalar_select %p261, %s260, 63
      %s263 = smul.addr %s262, 8
      %s264 = scalar_lea.vmem %s2, %s263
      %s265 = smul.u32 32, %s16
      %s266 = smul.u32 32, %s16
      %p267 = scmp.lt.s32.totalorder %s266, 63
      %s268 = scalar_select %p267, %s266, 63
      %s269 = smul.addr %s268, 8
      %s270 = scalar_lea.vmem %s5, %s269
      %s271 = smul.u32 32, %s16
      %v273 = vld [vmem:[%s4] sm:$0x1]
      %v275 = vlaneseq
      %v276 = vshrl.u32 %v275, 7
      %v277 = vsub.s32 0, %v276
      %v278 = vrot.slane %v273, %v277
      %v280 = vadd.f32 %v278, 0.0
      %v281 = vld [vmem:[%s252] sm:$0xff]
      %v282 = vld [vmem:[%s252 + $0x8] sm:$0xff]
      %v283 = vld [vmem:[%s252 + $0x10] sm:$0xff]
      %v284 = vld [vmem:[%s252 + $0x18] sm:$0xff]
      %v285 = vld [vmem:[%s252 + $0x20] sm:$0xff]
      %v286 = vld [vmem:[%s252 + $0x28] sm:$0xff]
      %v287 = vld [vmem:[%s252 + $0x30] sm:$0xff]
      %v288 = vld [vmem:[%s252 + $0x38] sm:$0xff]
      %v289 = vld [vmem:[%s252 + $0x40] sm:$0xff]
      %v290 = vld [vmem:[%s252 + $0x48] sm:$0xff]
      %v291 = vld [vmem:[%s252 + $0x50] sm:$0xff]
      %v292 = vld [vmem:[%s252 + $0x58] sm:$0xff]
      %v293 = vld [vmem:[%s252 + $0x60] sm:$0xff]
      %v294 = vld [vmem:[%s252 + $0x68] sm:$0xff]
      %v295 = vld [vmem:[%s252 + $0x70] sm:$0xff]
      %v296 = vld [vmem:[%s252 + $0x78] sm:$0xff]
      %v297 = vld [vmem:[%s252 + $0x80] sm:$0xff]
      %v298 = vld [vmem:[%s252 + $0x88] sm:$0xff]
      %v299 = vld [vmem:[%s252 + $0x90] sm:$0xff]
      %v300 = vld [vmem:[%s252 + $0x98] sm:$0xff]
      %v301 = vld [vmem:[%s252 + $0xa0] sm:$0xff]
      %v302 = vld [vmem:[%s252 + $0xa8] sm:$0xff]
      %v303 = vld [vmem:[%s252 + $0xb0] sm:$0xff]
      %v304 = vld [vmem:[%s252 + $0xb8] sm:$0xff]
      %v305 = vld [vmem:[%s252 + $0xc0] sm:$0xff]
      %v306 = vld [vmem:[%s252 + $0xc8] sm:$0xff]
      %v307 = vld [vmem:[%s252 + $0xd0] sm:$0xff]
      %v308 = vld [vmem:[%s252 + $0xd8] sm:$0xff]
      %v309 = vld [vmem:[%s252 + $0xe0] sm:$0xff]
      %v310 = vld [vmem:[%s252 + $0xe8] sm:$0xff]
      %v311 = vld [vmem:[%s252 + $0xf0] sm:$0xff]
      %v312 = vld [vmem:[%s252 + $0xf8] sm:$0xff]
      %v313 = vpack.c.bf16 %v282, %v281
      %v314 = vpack.c.bf16 %v284, %v283
      %v315 = vpack.c.bf16 %v286, %v285
      %v316 = vpack.c.bf16 %v288, %v287
      %v317 = vpack.c.bf16 %v290, %v289
      %v318 = vpack.c.bf16 %v292, %v291
      %v319 = vpack.c.bf16 %v294, %v293
      %v320 = vpack.c.bf16 %v296, %v295
      %v321 = vpack.c.bf16 %v298, %v297
      %v322 = vpack.c.bf16 %v300, %v299
      %v323 = vpack.c.bf16 %v302, %v301
      %v324 = vpack.c.bf16 %v304, %v303
      %v325 = vpack.c.bf16 %v306, %v305
      %v326 = vpack.c.bf16 %v308, %v307
      %v327 = vpack.c.bf16 %v310, %v309
      %v328 = vpack.c.bf16 %v312, %v311
      %v329 = vld [vmem:[%s3] sm:$0xf]
      %v330 = vld [vmem:[%s3 + $0x4] sm:$0xf]
      %v331 = vld [vmem:[%s3 + $0x8] sm:$0xf]
      %v332 = vld [vmem:[%s3 + $0xc] sm:$0xf]
      %v333 = vld [vmem:[%s3 + $0x10] sm:$0xf]
      %v334 = vld [vmem:[%s3 + $0x14] sm:$0xf]
      %v335 = vld [vmem:[%s3 + $0x18] sm:$0xf]
      %v336 = vld [vmem:[%s3 + $0x1c] sm:$0xf]
      %v345 = vunpack.c.l.b16 %v329
      %v346 = vunpack.c.l.b16 %v330
      %v347 = vunpack.c.l.b16 %v331
      %v348 = vunpack.c.l.b16 %v332
      %v349 = vunpack.c.l.b16 %v333
      %v350 = vunpack.c.l.b16 %v334
      %v351 = vunpack.c.l.b16 %v335
      %v352 = vunpack.c.l.b16 %v336
      %v353 = vpack.c.b16 %v346, %v345
      %v354 = vpack.c.b16 %v348, %v347
      %v355 = vpack.c.b16 %v350, %v349
      %v356 = vpack.c.b16 %v352, %v351
      %vm361 = vcmask 523264
      %v363 = vsel %vm361, %v313, 0
      %v366 = vsel %vm361, %v314, 0
      %v369 = vsel %vm361, %v315, 0
      %v372 = vsel %vm361, %v316, 0
      %v375 = vsel %vm361, %v317, 0
      %v378 = vsel %vm361, %v318, 0
      %v381 = vsel %vm361, %v319, 0
      %v384 = vsel %vm361, %v320, 0
      %v387 = vsel %vm361, %v321, 0
      %v390 = vsel %vm361, %v322, 0
      %v393 = vsel %vm361, %v323, 0
      %v396 = vsel %vm361, %v324, 0
      %v399 = vsel %vm361, %v325, 0
      %v402 = vsel %vm361, %v326, 0
      %v405 = vsel %vm361, %v327, 0
      %v408 = vsel %vm361, %v328, 0
      %410 = vmatprep.subr.bf16.mxu0 0
      %411 = vmatpush1.bf16.msra.mxu0 %v353
      %412 = vmatprep.subr.bf16.mxu0 0
      %413 = vmatpush1.bf16.msra.mxu0 %v354
      %414 = vmatprep.subr.bf16.mxu0 0
      %415 = vmatpush1.bf16.msra.mxu0 %v355
      %416 = vmatprep.subr.bf16.mxu0 0
      %417 = vmatpush1.bf16.msra.mxu0 %v356
      %418 = vmatprep.subr.bf16.mxu0 0
      %419 = vmatpush1.bf16.msra.mxu0 0
      %420 = vmatprep.subr.bf16.mxu0 0
      %421 = vmatpush1.bf16.msra.mxu0 0
      %422 = vmatprep.subr.bf16.mxu0 0
      %423 = vmatpush1.bf16.msra.mxu0 0
      %424 = vmatprep.subr.bf16.mxu0 0
      %425 = vmatpush1.bf16.msra.mxu0 0
      %426 = vmatprep.subr.bf16.mxu0 0
      %427 = vmatpush1.bf16.msra.mxu0 0
      %428 = vmatprep.subr.bf16.mxu0 0
      %429 = vmatpush1.bf16.msra.mxu0 0
      %430 = vmatprep.subr.bf16.mxu0 0
      %431 = vmatpush1.bf16.msra.mxu0 0
      %432 = vmatprep.subr.bf16.mxu0 0
      %433 = vmatpush1.bf16.msra.mxu0 0
      %434 = vmatprep.subr.bf16.mxu0 0
      %435 = vmatpush1.bf16.msra.mxu0 0
      %436 = vmatprep.subr.bf16.mxu0 0
      %437 = vmatpush1.bf16.msra.mxu0 0
      %438 = vmatprep.subr.bf16.mxu0 0
      %439 = vmatpush1.bf16.msra.mxu0 0
      %440 = vmatprep.subr.bf16.mxu0 0
      %441 = vmatpush1.bf16.msra.mxu0 0
      %442 = vmatprep.mubr.bf16.mxu0 0
      %443 = vmatmul.mubr.bf16.gmra.mrb[0].mxu0 %v363
      %v444 = vpop.f32.mrb[0].mxu0
      %v445 = vadd.f32 0.0, %v444
      %v446 = vpop.f32.mrb[0].mxu0
      %v447 = vpop.f32.mrb[0].mxu0
      %v448 = vadd.f32 0.0, %v447
      %v449 = vpop.f32.mrb[0].mxu0
      %450 = vmatprep.mubr.bf16.mxu0 0
      %451 = vmatmul.mubr.bf16.gmra.mrb[0].mxu0 %v366
      %v452 = vpop.f32.mrb[0].mxu0
      %v453 = vadd.f32 0.0, %v452
      %v454 = vpop.f32.mrb[0].mxu0
      %v455 = vpop.f32.mrb[0].mxu0
      %v456 = vadd.f32 0.0, %v455
      %v457 = vpop.f32.mrb[0].mxu0
      %458 = vmatprep.mubr.bf16.mxu0 0
      %459 = vmatmul.mubr.bf16.gmra.mrb[0].mxu0 %v369
      %v460 = vpop.f32.mrb[0].mxu0
      %v461 = vadd.f32 0.0, %v460
      %v462 = vpop.f32.mrb[0].mxu0
      %v463 = vpop.f32.mrb[0].mxu0
      %v464 = vadd.f32 0.0, %v463
      %v465 = vpop.f32.mrb[0].mxu0
      %466 = vmatprep.mubr.bf16.mxu0 0
      %467 = vmatmul.mubr.bf16.gmra.mrb[0].mxu0 %v372
      %v468 = vpop.f32.mrb[0].mxu0
      %v469 = vadd.f32 0.0, %v468
      %v470 = vpop.f32.mrb[0].mxu0
      %v471 = vpop.f32.mrb[0].mxu0
      %v472 = vadd.f32 0.0, %v471
      %v473 = vpop.f32.mrb[0].mxu0
      %474 = vmatprep.mubr.bf16.mxu0 0
      %475 = vmatmul.mubr.bf16.gmra.mrb[0].mxu0 %v375
      %v476 = vpop.f32.mrb[0].mxu0
      %v477 = vadd.f32 0.0, %v476
      %v478 = vpop.f32.mrb[0].mxu0
      %v479 = vpop.f32.mrb[0].mxu0
      %v480 = vadd.f32 0.0, %v479
      %v481 = vpop.f32.mrb[0].mxu0
      %482 = vmatprep.mubr.bf16.mxu0 0
      %483 = vmatmul.mubr.bf16.gmra.mrb[0].mxu0 %v378
      %v484 = vpop.f32.mrb[0].mxu0
      %v485 = vadd.f32 0.0, %v484
      %v486 = vpop.f32.mrb[0].mxu0
      %v487 = vpop.f32.mrb[0].mxu0
      %v488 = vadd.f32 0.0, %v487
      %v489 = vpop.f32.mrb[0].mxu0
      %490 = vmatprep.mubr.bf16.mxu0 0
      %491 = vmatmul.mubr.bf16.gmra.mrb[0].mxu0 %v381
      %v492 = vpop.f32.mrb[0].mxu0
      %v493 = vadd.f32 0.0, %v492
      %v494 = vpop.f32.mrb[0].mxu0
      %v495 = vpop.f32.mrb[0].mxu0
      %v496 = vadd.f32 0.0, %v495
      %v497 = vpop.f32.mrb[0].mxu0
      %498 = vmatprep.mubr.bf16.mxu0 0
      %499 = vmatmul.mubr.bf16.gmra.mrb[0].mxu0 %v384
      %v500 = vpop.f32.mrb[0].mxu0
      %v501 = vadd.f32 0.0, %v500
      %v502 = vpop.f32.mrb[0].mxu0
      %v503 = vpop.f32.mrb[0].mxu0
      %v504 = vadd.f32 0.0, %v503
      %v505 = vpop.f32.mrb[0].mxu0
      %506 = vmatprep.mubr.bf16.mxu0 0
      %507 = vmatmul.mubr.bf16.gmra.mrb[0].mxu0 %v387
      %v508 = vpop.f32.mrb[0].mxu0
      %v509 = vadd.f32 0.0, %v508
      %v510 = vpop.f32.mrb[0].mxu0
      %v511 = vpop.f32.mrb[0].mxu0
      %v512 = vadd.f32 0.0, %v511
      %v513 = vpop.f32.mrb[0].mxu0
      %514 = vmatprep.mubr.bf16.mxu0 0
      %515 = vmatmul.mubr.bf16.gmra.mrb[0].mxu0 %v390
      %v516 = vpop.f32.mrb[0].mxu0
      %v517 = vadd.f32 0.0, %v516
      %v518 = vpop.f32.mrb[0].mxu0
      %v519 = vpop.f32.mrb[0].mxu0
      %v520 = vadd.f32 0.0, %v519
      %v521 = vpop.f32.mrb[0].mxu0
      %522 = vmatprep.mubr.bf16.mxu0 0
      %523 = vmatmul.mubr.bf16.gmra.mrb[0].mxu0 %v393
      %v524 = vpop.f32.mrb[0].mxu0
      %v525 = vadd.f32 0.0, %v524
      %v526 = vpop.f32.mrb[0].mxu0
      %v527 = vpop.f32.mrb[0].mxu0
      %v528 = vadd.f32 0.0, %v527
      %v529 = vpop.f32.mrb[0].mxu0
      %530 = vmatprep.mubr.bf16.mxu0 0
      %531 = vmatmul.mubr.bf16.gmra.mrb[0].mxu0 %v396
      %v532 = vpop.f32.mrb[0].mxu0
      %v533 = vadd.f32 0.0, %v532
      %v534 = vpop.f32.mrb[0].mxu0
      %v535 = vpop.f32.mrb[0].mxu0
      %v536 = vadd.f32 0.0, %v535
      %v537 = vpop.f32.mrb[0].mxu0
      %538 = vmatprep.mubr.bf16.mxu0 0
      %539 = vmatmul.mubr.bf16.gmra.mrb[0].mxu0 %v399
      %v540 = vpop.f32.mrb[0].mxu0
      %v541 = vadd.f32 0.0, %v540
      %v542 = vpop.f32.mrb[0].mxu0
      %v543 = vpop.f32.mrb[0].mxu0
      %v544 = vadd.f32 0.0, %v543
      %v545 = vpop.f32.mrb[0].mxu0
      %546 = vmatprep.mubr.bf16.mxu0 0
      %547 = vmatmul.mubr.bf16.gmra.mrb[0].mxu0 %v402
      %v548 = vpop.f32.mrb[0].mxu0
      %v549 = vadd.f32 0.0, %v548
      %v550 = vpop.f32.mrb[0].mxu0
      %v551 = vpop.f32.mrb[0].mxu0
      %v552 = vadd.f32 0.0, %v551
      %v553 = vpop.f32.mrb[0].mxu0
      %554 = vmatprep.mubr.bf16.mxu0 0
      %555 = vmatmul.mubr.bf16.gmra.mrb[0].mxu0 %v405
      %v556 = vpop.f32.mrb[0].mxu0
      %v557 = vadd.f32 0.0, %v556
      %v558 = vpop.f32.mrb[0].mxu0
      %v559 = vpop.f32.mrb[0].mxu0
      %v560 = vadd.f32 0.0, %v559
      %v561 = vpop.f32.mrb[0].mxu0
      %562 = vmatprep.mubr.bf16.mxu0 0
      %563 = vmatmul.mubr.bf16.gmra.mrb[0].mxu0 %v408
      %v564 = vpop.f32.mrb[0].mxu0
      %v565 = vadd.f32 0.0, %v564
      %v566 = vpop.f32.mrb[0].mxu0
      %v567 = vpop.f32.mrb[0].mxu0
      %v568 = vadd.f32 0.0, %v567
      %v569 = vpop.f32.mrb[0].mxu0
      %570 = vdwg.mxu0
      %v571 = vadd.f32 %v280, %v445
      %v572 = vadd.f32 %v280, %v448
      %v573 = vadd.f32 %v280, %v453
      %v574 = vadd.f32 %v280, %v456
      %v575 = vadd.f32 %v280, %v461
      %v576 = vadd.f32 %v280, %v464
      %v577 = vadd.f32 %v280, %v469
      %v578 = vadd.f32 %v280, %v472
      %v579 = vadd.f32 %v280, %v477
      %v580 = vadd.f32 %v280, %v480
      %v581 = vadd.f32 %v280, %v485
      %v582 = vadd.f32 %v280, %v488
      %v583 = vadd.f32 %v280, %v493
      %v584 = vadd.f32 %v280, %v496
      %v585 = vadd.f32 %v280, %v501
      %v586 = vadd.f32 %v280, %v504
      %v587 = vadd.f32 %v280, %v509
      %v588 = vadd.f32 %v280, %v512
      %v589 = vadd.f32 %v280, %v517
      %v590 = vadd.f32 %v280, %v520
      %v591 = vadd.f32 %v280, %v525
      %v592 = vadd.f32 %v280, %v528
      %v593 = vadd.f32 %v280, %v533
      %v594 = vadd.f32 %v280, %v536
      %v595 = vadd.f32 %v280, %v541
      %v596 = vadd.f32 %v280, %v544
      %v597 = vadd.f32 %v280, %v549
      %v598 = vadd.f32 %v280, %v552
      %v599 = vadd.f32 %v280, %v557
      %v600 = vadd.f32 %v280, %v560
      %v601 = vadd.f32 %v280, %v565
      %v602 = vadd.f32 %v280, %v568
      %v603 = vld [vmem:[%s258] sm:$0xff]
      %v604 = vld [vmem:[%s258 + $0x8] sm:$0xff]
      %v605 = vld [vmem:[%s258 + $0x10] sm:$0xff]
      %v606 = vld [vmem:[%s258 + $0x18] sm:$0xff]
      %v607 = vld [vmem:[%s258 + $0x20] sm:$0xff]
      %v608 = vld [vmem:[%s258 + $0x28] sm:$0xff]
      %v609 = vld [vmem:[%s258 + $0x30] sm:$0xff]
      %v610 = vld [vmem:[%s258 + $0x38] sm:$0xff]
      %v611 = vld [vmem:[%s258 + $0x40] sm:$0xff]
      %v612 = vld [vmem:[%s258 + $0x48] sm:$0xff]
      %v613 = vld [vmem:[%s258 + $0x50] sm:$0xff]
      %v614 = vld [vmem:[%s258 + $0x58] sm:$0xff]
      %v615 = vld [vmem:[%s258 + $0x60] sm:$0xff]
      %v616 = vld [vmem:[%s258 + $0x68] sm:$0xff]
      %v617 = vld [vmem:[%s258 + $0x70] sm:$0xff]
      %v618 = vld [vmem:[%s258 + $0x78] sm:$0xff]
      %v619 = vld [vmem:[%s258 + $0x80] sm:$0xff]
      %v620 = vld [vmem:[%s258 + $0x88] sm:$0xff]
      %v621 = vld [vmem:[%s258 + $0x90] sm:$0xff]
      %v622 = vld [vmem:[%s258 + $0x98] sm:$0xff]
      %v623 = vld [vmem:[%s258 + $0xa0] sm:$0xff]
      %v624 = vld [vmem:[%s258 + $0xa8] sm:$0xff]
      %v625 = vld [vmem:[%s258 + $0xb0] sm:$0xff]
      %v626 = vld [vmem:[%s258 + $0xb8] sm:$0xff]
      %v627 = vld [vmem:[%s258 + $0xc0] sm:$0xff]
      %v628 = vld [vmem:[%s258 + $0xc8] sm:$0xff]
      %v629 = vld [vmem:[%s258 + $0xd0] sm:$0xff]
      %v630 = vld [vmem:[%s258 + $0xd8] sm:$0xff]
      %v631 = vld [vmem:[%s258 + $0xe0] sm:$0xff]
      %v632 = vld [vmem:[%s258 + $0xe8] sm:$0xff]
      %v633 = vld [vmem:[%s258 + $0xf0] sm:$0xff]
      %v634 = vld [vmem:[%s258 + $0xf8] sm:$0xff]
      %v635 = vpack.c.bf16 %v604, %v603
      %v636 = vpack.c.bf16 %v606, %v605
      %v637 = vpack.c.bf16 %v608, %v607
      %v638 = vpack.c.bf16 %v610, %v609
      %v639 = vpack.c.bf16 %v612, %v611
      %v640 = vpack.c.bf16 %v614, %v613
      %v641 = vpack.c.bf16 %v616, %v615
      %v642 = vpack.c.bf16 %v618, %v617
      %v643 = vpack.c.bf16 %v620, %v619
      %v644 = vpack.c.bf16 %v622, %v621
      %v645 = vpack.c.bf16 %v624, %v623
      %v646 = vpack.c.bf16 %v626, %v625
      %v647 = vpack.c.bf16 %v628, %v627
      %v648 = vpack.c.bf16 %v630, %v629
      %v649 = vpack.c.bf16 %v632, %v631
      %v650 = vpack.c.bf16 %v634, %v633
      %v651 = vld [vmem:[%s3 + $0x20] sm:$0xf]
      %v652 = vld [vmem:[%s3 + $0x24] sm:$0xf]
      %v653 = vld [vmem:[%s3 + $0x28] sm:$0xf]
      %v654 = vld [vmem:[%s3 + $0x2c] sm:$0xf]
      %v655 = vld [vmem:[%s3 + $0x30] sm:$0xf]
      %v656 = vld [vmem:[%s3 + $0x34] sm:$0xf]
      %v657 = vld [vmem:[%s3 + $0x38] sm:$0xf]
      %v658 = vld [vmem:[%s3 + $0x3c] sm:$0xf]
      %v667 = vunpack.c.l.b16 %v651
      %v668 = vunpack.c.l.b16 %v652
      %v669 = vunpack.c.l.b16 %v653
      %v670 = vunpack.c.l.b16 %v654
      %v671 = vunpack.c.l.b16 %v655
      %v672 = vunpack.c.l.b16 %v656
      %v673 = vunpack.c.l.b16 %v657
      %v674 = vunpack.c.l.b16 %v658
      %v675 = vpack.c.b16 %v668, %v667
      %v676 = vpack.c.b16 %v670, %v669
      %v677 = vpack.c.b16 %v672, %v671
      %v678 = vpack.c.b16 %v674, %v673
      %v684 = vsel %vm361, %v635, 0
      %v687 = vsel %vm361, %v636, 0
      %v690 = vsel %vm361, %v637, 0
      %v693 = vsel %vm361, %v638, 0
      %v696 = vsel %vm361, %v639, 0
      %v699 = vsel %vm361, %v640, 0
      %v702 = vsel %vm361, %v641, 0
      %v705 = vsel %vm361, %v642, 0
      %v708 = vsel %vm361, %v643, 0
      %v711 = vsel %vm361, %v644, 0
      %v714 = vsel %vm361, %v645, 0
      %v717 = vsel %vm361, %v646, 0
      %v720 = vsel %vm361, %v647, 0
      %v723 = vsel %vm361, %v648, 0
      %v726 = vsel %vm361, %v649, 0
      %v729 = vsel %vm361, %v650, 0
      %731 = vmatprep.subr.bf16.mxu0 0
      %732 = vmatpush1.bf16.msra.mxu0 %v675
      %733 = vmatprep.subr.bf16.mxu0 0
      %734 = vmatpush1.bf16.msra.mxu0 %v676
      %735 = vmatprep.subr.bf16.mxu0 0
      %736 = vmatpush1.bf16.msra.mxu0 %v677
      %737 = vmatprep.subr.bf16.mxu0 0
      %738 = vmatpush1.bf16.msra.mxu0 %v678
      %739 = vmatprep.subr.bf16.mxu0 0
      %740 = vmatpush1.bf16.msra.mxu0 0
      %741 = vmatprep.subr.bf16.mxu0 0
      %742 = vmatpush1.bf16.msra.mxu0 0
      %743 = vmatprep.subr.bf16.mxu0 0
      %744 = vmatpush1.bf16.msra.mxu0 0
      %745 = vmatprep.subr.bf16.mxu0 0
      %746 = vmatpush1.bf16.msra.mxu0 0
      %747 = vmatprep.subr.bf16.mxu0 0
      %748 = vmatpush1.bf16.msra.mxu0 0
      %749 = vmatprep.subr.bf16.mxu0 0
      %750 = vmatpush1.bf16.msra.mxu0 0
      %751 = vmatprep.subr.bf16.mxu0 0
      %752 = vmatpush1.bf16.msra.mxu0 0
      %753 = vmatprep.subr.bf16.mxu0 0
      %754 = vmatpush1.bf16.msra.mxu0 0
      %755 = vmatprep.subr.bf16.mxu0 0
      %756 = vmatpush1.bf16.msra.mxu0 0
      %757 = vmatprep.subr.bf16.mxu0 0
      %758 = vmatpush1.bf16.msra.mxu0 0
      %759 = vmatprep.subr.bf16.mxu0 0
      %760 = vmatpush1.bf16.msra.mxu0 0
      %761 = vmatprep.subr.bf16.mxu0 0
      %762 = vmatpush1.bf16.msra.mxu0 0
      %763 = vmatprep.mubr.bf16.mxu0 0
      %764 = vmatmul.mubr.bf16.gmra.mrb[0].mxu0 %v684
      %v765 = vpop.f32.mrb[0].mxu0
      %v766 = vadd.f32 0.0, %v765
      %v767 = vpop.f32.mrb[0].mxu0
      %v768 = vpop.f32.mrb[0].mxu0
      %v769 = vadd.f32 0.0, %v768
      %v770 = vpop.f32.mrb[0].mxu0
      %771 = vmatprep.mubr.bf16.mxu0 0
      %772 = vmatmul.mubr.bf16.gmra.mrb[0].mxu0 %v687
      %v773 = vpop.f32.mrb[0].mxu0
      %v774 = vadd.f32 0.0, %v773
      %v775 = vpop.f32.mrb[0].mxu0
      %v776 = vpop.f32.mrb[0].mxu0
      %v777 = vadd.f32 0.0, %v776
      %v778 = vpop.f32.mrb[0].mxu0
      %779 = vmatprep.mubr.bf16.mxu0 0
      %780 = vmatmul.mubr.bf16.gmra.mrb[0].mxu0 %v690
      %v781 = vpop.f32.mrb[0].mxu0
      %v782 = vadd.f32 0.0, %v781
      %v783 = vpop.f32.mrb[0].mxu0
      %v784 = vpop.f32.mrb[0].mxu0
      %v785 = vadd.f32 0.0, %v784
      %v786 = vpop.f32.mrb[0].mxu0
      %787 = vmatprep.mubr.bf16.mxu0 0
      %788 = vmatmul.mubr.bf16.gmra.mrb[0].mxu0 %v693
      %v789 = vpop.f32.mrb[0].mxu0
      %v790 = vadd.f32 0.0, %v789
      %v791 = vpop.f32.mrb[0].mxu0
      %v792 = vpop.f32.mrb[0].mxu0
      %v793 = vadd.f32 0.0, %v792
      %v794 = vpop.f32.mrb[0].mxu0
      %795 = vmatprep.mubr.bf16.mxu0 0
      %796 = vmatmul.mubr.bf16.gmra.mrb[0].mxu0 %v696
      %v797 = vpop.f32.mrb[0].mxu0
      %v798 = vadd.f32 0.0, %v797
      %v799 = vpop.f32.mrb[0].mxu0
      %v800 = vpop.f32.mrb[0].mxu0
      %v801 = vadd.f32 0.0, %v800
      %v802 = vpop.f32.mrb[0].mxu0
      %803 = vmatprep.mubr.bf16.mxu0 0
      %804 = vmatmul.mubr.bf16.gmra.mrb[0].mxu0 %v699
      %v805 = vpop.f32.mrb[0].mxu0
      %v806 = vadd.f32 0.0, %v805
      %v807 = vpop.f32.mrb[0].mxu0
      %v808 = vpop.f32.mrb[0].mxu0
      %v809 = vadd.f32 0.0, %v808
      %v810 = vpop.f32.mrb[0].mxu0
      %811 = vmatprep.mubr.bf16.mxu0 0
      %812 = vmatmul.mubr.bf16.gmra.mrb[0].mxu0 %v702
      %v813 = vpop.f32.mrb[0].mxu0
      %v814 = vadd.f32 0.0, %v813
      %v815 = vpop.f32.mrb[0].mxu0
      %v816 = vpop.f32.mrb[0].mxu0
      %v817 = vadd.f32 0.0, %v816
      %v818 = vpop.f32.mrb[0].mxu0
      %819 = vmatprep.mubr.bf16.mxu0 0
      %820 = vmatmul.mubr.bf16.gmra.mrb[0].mxu0 %v705
      %v821 = vpop.f32.mrb[0].mxu0
      %v822 = vadd.f32 0.0, %v821
      %v823 = vpop.f32.mrb[0].mxu0
      %v824 = vpop.f32.mrb[0].mxu0
      %v825 = vadd.f32 0.0, %v824
      %v826 = vpop.f32.mrb[0].mxu0
      %827 = vmatprep.mubr.bf16.mxu0 0
      %828 = vmatmul.mubr.bf16.gmra.mrb[0].mxu0 %v708
      %v829 = vpop.f32.mrb[0].mxu0
      %v830 = vadd.f32 0.0, %v829
      %v831 = vpop.f32.mrb[0].mxu0
      %v832 = vpop.f32.mrb[0].mxu0
      %v833 = vadd.f32 0.0, %v832
      %v834 = vpop.f32.mrb[0].mxu0
      %835 = vmatprep.mubr.bf16.mxu0 0
      %836 = vmatmul.mubr.bf16.gmra.mrb[0].mxu0 %v711
      %v837 = vpop.f32.mrb[0].mxu0
      %v838 = vadd.f32 0.0, %v837
      %v839 = vpop.f32.mrb[0].mxu0
      %v840 = vpop.f32.mrb[0].mxu0
      %v841 = vadd.f32 0.0, %v840
      %v842 = vpop.f32.mrb[0].mxu0
      %843 = vmatprep.mubr.bf16.mxu0 0
      %844 = vmatmul.mubr.bf16.gmra.mrb[0].mxu0 %v714
      %v845 = vpop.f32.mrb[0].mxu0
      %v846 = vadd.f32 0.0, %v845
      %v847 = vpop.f32.mrb[0].mxu0
      %v848 = vpop.f32.mrb[0].mxu0
      %v849 = vadd.f32 0.0, %v848
      %v850 = vpop.f32.mrb[0].mxu0
      %851 = vmatprep.mubr.bf16.mxu0 0
      %852 = vmatmul.mubr.bf16.gmra.mrb[0].mxu0 %v717
      %v853 = vpop.f32.mrb[0].mxu0
      %v854 = vadd.f32 0.0, %v853
      %v855 = vpop.f32.mrb[0].mxu0
      %v856 = vpop.f32.mrb[0].mxu0
      %v857 = vadd.f32 0.0, %v856
      %v858 = vpop.f32.mrb[0].mxu0
      %859 = vmatprep.mubr.bf16.mxu0 0
      %860 = vmatmul.mubr.bf16.gmra.mrb[0].mxu0 %v720
      %v861 = vpop.f32.mrb[0].mxu0
      %v862 = vadd.f32 0.0, %v861
      %v863 = vpop.f32.mrb[0].mxu0
      %v864 = vpop.f32.mrb[0].mxu0
      %v865 = vadd.f32 0.0, %v864
      %v866 = vpop.f32.mrb[0].mxu0
      %867 = vmatprep.mubr.bf16.mxu0 0
      %868 = vmatmul.mubr.bf16.gmra.mrb[0].mxu0 %v723
      %v869 = vpop.f32.mrb[0].mxu0
      %v870 = vadd.f32 0.0, %v869
      %v871 = vpop.f32.mrb[0].mxu0
      %v872 = vpop.f32.mrb[0].mxu0
      %v873 = vadd.f32 0.0, %v872
      %v874 = vpop.f32.mrb[0].mxu0
      %875 = vmatprep.mubr.bf16.mxu0 0
      %876 = vmatmul.mubr.bf16.gmra.mrb[0].mxu0 %v726
      %v877 = vpop.f32.mrb[0].mxu0
      %v878 = vadd.f32 0.0, %v877
      %v879 = vpop.f32.mrb[0].mxu0
      %v880 = vpop.f32.mrb[0].mxu0
      %v881 = vadd.f32 0.0, %v880
      %v882 = vpop.f32.mrb[0].mxu0
      %883 = vmatprep.mubr.bf16.mxu0 0
      %884 = vmatmul.mubr.bf16.gmra.mrb[0].mxu0 %v729
      %v885 = vpop.f32.mrb[0].mxu0
      %v886 = vadd.f32 0.0, %v885
      %v887 = vpop.f32.mrb[0].mxu0
      %v888 = vpop.f32.mrb[0].mxu0
      %v889 = vadd.f32 0.0, %v888
      %v890 = vpop.f32.mrb[0].mxu0
      %891 = vdwg.mxu0
      %v892 = vadd.f32 %v571, %v766
      %v893 = vadd.f32 %v572, %v769
      %v894 = vadd.f32 %v573, %v774
      %v895 = vadd.f32 %v574, %v777
      %v896 = vadd.f32 %v575, %v782
      %v897 = vadd.f32 %v576, %v785
      %v898 = vadd.f32 %v577, %v790
      %v899 = vadd.f32 %v578, %v793
      %v900 = vadd.f32 %v579, %v798
      %v901 = vadd.f32 %v580, %v801
      %v902 = vadd.f32 %v581, %v806
      %v903 = vadd.f32 %v582, %v809
      %v904 = vadd.f32 %v583, %v814
      %v905 = vadd.f32 %v584, %v817
      %v906 = vadd.f32 %v585, %v822
      %v907 = vadd.f32 %v586, %v825
      %v908 = vadd.f32 %v587, %v830
      %v909 = vadd.f32 %v588, %v833
      %v910 = vadd.f32 %v589, %v838
      %v911 = vadd.f32 %v590, %v841
      %v912 = vadd.f32 %v591, %v846
      %v913 = vadd.f32 %v592, %v849
      %v914 = vadd.f32 %v593, %v854
      %v915 = vadd.f32 %v594, %v857
      %v916 = vadd.f32 %v595, %v862
      %v917 = vadd.f32 %v596, %v865
      %v918 = vadd.f32 %v597, %v870
      %v919 = vadd.f32 %v598, %v873
      %v920 = vadd.f32 %v599, %v878
      %v921 = vadd.f32 %v600, %v881
      %v922 = vadd.f32 %v601, %v886
      %v923 = vadd.f32 %v602, %v889
      %v924 = vld [vmem:[%s264] sm:$0xff]
      %v925 = vld [vmem:[%s264 + $0x8] sm:$0xff]
      %v926 = vld [vmem:[%s264 + $0x10] sm:$0xff]
      %v927 = vld [vmem:[%s264 + $0x18] sm:$0xff]
      %v928 = vld [vmem:[%s264 + $0x20] sm:$0xff]
      %v929 = vld [vmem:[%s264 + $0x28] sm:$0xff]
      %v930 = vld [vmem:[%s264 + $0x30] sm:$0xff]
      %v931 = vld [vmem:[%s264 + $0x38] sm:$0xff]
      %v932 = vld [vmem:[%s264 + $0x40] sm:$0xff]
      %v933 = vld [vmem:[%s264 + $0x48] sm:$0xff]
      %v934 = vld [vmem:[%s264 + $0x50] sm:$0xff]
      %v935 = vld [vmem:[%s264 + $0x58] sm:$0xff]
      %v936 = vld [vmem:[%s264 + $0x60] sm:$0xff]
      %v937 = vld [vmem:[%s264 + $0x68] sm:$0xff]
      %v938 = vld [vmem:[%s264 + $0x70] sm:$0xff]
      %v939 = vld [vmem:[%s264 + $0x78] sm:$0xff]
      %v940 = vld [vmem:[%s264 + $0x80] sm:$0xff]
      %v941 = vld [vmem:[%s264 + $0x88] sm:$0xff]
      %v942 = vld [vmem:[%s264 + $0x90] sm:$0xff]
      %v943 = vld [vmem:[%s264 + $0x98] sm:$0xff]
      %v944 = vld [vmem:[%s264 + $0xa0] sm:$0xff]
      %v945 = vld [vmem:[%s264 + $0xa8] sm:$0xff]
      %v946 = vld [vmem:[%s264 + $0xb0] sm:$0xff]
      %v947 = vld [vmem:[%s264 + $0xb8] sm:$0xff]
      %v948 = vld [vmem:[%s264 + $0xc0] sm:$0xff]
      %v949 = vld [vmem:[%s264 + $0xc8] sm:$0xff]
      %v950 = vld [vmem:[%s264 + $0xd0] sm:$0xff]
      %v951 = vld [vmem:[%s264 + $0xd8] sm:$0xff]
      %v952 = vld [vmem:[%s264 + $0xe0] sm:$0xff]
      %v953 = vld [vmem:[%s264 + $0xe8] sm:$0xff]
      %v954 = vld [vmem:[%s264 + $0xf0] sm:$0xff]
      %v955 = vld [vmem:[%s264 + $0xf8] sm:$0xff]
      %v956 = vpack.c.bf16 %v925, %v924
      %v957 = vpack.c.bf16 %v927, %v926
      %v958 = vpack.c.bf16 %v929, %v928
      %v959 = vpack.c.bf16 %v931, %v930
      %v960 = vpack.c.bf16 %v933, %v932
      %v961 = vpack.c.bf16 %v935, %v934
      %v962 = vpack.c.bf16 %v937, %v936
      %v963 = vpack.c.bf16 %v939, %v938
      %v964 = vpack.c.bf16 %v941, %v940
      %v965 = vpack.c.bf16 %v943, %v942
      %v966 = vpack.c.bf16 %v945, %v944
      %v967 = vpack.c.bf16 %v947, %v946
      %v968 = vpack.c.bf16 %v949, %v948
      %v969 = vpack.c.bf16 %v951, %v950
      %v970 = vpack.c.bf16 %v953, %v952
      %v971 = vpack.c.bf16 %v955, %v954
      %v972 = vld [vmem:[%s3 + $0x40] sm:$0xf]
      %v973 = vld [vmem:[%s3 + $0x44] sm:$0xf]
      %v974 = vld [vmem:[%s3 + $0x48] sm:$0xf]
      %v975 = vld [vmem:[%s3 + $0x4c] sm:$0xf]
      %v976 = vld [vmem:[%s3 + $0x50] sm:$0xf]
      %v977 = vld [vmem:[%s3 + $0x54] sm:$0xf]
      %v978 = vld [vmem:[%s3 + $0x58] sm:$0xf]
      %v979 = vld [vmem:[%s3 + $0x5c] sm:$0xf]
      %v988 = vunpack.c.l.b16 %v972
      %v989 = vunpack.c.l.b16 %v973
      %v990 = vunpack.c.l.b16 %v974
      %v991 = vunpack.c.l.b16 %v975
      %v992 = vunpack.c.l.b16 %v976
      %v993 = vunpack.c.l.b16 %v977
      %v994 = vunpack.c.l.b16 %v978
      %v995 = vunpack.c.l.b16 %v979
      %v996 = vpack.c.b16 %v989, %v988
      %v997 = vpack.c.b16 %v991, %v990
      %v998 = vpack.c.b16 %v993, %v992
      %v999 = vpack.c.b16 %v995, %v994
      %v1005 = vsel %vm361, %v956, 0
      %v1008 = vsel %vm361, %v957, 0
      %v1011 = vsel %vm361, %v958, 0
      %v1014 = vsel %vm361, %v959, 0
      %v1017 = vsel %vm361, %v960, 0
      %v1020 = vsel %vm361, %v961, 0
      %v1023 = vsel %vm361, %v962, 0
      %v1026 = vsel %vm361, %v963, 0
      %v1029 = vsel %vm361, %v964, 0
      %v1032 = vsel %vm361, %v965, 0
      %v1035 = vsel %vm361, %v966, 0
      %v1038 = vsel %vm361, %v967, 0
      %v1041 = vsel %vm361, %v968, 0
      %v1044 = vsel %vm361, %v969, 0
      %v1047 = vsel %vm361, %v970, 0
      %v1050 = vsel %vm361, %v971, 0
      %1052 = vmatprep.subr.bf16.mxu0 0
      %1053 = vmatpush1.bf16.msra.mxu0 %v996
      %1054 = vmatprep.subr.bf16.mxu0 0
      %1055 = vmatpush1.bf16.msra.mxu0 %v997
      %1056 = vmatprep.subr.bf16.mxu0 0
      %1057 = vmatpush1.bf16.msra.mxu0 %v998
      %1058 = vmatprep.subr.bf16.mxu0 0
      %1059 = vmatpush1.bf16.msra.mxu0 %v999
      %1060 = vmatprep.subr.bf16.mxu0 0
      %1061 = vmatpush1.bf16.msra.mxu0 0
      %1062 = vmatprep.subr.bf16.mxu0 0
      %1063 = vmatpush1.bf16.msra.mxu0 0
      %1064 = vmatprep.subr.bf16.mxu0 0
      %1065 = vmatpush1.bf16.msra.mxu0 0
      %1066 = vmatprep.subr.bf16.mxu0 0
      %1067 = vmatpush1.bf16.msra.mxu0 0
      %1068 = vmatprep.subr.bf16.mxu0 0
      %1069 = vmatpush1.bf16.msra.mxu0 0
      %1070 = vmatprep.subr.bf16.mxu0 0
      %1071 = vmatpush1.bf16.msra.mxu0 0
      %1072 = vmatprep.subr.bf16.mxu0 0
      %1073 = vmatpush1.bf16.msra.mxu0 0
      %1074 = vmatprep.subr.bf16.mxu0 0
      %1075 = vmatpush1.bf16.msra.mxu0 0
      %1076 = vmatprep.subr.bf16.mxu0 0
      %1077 = vmatpush1.bf16.msra.mxu0 0
      %1078 = vmatprep.subr.bf16.mxu0 0
      %1079 = vmatpush1.bf16.msra.mxu0 0
      %1080 = vmatprep.subr.bf16.mxu0 0
      %1081 = vmatpush1.bf16.msra.mxu0 0
      %1082 = vmatprep.subr.bf16.mxu0 0
      %1083 = vmatpush1.bf16.msra.mxu0 0
      %1084 = vmatprep.mubr.bf16.mxu0 0
      %1085 = vmatmul.mubr.bf16.gmra.mrb[0].mxu0 %v1005
      %v1086 = vpop.f32.mrb[0].mxu0
      %v1087 = vadd.f32 0.0, %v1086
      %v1088 = vpop.f32.mrb[0].mxu0
      %v1089 = vpop.f32.mrb[0].mxu0
      %v1090 = vadd.f32 0.0, %v1089
      %v1091 = vpop.f32.mrb[0].mxu0
      %1092 = vmatprep.mubr.bf16.mxu0 0
      %1093 = vmatmul.mubr.bf16.gmra.mrb[0].mxu0 %v1008
      %v1094 = vpop.f32.mrb[0].mxu0
      %v1095 = vadd.f32 0.0, %v1094
      %v1096 = vpop.f32.mrb[0].mxu0
      %v1097 = vpop.f32.mrb[0].mxu0
      %v1098 = vadd.f32 0.0, %v1097
      %v1099 = vpop.f32.mrb[0].mxu0
      %1100 = vmatprep.mubr.bf16.mxu0 0
      %1101 = vmatmul.mubr.bf16.gmra.mrb[0].mxu0 %v1011
      %v1102 = vpop.f32.mrb[0].mxu0
      %v1103 = vadd.f32 0.0, %v1102
      %v1104 = vpop.f32.mrb[0].mxu0
      %v1105 = vpop.f32.mrb[0].mxu0
      %v1106 = vadd.f32 0.0, %v1105
      %v1107 = vpop.f32.mrb[0].mxu0
      %1108 = vmatprep.mubr.bf16.mxu0 0
      %1109 = vmatmul.mubr.bf16.gmra.mrb[0].mxu0 %v1014
      %v1110 = vpop.f32.mrb[0].mxu0
      %v1111 = vadd.f32 0.0, %v1110
      %v1112 = vpop.f32.mrb[0].mxu0
      %v1113 = vpop.f32.mrb[0].mxu0
      %v1114 = vadd.f32 0.0, %v1113
      %v1115 = vpop.f32.mrb[0].mxu0
      %1116 = vmatprep.mubr.bf16.mxu0 0
      %1117 = vmatmul.mubr.bf16.gmra.mrb[0].mxu0 %v1017
      %v1118 = vpop.f32.mrb[0].mxu0
      %v1119 = vadd.f32 0.0, %v1118
      %v1120 = vpop.f32.mrb[0].mxu0
      %v1121 = vpop.f32.mrb[0].mxu0
      %v1122 = vadd.f32 0.0, %v1121
      %v1123 = vpop.f32.mrb[0].mxu0
      %1124 = vmatprep.mubr.bf16.mxu0 0
      %1125 = vmatmul.mubr.bf16.gmra.mrb[0].mxu0 %v1020
      %v1126 = vpop.f32.mrb[0].mxu0
      %v1127 = vadd.f32 0.0, %v1126
      %v1128 = vpop.f32.mrb[0].mxu0
      %v1129 = vpop.f32.mrb[0].mxu0
      %v1130 = vadd.f32 0.0, %v1129
      %v1131 = vpop.f32.mrb[0].mxu0
      %1132 = vmatprep.mubr.bf16.mxu0 0
      %1133 = vmatmul.mubr.bf16.gmra.mrb[0].mxu0 %v1023
      %v1134 = vpop.f32.mrb[0].mxu0
      %v1135 = vadd.f32 0.0, %v1134
      %v1136 = vpop.f32.mrb[0].mxu0
      %v1137 = vpop.f32.mrb[0].mxu0
      %v1138 = vadd.f32 0.0, %v1137
      %v1139 = vpop.f32.mrb[0].mxu0
      %1140 = vmatprep.mubr.bf16.mxu0 0
      %1141 = vmatmul.mubr.bf16.gmra.mrb[0].mxu0 %v1026
      %v1142 = vpop.f32.mrb[0].mxu0
      %v1143 = vadd.f32 0.0, %v1142
      %v1144 = vpop.f32.mrb[0].mxu0
      %v1145 = vpop.f32.mrb[0].mxu0
      %v1146 = vadd.f32 0.0, %v1145
      %v1147 = vpop.f32.mrb[0].mxu0
      %1148 = vmatprep.mubr.bf16.mxu0 0
      %1149 = vmatmul.mubr.bf16.gmra.mrb[0].mxu0 %v1029
      %v1150 = vpop.f32.mrb[0].mxu0
      %v1151 = vadd.f32 0.0, %v1150
      %v1152 = vpop.f32.mrb[0].mxu0
      %v1153 = vpop.f32.mrb[0].mxu0
      %v1154 = vadd.f32 0.0, %v1153
      %v1155 = vpop.f32.mrb[0].mxu0
      %1156 = vmatprep.mubr.bf16.mxu0 0
      %1157 = vmatmul.mubr.bf16.gmra.mrb[0].mxu0 %v1032
      %v1158 = vpop.f32.mrb[0].mxu0
      %v1159 = vadd.f32 0.0, %v1158
      %v1160 = vpop.f32.mrb[0].mxu0
      %v1161 = vpop.f32.mrb[0].mxu0
      %v1162 = vadd.f32 0.0, %v1161
      %v1163 = vpop.f32.mrb[0].mxu0
      %1164 = vmatprep.mubr.bf16.mxu0 0
      %1165 = vmatmul.mubr.bf16.gmra.mrb[0].mxu0 %v1035
      %v1166 = vpop.f32.mrb[0].mxu0
      %v1167 = vadd.f32 0.0, %v1166
      %v1168 = vpop.f32.mrb[0].mxu0
      %v1169 = vpop.f32.mrb[0].mxu0
      %v1170 = vadd.f32 0.0, %v1169
      %v1171 = vpop.f32.mrb[0].mxu0
      %1172 = vmatprep.mubr.bf16.mxu0 0
      %1173 = vmatmul.mubr.bf16.gmra.mrb[0].mxu0 %v1038
      %v1174 = vpop.f32.mrb[0].mxu0
      %v1175 = vadd.f32 0.0, %v1174
      %v1176 = vpop.f32.mrb[0].mxu0
      %v1177 = vpop.f32.mrb[0].mxu0
      %v1178 = vadd.f32 0.0, %v1177
      %v1179 = vpop.f32.mrb[0].mxu0
      %1180 = vmatprep.mubr.bf16.mxu0 0
      %1181 = vmatmul.mubr.bf16.gmra.mrb[0].mxu0 %v1041
      %v1182 = vpop.f32.mrb[0].mxu0
      %v1183 = vadd.f32 0.0, %v1182
      %v1184 = vpop.f32.mrb[0].mxu0
      %v1185 = vpop.f32.mrb[0].mxu0
      %v1186 = vadd.f32 0.0, %v1185
      %v1187 = vpop.f32.mrb[0].mxu0
      %1188 = vmatprep.mubr.bf16.mxu0 0
      %1189 = vmatmul.mubr.bf16.gmra.mrb[0].mxu0 %v1044
      %v1190 = vpop.f32.mrb[0].mxu0
      %v1191 = vadd.f32 0.0, %v1190
      %v1192 = vpop.f32.mrb[0].mxu0
      %v1193 = vpop.f32.mrb[0].mxu0
      %v1194 = vadd.f32 0.0, %v1193
      %v1195 = vpop.f32.mrb[0].mxu0
      %1196 = vmatprep.mubr.bf16.mxu0 0
      %1197 = vmatmul.mubr.bf16.gmra.mrb[0].mxu0 %v1047
      %v1198 = vpop.f32.mrb[0].mxu0
      %v1199 = vadd.f32 0.0, %v1198
      %v1200 = vpop.f32.mrb[0].mxu0
      %v1201 = vpop.f32.mrb[0].mxu0
      %v1202 = vadd.f32 0.0, %v1201
      %v1203 = vpop.f32.mrb[0].mxu0
      %1204 = vmatprep.mubr.bf16.mxu0 0
      %1205 = vmatmul.mubr.bf16.gmra.mrb[0].mxu0 %v1050
      %v1206 = vpop.f32.mrb[0].mxu0
      %v1207 = vadd.f32 0.0, %v1206
      %v1208 = vpop.f32.mrb[0].mxu0
      %v1209 = vpop.f32.mrb[0].mxu0
      %v1210 = vadd.f32 0.0, %v1209
      %v1211 = vpop.f32.mrb[0].mxu0
      %1212 = vdwg.mxu0
      %v1213 = vadd.f32 %v892, %v1087
      %v1214 = vadd.f32 %v893, %v1090
      %v1215 = vadd.f32 %v894, %v1095
      %v1216 = vadd.f32 %v895, %v1098
      %v1217 = vadd.f32 %v896, %v1103
      %v1218 = vadd.f32 %v897, %v1106
      %v1219 = vadd.f32 %v898, %v1111
      %v1220 = vadd.f32 %v899, %v1114
      %v1221 = vadd.f32 %v900, %v1119
      %v1222 = vadd.f32 %v901, %v1122
      %v1223 = vadd.f32 %v902, %v1127
      %v1224 = vadd.f32 %v903, %v1130
      %v1225 = vadd.f32 %v904, %v1135
      %v1226 = vadd.f32 %v905, %v1138
      %v1227 = vadd.f32 %v906, %v1143
      %v1228 = vadd.f32 %v907, %v1146
      %v1229 = vadd.f32 %v908, %v1151
      %v1230 = vadd.f32 %v909, %v1154
      %v1231 = vadd.f32 %v910, %v1159
      %v1232 = vadd.f32 %v911, %v1162
      %v1233 = vadd.f32 %v912, %v1167
      %v1234 = vadd.f32 %v913, %v1170
      %v1235 = vadd.f32 %v914, %v1175
      %v1236 = vadd.f32 %v915, %v1178
      %v1237 = vadd.f32 %v916, %v1183
      %v1238 = vadd.f32 %v917, %v1186
      %v1239 = vadd.f32 %v918, %v1191
      %v1240 = vadd.f32 %v919, %v1194
      %v1241 = vadd.f32 %v920, %v1199
      %v1242 = vadd.f32 %v921, %v1202
      %v1243 = vadd.f32 %v922, %v1207
      %v1244 = vadd.f32 %v923, %v1210
      %v1245 = vmax.f32 %v1213, 0.0
      %v1246 = vmax.f32 %v1214, 0.0
      %v1247 = vmax.f32 %v1215, 0.0
      %v1248 = vmax.f32 %v1216, 0.0
      %v1249 = vmax.f32 %v1217, 0.0
      %v1250 = vmax.f32 %v1218, 0.0
      %v1251 = vmax.f32 %v1219, 0.0
      %v1252 = vmax.f32 %v1220, 0.0
      %v1253 = vmax.f32 %v1221, 0.0
      %v1254 = vmax.f32 %v1222, 0.0
      %v1255 = vmax.f32 %v1223, 0.0
      %v1256 = vmax.f32 %v1224, 0.0
      %v1257 = vmax.f32 %v1225, 0.0
      %v1258 = vmax.f32 %v1226, 0.0
      %v1259 = vmax.f32 %v1227, 0.0
      %v1260 = vmax.f32 %v1228, 0.0
      %v1261 = vmax.f32 %v1229, 0.0
      %v1262 = vmax.f32 %v1230, 0.0
      %v1263 = vmax.f32 %v1231, 0.0
      %v1264 = vmax.f32 %v1232, 0.0
      %v1265 = vmax.f32 %v1233, 0.0
      %v1266 = vmax.f32 %v1234, 0.0
      %v1267 = vmax.f32 %v1235, 0.0
      %v1268 = vmax.f32 %v1236, 0.0
      %v1269 = vmax.f32 %v1237, 0.0
      %v1270 = vmax.f32 %v1238, 0.0
      %v1271 = vmax.f32 %v1239, 0.0
      %v1272 = vmax.f32 %v1240, 0.0
      %v1273 = vmax.f32 %v1241, 0.0
      %v1274 = vmax.f32 %v1242, 0.0
      %v1275 = vmax.f32 %v1243, 0.0
      %v1276 = vmax.f32 %v1244, 0.0
      %1277 = vst.msk [vmem:[%s270] sm:$0xff] %vm361, %v1245
      %1278 = vst.msk [vmem:[%s270 + $0x8] sm:$0xff] %vm361, %v1246
      %1279 = vst.msk [vmem:[%s270 + $0x10] sm:$0xff] %vm361, %v1247
      %1280 = vst.msk [vmem:[%s270 + $0x18] sm:$0xff] %vm361, %v1248
      %1281 = vst.msk [vmem:[%s270 + $0x20] sm:$0xff] %vm361, %v1249
      %1282 = vst.msk [vmem:[%s270 + $0x28] sm:$0xff] %vm361, %v1250
      %1283 = vst.msk [vmem:[%s270 + $0x30] sm:$0xff] %vm361, %v1251
      %1284 = vst.msk [vmem:[%s270 + $0x38] sm:$0xff] %vm361, %v1252
      %1285 = vst.msk [vmem:[%s270 + $0x40] sm:$0xff] %vm361, %v1253
      %1286 = vst.msk [vmem:[%s270 + $0x48] sm:$0xff] %vm361, %v1254
      %1287 = vst.msk [vmem:[%s270 + $0x50] sm:$0xff] %vm361, %v1255
      %1288 = vst.msk [vmem:[%s270 + $0x58] sm:$0xff] %vm361, %v1256
      %1289 = vst.msk [vmem:[%s270 + $0x60] sm:$0xff] %vm361, %v1257
      %1290 = vst.msk [vmem:[%s270 + $0x68] sm:$0xff] %vm361, %v1258
      %1291 = vst.msk [vmem:[%s270 + $0x70] sm:$0xff] %vm361, %v1259
      %1292 = vst.msk [vmem:[%s270 + $0x78] sm:$0xff] %vm361, %v1260
      %1293 = vst.msk [vmem:[%s270 + $0x80] sm:$0xff] %vm361, %v1261
      %1294 = vst.msk [vmem:[%s270 + $0x88] sm:$0xff] %vm361, %v1262
      %1295 = vst.msk [vmem:[%s270 + $0x90] sm:$0xff] %vm361, %v1263
      %1296 = vst.msk [vmem:[%s270 + $0x98] sm:$0xff] %vm361, %v1264
      %1297 = vst.msk [vmem:[%s270 + $0xa0] sm:$0xff] %vm361, %v1265
      %1298 = vst.msk [vmem:[%s270 + $0xa8] sm:$0xff] %vm361, %v1266
      %1299 = vst.msk [vmem:[%s270 + $0xb0] sm:$0xff] %vm361, %v1267
      %1300 = vst.msk [vmem:[%s270 + $0xb8] sm:$0xff] %vm361, %v1268
      %1301 = vst.msk [vmem:[%s270 + $0xc0] sm:$0xff] %vm361, %v1269
      %1302 = vst.msk [vmem:[%s270 + $0xc8] sm:$0xff] %vm361, %v1270
      %1303 = vst.msk [vmem:[%s270 + $0xd0] sm:$0xff] %vm361, %v1271
      %1304 = vst.msk [vmem:[%s270 + $0xd8] sm:$0xff] %vm361, %v1272
      %1305 = vst.msk [vmem:[%s270 + $0xe0] sm:$0xff] %vm361, %v1273
      %1306 = vst.msk [vmem:[%s270 + $0xe8] sm:$0xff] %vm361, %v1274
      %1307 = vst.msk [vmem:[%s270 + $0xf0] sm:$0xff] %vm361, %v1275
      %1308 = vst.msk [vmem:[%s270 + $0xf8] sm:$0xff] %vm361, %v1276
      %s1309 = smul.u32 32, %s16
      %p1310 = scmp.lt.s32.totalorder %s1309, 63
      %s1311 = scalar_select %p1310, %s1309, 63
      %s1312 = smul.addr %s1311, 8
      %s1313 = scalar_lea.vmem %s5, %s1312
      // Predicated region
      $region41: #{block_forward.9} parent=39 // pred_check
        %p1314 = pneg %p154
      $region42: #{block_forward.9} parent=39 // pred_check_branch
        %1316 = sbr.rel (%p1314) target = $region44
      $region43: #{block_forward.9} parent=39 // pred_region
        %s1317 = smul.u32 32, %s16
      $region44: #{block_forward.9} parent=39 // pred_fallthru
        _
    $region40: #{block_forward.9} parent=5 // pred_fallthru
      _
    %p1318 = scmp.le.s32.totalorder 2, %s11
    // Predicated region
    $region45: #{block_forward.9} parent=5 // pred_check
      %p1319 = pneg %p1318
    $region46: #{block_forward.9} parent=5 // pred_check_branch
      %1321 = sbr.rel (%p1319) target = $region48
    $region47: #{block_forward.9} parent=5 // pred_region
      %s1322 = ssub.s32 %s11, 2
      // Predicated region
      $region49: #{block_forward.9} parent=47 // pred_check
        %p1323 = pneg %p160
      $region50: #{block_forward.9} parent=47 // pred_check_branch
        %1325 = sbr.rel (%p1323) target = $region52
      $region51: #{block_forward.9} parent=47 // pred_region
        %s1326 = smul.u32 32, %s17
        %p1327 = scmp.lt.s32.totalorder %s1326, 63
        %s1328 = scalar_select %p1327, %s1326, 63
        %s1329 = smul.addr %s1328, 8
        %s1330 = scalar_lea.vmem %s5, %s1329
      $region52: #{block_forward.9} parent=47 // pred_fallthru
        _
    $region48: #{block_forward.9} parent=5 // pred_fallthru
      _
  $region6: #{block_forward.9} parent=0 // loop_footer
    %s15 = sadd.s32 1, %s11
  $region7: #{block_forward.9} parent=0 // loop_footer_branch
    %10 = sbr.rel target = $region3
  $region8: #{block_forward.9} parent=0 // loop_exit
    _

// kernel: block_forward.11
$region0: #{block_forward.11}
  #allocation0 [shape = 'u32[]', space=smem, size = 0x4, offset = 0x4, fixed_abs, tag = 'smem constant byte address 0x4 - core index']
  #allocation1 [shape = 'u32[144,128]{1,0:T(1,128)}', space=vmem, size = 0x12000, scoped, tag = 'internal scratch']
  %s0 = inlined_call_operand.vmem [shape: f32[512,64], index: 0, kind: input, shape index: {}]
  %s1 = inlined_call_operand.vmem [shape: f32[512,64], index: 1, kind: input, shape index: {}]
  %s2 = inlined_call_operand.vmem [shape: f32[512,64], index: 2, kind: input, shape index: {}]
  %s3 = inlined_call_operand.vmem [shape: f32[512,64], index: 3, kind: input, shape index: {}]
  %s4 = inlined_call_operand.vmem [shape: bf16[256,64], index: 4, kind: input, shape index: {}]
  %s5 = inlined_call_operand.vmem [shape: f32[1,64], index: 5, kind: input, shape index: {}]
  %s6 = inlined_call_operand.hbm [shape: f32[512,64], index: 6, kind: output, shape index: {}]
  %s7 = sld [smem:[#allocation0]]
  $region57: #{block_forward.11} parent=0
    _
  %s9 = ssub.s32 1, %s7
  %s10 = scalar_select 0, %s9, %s7
  $region1: #{block_forward.11} parent=0
    #allocation2 [shape = 'u8[262144]{0}', space=vmem, size = 0x40000, scoped, tag = 'output window, operand 0']
    #allocation3 [shape = 's32[2]{0}', space=sflag, size = 0x8, scoped, tag = 'scoped memory for block_forward.11']
    %11 = vsyncpa [#allocation3], 0
    %s12 = scalar_lea.sflag [#allocation3], 1
    %13 = vsyncpa %s12, 0
    loop: start=0, step=1, limit=4
    $region2: #{block_forward.11} parent=1 // loop_pre_header
      _
    $region3: #{block_forward.11} parent=1 // loop_header
      %s15 = sphi 0, %s19
      %p16 = scmp.ge.s32.totalorder %s15, 4
      %s25 = sphi 0, %s27
      %s28 = sphi 0, %s25
      %s29 = sphi 0, %s28
      %s45 = sphi 0, %s29
      %s51 = sphi 0, %s53
      %s54 = sphi 0, %s51
      %s55 = sphi 0, %s54
      %s71 = sphi 0, %s55
      %s77 = sphi 0, %s79
      %s80 = sphi 0, %s77
      %s81 = sphi 0, %s80
      %s97 = sphi 0, %s81
      %s103 = sphi 0, %s105
      %s106 = sphi 0, %s103
      %s107 = sphi 0, %s106
      %s123 = sphi 0, %s107
      %s127 = sphi 0, %s127
      %s129 = sphi 0, %s127
      %s130 = sphi 0, %s129
      %s144 = sphi 0, %s130
      %s148 = sphi 0, %s148
      %s150 = sphi 0, %s148
      %s151 = sphi 0, %s150
      %s165 = sphi 0, %s151
      %s171 = sphi 0, %s173
      %s174 = sphi 0, %s171
      %s175 = sphi 0, %s174
      %s191 = sphi 0, %s175
    $region4: #{block_forward.11} parent=1 // loop_header_branch
      %18 = sbr.rel (%p16) target = $region8
    $region5: #{block_forward.11} parent=1 // loop_body
      %s20 = ssub.s32 %s15, 1
      %s21 = ssub.s32 %s15, 2
      %s22 = sadd.s32 %s15, 1
      %s23 = ssub.s32 %s15, %s22
      %p24 = scmp.eq.s32.totalorder %s23, 0
      %s26 = sadd.s32 %s25, 1
      %s27 = scalar_select %p24, %s25, %s26
      %p30 = pneg %p24
      %p31 = scmp.eq.s32.totalorder %s15, 1
      %p32 = por %p30, %p31
      %p33 = scmp.ne.s32.totalorder %s25, %s28
      %p34 = scmp.eq.s32.totalorder %s15, 0
      %p35 = por %p33, %p34
      %p36 = scmp.ne.s32.totalorder %s25, %s28
      %p37 = scmp.eq.s32.totalorder %s20, 1
      %p38 = por %p36, %p37
      %p39 = scmp.ne.s32.totalorder %s28, %s29
      %p40 = scmp.eq.s32.totalorder %s20, 0
      %p41 = por %p39, %p40
      %p42 = scmp.ne.s32.totalorder %s28, %s29
      %p43 = scmp.eq.s32.totalorder %s21, 1
      %p44 = por %p42, %p43
      %p46 = scmp.ne.s32.totalorder %s29, %s45
      %p47 = scmp.eq.s32.totalorder %s21, 0
      %p48 = por %p46, %p47
      %s49 = ssub.s32 %s15, %s22
      %p50 = scmp.eq.s32.totalorder %s49, 0
      %s52 = sadd.s32 %s51, 1
      %s53 = scalar_select %p50, %s51, %s52
      %p56 = pneg %p50
      %p57 = scmp.eq.s32.totalorder %s15, 1
      %p58 = por %p56, %p57
      %p59 = scmp.ne.s32.totalorder %s51, %s54
      %p60 = scmp.eq.s32.totalorder %s15, 0
      %p61 = por %p59, %p60
      %p62 = scmp.ne.s32.totalorder %s51, %s54
      %p63 = scmp.eq.s32.totalorder %s20, 1
      %p64 = por %p62, %p63
      %p65 = scmp.ne.s32.totalorder %s54, %s55
      %p66 = scmp.eq.s32.totalorder %s20, 0
      %p67 = por %p65, %p66
      %p68 = scmp.ne.s32.totalorder %s54, %s55
      %p69 = scmp.eq.s32.totalorder %s21, 1
      %p70 = por %p68, %p69
      %p72 = scmp.ne.s32.totalorder %s55, %s71
      %p73 = scmp.eq.s32.totalorder %s21, 0
      %p74 = por %p72, %p73
      %s75 = ssub.s32 %s15, %s22
      %p76 = scmp.eq.s32.totalorder %s75, 0
      %s78 = sadd.s32 %s77, 1
      %s79 = scalar_select %p76, %s77, %s78
      %p82 = pneg %p76
      %p83 = scmp.eq.s32.totalorder %s15, 1
      %p84 = por %p82, %p83
      %p85 = scmp.ne.s32.totalorder %s77, %s80
      %p86 = scmp.eq.s32.totalorder %s15, 0
      %p87 = por %p85, %p86
      %p88 = scmp.ne.s32.totalorder %s77, %s80
      %p89 = scmp.eq.s32.totalorder %s20, 1
      %p90 = por %p88, %p89
      %p91 = scmp.ne.s32.totalorder %s80, %s81
      %p92 = scmp.eq.s32.totalorder %s20, 0
      %p93 = por %p91, %p92
      %p94 = scmp.ne.s32.totalorder %s80, %s81
      %p95 = scmp.eq.s32.totalorder %s21, 1
      %p96 = por %p94, %p95
      %p98 = scmp.ne.s32.totalorder %s81, %s97
      %p99 = scmp.eq.s32.totalorder %s21, 0
      %p100 = por %p98, %p99
      %s101 = ssub.s32 %s15, %s22
      %p102 = scmp.eq.s32.totalorder %s101, 0
      %s104 = sadd.s32 %s103, 1
      %s105 = scalar_select %p102, %s103, %s104
      %p108 = pneg %p102
      %p109 = scmp.eq.s32.totalorder %s15, 1
      %p110 = por %p108, %p109
      %p111 = scmp.ne.s32.totalorder %s103, %s106
      %p112 = scmp.eq.s32.totalorder %s15, 0
      %p113 = por %p111, %p112
      %p114 = scmp.ne.s32.totalorder %s103, %s106
      %p115 = scmp.eq.s32.totalorder %s20, 1
      %p116 = por %p114, %p115
      %p117 = scmp.ne.s32.totalorder %s106, %s107
      %p118 = scmp.eq.s32.totalorder %s20, 0
      %p119 = por %p117, %p118
      %p120 = scmp.ne.s32.totalorder %s106, %s107
      %p121 = scmp.eq.s32.totalorder %s21, 1
      %p122 = por %p120, %p121
      %p124 = scmp.ne.s32.totalorder %s107, %s123
      %p125 = scmp.eq.s32.totalorder %s21, 0
      %p126 = por %p124, %p125
      %s128 = sadd.s32 %s127, 1
      %p131 = scmp.eq.s32.totalorder %s15, 1
      %p132 = scmp.ne.s32.totalorder %s127, %s129
      %p133 = scmp.eq.s32.totalorder %s15, 0
      %p134 = por %p132, %p133
      %p135 = scmp.ne.s32.totalorder %s127, %s129
      %p136 = scmp.eq.s32.totalorder %s20, 1
      %p137 = por %p135, %p136
      %p138 = scmp.ne.s32.totalorder %s129, %s130
      %p139 = scmp.eq.s32.totalorder %s20, 0
      %p140 = por %p138, %p139
      %p141 = scmp.ne.s32.totalorder %s129, %s130
      %p142 = scmp.eq.s32.totalorder %s21, 1
      %p143 = por %p141, %p142
      %p145 = scmp.ne.s32.totalorder %s130, %s144
      %p146 = scmp.eq.s32.totalorder %s21, 0
      %p147 = por %p145, %p146
      %s149 = sadd.s32 %s148, 1
      %p152 = scmp.eq.s32.totalorder %s15, 1
      %p153 = scmp.ne.s32.totalorder %s148, %s150
      %p154 = scmp.eq.s32.totalorder %s15, 0
      %p155 = por %p153, %p154
      %p156 = scmp.ne.s32.totalorder %s148, %s150
      %p157 = scmp.eq.s32.totalorder %s20, 1
      %p158 = por %p156, %p157
      %p159 = scmp.ne.s32.totalorder %s150, %s151
      %p160 = scmp.eq.s32.totalorder %s20, 0
      %p161 = por %p159, %p160
      %p162 = scmp.ne.s32.totalorder %s150, %s151
      %p163 = scmp.eq.s32.totalorder %s21, 1
      %p164 = por %p162, %p163
      %p166 = scmp.ne.s32.totalorder %s151, %s165
      %p167 = scmp.eq.s32.totalorder %s21, 0
      %p168 = por %p166, %p167
      %s169 = ssub.s32 %s15, %s22
      %p170 = scmp.eq.s32.totalorder %s169, 0
      %s172 = sadd.s32 %s171, 1
      %s173 = scalar_select %p170, %s171, %s172
      %p176 = pneg %p170
      %p177 = scmp.eq.s32.totalorder %s15, 1
      %p178 = por %p176, %p177
      %p179 = scmp.ne.s32.totalorder %s171, %s174
      %p180 = scmp.eq.s32.totalorder %s15, 0
      %p181 = por %p179, %p180
      %p182 = scmp.ne.s32.totalorder %s171, %s174
      %p183 = scmp.eq.s32.totalorder %s20, 1
      %p184 = por %p182, %p183
      %p185 = scmp.ne.s32.totalorder %s174, %s175
      %p186 = scmp.eq.s32.totalorder %s20, 0
      %p187 = por %p185, %p186
      %p188 = scmp.ne.s32.totalorder %s174, %s175
      %p189 = scmp.eq.s32.totalorder %s21, 1
      %p190 = por %p188, %p189
      %p192 = scmp.ne.s32.totalorder %s175, %s191
      %p193 = scmp.eq.s32.totalorder %s21, 0
      %p194 = por %p192, %p193
      %p195 = scmp.le.s32.totalorder 1, %s15
      %p196 = scmp.lt.s32.totalorder %s15, 3
      %p197 = pnand %p195, %p196
      %p198 = pneg %p197
      // Predicated region
      $region9: #{block_forward.11} parent=5 // pred_check
        _
      $region10: #{block_forward.11} parent=5 // pred_check_branch
        %200 = sbr.rel (%p197) target = $region12
      $region11: #{block_forward.11} parent=5 // pred_region
        %s201 = ssub.s32 %s15, 1
        // Predicated region
        $region13: #{block_forward.11} parent=11 // pred_check
          %p202 = pneg %p140
        $region14: #{block_forward.11} parent=11 // pred_check_branch
          %204 = sbr.rel (%p202) target = $region16
        $region15: #{block_forward.11} parent=11 // pred_region
          _
        $region16: #{block_forward.11} parent=11 // pred_fallthru
          _
        // Predicated region
        $region17: #{block_forward.11} parent=11 // pred_check
          %p205 = pneg %p161
        $region18: #{block_forward.11} parent=11 // pred_check_branch
          %207 = sbr.rel (%p205) target = $region20
        $region19: #{block_forward.11} parent=11 // pred_region
          _
        $region20: #{block_forward.11} parent=11 // pred_fallthru
          _
      $region12: #{block_forward.11} parent=5 // pred_fallthru
        _
      %p208 = scmp.lt.s32.totalorder %s15, 2
      // Predicated region
      $region21: #{block_forward.11} parent=5 // pred_check
        %p209 = pneg %p208
      $region22: #{block_forward.11} parent=5 // pred_check_branch
        %211 = sbr.rel (%p209) target = $region24
      $region23: #{block_forward.11} parent=5 // pred_region
        // Predicated region
        $region25: #{block_forward.11} parent=23 // pred_check
          %p212 = pneg %p35
        $region26: #{block_forward.11} parent=23 // pred_check_branch
          %214 = sbr.rel (%p212) target = $region28
        $region27: #{block_forward.11} parent=23 // pred_region
          %s215 = smul.u32 32, %s15
          %p216 = scmp.lt.s32.totalorder %s215, 63
          %s217 = scalar_select %p216, %s215, 63
          %s218 = smul.addr %s217, 8
          %s219 = scalar_lea.vmem %s0, %s218
          %s220 = smul.u32 32, %s15
        $region28: #{block_forward.11} parent=23 // pred_fallthru
          _
        // Predicated region
        $region29: #{block_forward.11} parent=23 // pred_check
          %p221 = pneg %p61
        $region30: #{block_forward.11} parent=23 // pred_check_branch
          %223 = sbr.rel (%p221) target = $region32
        $region31: #{block_forward.11} parent=23 // pred_region
          %s224 = smul.u32 32, %s15
          %p225 = scmp.lt.s32.totalorder %s224, 63
          %s226 = scalar_select %p225, %s224, 63
          %s227 = smul.addr %s226, 8
          %s228 = scalar_lea.vmem %s1, %s227
          %s229 = smul.u32 32, %s15
        $region32: #{block_forward.11} parent=23 // pred_fallthru
          _
        // Predicated region
        $region33: #{block_forward.11} parent=23 // pred_check
          %p230 = pneg %p87
        $region34: #{block_forward.11} parent=23 // pred_check_branch
          %232 = sbr.rel (%p230) target = $region36
        $region35: #{block_forward.11} parent=23 // pred_region
          %s233 = smul.u32 32, %s15
          %p234 = scmp.lt.s32.totalorder %s233, 63
          %s235 = scalar_select %p234, %s233, 63
          %s236 = smul.addr %s235, 8
          %s237 = scalar_lea.vmem %s2, %s236
          %s238 = smul.u32 32, %s15
        $region36: #{block_forward.11} parent=23 // pred_fallthru
          _
        // Predicated region
        $region37: #{block_forward.11} parent=23 // pred_check
          %p239 = pneg %p113
        $region38: #{block_forward.11} parent=23 // pred_check_branch
          %241 = sbr.rel (%p239) target = $region40
        $region39: #{block_forward.11} parent=23 // pred_region
          %s242 = smul.u32 32, %s15
          %p243 = scmp.lt.s32.totalorder %s242, 63
          %s244 = scalar_select %p243, %s242, 63
          %s245 = smul.addr %s244, 8
          %s246 = scalar_lea.vmem %s3, %s245
          %s247 = smul.u32 32, %s15
        $region40: #{block_forward.11} parent=23 // pred_fallthru
          _
      $region24: #{block_forward.11} parent=5 // pred_fallthru
        _
      %p248 = scmp.le.s32.totalorder 1, %s15
      %p249 = scmp.lt.s32.totalorder %s15, 3
      %p250 = pnand %p248, %p249
      %p251 = pneg %p250
      // Predicated region
      $region41: #{block_forward.11} parent=5 // pred_check
        _
      $region42: #{block_forward.11} parent=5 // pred_check_branch
        %253 = sbr.rel (%p250) target = $region44
      $region43: #{block_forward.11} parent=5 // pred_region
        %s254 = ssub.s32 %s15, 1
        %s255 = smul.u32 32, %s20
        %p256 = scmp.lt.s32.totalorder %s255, 63
        %s257 = scalar_select %p256, %s255, 63
        %s258 = smul.addr %s257, 8
        %s259 = scalar_lea.vmem %s0, %s258
        %p260 = pneg %p41
        %p261 = pneg %p38
        %s262 = smul.u32 32, %s20
        %p263 = scmp.lt.s32.totalorder %s262, 63
        %s264 = scalar_select %p263, %s262, 63
        %s265 = smul.addr %s264, 8
        %s266 = scalar_lea.vmem %s1, %s265
        %p267 = pneg %p67
        %p268 = pneg %p64
        %s269 = smul.u32 32, %s20
        %p270 = scmp.lt.s32.totalorder %s269, 63
        %s271 = scalar_select %p270, %s269, 63
        %s272 = smul.addr %s271, 8
        %s273 = scalar_lea.vmem %s2, %s272
        %p274 = pneg %p93
        %p275 = pneg %p90
        %s276 = smul.u32 32, %s20
        %p277 = scmp.lt.s32.totalorder %s276, 63
        %s278 = scalar_select %p277, %s276, 63
        %s279 = smul.addr %s278, 8
        %s280 = scalar_lea.vmem %s3, %s279
        %p281 = pneg %p119
        %p282 = pneg %p116
        %p283 = pneg %p140
        %p284 = pneg %p137
        %p285 = pneg %p161
        %p286 = pneg %p158
        %p287 = pneg %p187
        %p288 = pneg %p184
        %s289 = sand.u32 %s174, 1
        %s290 = scalar_lea.sflag [#allocation3], %s289
        %s291 = sand.u32 %s174, 1
        %s292 = smul.addr %s291, 256
        %s293 = scalar_lea.vmem [#allocation2], %s292
        %s294 = smul.u32 32, %s20
        %p295 = scmp.lt.s32.totalorder %s294, 63
        %s296 = scalar_select %p295, %s294, 63
        %s297 = smul.addr %s296, 8
        %s298 = scalar_lea.vmem %s0, %s297
        %s299 = smul.u32 32, %s20
        %s300 = smul.u32 32, %s20
        %p301 = scmp.lt.s32.totalorder %s300, 63
        %s302 = scalar_select %p301, %s300, 63
        %s303 = smul.addr %s302, 8
        %s304 = scalar_lea.vmem %s1, %s303
        %s305 = smul.u32 32, %s20
        %s306 = smul.u32 32, %s20
        %p307 = scmp.lt.s32.totalorder %s306, 63
        %s308 = scalar_select %p307, %s306, 63
        %s309 = smul.addr %s308, 8
        %s310 = scalar_lea.vmem %s2, %s309
        %s311 = smul.u32 32, %s20
        %s312 = smul.u32 32, %s20
        %p313 = scmp.lt.s32.totalorder %s312, 63
        %s314 = scalar_select %p313, %s312, 63
        %s315 = smul.addr %s314, 8
        %s316 = scalar_lea.vmem %s3, %s315
        %s317 = smul.u32 32, %s20
        %s318 = smul.u32 32, %s20
        %v320 = vld [vmem:[%s5] sm:$0x1]
        %v322 = vlaneseq
        %v323 = vshrl.u32 %v322, 7
        %v324 = vsub.s32 0, %v323
        %v325 = vrot.slane %v320, %v324
        %v327 = vadd.f32 %v325, 0.0
        %v328 = vld [vmem:[%s298] sm:$0xff]
        %v329 = vld [vmem:[%s298 + $0x8] sm:$0xff]
        %v330 = vld [vmem:[%s298 + $0x10] sm:$0xff]
        %v331 = vld [vmem:[%s298 + $0x18] sm:$0xff]
        %v332 = vld [vmem:[%s298 + $0x20] sm:$0xff]
        %v333 = vld [vmem:[%s298 + $0x28] sm:$0xff]
        %v334 = vld [vmem:[%s298 + $0x30] sm:$0xff]
        %v335 = vld [vmem:[%s298 + $0x38] sm:$0xff]
        %v336 = vld [vmem:[%s298 + $0x40] sm:$0xff]
        %v337 = vld [vmem:[%s298 + $0x48] sm:$0xff]
        %v338 = vld [vmem:[%s298 + $0x50] sm:$0xff]
        %v339 = vld [vmem:[%s298 + $0x58] sm:$0xff]
        %v340 = vld [vmem:[%s298 + $0x60] sm:$0xff]
        %v341 = vld [vmem:[%s298 + $0x68] sm:$0xff]
        %v342 = vld [vmem:[%s298 + $0x70] sm:$0xff]
        %v343 = vld [vmem:[%s298 + $0x78] sm:$0xff]
        %v344 = vld [vmem:[%s298 + $0x80] sm:$0xff]
        %v345 = vld [vmem:[%s298 + $0x88] sm:$0xff]
        %v346 = vld [vmem:[%s298 + $0x90] sm:$0xff]
        %v347 = vld [vmem:[%s298 + $0x98] sm:$0xff]
        %v348 = vld [vmem:[%s298 + $0xa0] sm:$0xff]
        %v349 = vld [vmem:[%s298 + $0xa8] sm:$0xff]
        %v350 = vld [vmem:[%s298 + $0xb0] sm:$0xff]
        %v351 = vld [vmem:[%s298 + $0xb8] sm:$0xff]
        %v352 = vld [vmem:[%s298 + $0xc0] sm:$0xff]
        %v353 = vld [vmem:[%s298 + $0xc8] sm:$0xff]
        %v354 = vld [vmem:[%s298 + $0xd0] sm:$0xff]
        %v355 = vld [vmem:[%s298 + $0xd8] sm:$0xff]
        %v356 = vld [vmem:[%s298 + $0xe0] sm:$0xff]
        %v357 = vld [vmem:[%s298 + $0xe8] sm:$0xff]
        %v358 = vld [vmem:[%s298 + $0xf0] sm:$0xff]
        %v359 = vld [vmem:[%s298 + $0xf8] sm:$0xff]
        %v360 = vpack.c.bf16 %v329, %v328
        %v361 = vpack.c.bf16 %v331, %v330
        %v362 = vpack.c.bf16 %v333, %v332
        %v363 = vpack.c.bf16 %v335, %v334
        %v364 = vpack.c.bf16 %v337, %v336
        %v365 = vpack.c.bf16 %v339, %v338
        %v366 = vpack.c.bf16 %v341, %v340
        %v367 = vpack.c.bf16 %v343, %v342
        %v368 = vpack.c.bf16 %v345, %v344
        %v369 = vpack.c.bf16 %v347, %v346
        %v370 = vpack.c.bf16 %v349, %v348
        %v371 = vpack.c.bf16 %v351, %v350
        %v372 = vpack.c.bf16 %v353, %v352
        %v373 = vpack.c.bf16 %v355, %v354
        %v374 = vpack.c.bf16 %v357, %v356
        %v375 = vpack.c.bf16 %v359, %v358
        %v376 = vld [vmem:[%s4] sm:$0xf]
        %v377 = vld [vmem:[%s4 + $0x4] sm:$0xf]
        %v378 = vld [vmem:[%s4 + $0x8] sm:$0xf]
        %v379 = vld [vmem:[%s4 + $0xc] sm:$0xf]
        %v380 = vld [vmem:[%s4 + $0x10] sm:$0xf]
        %v381 = vld [vmem:[%s4 + $0x14] sm:$0xf]
        %v382 = vld [vmem:[%s4 + $0x18] sm:$0xf]
        %v383 = vld [vmem:[%s4 + $0x1c] sm:$0xf]
        %v392 = vunpack.c.l.b16 %v376
        %v393 = vunpack.c.l.b16 %v377
        %v394 = vunpack.c.l.b16 %v378
        %v395 = vunpack.c.l.b16 %v379
        %v396 = vunpack.c.l.b16 %v380
        %v397 = vunpack.c.l.b16 %v381
        %v398 = vunpack.c.l.b16 %v382
        %v399 = vunpack.c.l.b16 %v383
        %v400 = vpack.c.b16 %v393, %v392
        %v401 = vpack.c.b16 %v395, %v394
        %v402 = vpack.c.b16 %v397, %v396
        %v403 = vpack.c.b16 %v399, %v398
        %vm408 = vcmask 523264
        %v410 = vsel %vm408, %v360, 0
        %v413 = vsel %vm408, %v361, 0
        %v416 = vsel %vm408, %v362, 0
        %v419 = vsel %vm408, %v363, 0
        %v422 = vsel %vm408, %v364, 0
        %v425 = vsel %vm408, %v365, 0
        %v428 = vsel %vm408, %v366, 0
        %v431 = vsel %vm408, %v367, 0
        %v434 = vsel %vm408, %v368, 0
        %v437 = vsel %vm408, %v369, 0
        %v440 = vsel %vm408, %v370, 0
        %v443 = vsel %vm408, %v371, 0
        %v446 = vsel %vm408, %v372, 0
        %v449 = vsel %vm408, %v373, 0
        %v452 = vsel %vm408, %v374, 0
        %v455 = vsel %vm408, %v375, 0
        %457 = vmatprep.subr.bf16.mxu0 0
        %458 = vmatpush1.bf16.msra.mxu0 %v400
        %459 = vmatprep.subr.bf16.mxu0 0
        %460 = vmatpush1.bf16.msra.mxu0 %v401
        %461 = vmatprep.subr.bf16.mxu0 0
        %462 = vmatpush1.bf16.msra.mxu0 %v402
        %463 = vmatprep.subr.bf16.mxu0 0
        %464 = vmatpush1.bf16.msra.mxu0 %v403
        %465 = vmatprep.subr.bf16.mxu0 0
        %466 = vmatpush1.bf16.msra.mxu0 0
        %467 = vmatprep.subr.bf16.mxu0 0
        %468 = vmatpush1.bf16.msra.mxu0 0
        %469 = vmatprep.subr.bf16.mxu0 0
        %470 = vmatpush1.bf16.msra.mxu0 0
        %471 = vmatprep.subr.bf16.mxu0 0
        %472 = vmatpush1.bf16.msra.mxu0 0
        %473 = vmatprep.subr.bf16.mxu0 0
        %474 = vmatpush1.bf16.msra.mxu0 0
        %475 = vmatprep.subr.bf16.mxu0 0
        %476 = vmatpush1.bf16.msra.mxu0 0
        %477 = vmatprep.subr.bf16.mxu0 0
        %478 = vmatpush1.bf16.msra.mxu0 0
        %479 = vmatprep.subr.bf16.mxu0 0
        %480 = vmatpush1.bf16.msra.mxu0 0
        %481 = vmatprep.subr.bf16.mxu0 0
        %482 = vmatpush1.bf16.msra.mxu0 0
        %483 = vmatprep.subr.bf16.mxu0 0
        %484 = vmatpush1.bf16.msra.mxu0 0
        %485 = vmatprep.subr.bf16.mxu0 0
        %486 = vmatpush1.bf16.msra.mxu0 0
        %487 = vmatprep.subr.bf16.mxu0 0
        %488 = vmatpush1.bf16.msra.mxu0 0
        %489 = vmatprep.mubr.bf16.mxu0 0
        %490 = vmatmul.mubr.bf16.gmra.mrb[0].mxu0 %v410
        %v491 = vpop.f32.mrb[0].mxu0
        %v492 = vadd.f32 0.0, %v491
        %v493 = vpop.f32.mrb[0].mxu0
        %v494 = vpop.f32.mrb[0].mxu0
        %v495 = vadd.f32 0.0, %v494
        %v496 = vpop.f32.mrb[0].mxu0
        %497 = vmatprep.mubr.bf16.mxu0 0
        %498 = vmatmul.mubr.bf16.gmra.mrb[0].mxu0 %v413
        %v499 = vpop.f32.mrb[0].mxu0
        %v500 = vadd.f32 0.0, %v499
        %v501 = vpop.f32.mrb[0].mxu0
        %v502 = vpop.f32.mrb[0].mxu0
        %v503 = vadd.f32 0.0, %v502
        %v504 = vpop.f32.mrb[0].mxu0
        %505 = vmatprep.mubr.bf16.mxu0 0
        %506 = vmatmul.mubr.bf16.gmra.mrb[0].mxu0 %v416
        %v507 = vpop.f32.mrb[0].mxu0
        %v508 = vadd.f32 0.0, %v507
        %v509 = vpop.f32.mrb[0].mxu0
        %v510 = vpop.f32.mrb[0].mxu0
        %v511 = vadd.f32 0.0, %v510
        %v512 = vpop.f32.mrb[0].mxu0
        %513 = vmatprep.mubr.bf16.mxu0 0
        %514 = vmatmul.mubr.bf16.gmra.mrb[0].mxu0 %v419
        %v515 = vpop.f32.mrb[0].mxu0
        %v516 = vadd.f32 0.0, %v515
        %v517 = vpop.f32.mrb[0].mxu0
        %v518 = vpop.f32.mrb[0].mxu0
        %v519 = vadd.f32 0.0, %v518
        %v520 = vpop.f32.mrb[0].mxu0
        %521 = vmatprep.mubr.bf16.mxu0 0
        %522 = vmatmul.mubr.bf16.gmra.mrb[0].mxu0 %v422
        %v523 = vpop.f32.mrb[0].mxu0
        %v524 = vadd.f32 0.0, %v523
        %v525 = vpop.f32.mrb[0].mxu0
        %v526 = vpop.f32.mrb[0].mxu0
        %v527 = vadd.f32 0.0, %v526
        %v528 = vpop.f32.mrb[0].mxu0
        %529 = vmatprep.mubr.bf16.mxu0 0
        %530 = vmatmul.mubr.bf16.gmra.mrb[0].mxu0 %v425
        %v531 = vpop.f32.mrb[0].mxu0
        %v532 = vadd.f32 0.0, %v531
        %v533 = vpop.f32.mrb[0].mxu0
        %v534 = vpop.f32.mrb[0].mxu0
        %v535 = vadd.f32 0.0, %v534
        %v536 = vpop.f32.mrb[0].mxu0
        %537 = vmatprep.mubr.bf16.mxu0 0
        %538 = vmatmul.mubr.bf16.gmra.mrb[0].mxu0 %v428
        %v539 = vpop.f32.mrb[0].mxu0
        %v540 = vadd.f32 0.0, %v539
        %v541 = vpop.f32.mrb[0].mxu0
        %v542 = vpop.f32.mrb[0].mxu0
        %v543 = vadd.f32 0.0, %v542
        %v544 = vpop.f32.mrb[0].mxu0
        %545 = vmatprep.mubr.bf16.mxu0 0
        %546 = vmatmul.mubr.bf16.gmra.mrb[0].mxu0 %v431
        %v547 = vpop.f32.mrb[0].mxu0
        %v548 = vadd.f32 0.0, %v547
        %v549 = vpop.f32.mrb[0].mxu0
        %v550 = vpop.f32.mrb[0].mxu0
        %v551 = vadd.f32 0.0, %v550
        %v552 = vpop.f32.mrb[0].mxu0
        %553 = vmatprep.mubr.bf16.mxu0 0
        %554 = vmatmul.mubr.bf16.gmra.mrb[0].mxu0 %v434
        %v555 = vpop.f32.mrb[0].mxu0
        %v556 = vadd.f32 0.0, %v555
        %v557 = vpop.f32.mrb[0].mxu0
        %v558 = vpop.f32.mrb[0].mxu0
        %v559 = vadd.f32 0.0, %v558
        %v560 = vpop.f32.mrb[0].mxu0
        %561 = vmatprep.mubr.bf16.mxu0 0
        %562 = vmatmul.mubr.bf16.gmra.mrb[0].mxu0 %v437
        %v563 = vpop.f32.mrb[0].mxu0
        %v564 = vadd.f32 0.0, %v563
        %v565 = vpop.f32.mrb[0].mxu0
        %v566 = vpop.f32.mrb[0].mxu0
        %v567 = vadd.f32 0.0, %v566
        %v568 = vpop.f32.mrb[0].mxu0
        %569 = vmatprep.mubr.bf16.mxu0 0
        %570 = vmatmul.mubr.bf16.gmra.mrb[0].mxu0 %v440
        %v571 = vpop.f32.mrb[0].mxu0
        %v572 = vadd.f32 0.0, %v571
        %v573 = vpop.f32.mrb[0].mxu0
        %v574 = vpop.f32.mrb[0].mxu0
        %v575 = vadd.f32 0.0, %v574
        %v576 = vpop.f32.mrb[0].mxu0
        %577 = vmatprep.mubr.bf16.mxu0 0
        %578 = vmatmul.mubr.bf16.gmra.mrb[0].mxu0 %v443
        %v579 = vpop.f32.mrb[0].mxu0
        %v580 = vadd.f32 0.0, %v579
        %v581 = vpop.f32.mrb[0].mxu0
        %v582 = vpop.f32.mrb[0].mxu0
        %v583 = vadd.f32 0.0, %v582
        %v584 = vpop.f32.mrb[0].mxu0
        %585 = vmatprep.mubr.bf16.mxu0 0
        %586 = vmatmul.mubr.bf16.gmra.mrb[0].mxu0 %v446
        %v587 = vpop.f32.mrb[0].mxu0
        %v588 = vadd.f32 0.0, %v587
        %v589 = vpop.f32.mrb[0].mxu0
        %v590 = vpop.f32.mrb[0].mxu0
        %v591 = vadd.f32 0.0, %v590
        %v592 = vpop.f32.mrb[0].mxu0
        %593 = vmatprep.mubr.bf16.mxu0 0
        %594 = vmatmul.mubr.bf16.gmra.mrb[0].mxu0 %v449
        %v595 = vpop.f32.mrb[0].mxu0
        %v596 = vadd.f32 0.0, %v595
        %v597 = vpop.f32.mrb[0].mxu0
        %v598 = vpop.f32.mrb[0].mxu0
        %v599 = vadd.f32 0.0, %v598
        %v600 = vpop.f32.mrb[0].mxu0
        %601 = vmatprep.mubr.bf16.mxu0 0
        %602 = vmatmul.mubr.bf16.gmra.mrb[0].mxu0 %v452
        %v603 = vpop.f32.mrb[0].mxu0
        %v604 = vadd.f32 0.0, %v603
        %v605 = vpop.f32.mrb[0].mxu0
        %v606 = vpop.f32.mrb[0].mxu0
        %v607 = vadd.f32 0.0, %v606
        %v608 = vpop.f32.mrb[0].mxu0
        %609 = vmatprep.mubr.bf16.mxu0 0
        %610 = vmatmul.mubr.bf16.gmra.mrb[0].mxu0 %v455
        %v611 = vpop.f32.mrb[0].mxu0
        %v612 = vadd.f32 0.0, %v611
        %v613 = vpop.f32.mrb[0].mxu0
        %v614 = vpop.f32.mrb[0].mxu0
        %v615 = vadd.f32 0.0, %v614
        %v616 = vpop.f32.mrb[0].mxu0
        %617 = vdwg.mxu0
        %v618 = vadd.f32 %v327, %v492
        %v619 = vadd.f32 %v327, %v495
        %v620 = vadd.f32 %v327, %v500
        %v621 = vadd.f32 %v327, %v503
        %v622 = vadd.f32 %v327, %v508
        %v623 = vadd.f32 %v327, %v511
        %v624 = vadd.f32 %v327, %v516
        %v625 = vadd.f32 %v327, %v519
        %v626 = vadd.f32 %v327, %v524
        %v627 = vadd.f32 %v327, %v527
        %v628 = vadd.f32 %v327, %v532
        %v629 = vadd.f32 %v327, %v535
        %v630 = vadd.f32 %v327, %v540
        %v631 = vadd.f32 %v327, %v543
        %v632 = vadd.f32 %v327, %v548
        %v633 = vadd.f32 %v327, %v551
        %v634 = vadd.f32 %v327, %v556
        %v635 = vadd.f32 %v327, %v559
        %v636 = vadd.f32 %v327, %v564
        %v637 = vadd.f32 %v327, %v567
        %v638 = vadd.f32 %v327, %v572
        %v639 = vadd.f32 %v327, %v575
        %v640 = vadd.f32 %v327, %v580
        %v641 = vadd.f32 %v327, %v583
        %v642 = vadd.f32 %v327, %v588
        %v643 = vadd.f32 %v327, %v591
        %v644 = vadd.f32 %v327, %v596
        %v645 = vadd.f32 %v327, %v599
        %v646 = vadd.f32 %v327, %v604
        %v647 = vadd.f32 %v327, %v607
        %v648 = vadd.f32 %v327, %v612
        %v649 = vadd.f32 %v327, %v615
        %v650 = vld [vmem:[%s304] sm:$0xff]
        %v651 = vld [vmem:[%s304 + $0x8] sm:$0xff]
        %v652 = vld [vmem:[%s304 + $0x10] sm:$0xff]
        %v653 = vld [vmem:[%s304 + $0x18] sm:$0xff]
        %v654 = vld [vmem:[%s304 + $0x20] sm:$0xff]
        %v655 = vld [vmem:[%s304 + $0x28] sm:$0xff]
        %v656 = vld [vmem:[%s304 + $0x30] sm:$0xff]
        %v657 = vld [vmem:[%s304 + $0x38] sm:$0xff]
        %v658 = vld [vmem:[%s304 + $0x40] sm:$0xff]
        %v659 = vld [vmem:[%s304 + $0x48] sm:$0xff]
        %v660 = vld [vmem:[%s304 + $0x50] sm:$0xff]
        %v661 = vld [vmem:[%s304 + $0x58] sm:$0xff]
        %v662 = vld [vmem:[%s304 + $0x60] sm:$0xff]
        %v663 = vld [vmem:[%s304 + $0x68] sm:$0xff]
        %v664 = vld [vmem:[%s304 + $0x70] sm:$0xff]
        %v665 = vld [vmem:[%s304 + $0x78] sm:$0xff]
        %v666 = vld [vmem:[%s304 + $0x80] sm:$0xff]
        %v667 = vld [vmem:[%s304 + $0x88] sm:$0xff]
        %v668 = vld [vmem:[%s304 + $0x90] sm:$0xff]
        %v669 = vld [vmem:[%s304 + $0x98] sm:$0xff]
        %v670 = vld [vmem:[%s304 + $0xa0] sm:$0xff]
        %v671 = vld [vmem:[%s304 + $0xa8] sm:$0xff]
        %v672 = vld [vmem:[%s304 + $0xb0] sm:$0xff]
        %v673 = vld [vmem:[%s304 + $0xb8] sm:$0xff]
        %v674 = vld [vmem:[%s304 + $0xc0] sm:$0xff]
        %v675 = vld [vmem:[%s304 + $0xc8] sm:$0xff]
        %v676 = vld [vmem:[%s304 + $0xd0] sm:$0xff]
        %v677 = vld [vmem:[%s304 + $0xd8] sm:$0xff]
        %v678 = vld [vmem:[%s304 + $0xe0] sm:$0xff]
        %v679 = vld [vmem:[%s304 + $0xe8] sm:$0xff]
        %v680 = vld [vmem:[%s304 + $0xf0] sm:$0xff]
        %v681 = vld [vmem:[%s304 + $0xf8] sm:$0xff]
        %v682 = vpack.c.bf16 %v651, %v650
        %v683 = vpack.c.bf16 %v653, %v652
        %v684 = vpack.c.bf16 %v655, %v654
        %v685 = vpack.c.bf16 %v657, %v656
        %v686 = vpack.c.bf16 %v659, %v658
        %v687 = vpack.c.bf16 %v661, %v660
        %v688 = vpack.c.bf16 %v663, %v662
        %v689 = vpack.c.bf16 %v665, %v664
        %v690 = vpack.c.bf16 %v667, %v666
        %v691 = vpack.c.bf16 %v669, %v668
        %v692 = vpack.c.bf16 %v671, %v670
        %v693 = vpack.c.bf16 %v673, %v672
        %v694 = vpack.c.bf16 %v675, %v674
        %v695 = vpack.c.bf16 %v677, %v676
        %v696 = vpack.c.bf16 %v679, %v678
        %v697 = vpack.c.bf16 %v681, %v680
        %v698 = vld [vmem:[%s4 + $0x20] sm:$0xf]
        %v699 = vld [vmem:[%s4 + $0x24] sm:$0xf]
        %v700 = vld [vmem:[%s4 + $0x28] sm:$0xf]
        %v701 = vld [vmem:[%s4 + $0x2c] sm:$0xf]
        %v702 = vld [vmem:[%s4 + $0x30] sm:$0xf]
        %v703 = vld [vmem:[%s4 + $0x34] sm:$0xf]
        %v704 = vld [vmem:[%s4 + $0x38] sm:$0xf]
        %v705 = vld [vmem:[%s4 + $0x3c] sm:$0xf]
        %v714 = vunpack.c.l.b16 %v698
        %v715 = vunpack.c.l.b16 %v699
        %v716 = vunpack.c.l.b16 %v700
        %v717 = vunpack.c.l.b16 %v701
        %v718 = vunpack.c.l.b16 %v702
        %v719 = vunpack.c.l.b16 %v703
        %v720 = vunpack.c.l.b16 %v704
        %v721 = vunpack.c.l.b16 %v705
        %v722 = vpack.c.b16 %v715, %v714
        %v723 = vpack.c.b16 %v717, %v716
        %v724 = vpack.c.b16 %v719, %v718
        %v725 = vpack.c.b16 %v721, %v720
        %v731 = vsel %vm408, %v682, 0
        %v734 = vsel %vm408, %v683, 0
        %v737 = vsel %vm408, %v684, 0
        %v740 = vsel %vm408, %v685, 0
        %v743 = vsel %vm408, %v686, 0
        %v746 = vsel %vm408, %v687, 0
        %v749 = vsel %vm408, %v688, 0
        %v752 = vsel %vm408, %v689, 0
        %v755 = vsel %vm408, %v690, 0
        %v758 = vsel %vm408, %v691, 0
        %v761 = vsel %vm408, %v692, 0
        %v764 = vsel %vm408, %v693, 0
        %v767 = vsel %vm408, %v694, 0
        %v770 = vsel %vm408, %v695, 0
        %v773 = vsel %vm408, %v696, 0
        %v776 = vsel %vm408, %v697, 0
        %778 = vmatprep.subr.bf16.mxu0 0
        %779 = vmatpush1.bf16.msra.mxu0 %v722
        %780 = vmatprep.subr.bf16.mxu0 0
        %781 = vmatpush1.bf16.msra.mxu0 %v723
        %782 = vmatprep.subr.bf16.mxu0 0
        %783 = vmatpush1.bf16.msra.mxu0 %v724
        %784 = vmatprep.subr.bf16.mxu0 0
        %785 = vmatpush1.bf16.msra.mxu0 %v725
        %786 = vmatprep.subr.bf16.mxu0 0
        %787 = vmatpush1.bf16.msra.mxu0 0
        %788 = vmatprep.subr.bf16.mxu0 0
        %789 = vmatpush1.bf16.msra.mxu0 0
        %790 = vmatprep.subr.bf16.mxu0 0
        %791 = vmatpush1.bf16.msra.mxu0 0
        %792 = vmatprep.subr.bf16.mxu0 0
        %793 = vmatpush1.bf16.msra.mxu0 0
        %794 = vmatprep.subr.bf16.mxu0 0
        %795 = vmatpush1.bf16.msra.mxu0 0
        %796 = vmatprep.subr.bf16.mxu0 0
        %797 = vmatpush1.bf16.msra.mxu0 0
        %798 = vmatprep.subr.bf16.mxu0 0
        %799 = vmatpush1.bf16.msra.mxu0 0
        %800 = vmatprep.subr.bf16.mxu0 0
        %801 = vmatpush1.bf16.msra.mxu0 0
        %802 = vmatprep.subr.bf16.mxu0 0
        %803 = vmatpush1.bf16.msra.mxu0 0
        %804 = vmatprep.subr.bf16.mxu0 0
        %805 = vmatpush1.bf16.msra.mxu0 0
        %806 = vmatprep.subr.bf16.mxu0 0
        %807 = vmatpush1.bf16.msra.mxu0 0
        %808 = vmatprep.subr.bf16.mxu0 0
        %809 = vmatpush1.bf16.msra.mxu0 0
        %810 = vmatprep.mubr.bf16.mxu0 0
        %811 = vmatmul.mubr.bf16.gmra.mrb[0].mxu0 %v731
        %v812 = vpop.f32.mrb[0].mxu0
        %v813 = vadd.f32 0.0, %v812
        %v814 = vpop.f32.mrb[0].mxu0
        %v815 = vpop.f32.mrb[0].mxu0
        %v816 = vadd.f32 0.0, %v815
        %v817 = vpop.f32.mrb[0].mxu0
        %818 = vmatprep.mubr.bf16.mxu0 0
        %819 = vmatmul.mubr.bf16.gmra.mrb[0].mxu0 %v734
        %v820 = vpop.f32.mrb[0].mxu0
        %v821 = vadd.f32 0.0, %v820
        %v822 = vpop.f32.mrb[0].mxu0
        %v823 = vpop.f32.mrb[0].mxu0
        %v824 = vadd.f32 0.0, %v823
        %v825 = vpop.f32.mrb[0].mxu0
        %826 = vmatprep.mubr.bf16.mxu0 0
        %827 = vmatmul.mubr.bf16.gmra.mrb[0].mxu0 %v737
        %v828 = vpop.f32.mrb[0].mxu0
        %v829 = vadd.f32 0.0, %v828
        %v830 = vpop.f32.mrb[0].mxu0
        %v831 = vpop.f32.mrb[0].mxu0
        %v832 = vadd.f32 0.0, %v831
        %v833 = vpop.f32.mrb[0].mxu0
        %834 = vmatprep.mubr.bf16.mxu0 0
        %835 = vmatmul.mubr.bf16.gmra.mrb[0].mxu0 %v740
        %v836 = vpop.f32.mrb[0].mxu0
        %v837 = vadd.f32 0.0, %v836
        %v838 = vpop.f32.mrb[0].mxu0
        %v839 = vpop.f32.mrb[0].mxu0
        %v840 = vadd.f32 0.0, %v839
        %v841 = vpop.f32.mrb[0].mxu0
        %842 = vmatprep.mubr.bf16.mxu0 0
        %843 = vmatmul.mubr.bf16.gmra.mrb[0].mxu0 %v743
        %v844 = vpop.f32.mrb[0].mxu0
        %v845 = vadd.f32 0.0, %v844
        %v846 = vpop.f32.mrb[0].mxu0
        %v847 = vpop.f32.mrb[0].mxu0
        %v848 = vadd.f32 0.0, %v847
        %v849 = vpop.f32.mrb[0].mxu0
        %850 = vmatprep.mubr.bf16.mxu0 0
        %851 = vmatmul.mubr.bf16.gmra.mrb[0].mxu0 %v746
        %v852 = vpop.f32.mrb[0].mxu0
        %v853 = vadd.f32 0.0, %v852
        %v854 = vpop.f32.mrb[0].mxu0
        %v855 = vpop.f32.mrb[0].mxu0
        %v856 = vadd.f32 0.0, %v855
        %v857 = vpop.f32.mrb[0].mxu0
        %858 = vmatprep.mubr.bf16.mxu0 0
        %859 = vmatmul.mubr.bf16.gmra.mrb[0].mxu0 %v749
        %v860 = vpop.f32.mrb[0].mxu0
        %v861 = vadd.f32 0.0, %v860
        %v862 = vpop.f32.mrb[0].mxu0
        %v863 = vpop.f32.mrb[0].mxu0
        %v864 = vadd.f32 0.0, %v863
        %v865 = vpop.f32.mrb[0].mxu0
        %866 = vmatprep.mubr.bf16.mxu0 0
        %867 = vmatmul.mubr.bf16.gmra.mrb[0].mxu0 %v752
        %v868 = vpop.f32.mrb[0].mxu0
        %v869 = vadd.f32 0.0, %v868
        %v870 = vpop.f32.mrb[0].mxu0
        %v871 = vpop.f32.mrb[0].mxu0
        %v872 = vadd.f32 0.0, %v871
        %v873 = vpop.f32.mrb[0].mxu0
        %874 = vmatprep.mubr.bf16.mxu0 0
        %875 = vmatmul.mubr.bf16.gmra.mrb[0].mxu0 %v755
        %v876 = vpop.f32.mrb[0].mxu0
        %v877 = vadd.f32 0.0, %v876
        %v878 = vpop.f32.mrb[0].mxu0
        %v879 = vpop.f32.mrb[0].mxu0
        %v880 = vadd.f32 0.0, %v879
        %v881 = vpop.f32.mrb[0].mxu0
        %882 = vmatprep.mubr.bf16.mxu0 0
        %883 = vmatmul.mubr.bf16.gmra.mrb[0].mxu0 %v758
        %v884 = vpop.f32.mrb[0].mxu0
        %v885 = vadd.f32 0.0, %v884
        %v886 = vpop.f32.mrb[0].mxu0
        %v887 = vpop.f32.mrb[0].mxu0
        %v888 = vadd.f32 0.0, %v887
        %v889 = vpop.f32.mrb[0].mxu0
        %890 = vmatprep.mubr.bf16.mxu0 0
        %891 = vmatmul.mubr.bf16.gmra.mrb[0].mxu0 %v761
        %v892 = vpop.f32.mrb[0].mxu0
        %v893 = vadd.f32 0.0, %v892
        %v894 = vpop.f32.mrb[0].mxu0
        %v895 = vpop.f32.mrb[0].mxu0
        %v896 = vadd.f32 0.0, %v895
        %v897 = vpop.f32.mrb[0].mxu0
        %898 = vmatprep.mubr.bf16.mxu0 0
        %899 = vmatmul.mubr.bf16.gmra.mrb[0].mxu0 %v764
        %v900 = vpop.f32.mrb[0].mxu0
        %v901 = vadd.f32 0.0, %v900
        %v902 = vpop.f32.mrb[0].mxu0
        %v903 = vpop.f32.mrb[0].mxu0
        %v904 = vadd.f32 0.0, %v903
        %v905 = vpop.f32.mrb[0].mxu0
        %906 = vmatprep.mubr.bf16.mxu0 0
        %907 = vmatmul.mubr.bf16.gmra.mrb[0].mxu0 %v767
        %v908 = vpop.f32.mrb[0].mxu0
        %v909 = vadd.f32 0.0, %v908
        %v910 = vpop.f32.mrb[0].mxu0
        %v911 = vpop.f32.mrb[0].mxu0
        %v912 = vadd.f32 0.0, %v911
        %v913 = vpop.f32.mrb[0].mxu0
        %914 = vmatprep.mubr.bf16.mxu0 0
        %915 = vmatmul.mubr.bf16.gmra.mrb[0].mxu0 %v770
        %v916 = vpop.f32.mrb[0].mxu0
        %v917 = vadd.f32 0.0, %v916
        %v918 = vpop.f32.mrb[0].mxu0
        %v919 = vpop.f32.mrb[0].mxu0
        %v920 = vadd.f32 0.0, %v919
        %v921 = vpop.f32.mrb[0].mxu0
        %922 = vmatprep.mubr.bf16.mxu0 0
        %923 = vmatmul.mubr.bf16.gmra.mrb[0].mxu0 %v773
        %v924 = vpop.f32.mrb[0].mxu0
        %v925 = vadd.f32 0.0, %v924
        %v926 = vpop.f32.mrb[0].mxu0
        %v927 = vpop.f32.mrb[0].mxu0
        %v928 = vadd.f32 0.0, %v927
        %v929 = vpop.f32.mrb[0].mxu0
        %930 = vmatprep.mubr.bf16.mxu0 0
        %931 = vmatmul.mubr.bf16.gmra.mrb[0].mxu0 %v776
        %v932 = vpop.f32.mrb[0].mxu0
        %v933 = vadd.f32 0.0, %v932
        %v934 = vpop.f32.mrb[0].mxu0
        %v935 = vpop.f32.mrb[0].mxu0
        %v936 = vadd.f32 0.0, %v935
        %v937 = vpop.f32.mrb[0].mxu0
        %938 = vdwg.mxu0
        %v939 = vadd.f32 %v618, %v813
        %v940 = vadd.f32 %v619, %v816
        %v941 = vadd.f32 %v620, %v821
        %v942 = vadd.f32 %v621, %v824
        %v943 = vadd.f32 %v622, %v829
        %v944 = vadd.f32 %v623, %v832
        %v945 = vadd.f32 %v624, %v837
        %v946 = vadd.f32 %v625, %v840
        %v947 = vadd.f32 %v626, %v845
        %v948 = vadd.f32 %v627, %v848
        %v949 = vadd.f32 %v628, %v853
        %v950 = vadd.f32 %v629, %v856
        %v951 = vadd.f32 %v630, %v861
        %v952 = vadd.f32 %v631, %v864
        %v953 = vadd.f32 %v632, %v869
        %v954 = vadd.f32 %v633, %v872
        %v955 = vadd.f32 %v634, %v877
        %v956 = vadd.f32 %v635, %v880
        %v957 = vadd.f32 %v636, %v885
        %v958 = vadd.f32 %v637, %v888
        %v959 = vadd.f32 %v638, %v893
        %v960 = vadd.f32 %v639, %v896
        %v961 = vadd.f32 %v640, %v901
        %v962 = vadd.f32 %v641, %v904
        %v963 = vadd.f32 %v642, %v909
        %v964 = vadd.f32 %v643, %v912
        %v965 = vadd.f32 %v644, %v917
        %v966 = vadd.f32 %v645, %v920
        %v967 = vadd.f32 %v646, %v925
        %v968 = vadd.f32 %v647, %v928
        %v969 = vadd.f32 %v648, %v933
        %v970 = vadd.f32 %v649, %v936
        %v971 = vld [vmem:[%s310] sm:$0xff]
        %v972 = vld [vmem:[%s310 + $0x8] sm:$0xff]
        %v973 = vld [vmem:[%s310 + $0x10] sm:$0xff]
        %v974 = vld [vmem:[%s310 + $0x18] sm:$0xff]
        %v975 = vld [vmem:[%s310 + $0x20] sm:$0xff]
        %v976 = vld [vmem:[%s310 + $0x28] sm:$0xff]
        %v977 = vld [vmem:[%s310 + $0x30] sm:$0xff]
        %v978 = vld [vmem:[%s310 + $0x38] sm:$0xff]
        %v979 = vld [vmem:[%s310 + $0x40] sm:$0xff]
        %v980 = vld [vmem:[%s310 + $0x48] sm:$0xff]
        %v981 = vld [vmem:[%s310 + $0x50] sm:$0xff]
        %v982 = vld [vmem:[%s310 + $0x58] sm:$0xff]
        %v983 = vld [vmem:[%s310 + $0x60] sm:$0xff]
        %v984 = vld [vmem:[%s310 + $0x68] sm:$0xff]
        %v985 = vld [vmem:[%s310 + $0x70] sm:$0xff]
        %v986 = vld [vmem:[%s310 + $0x78] sm:$0xff]
        %v987 = vld [vmem:[%s310 + $0x80] sm:$0xff]
        %v988 = vld [vmem:[%s310 + $0x88] sm:$0xff]
        %v989 = vld [vmem:[%s310 + $0x90] sm:$0xff]
        %v990 = vld [vmem:[%s310 + $0x98] sm:$0xff]
        %v991 = vld [vmem:[%s310 + $0xa0] sm:$0xff]
        %v992 = vld [vmem:[%s310 + $0xa8] sm:$0xff]
        %v993 = vld [vmem:[%s310 + $0xb0] sm:$0xff]
        %v994 = vld [vmem:[%s310 + $0xb8] sm:$0xff]
        %v995 = vld [vmem:[%s310 + $0xc0] sm:$0xff]
        %v996 = vld [vmem:[%s310 + $0xc8] sm:$0xff]
        %v997 = vld [vmem:[%s310 + $0xd0] sm:$0xff]
        %v998 = vld [vmem:[%s310 + $0xd8] sm:$0xff]
        %v999 = vld [vmem:[%s310 + $0xe0] sm:$0xff]
        %v1000 = vld [vmem:[%s310 + $0xe8] sm:$0xff]
        %v1001 = vld [vmem:[%s310 + $0xf0] sm:$0xff]
        %v1002 = vld [vmem:[%s310 + $0xf8] sm:$0xff]
        %v1003 = vpack.c.bf16 %v972, %v971
        %v1004 = vpack.c.bf16 %v974, %v973
        %v1005 = vpack.c.bf16 %v976, %v975
        %v1006 = vpack.c.bf16 %v978, %v977
        %v1007 = vpack.c.bf16 %v980, %v979
        %v1008 = vpack.c.bf16 %v982, %v981
        %v1009 = vpack.c.bf16 %v984, %v983
        %v1010 = vpack.c.bf16 %v986, %v985
        %v1011 = vpack.c.bf16 %v988, %v987
        %v1012 = vpack.c.bf16 %v990, %v989
        %v1013 = vpack.c.bf16 %v992, %v991
        %v1014 = vpack.c.bf16 %v994, %v993
        %v1015 = vpack.c.bf16 %v996, %v995
        %v1016 = vpack.c.bf16 %v998, %v997
        %v1017 = vpack.c.bf16 %v1000, %v999
        %v1018 = vpack.c.bf16 %v1002, %v1001
        %v1019 = vld [vmem:[%s4 + $0x40] sm:$0xf]
        %v1020 = vld [vmem:[%s4 + $0x44] sm:$0xf]
        %v1021 = vld [vmem:[%s4 + $0x48] sm:$0xf]
        %v1022 = vld [vmem:[%s4 + $0x4c] sm:$0xf]
        %v1023 = vld [vmem:[%s4 + $0x50] sm:$0xf]
        %v1024 = vld [vmem:[%s4 + $0x54] sm:$0xf]
        %v1025 = vld [vmem:[%s4 + $0x58] sm:$0xf]
        %v1026 = vld [vmem:[%s4 + $0x5c] sm:$0xf]
        %v1035 = vunpack.c.l.b16 %v1019
        %v1036 = vunpack.c.l.b16 %v1020
        %v1037 = vunpack.c.l.b16 %v1021
        %v1038 = vunpack.c.l.b16 %v1022
        %v1039 = vunpack.c.l.b16 %v1023
        %v1040 = vunpack.c.l.b16 %v1024
        %v1041 = vunpack.c.l.b16 %v1025
        %v1042 = vunpack.c.l.b16 %v1026
        %v1043 = vpack.c.b16 %v1036, %v1035
        %v1044 = vpack.c.b16 %v1038, %v1037
        %v1045 = vpack.c.b16 %v1040, %v1039
        %v1046 = vpack.c.b16 %v1042, %v1041
        %v1052 = vsel %vm408, %v1003, 0
        %v1055 = vsel %vm408, %v1004, 0
        %v1058 = vsel %vm408, %v1005, 0
        %v1061 = vsel %vm408, %v1006, 0
        %v1064 = vsel %vm408, %v1007, 0
        %v1067 = vsel %vm408, %v1008, 0
        %v1070 = vsel %vm408, %v1009, 0
        %v1073 = vsel %vm408, %v1010, 0
        %v1076 = vsel %vm408, %v1011, 0
        %v1079 = vsel %vm408, %v1012, 0
        %v1082 = vsel %vm408, %v1013, 0
        %v1085 = vsel %vm408, %v1014, 0
        %v1088 = vsel %vm408, %v1015, 0
        %v1091 = vsel %vm408, %v1016, 0
        %v1094 = vsel %vm408, %v1017, 0
        %v1097 = vsel %vm408, %v1018, 0
        %1099 = vmatprep.subr.bf16.mxu0 0
        %1100 = vmatpush1.bf16.msra.mxu0 %v1043
        %1101 = vmatprep.subr.bf16.mxu0 0
        %1102 = vmatpush1.bf16.msra.mxu0 %v1044
        %1103 = vmatprep.subr.bf16.mxu0 0
        %1104 = vmatpush1.bf16.msra.mxu0 %v1045
        %1105 = vmatprep.subr.bf16.mxu0 0
        %1106 = vmatpush1.bf16.msra.mxu0 %v1046
        %1107 = vmatprep.subr.bf16.mxu0 0
        %1108 = vmatpush1.bf16.msra.mxu0 0
        %1109 = vmatprep.subr.bf16.mxu0 0
        %1110 = vmatpush1.bf16.msra.mxu0 0
        %1111 = vmatprep.subr.bf16.mxu0 0
        %1112 = vmatpush1.bf16.msra.mxu0 0
        %1113 = vmatprep.subr.bf16.mxu0 0
        %1114 = vmatpush1.bf16.msra.mxu0 0
        %1115 = vmatprep.subr.bf16.mxu0 0
        %1116 = vmatpush1.bf16.msra.mxu0 0
        %1117 = vmatprep.subr.bf16.mxu0 0
        %1118 = vmatpush1.bf16.msra.mxu0 0
        %1119 = vmatprep.subr.bf16.mxu0 0
        %1120 = vmatpush1.bf16.msra.mxu0 0
        %1121 = vmatprep.subr.bf16.mxu0 0
        %1122 = vmatpush1.bf16.msra.mxu0 0
        %1123 = vmatprep.subr.bf16.mxu0 0
        %1124 = vmatpush1.bf16.msra.mxu0 0
        %1125 = vmatprep.subr.bf16.mxu0 0
        %1126 = vmatpush1.bf16.msra.mxu0 0
        %1127 = vmatprep.subr.bf16.mxu0 0
        %1128 = vmatpush1.bf16.msra.mxu0 0
        %1129 = vmatprep.subr.bf16.mxu0 0
        %1130 = vmatpush1.bf16.msra.mxu0 0
        %1131 = vmatprep.mubr.bf16.mxu0 0
        %1132 = vmatmul.mubr.bf16.gmra.mrb[0].mxu0 %v1052
        %v1133 = vpop.f32.mrb[0].mxu0
        %v1134 = vadd.f32 0.0, %v1133
        %v1135 = vpop.f32.mrb[0].mxu0
        %v1136 = vpop.f32.mrb[0].mxu0
        %v1137 = vadd.f32 0.0, %v1136
        %v1138 = vpop.f32.mrb[0].mxu0
        %1139 = vmatprep.mubr.bf16.mxu0 0
        %1140 = vmatmul.mubr.bf16.gmra.mrb[0].mxu0 %v1055
        %v1141 = vpop.f32.mrb[0].mxu0
        %v1142 = vadd.f32 0.0, %v1141
        %v1143 = vpop.f32.mrb[0].mxu0
        %v1144 = vpop.f32.mrb[0].mxu0
        %v1145 = vadd.f32 0.0, %v1144
        %v1146 = vpop.f32.mrb[0].mxu0
        %1147 = vmatprep.mubr.bf16.mxu0 0
        %1148 = vmatmul.mubr.bf16.gmra.mrb[0].mxu0 %v1058
        %v1149 = vpop.f32.mrb[0].mxu0
        %v1150 = vadd.f32 0.0, %v1149
        %v1151 = vpop.f32.mrb[0].mxu0
        %v1152 = vpop.f32.mrb[0].mxu0
        %v1153 = vadd.f32 0.0, %v1152
        %v1154 = vpop.f32.mrb[0].mxu0
        %1155 = vmatprep.mubr.bf16.mxu0 0
        %1156 = vmatmul.mubr.bf16.gmra.mrb[0].mxu0 %v1061
        %v1157 = vpop.f32.mrb[0].mxu0
        %v1158 = vadd.f32 0.0, %v1157
        %v1159 = vpop.f32.mrb[0].mxu0
        %v1160 = vpop.f32.mrb[0].mxu0
        %v1161 = vadd.f32 0.0, %v1160
        %v1162 = vpop.f32.mrb[0].mxu0
        %1163 = vmatprep.mubr.bf16.mxu0 0
        %1164 = vmatmul.mubr.bf16.gmra.mrb[0].mxu0 %v1064
        %v1165 = vpop.f32.mrb[0].mxu0
        %v1166 = vadd.f32 0.0, %v1165
        %v1167 = vpop.f32.mrb[0].mxu0
        %v1168 = vpop.f32.mrb[0].mxu0
        %v1169 = vadd.f32 0.0, %v1168
        %v1170 = vpop.f32.mrb[0].mxu0
        %1171 = vmatprep.mubr.bf16.mxu0 0
        %1172 = vmatmul.mubr.bf16.gmra.mrb[0].mxu0 %v1067
        %v1173 = vpop.f32.mrb[0].mxu0
        %v1174 = vadd.f32 0.0, %v1173
        %v1175 = vpop.f32.mrb[0].mxu0
        %v1176 = vpop.f32.mrb[0].mxu0
        %v1177 = vadd.f32 0.0, %v1176
        %v1178 = vpop.f32.mrb[0].mxu0
        %1179 = vmatprep.mubr.bf16.mxu0 0
        %1180 = vmatmul.mubr.bf16.gmra.mrb[0].mxu0 %v1070
        %v1181 = vpop.f32.mrb[0].mxu0
        %v1182 = vadd.f32 0.0, %v1181
        %v1183 = vpop.f32.mrb[0].mxu0
        %v1184 = vpop.f32.mrb[0].mxu0
        %v1185 = vadd.f32 0.0, %v1184
        %v1186 = vpop.f32.mrb[0].mxu0
        %1187 = vmatprep.mubr.bf16.mxu0 0
        %1188 = vmatmul.mubr.bf16.gmra.mrb[0].mxu0 %v1073
        %v1189 = vpop.f32.mrb[0].mxu0
        %v1190 = vadd.f32 0.0, %v1189
        %v1191 = vpop.f32.mrb[0].mxu0
        %v1192 = vpop.f32.mrb[0].mxu0
        %v1193 = vadd.f32 0.0, %v1192
        %v1194 = vpop.f32.mrb[0].mxu0
        %1195 = vmatprep.mubr.bf16.mxu0 0
        %1196 = vmatmul.mubr.bf16.gmra.mrb[0].mxu0 %v1076
        %v1197 = vpop.f32.mrb[0].mxu0
        %v1198 = vadd.f32 0.0, %v1197
        %v1199 = vpop.f32.mrb[0].mxu0
        %v1200 = vpop.f32.mrb[0].mxu0
        %v1201 = vadd.f32 0.0, %v1200
        %v1202 = vpop.f32.mrb[0].mxu0
        %1203 = vmatprep.mubr.bf16.mxu0 0
        %1204 = vmatmul.mubr.bf16.gmra.mrb[0].mxu0 %v1079
        %v1205 = vpop.f32.mrb[0].mxu0
        %v1206 = vadd.f32 0.0, %v1205
        %v1207 = vpop.f32.mrb[0].mxu0
        %v1208 = vpop.f32.mrb[0].mxu0
        %v1209 = vadd.f32 0.0, %v1208
        %v1210 = vpop.f32.mrb[0].mxu0
        %1211 = vmatprep.mubr.bf16.mxu0 0
        %1212 = vmatmul.mubr.bf16.gmra.mrb[0].mxu0 %v1082
        %v1213 = vpop.f32.mrb[0].mxu0
        %v1214 = vadd.f32 0.0, %v1213
        %v1215 = vpop.f32.mrb[0].mxu0
        %v1216 = vpop.f32.mrb[0].mxu0
        %v1217 = vadd.f32 0.0, %v1216
        %v1218 = vpop.f32.mrb[0].mxu0
        %1219 = vmatprep.mubr.bf16.mxu0 0
        %1220 = vmatmul.mubr.bf16.gmra.mrb[0].mxu0 %v1085
        %v1221 = vpop.f32.mrb[0].mxu0
        %v1222 = vadd.f32 0.0, %v1221
        %v1223 = vpop.f32.mrb[0].mxu0
        %v1224 = vpop.f32.mrb[0].mxu0
        %v1225 = vadd.f32 0.0, %v1224
        %v1226 = vpop.f32.mrb[0].mxu0
        %1227 = vmatprep.mubr.bf16.mxu0 0
        %1228 = vmatmul.mubr.bf16.gmra.mrb[0].mxu0 %v1088
        %v1229 = vpop.f32.mrb[0].mxu0
        %v1230 = vadd.f32 0.0, %v1229
        %v1231 = vpop.f32.mrb[0].mxu0
        %v1232 = vpop.f32.mrb[0].mxu0
        %v1233 = vadd.f32 0.0, %v1232
        %v1234 = vpop.f32.mrb[0].mxu0
        %1235 = vmatprep.mubr.bf16.mxu0 0
        %1236 = vmatmul.mubr.bf16.gmra.mrb[0].mxu0 %v1091
        %v1237 = vpop.f32.mrb[0].mxu0
        %v1238 = vadd.f32 0.0, %v1237
        %v1239 = vpop.f32.mrb[0].mxu0
        %v1240 = vpop.f32.mrb[0].mxu0
        %v1241 = vadd.f32 0.0, %v1240
        %v1242 = vpop.f32.mrb[0].mxu0
        %1243 = vmatprep.mubr.bf16.mxu0 0
        %1244 = vmatmul.mubr.bf16.gmra.mrb[0].mxu0 %v1094
        %v1245 = vpop.f32.mrb[0].mxu0
        %v1246 = vadd.f32 0.0, %v1245
        %v1247 = vpop.f32.mrb[0].mxu0
        %v1248 = vpop.f32.mrb[0].mxu0
        %v1249 = vadd.f32 0.0, %v1248
        %v1250 = vpop.f32.mrb[0].mxu0
        %1251 = vmatprep.mubr.bf16.mxu0 0
        %1252 = vmatmul.mubr.bf16.gmra.mrb[0].mxu0 %v1097
        %v1253 = vpop.f32.mrb[0].mxu0
        %v1254 = vadd.f32 0.0, %v1253
        %v1255 = vpop.f32.mrb[0].mxu0
        %v1256 = vpop.f32.mrb[0].mxu0
        %v1257 = vadd.f32 0.0, %v1256
        %v1258 = vpop.f32.mrb[0].mxu0
        %1259 = vdwg.mxu0
        %v1260 = vadd.f32 %v939, %v1134
        %v1261 = vadd.f32 %v940, %v1137
        %v1262 = vadd.f32 %v941, %v1142
        %v1263 = vadd.f32 %v942, %v1145
        %v1264 = vadd.f32 %v943, %v1150
        %v1265 = vadd.f32 %v944, %v1153
        %v1266 = vadd.f32 %v945, %v1158
        %v1267 = vadd.f32 %v946, %v1161
        %v1268 = vadd.f32 %v947, %v1166
        %v1269 = vadd.f32 %v948, %v1169
        %v1270 = vadd.f32 %v949, %v1174
        %v1271 = vadd.f32 %v950, %v1177
        %v1272 = vadd.f32 %v951, %v1182
        %v1273 = vadd.f32 %v952, %v1185
        %v1274 = vadd.f32 %v953, %v1190
        %v1275 = vadd.f32 %v954, %v1193
        %v1276 = vadd.f32 %v955, %v1198
        %v1277 = vadd.f32 %v956, %v1201
        %v1278 = vadd.f32 %v957, %v1206
        %v1279 = vadd.f32 %v958, %v1209
        %v1280 = vadd.f32 %v959, %v1214
        %v1281 = vadd.f32 %v960, %v1217
        %v1282 = vadd.f32 %v961, %v1222
        %v1283 = vadd.f32 %v962, %v1225
        %v1284 = vadd.f32 %v963, %v1230
        %v1285 = vadd.f32 %v964, %v1233
        %v1286 = vadd.f32 %v965, %v1238
        %v1287 = vadd.f32 %v966, %v1241
        %v1288 = vadd.f32 %v967, %v1246
        %v1289 = vadd.f32 %v968, %v1249
        %v1290 = vadd.f32 %v969, %v1254
        %v1291 = vadd.f32 %v970, %v1257
        %v1292 = vld [vmem:[%s316] sm:$0xff]
        %v1293 = vld [vmem:[%s316 + $0x8] sm:$0xff]
        %v1294 = vld [vmem:[%s316 + $0x10] sm:$0xff]
        %v1295 = vld [vmem:[%s316 + $0x18] sm:$0xff]
        %v1296 = vld [vmem:[%s316 + $0x20] sm:$0xff]
        %v1297 = vld [vmem:[%s316 + $0x28] sm:$0xff]
        %v1298 = vld [vmem:[%s316 + $0x30] sm:$0xff]
        %v1299 = vld [vmem:[%s316 + $0x38] sm:$0xff]
        %v1300 = vld [vmem:[%s316 + $0x40] sm:$0xff]
        %v1301 = vld [vmem:[%s316 + $0x48] sm:$0xff]
        %v1302 = vld [vmem:[%s316 + $0x50] sm:$0xff]
        %v1303 = vld [vmem:[%s316 + $0x58] sm:$0xff]
        %v1304 = vld [vmem:[%s316 + $0x60] sm:$0xff]
        %v1305 = vld [vmem:[%s316 + $0x68] sm:$0xff]
        %v1306 = vld [vmem:[%s316 + $0x70] sm:$0xff]
        %v1307 = vld [vmem:[%s316 + $0x78] sm:$0xff]
        %v1308 = vld [vmem:[%s316 + $0x80] sm:$0xff]
        %v1309 = vld [vmem:[%s316 + $0x88] sm:$0xff]
        %v1310 = vld [vmem:[%s316 + $0x90] sm:$0xff]
        %v1311 = vld [vmem:[%s316 + $0x98] sm:$0xff]
        %v1312 = vld [vmem:[%s316 + $0xa0] sm:$0xff]
        %v1313 = vld [vmem:[%s316 + $0xa8] sm:$0xff]
        %v1314 = vld [vmem:[%s316 + $0xb0] sm:$0xff]
        %v1315 = vld [vmem:[%s316 + $0xb8] sm:$0xff]
        %v1316 = vld [vmem:[%s316 + $0xc0] sm:$0xff]
        %v1317 = vld [vmem:[%s316 + $0xc8] sm:$0xff]
        %v1318 = vld [vmem:[%s316 + $0xd0] sm:$0xff]
        %v1319 = vld [vmem:[%s316 + $0xd8] sm:$0xff]
        %v1320 = vld [vmem:[%s316 + $0xe0] sm:$0xff]
        %v1321 = vld [vmem:[%s316 + $0xe8] sm:$0xff]
        %v1322 = vld [vmem:[%s316 + $0xf0] sm:$0xff]
        %v1323 = vld [vmem:[%s316 + $0xf8] sm:$0xff]
        %v1324 = vpack.c.bf16 %v1293, %v1292
        %v1325 = vpack.c.bf16 %v1295, %v1294
        %v1326 = vpack.c.bf16 %v1297, %v1296
        %v1327 = vpack.c.bf16 %v1299, %v1298
        %v1328 = vpack.c.bf16 %v1301, %v1300
        %v1329 = vpack.c.bf16 %v1303, %v1302
        %v1330 = vpack.c.bf16 %v1305, %v1304
        %v1331 = vpack.c.bf16 %v1307, %v1306
        %v1332 = vpack.c.bf16 %v1309, %v1308
        %v1333 = vpack.c.bf16 %v1311, %v1310
        %v1334 = vpack.c.bf16 %v1313, %v1312
        %v1335 = vpack.c.bf16 %v1315, %v1314
        %v1336 = vpack.c.bf16 %v1317, %v1316
        %v1337 = vpack.c.bf16 %v1319, %v1318
        %v1338 = vpack.c.bf16 %v1321, %v1320
        %v1339 = vpack.c.bf16 %v1323, %v1322
        %v1340 = vld [vmem:[%s4 + $0x60] sm:$0xf]
        %v1341 = vld [vmem:[%s4 + $0x64] sm:$0xf]
        %v1342 = vld [vmem:[%s4 + $0x68] sm:$0xf]
        %v1343 = vld [vmem:[%s4 + $0x6c] sm:$0xf]
        %v1344 = vld [vmem:[%s4 + $0x70] sm:$0xf]
        %v1345 = vld [vmem:[%s4 + $0x74] sm:$0xf]
        %v1346 = vld [vmem:[%s4 + $0x78] sm:$0xf]
        %v1347 = vld [vmem:[%s4 + $0x7c] sm:$0xf]
        %v1356 = vunpack.c.l.b16 %v1340
        %v1357 = vunpack.c.l.b16 %v1341
        %v1358 = vunpack.c.l.b16 %v1342
        %v1359 = vunpack.c.l.b16 %v1343
        %v1360 = vunpack.c.l.b16 %v1344
        %v1361 = vunpack.c.l.b16 %v1345
        %v1362 = vunpack.c.l.b16 %v1346
        %v1363 = vunpack.c.l.b16 %v1347
        %v1364 = vpack.c.b16 %v1357, %v1356
        %v1365 = vpack.c.b16 %v1359, %v1358
        %v1366 = vpack.c.b16 %v1361, %v1360
        %v1367 = vpack.c.b16 %v1363, %v1362
        %v1373 = vsel %vm408, %v1324, 0
        %v1376 = vsel %vm408, %v1325, 0
        %v1379 = vsel %vm408, %v1326, 0
        %v1382 = vsel %vm408, %v1327, 0
        %v1385 = vsel %vm408, %v1328, 0
        %v1388 = vsel %vm408, %v1329, 0
        %v1391 = vsel %vm408, %v1330, 0
        %v1394 = vsel %vm408, %v1331, 0
        %v1397 = vsel %vm408, %v1332, 0
        %v1400 = vsel %vm408, %v1333, 0
        %v1403 = vsel %vm408, %v1334, 0
        %v1406 = vsel %vm408, %v1335, 0
        %v1409 = vsel %vm408, %v1336, 0
        %v1412 = vsel %vm408, %v1337, 0
        %v1415 = vsel %vm408, %v1338, 0
        %v1418 = vsel %vm408, %v1339, 0
        %1420 = vmatprep.subr.bf16.mxu0 0
        %1421 = vmatpush1.bf16.msra.mxu0 %v1364
        %1422 = vmatprep.subr.bf16.mxu0 0
        %1423 = vmatpush1.bf16.msra.mxu0 %v1365
        %1424 = vmatprep.subr.bf16.mxu0 0
        %1425 = vmatpush1.bf16.msra.mxu0 %v1366
        %1426 = vmatprep.subr.bf16.mxu0 0
        %1427 = vmatpush1.bf16.msra.mxu0 %v1367
        %1428 = vmatprep.subr.bf16.mxu0 0
        %1429 = vmatpush1.bf16.msra.mxu0 0
        %1430 = vmatprep.subr.bf16.mxu0 0
        %1431 = vmatpush1.bf16.msra.mxu0 0
        %1432 = vmatprep.subr.bf16.mxu0 0
        %1433 = vmatpush1.bf16.msra.mxu0 0
        %1434 = vmatprep.subr.bf16.mxu0 0
        %1435 = vmatpush1.bf16.msra.mxu0 0
        %1436 = vmatprep.subr.bf16.mxu0 0
        %1437 = vmatpush1.bf16.msra.mxu0 0
        %1438 = vmatprep.subr.bf16.mxu0 0
        %1439 = vmatpush1.bf16.msra.mxu0 0
        %1440 = vmatprep.subr.bf16.mxu0 0
        %1441 = vmatpush1.bf16.msra.mxu0 0
        %1442 = vmatprep.subr.bf16.mxu0 0
        %1443 = vmatpush1.bf16.msra.mxu0 0
        %1444 = vmatprep.subr.bf16.mxu0 0
        %1445 = vmatpush1.bf16.msra.mxu0 0
        %1446 = vmatprep.subr.bf16.mxu0 0
        %1447 = vmatpush1.bf16.msra.mxu0 0
        %1448 = vmatprep.subr.bf16.mxu0 0
        %1449 = vmatpush1.bf16.msra.mxu0 0
        %1450 = vmatprep.subr.bf16.mxu0 0
        %1451 = vmatpush1.bf16.msra.mxu0 0
        %1452 = vmatprep.mubr.bf16.mxu0 0
        %1453 = vmatmul.mubr.bf16.gmra.mrb[0].mxu0 %v1373
        %v1454 = vpop.f32.mrb[0].mxu0
        %v1455 = vadd.f32 0.0, %v1454
        %v1456 = vpop.f32.mrb[0].mxu0
        %v1457 = vpop.f32.mrb[0].mxu0
        %v1458 = vadd.f32 0.0, %v1457
        %v1459 = vpop.f32.mrb[0].mxu0
        %1460 = vmatprep.mubr.bf16.mxu0 0
        %1461 = vmatmul.mubr.bf16.gmra.mrb[0].mxu0 %v1376
        %v1462 = vpop.f32.mrb[0].mxu0
        %v1463 = vadd.f32 0.0, %v1462
        %v1464 = vpop.f32.mrb[0].mxu0
        %v1465 = vpop.f32.mrb[0].mxu0
        %v1466 = vadd.f32 0.0, %v1465
        %v1467 = vpop.f32.mrb[0].mxu0
        %1468 = vmatprep.mubr.bf16.mxu0 0
        %1469 = vmatmul.mubr.bf16.gmra.mrb[0].mxu0 %v1379
        %v1470 = vpop.f32.mrb[0].mxu0
        %v1471 = vadd.f32 0.0, %v1470
        %v1472 = vpop.f32.mrb[0].mxu0
        %v1473 = vpop.f32.mrb[0].mxu0
        %v1474 = vadd.f32 0.0, %v1473
        %v1475 = vpop.f32.mrb[0].mxu0
        %1476 = vmatprep.mubr.bf16.mxu0 0
        %1477 = vmatmul.mubr.bf16.gmra.mrb[0].mxu0 %v1382
        %v1478 = vpop.f32.mrb[0].mxu0
        %v1479 = vadd.f32 0.0, %v1478
        %v1480 = vpop.f32.mrb[0].mxu0
        %v1481 = vpop.f32.mrb[0].mxu0
        %v1482 = vadd.f32 0.0, %v1481
        %v1483 = vpop.f32.mrb[0].mxu0
        %1484 = vmatprep.mubr.bf16.mxu0 0
        %1485 = vmatmul.mubr.bf16.gmra.mrb[0].mxu0 %v1385
        %v1486 = vpop.f32.mrb[0].mxu0
        %v1487 = vadd.f32 0.0, %v1486
        %v1488 = vpop.f32.mrb[0].mxu0
        %v1489 = vpop.f32.mrb[0].mxu0
        %v1490 = vadd.f32 0.0, %v1489
        %v1491 = vpop.f32.mrb[0].mxu0
        %1492 = vmatprep.mubr.bf16.mxu0 0
        %1493 = vmatmul.mubr.bf16.gmra.mrb[0].mxu0 %v1388
        %v1494 = vpop.f32.mrb[0].mxu0
        %v1495 = vadd.f32 0.0, %v1494
        %v1496 = vpop.f32.mrb[0].mxu0
        %v1497 = vpop.f32.mrb[0].mxu0
        %v1498 = vadd.f32 0.0, %v1497
        %v1499 = vpop.f32.mrb[0].mxu0
        %1500 = vmatprep.mubr.bf16.mxu0 0
        %1501 = vmatmul.mubr.bf16.gmra.mrb[0].mxu0 %v1391
        %v1502 = vpop.f32.mrb[0].mxu0
        %v1503 = vadd.f32 0.0, %v1502
        %v1504 = vpop.f32.mrb[0].mxu0
        %v1505 = vpop.f32.mrb[0].mxu0
        %v1506 = vadd.f32 0.0, %v1505
        %v1507 = vpop.f32.mrb[0].mxu0
        %1508 = vmatprep.mubr.bf16.mxu0 0
        %1509 = vmatmul.mubr.bf16.gmra.mrb[0].mxu0 %v1394
        %v1510 = vpop.f32.mrb[0].mxu0
        %v1511 = vadd.f32 0.0, %v1510
        %v1512 = vpop.f32.mrb[0].mxu0
        %v1513 = vpop.f32.mrb[0].mxu0
        %v1514 = vadd.f32 0.0, %v1513
        %v1515 = vpop.f32.mrb[0].mxu0
        %1516 = vmatprep.mubr.bf16.mxu0 0
        %1517 = vmatmul.mubr.bf16.gmra.mrb[0].mxu0 %v1397
        %v1518 = vpop.f32.mrb[0].mxu0
        %v1519 = vadd.f32 0.0, %v1518
        %v1520 = vpop.f32.mrb[0].mxu0
        %v1521 = vpop.f32.mrb[0].mxu0
        %v1522 = vadd.f32 0.0, %v1521
        %v1523 = vpop.f32.mrb[0].mxu0
        %1524 = vmatprep.mubr.bf16.mxu0 0
        %1525 = vmatmul.mubr.bf16.gmra.mrb[0].mxu0 %v1400
        %v1526 = vpop.f32.mrb[0].mxu0
        %v1527 = vadd.f32 0.0, %v1526
        %v1528 = vpop.f32.mrb[0].mxu0
        %v1529 = vpop.f32.mrb[0].mxu0
        %v1530 = vadd.f32 0.0, %v1529
        %v1531 = vpop.f32.mrb[0].mxu0
        %1532 = vmatprep.mubr.bf16.mxu0 0
        %1533 = vmatmul.mubr.bf16.gmra.mrb[0].mxu0 %v1403
        %v1534 = vpop.f32.mrb[0].mxu0
        %v1535 = vadd.f32 0.0, %v1534
        %v1536 = vpop.f32.mrb[0].mxu0
        %v1537 = vpop.f32.mrb[0].mxu0
        %v1538 = vadd.f32 0.0, %v1537
        %v1539 = vpop.f32.mrb[0].mxu0
        %1540 = vmatprep.mubr.bf16.mxu0 0
        %1541 = vmatmul.mubr.bf16.gmra.mrb[0].mxu0 %v1406
        %v1542 = vpop.f32.mrb[0].mxu0
        %v1543 = vadd.f32 0.0, %v1542
        %v1544 = vpop.f32.mrb[0].mxu0
        %v1545 = vpop.f32.mrb[0].mxu0
        %v1546 = vadd.f32 0.0, %v1545
        %v1547 = vpop.f32.mrb[0].mxu0
        %1548 = vmatprep.mubr.bf16.mxu0 0
        %1549 = vmatmul.mubr.bf16.gmra.mrb[0].mxu0 %v1409
        %v1550 = vpop.f32.mrb[0].mxu0
        %v1551 = vadd.f32 0.0, %v1550
        %v1552 = vpop.f32.mrb[0].mxu0
        %v1553 = vpop.f32.mrb[0].mxu0
        %v1554 = vadd.f32 0.0, %v1553
        %v1555 = vpop.f32.mrb[0].mxu0
        %1556 = vmatprep.mubr.bf16.mxu0 0
        %1557 = vmatmul.mubr.bf16.gmra.mrb[0].mxu0 %v1412
        %v1558 = vpop.f32.mrb[0].mxu0
        %v1559 = vadd.f32 0.0, %v1558
        %v1560 = vpop.f32.mrb[0].mxu0
        %v1561 = vpop.f32.mrb[0].mxu0
        %v1562 = vadd.f32 0.0, %v1561
        %v1563 = vpop.f32.mrb[0].mxu0
        %1564 = vmatprep.mubr.bf16.mxu0 0
        %1565 = vmatmul.mubr.bf16.gmra.mrb[0].mxu0 %v1415
        %v1566 = vpop.f32.mrb[0].mxu0
        %v1567 = vadd.f32 0.0, %v1566
        %v1568 = vpop.f32.mrb[0].mxu0
        %v1569 = vpop.f32.mrb[0].mxu0
        %v1570 = vadd.f32 0.0, %v1569
        %v1571 = vpop.f32.mrb[0].mxu0
        %1572 = vmatprep.mubr.bf16.mxu0 0
        %1573 = vmatmul.mubr.bf16.gmra.mrb[0].mxu0 %v1418
        %v1574 = vpop.f32.mrb[0].mxu0
        %v1575 = vadd.f32 0.0, %v1574
        %v1576 = vpop.f32.mrb[0].mxu0
        %v1577 = vpop.f32.mrb[0].mxu0
        %v1578 = vadd.f32 0.0, %v1577
        %v1579 = vpop.f32.mrb[0].mxu0
        %1580 = vdwg.mxu0
        %v1581 = vadd.f32 %v1260, %v1455
        %v1582 = vadd.f32 %v1261, %v1458
        %v1583 = vadd.f32 %v1262, %v1463
        %v1584 = vadd.f32 %v1263, %v1466
        %v1585 = vadd.f32 %v1264, %v1471
        %v1586 = vadd.f32 %v1265, %v1474
        %v1587 = vadd.f32 %v1266, %v1479
        %v1588 = vadd.f32 %v1267, %v1482
        %v1589 = vadd.f32 %v1268, %v1487
        %v1590 = vadd.f32 %v1269, %v1490
        %v1591 = vadd.f32 %v1270, %v1495
        %v1592 = vadd.f32 %v1271, %v1498
        %v1593 = vadd.f32 %v1272, %v1503
        %v1594 = vadd.f32 %v1273, %v1506
        %v1595 = vadd.f32 %v1274, %v1511
        %v1596 = vadd.f32 %v1275, %v1514
        %v1597 = vadd.f32 %v1276, %v1519
        %v1598 = vadd.f32 %v1277, %v1522
        %v1599 = vadd.f32 %v1278, %v1527
        %v1600 = vadd.f32 %v1279, %v1530
        %v1601 = vadd.f32 %v1280, %v1535
        %v1602 = vadd.f32 %v1281, %v1538
        %v1603 = vadd.f32 %v1282, %v1543
        %v1604 = vadd.f32 %v1283, %v1546
        %v1605 = vadd.f32 %v1284, %v1551
        %v1606 = vadd.f32 %v1285, %v1554
        %v1607 = vadd.f32 %v1286, %v1559
        %v1608 = vadd.f32 %v1287, %v1562
        %v1609 = vadd.f32 %v1288, %v1567
        %v1610 = vadd.f32 %v1289, %v1570
        %v1611 = vadd.f32 %v1290, %v1575
        %v1612 = vadd.f32 %v1291, %v1578
        %v1613 = vmax.f32 %v1581, 0.0
        %v1614 = vmax.f32 %v1582, 0.0
        %v1615 = vmax.f32 %v1583, 0.0
        %v1616 = vmax.f32 %v1584, 0.0
        %v1617 = vmax.f32 %v1585, 0.0
        %v1618 = vmax.f32 %v1586, 0.0
        %v1619 = vmax.f32 %v1587, 0.0
        %v1620 = vmax.f32 %v1588, 0.0
        %v1621 = vmax.f32 %v1589, 0.0
        %v1622 = vmax.f32 %v1590, 0.0
        %v1623 = vmax.f32 %v1591, 0.0
        %v1624 = vmax.f32 %v1592, 0.0
        %v1625 = vmax.f32 %v1593, 0.0
        %v1626 = vmax.f32 %v1594, 0.0
        %v1627 = vmax.f32 %v1595, 0.0
        %v1628 = vmax.f32 %v1596, 0.0
        %v1629 = vmax.f32 %v1597, 0.0
        %v1630 = vmax.f32 %v1598, 0.0
        %v1631 = vmax.f32 %v1599, 0.0
        %v1632 = vmax.f32 %v1600, 0.0
        %v1633 = vmax.f32 %v1601, 0.0
        %v1634 = vmax.f32 %v1602, 0.0
        %v1635 = vmax.f32 %v1603, 0.0
        %v1636 = vmax.f32 %v1604, 0.0
        %v1637 = vmax.f32 %v1605, 0.0
        %v1638 = vmax.f32 %v1606, 0.0
        %v1639 = vmax.f32 %v1607, 0.0
        %v1640 = vmax.f32 %v1608, 0.0
        %v1641 = vmax.f32 %v1609, 0.0
        %v1642 = vmax.f32 %v1610, 0.0
        %v1643 = vmax.f32 %v1611, 0.0
        %v1644 = vmax.f32 %v1612, 0.0
        %1645 = vst.msk [vmem:[%s293] sm:$0xff] %vm408, %v1613
        %1646 = vst.msk [vmem:[%s293 + $0x8] sm:$0xff] %vm408, %v1614
        %1647 = vst.msk [vmem:[%s293 + $0x10] sm:$0xff] %vm408, %v1615
        %1648 = vst.msk [vmem:[%s293 + $0x18] sm:$0xff] %vm408, %v1616
        %1649 = vst.msk [vmem:[%s293 + $0x20] sm:$0xff] %vm408, %v1617
        %1650 = vst.msk [vmem:[%s293 + $0x28] sm:$0xff] %vm408, %v1618
        %1651 = vst.msk [vmem:[%s293 + $0x30] sm:$0xff] %vm408, %v1619
        %1652 = vst.msk [vmem:[%s293 + $0x38] sm:$0xff] %vm408, %v1620
        %1653 = vst.msk [vmem:[%s293 + $0x40] sm:$0xff] %vm408, %v1621
        %1654 = vst.msk [vmem:[%s293 + $0x48] sm:$0xff] %vm408, %v1622
        %1655 = vst.msk [vmem:[%s293 + $0x50] sm:$0xff] %vm408, %v1623
        %1656 = vst.msk [vmem:[%s293 + $0x58] sm:$0xff] %vm408, %v1624
        %1657 = vst.msk [vmem:[%s293 + $0x60] sm:$0xff] %vm408, %v1625
        %1658 = vst.msk [vmem:[%s293 + $0x68] sm:$0xff] %vm408, %v1626
        %1659 = vst.msk [vmem:[%s293 + $0x70] sm:$0xff] %vm408, %v1627
        %1660 = vst.msk [vmem:[%s293 + $0x78] sm:$0xff] %vm408, %v1628
        %1661 = vst.msk [vmem:[%s293 + $0x80] sm:$0xff] %vm408, %v1629
        %1662 = vst.msk [vmem:[%s293 + $0x88] sm:$0xff] %vm408, %v1630
        %1663 = vst.msk [vmem:[%s293 + $0x90] sm:$0xff] %vm408, %v1631
        %1664 = vst.msk [vmem:[%s293 + $0x98] sm:$0xff] %vm408, %v1632
        %1665 = vst.msk [vmem:[%s293 + $0xa0] sm:$0xff] %vm408, %v1633
        %1666 = vst.msk [vmem:[%s293 + $0xa8] sm:$0xff] %vm408, %v1634
        %1667 = vst.msk [vmem:[%s293 + $0xb0] sm:$0xff] %vm408, %v1635
        %1668 = vst.msk [vmem:[%s293 + $0xb8] sm:$0xff] %vm408, %v1636
        %1669 = vst.msk [vmem:[%s293 + $0xc0] sm:$0xff] %vm408, %v1637
        %1670 = vst.msk [vmem:[%s293 + $0xc8] sm:$0xff] %vm408, %v1638
        %1671 = vst.msk [vmem:[%s293 + $0xd0] sm:$0xff] %vm408, %v1639
        %1672 = vst.msk [vmem:[%s293 + $0xd8] sm:$0xff] %vm408, %v1640
        %1673 = vst.msk [vmem:[%s293 + $0xe0] sm:$0xff] %vm408, %v1641
        %1674 = vst.msk [vmem:[%s293 + $0xe8] sm:$0xff] %vm408, %v1642
        %1675 = vst.msk [vmem:[%s293 + $0xf0] sm:$0xff] %vm408, %v1643
        %1676 = vst.msk [vmem:[%s293 + $0xf8] sm:$0xff] %vm408, %v1644
        %s1677 = sand.u32 %s174, 1
        %s1678 = scalar_lea.sflag [#allocation3], %s1677
        %s1679 = sand.u32 %s174, 1
        %s1680 = smul.addr %s1679, 256
        %s1681 = scalar_lea.vmem [#allocation2], %s1680
        // Predicated region
        $region45: #{block_forward.11} parent=43 // pred_check
          %p1682 = pneg %p184
        $region46: #{block_forward.11} parent=43 // pred_check_branch
          %1684 = sbr.rel (%p1682) target = $region48
        $region47: #{block_forward.11} parent=43 // pred_region
          %s1685 = smul.u32 32, %s20
          %s1687 = ssub.s32 4096, 4096
          %1688 = vsyncadd %s1678, %s1687
          %s1689 = smul.addr %s1685, 128
          %s1690 = scalar_lea.hbm %s6, %s1689
          %s1691 = sshll.u32 %s1681, 4
          %s1692 = int_to_ptr.vmem [resolvable:$true] %s1691
          %1697 = dma.vmem_to_hbm [thread:$0]  %s1692, 4096, %s1690, %s1678, 128, 128, 8
        $region48: #{block_forward.11} parent=43 // pred_fallthru
          _
      $region44: #{block_forward.11} parent=5 // pred_fallthru
        _
      %p1698 = scmp.le.s32.totalorder 2, %s15
      // Predicated region
      $region49: #{block_forward.11} parent=5 // pred_check
        %p1699 = pneg %p1698
      $region50: #{block_forward.11} parent=5 // pred_check_branch
        %1701 = sbr.rel (%p1699) target = $region52
      $region51: #{block_forward.11} parent=5 // pred_region
        %s1702 = ssub.s32 %s15, 2
        // Predicated region
        $region53: #{block_forward.11} parent=51 // pred_check
          %p1703 = pneg %p190
        $region54: #{block_forward.11} parent=51 // pred_check_branch
          %1705 = sbr.rel (%p1703) target = $region56
        $region55: #{block_forward.11} parent=51 // pred_region
          %s1706 = sand.u32 %s175, 1
          %s1707 = scalar_lea.sflag [#allocation3], %s1706
          %s1708 = sand.u32 %s175, 1
          %s1709 = smul.addr %s1708, 256
          %s1710 = scalar_lea.vmem [#allocation2], %s1709
          %1711 = dma.done %s1707, 4096
        $region56: #{block_forward.11} parent=51 // pred_fallthru
          _
      $region52: #{block_forward.11} parent=5 // pred_fallthru
        _
    $region6: #{block_forward.11} parent=1 // loop_footer
      %s19 = sadd.s32 1, %s15
    $region7: #{block_forward.11} parent=1 // loop_footer_branch
      %14 = sbr.rel target = $region3
    $region8: #{block_forward.11} parent=1 // loop_exit
      _
    %1712 = vsyncpa [#allocation3], 1
    %s1713 = scalar_lea.sflag [#allocation3], 1
    %1714 = vsyncpa %s1713, 1

// kernel: block_forward.6
$region0: #{block_forward.6}
  #allocation0 [shape = 'u32[]', space=smem, size = 0x4, offset = 0x4, fixed_abs, tag = 'smem constant byte address 0x4 - core index']
  #allocation1 [shape = 'u32[144,128]{1,0:T(1,128)}', space=vmem, size = 0x12000, scoped, tag = 'internal scratch']
  #allocation2 [shape = 'bf16[18,32,64]{2,1,0:T(16,128)(2,1)}', space=vmem, size = 0x24000, scoped, tag = 'scratch operand']
  %s0 = inlined_call_operand.vmem [shape: f32[2,18,18,64], index: 0, kind: input, shape index: {}]
  %s1 = inlined_call_operand.vmem [shape: bf16[9,64,64], index: 1, kind: input, shape index: {}]
  %s2 = inlined_call_operand.vmem [shape: f32[1,64], index: 2, kind: input, shape index: {}]
  %s3 = inlined_call_operand.vmem [shape: bf16[9,64,64], index: 3, kind: input, shape index: {}]
  %s4 = inlined_call_operand.vmem [shape: f32[1,64], index: 4, kind: input, shape index: {}]
  %s5 = inlined_call_operand.vmem [shape: bf16[64,64], index: 5, kind: input, shape index: {}]
  %s6 = inlined_call_operand.vmem [shape: f32[1,64], index: 6, kind: input, shape index: {}]
  %s7 = inlined_call_operand.vmem [shape: f32[2,16,16,64], index: 7, kind: output, shape index: {}]
  %s8 = sld [smem:[#allocation0]]
  $region61: #{block_forward.6} parent=0
    _
  %s10 = ssub.s32 1, %s8
  %s11 = scalar_select 0, %s10, %s8
  loop: start=0, step=1, limit=4
  $region2: #{block_forward.6} parent=0 // loop_pre_header
    _
  $region3: #{block_forward.6} parent=0 // loop_header
    %s13 = sphi 0, %s17
    %p14 = scmp.ge.s32.totalorder %s13, 4
    %s23 = sphi 0, %s25
    %s26 = sphi 0, %s23
    %s27 = sphi 0, %s26
    %s43 = sphi 0, %s27
    %s47 = sphi 0, %s47
    %s49 = sphi 0, %s47
    %s50 = sphi 0, %s49
    %s64 = sphi 0, %s50
    %s68 = sphi 0, %s68
    %s70 = sphi 0, %s68
    %s71 = sphi 0, %s70
    %s85 = sphi 0, %s71
    %s89 = sphi 0, %s89
    %s91 = sphi 0, %s89
    %s92 = sphi 0, %s91
    %s106 = sphi 0, %s92
    %s110 = sphi 0, %s110
    %s112 = sphi 0, %s110
    %s113 = sphi 0, %s112
    %s127 = sphi 0, %s113
    %s131 = sphi 0, %s131
    %s133 = sphi 0, %s131
    %s134 = sphi 0, %s133
    %s148 = sphi 0, %s134
    %s152 = sphi 0, %s152
    %s154 = sphi 0, %s152
    %s155 = sphi 0, %s154
    %s169 = sphi 0, %s155
    %s175 = sphi 0, %s177
    %s178 = sphi 0, %s175
    %s179 = sphi 0, %s178
    %s195 = sphi 0, %s179
  $region4: #{block_forward.6} parent=0 // loop_header_branch
    %16 = sbr.rel (%p14) target = $region8
  $region5: #{block_forward.6} parent=0 // loop_body
    %s18 = ssub.s32 %s13, 1
    %s19 = ssub.s32 %s13, 2
    %s20 = sadd.s32 %s13, 1
    %s21 = ssub.s32 %s13, %s20
    %p22 = scmp.eq.s32.totalorder %s21, 0
    %s24 = sadd.s32 %s23, 1
    %s25 = scalar_select %p22, %s23, %s24
    %p28 = pneg %p22
    %p29 = scmp.eq.s32.totalorder %s13, 1
    %p30 = por %p28, %p29
    %p31 = scmp.ne.s32.totalorder %s23, %s26
    %p32 = scmp.eq.s32.totalorder %s13, 0
    %p33 = por %p31, %p32
    %p34 = scmp.ne.s32.totalorder %s23, %s26
    %p35 = scmp.eq.s32.totalorder %s18, 1
    %p36 = por %p34, %p35
    %p37 = scmp.ne.s32.totalorder %s26, %s27
    %p38 = scmp.eq.s32.totalorder %s18, 0
    %p39 = por %p37, %p38
    %p40 = scmp.ne.s32.totalorder %s26, %s27
    %p41 = scmp.eq.s32.totalorder %s19, 1
    %p42 = por %p40, %p41
    %p44 = scmp.ne.s32.totalorder %s27, %s43
    %p45 = scmp.eq.s32.totalorder %s19, 0
    %p46 = por %p44, %p45
    %s48 = sadd.s32 %s47, 1
    %p51 = scmp.eq.s32.totalorder %s13, 1
    %p52 = scmp.ne.s32.totalorder %s47, %s49
    %p53 = scmp.eq.s32.totalorder %s13, 0
    %p54 = por %p52, %p53
    %p55 = scmp.ne.s32.totalorder %s47, %s49
    %p56 = scmp.eq.s32.totalorder %s18, 1
    %p57 = por %p55, %p56
    %p58 = scmp.ne.s32.totalorder %s49, %s50
    %p59 = scmp.eq.s32.totalorder %s18, 0
    %p60 = por %p58, %p59
    %p61 = scmp.ne.s32.totalorder %s49, %s50
    %p62 = scmp.eq.s32.totalorder %s19, 1
    %p63 = por %p61, %p62
    %p65 = scmp.ne.s32.totalorder %s50, %s64
    %p66 = scmp.eq.s32.totalorder %s19, 0
    %p67 = por %p65, %p66
    %s69 = sadd.s32 %s68, 1
    %p72 = scmp.eq.s32.totalorder %s13, 1
    %p73 = scmp.ne.s32.totalorder %s68, %s70
    %p74 = scmp.eq.s32.totalorder %s13, 0
    %p75 = por %p73, %p74
    %p76 = scmp.ne.s32.totalorder %s68, %s70
    %p77 = scmp.eq.s32.totalorder %s18, 1
    %p78 = por %p76, %p77
    %p79 = scmp.ne.s32.totalorder %s70, %s71
    %p80 = scmp.eq.s32.totalorder %s18, 0
    %p81 = por %p79, %p80
    %p82 = scmp.ne.s32.totalorder %s70, %s71
    %p83 = scmp.eq.s32.totalorder %s19, 1
    %p84 = por %p82, %p83
    %p86 = scmp.ne.s32.totalorder %s71, %s85
    %p87 = scmp.eq.s32.totalorder %s19, 0
    %p88 = por %p86, %p87
    %s90 = sadd.s32 %s89, 1
    %p93 = scmp.eq.s32.totalorder %s13, 1
    %p94 = scmp.ne.s32.totalorder %s89, %s91
    %p95 = scmp.eq.s32.totalorder %s13, 0
    %p96 = por %p94, %p95
    %p97 = scmp.ne.s32.totalorder %s89, %s91
    %p98 = scmp.eq.s32.totalorder %s18, 1
    %p99 = por %p97, %p98
    %p100 = scmp.ne.s32.totalorder %s91, %s92
    %p101 = scmp.eq.s32.totalorder %s18, 0
    %p102 = por %p100, %p101
    %p103 = scmp.ne.s32.totalorder %s91, %s92
    %p104 = scmp.eq.s32.totalorder %s19, 1
    %p105 = por %p103, %p104
    %p107 = scmp.ne.s32.totalorder %s92, %s106
    %p108 = scmp.eq.s32.totalorder %s19, 0
    %p109 = por %p107, %p108
    %s111 = sadd.s32 %s110, 1
    %p114 = scmp.eq.s32.totalorder %s13, 1
    %p115 = scmp.ne.s32.totalorder %s110, %s112
    %p116 = scmp.eq.s32.totalorder %s13, 0
    %p117 = por %p115, %p116
    %p118 = scmp.ne.s32.totalorder %s110, %s112
    %p119 = scmp.eq.s32.totalorder %s18, 1
    %p120 = por %p118, %p119
    %p121 = scmp.ne.s32.totalorder %s112, %s113
    %p122 = scmp.eq.s32.totalorder %s18, 0
    %p123 = por %p121, %p122
    %p124 = scmp.ne.s32.totalorder %s112, %s113
    %p125 = scmp.eq.s32.totalorder %s19, 1
    %p126 = por %p124, %p125
    %p128 = scmp.ne.s32.totalorder %s113, %s127
    %p129 = scmp.eq.s32.totalorder %s19, 0
    %p130 = por %p128, %p129
    %s132 = sadd.s32 %s131, 1
    %p135 = scmp.eq.s32.totalorder %s13, 1
    %p136 = scmp.ne.s32.totalorder %s131, %s133
    %p137 = scmp.eq.s32.totalorder %s13, 0
    %p138 = por %p136, %p137
    %p139 = scmp.ne.s32.totalorder %s131, %s133
    %p140 = scmp.eq.s32.totalorder %s18, 1
    %p141 = por %p139, %p140
    %p142 = scmp.ne.s32.totalorder %s133, %s134
    %p143 = scmp.eq.s32.totalorder %s18, 0
    %p144 = por %p142, %p143
    %p145 = scmp.ne.s32.totalorder %s133, %s134
    %p146 = scmp.eq.s32.totalorder %s19, 1
    %p147 = por %p145, %p146
    %p149 = scmp.ne.s32.totalorder %s134, %s148
    %p150 = scmp.eq.s32.totalorder %s19, 0
    %p151 = por %p149, %p150
    %s153 = sadd.s32 %s152, 1
    %p156 = scmp.eq.s32.totalorder %s13, 1
    %p157 = scmp.ne.s32.totalorder %s152, %s154
    %p158 = scmp.eq.s32.totalorder %s13, 0
    %p159 = por %p157, %p158
    %p160 = scmp.ne.s32.totalorder %s152, %s154
    %p161 = scmp.eq.s32.totalorder %s18, 1
    %p162 = por %p160, %p161
    %p163 = scmp.ne.s32.totalorder %s154, %s155
    %p164 = scmp.eq.s32.totalorder %s18, 0
    %p165 = por %p163, %p164
    %p166 = scmp.ne.s32.totalorder %s154, %s155
    %p167 = scmp.eq.s32.totalorder %s19, 1
    %p168 = por %p166, %p167
    %p170 = scmp.ne.s32.totalorder %s155, %s169
    %p171 = scmp.eq.s32.totalorder %s19, 0
    %p172 = por %p170, %p171
    %s173 = ssub.s32 %s13, %s20
    %p174 = scmp.eq.s32.totalorder %s173, 0
    %s176 = sadd.s32 %s175, 1
    %s177 = scalar_select %p174, %s175, %s176
    %p180 = pneg %p174
    %p181 = scmp.eq.s32.totalorder %s13, 1
    %p182 = por %p180, %p181
    %p183 = scmp.ne.s32.totalorder %s175, %s178
    %p184 = scmp.eq.s32.totalorder %s13, 0
    %p185 = por %p183, %p184
    %p186 = scmp.ne.s32.totalorder %s175, %s178
    %p187 = scmp.eq.s32.totalorder %s18, 1
    %p188 = por %p186, %p187
    %p189 = scmp.ne.s32.totalorder %s178, %s179
    %p190 = scmp.eq.s32.totalorder %s18, 0
    %p191 = por %p189, %p190
    %p192 = scmp.ne.s32.totalorder %s178, %s179
    %p193 = scmp.eq.s32.totalorder %s19, 1
    %p194 = por %p192, %p193
    %p196 = scmp.ne.s32.totalorder %s179, %s195
    %p197 = scmp.eq.s32.totalorder %s19, 0
    %p198 = por %p196, %p197
    %p199 = scmp.le.s32.totalorder 1, %s13
    %p200 = scmp.lt.s32.totalorder %s13, 3
    %p201 = pnand %p199, %p200
    %p202 = pneg %p201
    // Predicated region
    $region9: #{block_forward.6} parent=5 // pred_check
      _
    $region10: #{block_forward.6} parent=5 // pred_check_branch
      %204 = sbr.rel (%p201) target = $region12
    $region11: #{block_forward.6} parent=5 // pred_region
      %s205 = ssub.s32 %s13, 1
      // Predicated region
      $region13: #{block_forward.6} parent=11 // pred_check
        %p206 = pneg %p60
      $region14: #{block_forward.6} parent=11 // pred_check_branch
        %208 = sbr.rel (%p206) target = $region16
      $region15: #{block_forward.6} parent=11 // pred_region
        _
      $region16: #{block_forward.6} parent=11 // pred_fallthru
        _
      // Predicated region
      $region17: #{block_forward.6} parent=11 // pred_check
        %p209 = pneg %p81
      $region18: #{block_forward.6} parent=11 // pred_check_branch
        %211 = sbr.rel (%p209) target = $region20
      $region19: #{block_forward.6} parent=11 // pred_region
        _
      $region20: #{block_forward.6} parent=11 // pred_fallthru
        _
      // Predicated region
      $region21: #{block_forward.6} parent=11 // pred_check
        %p212 = pneg %p102
      $region22: #{block_forward.6} parent=11 // pred_check_branch
        %214 = sbr.rel (%p212) target = $region24
      $region23: #{block_forward.6} parent=11 // pred_region
        _
      $region24: #{block_forward.6} parent=11 // pred_fallthru
        _
      // Predicated region
      $region25: #{block_forward.6} parent=11 // pred_check
        %p215 = pneg %p123
      $region26: #{block_forward.6} parent=11 // pred_check_branch
        %217 = sbr.rel (%p215) target = $region28
      $region27: #{block_forward.6} parent=11 // pred_region
        _
      $region28: #{block_forward.6} parent=11 // pred_fallthru
        _
      // Predicated region
      $region29: #{block_forward.6} parent=11 // pred_check
        %p218 = pneg %p144
      $region30: #{block_forward.6} parent=11 // pred_check_branch
        %220 = sbr.rel (%p218) target = $region32
      $region31: #{block_forward.6} parent=11 // pred_region
        _
      $region32: #{block_forward.6} parent=11 // pred_fallthru
        _
      // Predicated region
      $region33: #{block_forward.6} parent=11 // pred_check
        %p221 = pneg %p165
      $region34: #{block_forward.6} parent=11 // pred_check_branch
        %223 = sbr.rel (%p221) target = $region36
      $region35: #{block_forward.6} parent=11 // pred_region
        _
      $region36: #{block_forward.6} parent=11 // pred_fallthru
        _
    $region12: #{block_forward.6} parent=5 // pred_fallthru
      _
    %p224 = scmp.lt.s32.totalorder %s13, 2
    // Predicated region
    $region37: #{block_forward.6} parent=5 // pred_check
      %p225 = pneg %p224
    $region38: #{block_forward.6} parent=5 // pred_check_branch
      %227 = sbr.rel (%p225) target = $region40
    $region39: #{block_forward.6} parent=5 // pred_region
      // Predicated region
      $region41: #{block_forward.6} parent=39 // pred_check
        %p228 = pneg %p33
      $region42: #{block_forward.6} parent=39 // pred_check_branch
        %230 = sbr.rel (%p228) target = $region44
      $region43: #{block_forward.6} parent=39 // pred_region
        %p231 = scmp.lt.s32.totalorder %s13, 1
        %s232 = scalar_select %p231, %s13, 1
        %s233 = smul.addr %s232, 54
        %s234 = smul.addr %s233, 8
        %s235 = scalar_lea.vmem %s0, %s234
      $region44: #{block_forward.6} parent=39 // pred_fallthru
        _
    $region40: #{block_forward.6} parent=5 // pred_fallthru
      _
    %p236 = scmp.le.s32.totalorder 1, %s13
    %p237 = scmp.lt.s32.totalorder %s13, 3
    %p238 = pnand %p236, %p237
    %p239 = pneg %p238
    // Predicated region
    $region45: #{block_forward.6} parent=5 // pred_check
      _
    $region46: #{block_forward.6} parent=5 // pred_check_branch
      %241 = sbr.rel (%p238) target = $region48
    $region47: #{block_forward.6} parent=5 // pred_region
      %s242 = ssub.s32 %s13, 1
      %p243 = scmp.lt.s32.totalorder %s18, 1
      %s244 = scalar_select %p243, %s18, 1
      %s245 = smul.addr %s244, 54
      %s246 = smul.addr %s245, 8
      %s247 = scalar_lea.vmem %s0, %s246
      %p248 = pneg %p39
      %p249 = pneg %p36
      %p250 = pneg %p60
      %p251 = pneg %p57
      %p252 = pneg %p81
      %p253 = pneg %p78
      %p254 = pneg %p102
      %p255 = pneg %p99
      %p256 = pneg %p123
      %p257 = pneg %p120
      %p258 = pneg %p144
      %p259 = pneg %p141
      %p260 = pneg %p165
      %p261 = pneg %p162
      %p262 = pneg %p191
      %p263 = pneg %p188
      %p264 = scmp.lt.s32.totalorder %s18, 1
      %s265 = scalar_select %p264, %s18, 1
      %s266 = smul.addr %s265, 32
      %s267 = smul.addr %s266, 8
      %s268 = scalar_lea.vmem %s7, %s267
      %p269 = scmp.lt.s32.totalorder %s18, 1
      %s270 = scalar_select %p269, %s18, 1
      %s271 = smul.addr %s270, 54
      %s272 = smul.addr %s271, 8
      %s273 = scalar_lea.vmem %s0, %s272
      %p274 = scmp.lt.s32.totalorder %s18, 1
      %s275 = scalar_select %p274, %s18, 1
      %s276 = smul.addr %s275, 32
      %s277 = smul.addr %s276, 8
      %s278 = scalar_lea.vmem %s7, %s277
      %v280 = vld [vmem:[%s2] sm:$0x1]
      %v282 = vlaneseq
      %v283 = vshrl.u32 %v282, 7
      %v284 = vsub.s32 0, %v283
      %v285 = vrot.slane %v280, %v284
      %v287 = vadd.f32 %v285, 0.0
      %v288 = vld [vmem:[%s273] sm:$0xff]
      %v289 = vld [vmem:[%s273 + $0x8] sm:$0xff]
      %v290 = vld [vmem:[%s273 + $0x18] sm:$0xff]
      %v291 = vld [vmem:[%s273 + $0x20] sm:$0xff]
      %v292 = vld [vmem:[%s273 + $0x30] sm:$0xff]
      %v293 = vld [vmem:[%s273 + $0x38] sm:$0xff]
      %v294 = vld [vmem:[%s273 + $0x48] sm:$0xff]
      %v295 = vld [vmem:[%s273 + $0x50] sm:$0xff]
      %v296 = vld [vmem:[%s273 + $0x60] sm:$0xff]
      %v297 = vld [vmem:[%s273 + $0x68] sm:$0xff]
      %v298 = vld [vmem:[%s273 + $0x78] sm:$0xff]
      %v299 = vld [vmem:[%s273 + $0x80] sm:$0xff]
      %v300 = vld [vmem:[%s273 + $0x90] sm:$0xff]
      %v301 = vld [vmem:[%s273 + $0x98] sm:$0xff]
      %v302 = vld [vmem:[%s273 + $0xa8] sm:$0xff]
      %v303 = vld [vmem:[%s273 + $0xb0] sm:$0xff]
      %v304 = vld [vmem:[%s273 + $0xc0] sm:$0xff]
      %v305 = vld [vmem:[%s273 + $0xc8] sm:$0xff]
      %v306 = vld [vmem:[%s273 + $0xd8] sm:$0xff]
      %v307 = vld [vmem:[%s273 + $0xe0] sm:$0xff]
      %v308 = vld [vmem:[%s273 + $0xf0] sm:$0xff]
      %v309 = vld [vmem:[%s273 + $0xf8] sm:$0xff]
      %v310 = vld [vmem:[%s273 + $0x108] sm:$0xff]
      %v311 = vld [vmem:[%s273 + $0x110] sm:$0xff]
      %v312 = vld [vmem:[%s273 + $0x120] sm:$0xff]
      %v313 = vld [vmem:[%s273 + $0x128] sm:$0xff]
      %v314 = vld [vmem:[%s273 + $0x138] sm:$0xff]
      %v315 = vld [vmem:[%s273 + $0x140] sm:$0xff]
      %v316 = vld [vmem:[%s273 + $0x150] sm:$0xff]
      %v317 = vld [vmem:[%s273 + $0x158] sm:$0xff]
      %v318 = vld [vmem:[%s273 + $0x168] sm:$0xff]
      %v319 = vld [vmem:[%s273 + $0x170] sm:$0xff]
      %v320 = vpack.c.bf16 %v289, %v288
      %v321 = vpack.c.bf16 %v291, %v290
      %v322 = vpack.c.bf16 %v293, %v292
      %v323 = vpack.c.bf16 %v295, %v294
      %v324 = vpack.c.bf16 %v297, %v296
      %v325 = vpack.c.bf16 %v299, %v298
      %v326 = vpack.c.bf16 %v301, %v300
      %v327 = vpack.c.bf16 %v303, %v302
      %v328 = vpack.c.bf16 %v305, %v304
      %v329 = vpack.c.bf16 %v307, %v306
      %v330 = vpack.c.bf16 %v309, %v308
      %v331 = vpack.c.bf16 %v311, %v310
      %v332 = vpack.c.bf16 %v313, %v312
      %v333 = vpack.c.bf16 %v315, %v314
      %v334 = vpack.c.bf16 %v317, %v316
      %v335 = vpack.c.bf16 %v319, %v318
      %v336 = vld [vmem:[%s1] sm:$0xf]
      %v337 = vld [vmem:[%s1 + $0x4] sm:$0xf]
      %v338 = vld [vmem:[%s1 + $0x8] sm:$0xf]
      %v339 = vld [vmem:[%s1 + $0xc] sm:$0xf]
      %v340 = vld [vmem:[%s1 + $0x10] sm:$0xf]
      %v341 = vld [vmem:[%s1 + $0x14] sm:$0xf]
      %v342 = vld [vmem:[%s1 + $0x18] sm:$0xf]
      %v343 = vld [vmem:[%s1 + $0x1c] sm:$0xf]
      %v352 = vunpack.c.l.b16 %v336
      %v353 = vunpack.c.l.b16 %v337
      %v354 = vunpack.c.l.b16 %v338
      %v355 = vunpack.c.l.b16 %v339
      %v356 = vunpack.c.l.b16 %v340
      %v357 = vunpack.c.l.b16 %v341
      %v358 = vunpack.c.l.b16 %v342
      %v359 = vunpack.c.l.b16 %v343
      %v360 = vpack.c.b16 %v353, %v352
      %v361 = vpack.c.b16 %v355, %v354
      %v362 = vpack.c.b16 %v357, %v356
      %v363 = vpack.c.b16 %v359, %v358
      %vm368 = vcmask 523264
      %v370 = vsel %vm368, %v320, 0
      %v373 = vsel %vm368, %v321, 0
      %v376 = vsel %vm368, %v322, 0
      %v379 = vsel %vm368, %v323, 0
      %v382 = vsel %vm368, %v324, 0
      %v385 = vsel %vm368, %v325, 0
      %v388 = vsel %vm368, %v326, 0
      %v391 = vsel %vm368, %v327, 0
      %v394 = vsel %vm368, %v328, 0
      %v397 = vsel %vm368, %v329, 0
      %v400 = vsel %vm368, %v330, 0
      %v403 = vsel %vm368, %v331, 0
      %v406 = vsel %vm368, %v332, 0
      %v409 = vsel %vm368, %v333, 0
      %v412 = vsel %vm368, %v334, 0
      %v415 = vsel %vm368, %v335, 0
      %417 = vmatprep.subr.bf16.mxu0 0
      %418 = vmatpush1.bf16.msra.mxu0 %v360
      %419 = vmatprep.subr.bf16.mxu0 0
      %420 = vmatpush1.bf16.msra.mxu0 %v361
      %421 = vmatprep.subr.bf16.mxu0 0
      %422 = vmatpush1.bf16.msra.mxu0 %v362
      %423 = vmatprep.subr.bf16.mxu0 0
      %424 = vmatpush1.bf16.msra.mxu0 %v363
      %425 = vmatprep.subr.bf16.mxu0 0
      %426 = vmatpush1.bf16.msra.mxu0 0
      %427 = vmatprep.subr.bf16.mxu0 0
      %428 = vmatpush1.bf16.msra.mxu0 0
      %429 = vmatprep.subr.bf16.mxu0 0
      %430 = vmatpush1.bf16.msra.mxu0 0
      %431 = vmatprep.subr.bf16.mxu0 0
      %432 = vmatpush1.bf16.msra.mxu0 0
      %433 = vmatprep.subr.bf16.mxu0 0
      %434 = vmatpush1.bf16.msra.mxu0 0
      %435 = vmatprep.subr.bf16.mxu0 0
      %436 = vmatpush1.bf16.msra.mxu0 0
      %437 = vmatprep.subr.bf16.mxu0 0
      %438 = vmatpush1.bf16.msra.mxu0 0
      %439 = vmatprep.subr.bf16.mxu0 0
      %440 = vmatpush1.bf16.msra.mxu0 0
      %441 = vmatprep.subr.bf16.mxu0 0
      %442 = vmatpush1.bf16.msra.mxu0 0
      %443 = vmatprep.subr.bf16.mxu0 0
      %444 = vmatpush1.bf16.msra.mxu0 0
      %445 = vmatprep.subr.bf16.mxu0 0
      %446 = vmatpush1.bf16.msra.mxu0 0
      %447 = vmatprep.subr.bf16.mxu0 0
      %448 = vmatpush1.bf16.msra.mxu0 0
      %449 = vmatprep.mubr.bf16.mxu0 0
      %450 = vmatmul.mubr.bf16.gmra.mrb[0].mxu0 %v370
      %v451 = vpop.f32.mrb[0].mxu0
      %v452 = vadd.f32 0.0, %v451
      %v453 = vpop.f32.mrb[0].mxu0
      %v454 = vpop.f32.mrb[0].mxu0
      %v455 = vadd.f32 0.0, %v454
      %v456 = vpop.f32.mrb[0].mxu0
      %457 = vmatprep.mubr.bf16.mxu0 0
      %458 = vmatmul.mubr.bf16.gmra.mrb[0].mxu0 %v373
      %v459 = vpop.f32.mrb[0].mxu0
      %v460 = vadd.f32 0.0, %v459
      %v461 = vpop.f32.mrb[0].mxu0
      %v462 = vpop.f32.mrb[0].mxu0
      %v463 = vadd.f32 0.0, %v462
      %v464 = vpop.f32.mrb[0].mxu0
      %465 = vmatprep.mubr.bf16.mxu0 0
      %466 = vmatmul.mubr.bf16.gmra.mrb[0].mxu0 %v376
      %v467 = vpop.f32.mrb[0].mxu0
      %v468 = vadd.f32 0.0, %v467
      %v469 = vpop.f32.mrb[0].mxu0
      %v470 = vpop.f32.mrb[0].mxu0
      %v471 = vadd.f32 0.0, %v470
      %v472 = vpop.f32.mrb[0].mxu0
      %473 = vmatprep.mubr.bf16.mxu0 0
      %474 = vmatmul.mubr.bf16.gmra.mrb[0].mxu0 %v379
      %v475 = vpop.f32.mrb[0].mxu0
      %v476 = vadd.f32 0.0, %v475
      %v477 = vpop.f32.mrb[0].mxu0
      %v478 = vpop.f32.mrb[0].mxu0
      %v479 = vadd.f32 0.0, %v478
      %v480 = vpop.f32.mrb[0].mxu0
      %481 = vmatprep.mubr.bf16.mxu0 0
      %482 = vmatmul.mubr.bf16.gmra.mrb[0].mxu0 %v382
      %v483 = vpop.f32.mrb[0].mxu0
      %v484 = vadd.f32 0.0, %v483
      %v485 = vpop.f32.mrb[0].mxu0
      %v486 = vpop.f32.mrb[0].mxu0
      %v487 = vadd.f32 0.0, %v486
      %v488 = vpop.f32.mrb[0].mxu0
      %489 = vmatprep.mubr.bf16.mxu0 0
      %490 = vmatmul.mubr.bf16.gmra.mrb[0].mxu0 %v385
      %v491 = vpop.f32.mrb[0].mxu0
      %v492 = vadd.f32 0.0, %v491
      %v493 = vpop.f32.mrb[0].mxu0
      %v494 = vpop.f32.mrb[0].mxu0
      %v495 = vadd.f32 0.0, %v494
      %v496 = vpop.f32.mrb[0].mxu0
      %497 = vmatprep.mubr.bf16.mxu0 0
      %498 = vmatmul.mubr.bf16.gmra.mrb[0].mxu0 %v388
      %v499 = vpop.f32.mrb[0].mxu0
      %v500 = vadd.f32 0.0, %v499
      %v501 = vpop.f32.mrb[0].mxu0
      %v502 = vpop.f32.mrb[0].mxu0
      %v503 = vadd.f32 0.0, %v502
      %v504 = vpop.f32.mrb[0].mxu0
      %505 = vmatprep.mubr.bf16.mxu0 0
      %506 = vmatmul.mubr.bf16.gmra.mrb[0].mxu0 %v391
      %v507 = vpop.f32.mrb[0].mxu0
      %v508 = vadd.f32 0.0, %v507
      %v509 = vpop.f32.mrb[0].mxu0
      %v510 = vpop.f32.mrb[0].mxu0
      %v511 = vadd.f32 0.0, %v510
      %v512 = vpop.f32.mrb[0].mxu0
      %513 = vmatprep.mubr.bf16.mxu0 0
      %514 = vmatmul.mubr.bf16.gmra.mrb[0].mxu0 %v394
      %v515 = vpop.f32.mrb[0].mxu0
      %v516 = vadd.f32 0.0, %v515
      %v517 = vpop.f32.mrb[0].mxu0
      %v518 = vpop.f32.mrb[0].mxu0
      %v519 = vadd.f32 0.0, %v518
      %v520 = vpop.f32.mrb[0].mxu0
      %521 = vmatprep.mubr.bf16.mxu0 0
      %522 = vmatmul.mubr.bf16.gmra.mrb[0].mxu0 %v397
      %v523 = vpop.f32.mrb[0].mxu0
      %v524 = vadd.f32 0.0, %v523
      %v525 = vpop.f32.mrb[0].mxu0
      %v526 = vpop.f32.mrb[0].mxu0
      %v527 = vadd.f32 0.0, %v526
      %v528 = vpop.f32.mrb[0].mxu0
      %529 = vmatprep.mubr.bf16.mxu0 0
      %530 = vmatmul.mubr.bf16.gmra.mrb[0].mxu0 %v400
      %v531 = vpop.f32.mrb[0].mxu0
      %v532 = vadd.f32 0.0, %v531
      %v533 = vpop.f32.mrb[0].mxu0
      %v534 = vpop.f32.mrb[0].mxu0
      %v535 = vadd.f32 0.0, %v534
      %v536 = vpop.f32.mrb[0].mxu0
      %537 = vmatprep.mubr.bf16.mxu0 0
      %538 = vmatmul.mubr.bf16.gmra.mrb[0].mxu0 %v403
      %v539 = vpop.f32.mrb[0].mxu0
      %v540 = vadd.f32 0.0, %v539
      %v541 = vpop.f32.mrb[0].mxu0
      %v542 = vpop.f32.mrb[0].mxu0
      %v543 = vadd.f32 0.0, %v542
      %v544 = vpop.f32.mrb[0].mxu0
      %545 = vmatprep.mubr.bf16.mxu0 0
      %546 = vmatmul.mubr.bf16.gmra.mrb[0].mxu0 %v406
      %v547 = vpop.f32.mrb[0].mxu0
      %v548 = vadd.f32 0.0, %v547
      %v549 = vpop.f32.mrb[0].mxu0
      %v550 = vpop.f32.mrb[0].mxu0
      %v551 = vadd.f32 0.0, %v550
      %v552 = vpop.f32.mrb[0].mxu0
      %553 = vmatprep.mubr.bf16.mxu0 0
      %554 = vmatmul.mubr.bf16.gmra.mrb[0].mxu0 %v409
      %v555 = vpop.f32.mrb[0].mxu0
      %v556 = vadd.f32 0.0, %v555
      %v557 = vpop.f32.mrb[0].mxu0
      %v558 = vpop.f32.mrb[0].mxu0
      %v559 = vadd.f32 0.0, %v558
      %v560 = vpop.f32.mrb[0].mxu0
      %561 = vmatprep.mubr.bf16.mxu0 0
      %562 = vmatmul.mubr.bf16.gmra.mrb[0].mxu0 %v412
      %v563 = vpop.f32.mrb[0].mxu0
      %v564 = vadd.f32 0.0, %v563
      %v565 = vpop.f32.mrb[0].mxu0
      %v566 = vpop.f32.mrb[0].mxu0
      %v567 = vadd.f32 0.0, %v566
      %v568 = vpop.f32.mrb[0].mxu0
      %569 = vmatprep.mubr.bf16.mxu0 0
      %570 = vmatmul.mubr.bf16.gmra.mrb[0].mxu0 %v415
      %v571 = vpop.f32.mrb[0].mxu0
      %v572 = vadd.f32 0.0, %v571
      %v573 = vpop.f32.mrb[0].mxu0
      %v574 = vpop.f32.mrb[0].mxu0
      %v575 = vadd.f32 0.0, %v574
      %v576 = vpop.f32.mrb[0].mxu0
      %577 = vdwg.mxu0
      %v578 = vadd.f32 %v287, %v452
      %v579 = vadd.f32 %v287, %v455
      %v580 = vadd.f32 %v287, %v460
      %v581 = vadd.f32 %v287, %v463
      %v582 = vadd.f32 %v287, %v468
      %v583 = vadd.f32 %v287, %v471
      %v584 = vadd.f32 %v287, %v476
      %v585 = vadd.f32 %v287, %v479
      %v586 = vadd.f32 %v287, %v484
      %v587 = vadd.f32 %v287, %v487
      %v588 = vadd.f32 %v287, %v492
      %v589 = vadd.f32 %v287, %v495
      %v590 = vadd.f32 %v287, %v500
      %v591 = vadd.f32 %v287, %v503
      %v592 = vadd.f32 %v287, %v508
      %v593 = vadd.f32 %v287, %v511
      %v594 = vadd.f32 %v287, %v516
      %v595 = vadd.f32 %v287, %v519
      %v596 = vadd.f32 %v287, %v524
      %v597 = vadd.f32 %v287, %v527
      %v598 = vadd.f32 %v287, %v532
      %v599 = vadd.f32 %v287, %v535
      %v600 = vadd.f32 %v287, %v540
      %v601 = vadd.f32 %v287, %v543
      %v602 = vadd.f32 %v287, %v548
      %v603 = vadd.f32 %v287, %v551
      %v604 = vadd.f32 %v287, %v556
      %v605 = vadd.f32 %v287, %v559
      %v606 = vadd.f32 %v287, %v564
      %v607 = vadd.f32 %v287, %v567
      %v608 = vadd.f32 %v287, %v572
      %v609 = vadd.f32 %v287, %v575
      %v610 = vld [vmem:[%s273 + $0x1] sm:$0xff]
      %v611 = vld [vmem:[%s273 + $0x9] sm:$0xff]
      %v612 = vld [vmem:[%s273 + $0x19] sm:$0xff]
      %v613 = vld [vmem:[%s273 + $0x21] sm:$0xff]
      %v614 = vld [vmem:[%s273 + $0x31] sm:$0xff]
      %v615 = vld [vmem:[%s273 + $0x39] sm:$0xff]
      %v616 = vld [vmem:[%s273 + $0x49] sm:$0xff]
      %v617 = vld [vmem:[%s273 + $0x51] sm:$0xff]
      %v618 = vld [vmem:[%s273 + $0x61] sm:$0xff]
      %v619 = vld [vmem:[%s273 + $0x69] sm:$0xff]
      %v620 = vld [vmem:[%s273 + $0x79] sm:$0xff]
      %v621 = vld [vmem:[%s273 + $0x81] sm:$0xff]
      %v622 = vld [vmem:[%s273 + $0x91] sm:$0xff]
      %v623 = vld [vmem:[%s273 + $0x99] sm:$0xff]
      %v624 = vld [vmem:[%s273 + $0xa9] sm:$0xff]
      %v625 = vld [vmem:[%s273 + $0xb1] sm:$0xff]
      %v626 = vld [vmem:[%s273 + $0xc1] sm:$0xff]
      %v627 = vld [vmem:[%s273 + $0xc9] sm:$0xff]
      %v628 = vld [vmem:[%s273 + $0xd9] sm:$0xff]
      %v629 = vld [vmem:[%s273 + $0xe1] sm:$0xff]
      %v630 = vld [vmem:[%s273 + $0xf1] sm:$0xff]
      %v631 = vld [vmem:[%s273 + $0xf9] sm:$0xff]
      %v632 = vld [vmem:[%s273 + $0x109] sm:$0xff]
      %v633 = vld [vmem:[%s273 + $0x111] sm:$0xff]
      %v634 = vld [vmem:[%s273 + $0x121] sm:$0xff]
      %v635 = vld [vmem:[%s273 + $0x129] sm:$0xff]
      %v636 = vld [vmem:[%s273 + $0x139] sm:$0xff]
      %v637 = vld [vmem:[%s273 + $0x141] sm:$0xff]
      %v638 = vld [vmem:[%s273 + $0x151] sm:$0xff]
      %v639 = vld [vmem:[%s273 + $0x159] sm:$0xff]
      %v640 = vld [vmem:[%s273 + $0x169] sm:$0xff]
      %v641 = vld [vmem:[%s273 + $0x171] sm:$0xff]
      %v642 = vpack.c.bf16 %v611, %v610
      %v643 = vpack.c.bf16 %v613, %v612
      %v644 = vpack.c.bf16 %v615, %v614
      %v645 = vpack.c.bf16 %v617, %v616
      %v646 = vpack.c.bf16 %v619, %v618
      %v647 = vpack.c.bf16 %v621, %v620
      %v648 = vpack.c.bf16 %v623, %v622
      %v649 = vpack.c.bf16 %v625, %v624
      %v650 = vpack.c.bf16 %v627, %v626
      %v651 = vpack.c.bf16 %v629, %v628
      %v652 = vpack.c.bf16 %v631, %v630
      %v653 = vpack.c.bf16 %v633, %v632
      %v654 = vpack.c.bf16 %v635, %v634
      %v655 = vpack.c.bf16 %v637, %v636
      %v656 = vpack.c.bf16 %v639, %v638
      %v657 = vpack.c.bf16 %v641, %v640
      %s658 = scalar_lea.vmem %s1, 32
      %v659 = vld [vmem:[%s658] sm:$0xf]
      %v660 = vld [vmem:[%s658 + $0x4] sm:$0xf]
      %v661 = vld [vmem:[%s658 + $0x8] sm:$0xf]
      %v662 = vld [vmem:[%s658 + $0xc] sm:$0xf]
      %v663 = vld [vmem:[%s658 + $0x10] sm:$0xf]
      %v664 = vld [vmem:[%s658 + $0x14] sm:$0xf]
      %v665 = vld [vmem:[%s658 + $0x18] sm:$0xf]
      %v666 = vld [vmem:[%s658 + $0x1c] sm:$0xf]
      %v675 = vunpack.c.l.b16 %v659
      %v676 = vunpack.c.l.b16 %v660
      %v677 = vunpack.c.l.b16 %v661
      %v678 = vunpack.c.l.b16 %v662
      %v679 = vunpack.c.l.b16 %v663
      %v680 = vunpack.c.l.b16 %v664
      %v681 = vunpack.c.l.b16 %v665
      %v682 = vunpack.c.l.b16 %v666
      %v683 = vpack.c.b16 %v676, %v675
      %v684 = vpack.c.b16 %v678, %v677
      %v685 = vpack.c.b16 %v680, %v679
      %v686 = vpack.c.b16 %v682, %v681
      %v692 = vsel %vm368, %v642, 0
      %v695 = vsel %vm368, %v643, 0
      %v698 = vsel %vm368, %v644, 0
      %v701 = vsel %vm368, %v645, 0
      %v704 = vsel %vm368, %v646, 0
      %v707 = vsel %vm368, %v647, 0
      %v710 = vsel %vm368, %v648, 0
      %v713 = vsel %vm368, %v649, 0
      %v716 = vsel %vm368, %v650, 0
      %v719 = vsel %vm368, %v651, 0
      %v722 = vsel %vm368, %v652, 0
      %v725 = vsel %vm368, %v653, 0
      %v728 = vsel %vm368, %v654, 0
      %v731 = vsel %vm368, %v655, 0
      %v734 = vsel %vm368, %v656, 0
      %v737 = vsel %vm368, %v657, 0
      %739 = vmatprep.subr.bf16.mxu0 0
      %740 = vmatpush1.bf16.msra.mxu0 %v683
      %741 = vmatprep.subr.bf16.mxu0 0
      %742 = vmatpush1.bf16.msra.mxu0 %v684
      %743 = vmatprep.subr.bf16.mxu0 0
      %744 = vmatpush1.bf16.msra.mxu0 %v685
      %745 = vmatprep.subr.bf16.mxu0 0
      %746 = vmatpush1.bf16.msra.mxu0 %v686
      %747 = vmatprep.subr.bf16.mxu0 0
      %748 = vmatpush1.bf16.msra.mxu0 0
      %749 = vmatprep.subr.bf16.mxu0 0
      %750 = vmatpush1.bf16.msra.mxu0 0
      %751 = vmatprep.subr.bf16.mxu0 0
      %752 = vmatpush1.bf16.msra.mxu0 0
      %753 = vmatprep.subr.bf16.mxu0 0
      %754 = vmatpush1.bf16.msra.mxu0 0
      %755 = vmatprep.subr.bf16.mxu0 0
      %756 = vmatpush1.bf16.msra.mxu0 0
      %757 = vmatprep.subr.bf16.mxu0 0
      %758 = vmatpush1.bf16.msra.mxu0 0
      %759 = vmatprep.subr.bf16.mxu0 0
      %760 = vmatpush1.bf16.msra.mxu0 0
      %761 = vmatprep.subr.bf16.mxu0 0
      %762 = vmatpush1.bf16.msra.mxu0 0
      %763 = vmatprep.subr.bf16.mxu0 0
      %764 = vmatpush1.bf16.msra.mxu0 0
      %765 = vmatprep.subr.bf16.mxu0 0
      %766 = vmatpush1.bf16.msra.mxu0 0
      %767 = vmatprep.subr.bf16.mxu0 0
      %768 = vmatpush1.bf16.msra.mxu0 0
      %769 = vmatprep.subr.bf16.mxu0 0
      %770 = vmatpush1.bf16.msra.mxu0 0
      %771 = vmatprep.mubr.bf16.mxu0 0
      %772 = vmatmul.mubr.bf16.gmra.mrb[0].mxu0 %v692
      %v773 = vpop.f32.mrb[0].mxu0
      %v774 = vadd.f32 0.0, %v773
      %v775 = vpop.f32.mrb[0].mxu0
      %v776 = vpop.f32.mrb[0].mxu0
      %v777 = vadd.f32 0.0, %v776
      %v778 = vpop.f32.mrb[0].mxu0
      %779 = vmatprep.mubr.bf16.mxu0 0
      %780 = vmatmul.mubr.bf16.gmra.mrb[0].mxu0 %v695
      %v781 = vpop.f32.mrb[0].mxu0
      %v782 = vadd.f32 0.0, %v781
      %v783 = vpop.f32.mrb[0].mxu0
      %v784 = vpop.f32.mrb[0].mxu0
      %v785 = vadd.f32 0.0, %v784
      %v786 = vpop.f32.mrb[0].mxu0
      %787 = vmatprep.mubr.bf16.mxu0 0
      %788 = vmatmul.mubr.bf16.gmra.mrb[0].mxu0 %v698
      %v789 = vpop.f32.mrb[0].mxu0
      %v790 = vadd.f32 0.0, %v789
      %v791 = vpop.f32.mrb[0].mxu0
      %v792 = vpop.f32.mrb[0].mxu0
      %v793 = vadd.f32 0.0, %v792
      %v794 = vpop.f32.mrb[0].mxu0
      %795 = vmatprep.mubr.bf16.mxu0 0
      %796 = vmatmul.mubr.bf16.gmra.mrb[0].mxu0 %v701
      %v797 = vpop.f32.mrb[0].mxu0
      %v798 = vadd.f32 0.0, %v797
      %v799 = vpop.f32.mrb[0].mxu0
      %v800 = vpop.f32.mrb[0].mxu0
      %v801 = vadd.f32 0.0, %v800
      %v802 = vpop.f32.mrb[0].mxu0
      %803 = vmatprep.mubr.bf16.mxu0 0
      %804 = vmatmul.mubr.bf16.gmra.mrb[0].mxu0 %v704
      %v805 = vpop.f32.mrb[0].mxu0
      %v806 = vadd.f32 0.0, %v805
      %v807 = vpop.f32.mrb[0].mxu0
      %v808 = vpop.f32.mrb[0].mxu0
      %v809 = vadd.f32 0.0, %v808
      %v810 = vpop.f32.mrb[0].mxu0
      %811 = vmatprep.mubr.bf16.mxu0 0
      %812 = vmatmul.mubr.bf16.gmra.mrb[0].mxu0 %v707
      %v813 = vpop.f32.mrb[0].mxu0
      %v814 = vadd.f32 0.0, %v813
      %v815 = vpop.f32.mrb[0].mxu0
      %v816 = vpop.f32.mrb[0].mxu0
      %v817 = vadd.f32 0.0, %v816
      %v818 = vpop.f32.mrb[0].mxu0
      %819 = vmatprep.mubr.bf16.mxu0 0
      %820 = vmatmul.mubr.bf16.gmra.mrb[0].mxu0 %v710
      %v821 = vpop.f32.mrb[0].mxu0
      %v822 = vadd.f32 0.0, %v821
      %v823 = vpop.f32.mrb[0].mxu0
      %v824 = vpop.f32.mrb[0].mxu0
      %v825 = vadd.f32 0.0, %v824
      %v826 = vpop.f32.mrb[0].mxu0
      %827 = vmatprep.mubr.bf16.mxu0 0
      %828 = vmatmul.mubr.bf16.gmra.mrb[0].mxu0 %v713
      %v829 = vpop.f32.mrb[0].mxu0
      %v830 = vadd.f32 0.0, %v829
      %v831 = vpop.f32.mrb[0].mxu0
      %v832 = vpop.f32.mrb[0].mxu0
      %v833 = vadd.f32 0.0, %v832
      %v834 = vpop.f32.mrb[0].mxu0
      %835 = vmatprep.mubr.bf16.mxu0 0
      %836 = vmatmul.mubr.bf16.gmra.mrb[0].mxu0 %v716
      %v837 = vpop.f32.mrb[0].mxu0
      %v838 = vadd.f32 0.0, %v837
      %v839 = vpop.f32.mrb[0].mxu0
      %v840 = vpop.f32.mrb[0].mxu0
      %v841 = vadd.f32 0.0, %v840
      %v842 = vpop.f32.mrb[0].mxu0
      %843 = vmatprep.mubr.bf16.mxu0 0
      %844 = vmatmul.mubr.bf16.gmra.mrb[0].mxu0 %v719
      %v845 = vpop.f32.mrb[0].mxu0
      %v846 = vadd.f32 0.0, %v845
      %v847 = vpop.f32.mrb[0].mxu0
      %v848 = vpop.f32.mrb[0].mxu0
      %v849 = vadd.f32 0.0, %v848
      %v850 = vpop.f32.mrb[0].mxu0
      %851 = vmatprep.mubr.bf16.mxu0 0
      %852 = vmatmul.mubr.bf16.gmra.mrb[0].mxu0 %v722
      %v853 = vpop.f32.mrb[0].mxu0
      %v854 = vadd.f32 0.0, %v853
      %v855 = vpop.f32.mrb[0].mxu0
      %v856 = vpop.f32.mrb[0].mxu0
      %v857 = vadd.f32 0.0, %v856
      %v858 = vpop.f32.mrb[0].mxu0
      %859 = vmatprep.mubr.bf16.mxu0 0
      %860 = vmatmul.mubr.bf16.gmra.mrb[0].mxu0 %v725
      %v861 = vpop.f32.mrb[0].mxu0
      %v862 = vadd.f32 0.0, %v861
      %v863 = vpop.f32.mrb[0].mxu0
      %v864 = vpop.f32.mrb[0].mxu0
      %v865 = vadd.f32 0.0, %v864
      %v866 = vpop.f32.mrb[0].mxu0
      %867 = vmatprep.mubr.bf16.mxu0 0
      %868 = vmatmul.mubr.bf16.gmra.mrb[0].mxu0 %v728
      %v869 = vpop.f32.mrb[0].mxu0
      %v870 = vadd.f32 0.0, %v869
      %v871 = vpop.f32.mrb[0].mxu0
      %v872 = vpop.f32.mrb[0].mxu0
      %v873 = vadd.f32 0.0, %v872
      %v874 = vpop.f32.mrb[0].mxu0
      %875 = vmatprep.mubr.bf16.mxu0 0
      %876 = vmatmul.mubr.bf16.gmra.mrb[0].mxu0 %v731
      %v877 = vpop.f32.mrb[0].mxu0
      %v878 = vadd.f32 0.0, %v877
      %v879 = vpop.f32.mrb[0].mxu0
      %v880 = vpop.f32.mrb[0].mxu0
      %v881 = vadd.f32 0.0, %v880
      %v882 = vpop.f32.mrb[0].mxu0
      %883 = vmatprep.mubr.bf16.mxu0 0
      %884 = vmatmul.mubr.bf16.gmra.mrb[0].mxu0 %v734
      %v885 = vpop.f32.mrb[0].mxu0
      %v886 = vadd.f32 0.0, %v885
      %v887 = vpop.f32.mrb[0].mxu0
      %v888 = vpop.f32.mrb[0].mxu0
      %v889 = vadd.f32 0.0, %v888
      %v890 = vpop.f32.mrb[0].mxu0
      %891 = vmatprep.mubr.bf16.mxu0 0
      %892 = vmatmul.mubr.bf16.gmra.mrb[0].mxu0 %v737
      %v893 = vpop.f32.mrb[0].mxu0
      %v894 = vadd.f32 0.0, %v893
      %v895 = vpop.f32.mrb[0].mxu0
      %v896 = vpop.f32.mrb[0].mxu0
      %v897 = vadd.f32 0.0, %v896
      %v898 = vpop.f32.mrb[0].mxu0
      %899 = vdwg.mxu0
      %v900 = vadd.f32 %v578, %v774
      %v901 = vadd.f32 %v579, %v777
      %v902 = vadd.f32 %v580, %v782
      %v903 = vadd.f32 %v581, %v785
      %v904 = vadd.f32 %v582, %v790
      %v905 = vadd.f32 %v583, %v793
      %v906 = vadd.f32 %v584, %v798
      %v907 = vadd.f32 %v585, %v801
      %v908 = vadd.f32 %v586, %v806
      %v909 = vadd.f32 %v587, %v809
      %v910 = vadd.f32 %v588, %v814
      %v911 = vadd.f32 %v589, %v817
      %v912 = vadd.f32 %v590, %v822
      %v913 = vadd.f32 %v591, %v825
      %v914 = vadd.f32 %v592, %v830
      %v915 = vadd.f32 %v593, %v833
      %v916 = vadd.f32 %v594, %v838
      %v917 = vadd.f32 %v595, %v841
      %v918 = vadd.f32 %v596, %v846
      %v919 = vadd.f32 %v597, %v849
      %v920 = vadd.f32 %v598, %v854
      %v921 = vadd.f32 %v599, %v857
      %v922 = vadd.f32 %v600, %v862
      %v923 = vadd.f32 %v601, %v865
      %v924 = vadd.f32 %v602, %v870
      %v925 = vadd.f32 %v603, %v873
      %v926 = vadd.f32 %v604, %v878
      %v927 = vadd.f32 %v605, %v881
      %v928 = vadd.f32 %v606, %v886
      %v929 = vadd.f32 %v607, %v889
      %v930 = vadd.f32 %v608, %v894
      %v931 = vadd.f32 %v609, %v897
      %v932 = vld [vmem:[%s273 + $0x2] sm:$0xff]
      %v933 = vld [vmem:[%s273 + $0xa] sm:$0xff]
      %v934 = vld [vmem:[%s273 + $0x1a] sm:$0xff]
      %v935 = vld [vmem:[%s273 + $0x22] sm:$0xff]
      %v936 = vld [vmem:[%s273 + $0x32] sm:$0xff]
      %v937 = vld [vmem:[%s273 + $0x3a] sm:$0xff]
      %v938 = vld [vmem:[%s273 + $0x4a] sm:$0xff]
      %v939 = vld [vmem:[%s273 + $0x52] sm:$0xff]
      %v940 = vld [vmem:[%s273 + $0x62] sm:$0xff]
      %v941 = vld [vmem:[%s273 + $0x6a] sm:$0xff]
      %v942 = vld [vmem:[%s273 + $0x7a] sm:$0xff]
      %v943 = vld [vmem:[%s273 + $0x82] sm:$0xff]
      %v944 = vld [vmem:[%s273 + $0x92] sm:$0xff]
      %v945 = vld [vmem:[%s273 + $0x9a] sm:$0xff]
      %v946 = vld [vmem:[%s273 + $0xaa] sm:$0xff]
      %v947 = vld [vmem:[%s273 + $0xb2] sm:$0xff]
      %v948 = vld [vmem:[%s273 + $0xc2] sm:$0xff]
      %v949 = vld [vmem:[%s273 + $0xca] sm:$0xff]
      %v950 = vld [vmem:[%s273 + $0xda] sm:$0xff]
      %v951 = vld [vmem:[%s273 + $0xe2] sm:$0xff]
      %v952 = vld [vmem:[%s273 + $0xf2] sm:$0xff]
      %v953 = vld [vmem:[%s273 + $0xfa] sm:$0xff]
      %v954 = vld [vmem:[%s273 + $0x10a] sm:$0xff]
      %v955 = vld [vmem:[%s273 + $0x112] sm:$0xff]
      %v956 = vld [vmem:[%s273 + $0x122] sm:$0xff]
      %v957 = vld [vmem:[%s273 + $0x12a] sm:$0xff]
      %v958 = vld [vmem:[%s273 + $0x13a] sm:$0xff]
      %v959 = vld [vmem:[%s273 + $0x142] sm:$0xff]
      %v960 = vld [vmem:[%s273 + $0x152] sm:$0xff]
      %v961 = vld [vmem:[%s273 + $0x15a] sm:$0xff]
      %v962 = vld [vmem:[%s273 + $0x16a] sm:$0xff]
      %v963 = vld [vmem:[%s273 + $0x172] sm:$0xff]
      %v964 = vpack.c.bf16 %v933, %v932
      %v965 = vpack.c.bf16 %v935, %v934
      %v966 = vpack.c.bf16 %v937, %v936
      %v967 = vpack.c.bf16 %v939, %v938
      %v968 = vpack.c.bf16 %v941, %v940
      %v969 = vpack.c.bf16 %v943, %v942
      %v970 = vpack.c.bf16 %v945, %v944
      %v971 = vpack.c.bf16 %v947, %v946
      %v972 = vpack.c.bf16 %v949, %v948
      %v973 = vpack.c.bf16 %v951, %v950
      %v974 = vpack.c.bf16 %v953, %v952
      %v975 = vpack.c.bf16 %v955, %v954
      %v976 = vpack.c.bf16 %v957, %v956
      %v977 = vpack.c.bf16 %v959, %v958
      %v978 = vpack.c.bf16 %v961, %v960
      %v979 = vpack.c.bf16 %v963, %v962
      %s980 = scalar_lea.vmem %s1, 64
      %v981 = vld [vmem:[%s980] sm:$0xf]
      %v982 = vld [vmem:[%s980 + $0x4] sm:$0xf]
      %v983 = vld [vmem:[%s980 + $0x8] sm:$0xf]
      %v984 = vld [vmem:[%s980 + $0xc] sm:$0xf]
      %v985 = vld [vmem:[%s980 + $0x10] sm:$0xf]
      %v986 = vld [vmem:[%s980 + $0x14] sm:$0xf]
      %v987 = vld [vmem:[%s980 + $0x18] sm:$0xf]
      %v988 = vld [vmem:[%s980 + $0x1c] sm:$0xf]
      %v997 = vunpack.c.l.b16 %v981
      %v998 = vunpack.c.l.b16 %v982
      %v999 = vunpack.c.l.b16 %v983
      %v1000 = vunpack.c.l.b16 %v984
      %v1001 = vunpack.c.l.b16 %v985
      %v1002 = vunpack.c.l.b16 %v986
      %v1003 = vunpack.c.l.b16 %v987
      %v1004 = vunpack.c.l.b16 %v988
      %v1005 = vpack.c.b16 %v998, %v997
      %v1006 = vpack.c.b16 %v1000, %v999
      %v1007 = vpack.c.b16 %v1002, %v1001
      %v1008 = vpack.c.b16 %v1004, %v1003
      %v1014 = vsel %vm368, %v964, 0
      %v1017 = vsel %vm368, %v965, 0
      %v1020 = vsel %vm368, %v966, 0
      %v1023 = vsel %vm368, %v967, 0
      %v1026 = vsel %vm368, %v968, 0
      %v1029 = vsel %vm368, %v969, 0
      %v1032 = vsel %vm368, %v970, 0
      %v1035 = vsel %vm368, %v971, 0
      %v1038 = vsel %vm368, %v972, 0
      %v1041 = vsel %vm368, %v973, 0
      %v1044 = vsel %vm368, %v974, 0
      %v1047 = vsel %vm368, %v975, 0
      %v1050 = vsel %vm368, %v976, 0
      %v1053 = vsel %vm368, %v977, 0
      %v1056 = vsel %vm368, %v978, 0
      %v1059 = vsel %vm368, %v979, 0
      %1061 = vmatprep.subr.bf16.mxu0 0
      %1062 = vmatpush1.bf16.msra.mxu0 %v1005
      %1063 = vmatprep.subr.bf16.mxu0 0
      %1064 = vmatpush1.bf16.msra.mxu0 %v1006
      %1065 = vmatprep.subr.bf16.mxu0 0
      %1066 = vmatpush1.bf16.msra.mxu0 %v1007
      %1067 = vmatprep.subr.bf16.mxu0 0
      %1068 = vmatpush1.bf16.msra.mxu0 %v1008
      %1069 = vmatprep.subr.bf16.mxu0 0
      %1070 = vmatpush1.bf16.msra.mxu0 0
      %1071 = vmatprep.subr.bf16.mxu0 0
      %1072 = vmatpush1.bf16.msra.mxu0 0
      %1073 = vmatprep.subr.bf16.mxu0 0
      %1074 = vmatpush1.bf16.msra.mxu0 0
      %1075 = vmatprep.subr.bf16.mxu0 0
      %1076 = vmatpush1.bf16.msra.mxu0 0
      %1077 = vmatprep.subr.bf16.mxu0 0
      %1078 = vmatpush1.bf16.msra.mxu0 0
      %1079 = vmatprep.subr.bf16.mxu0 0
      %1080 = vmatpush1.bf16.msra.mxu0 0
      %1081 = vmatprep.subr.bf16.mxu0 0
      %1082 = vmatpush1.bf16.msra.mxu0 0
      %1083 = vmatprep.subr.bf16.mxu0 0
      %1084 = vmatpush1.bf16.msra.mxu0 0
      %1085 = vmatprep.subr.bf16.mxu0 0
      %1086 = vmatpush1.bf16.msra.mxu0 0
      %1087 = vmatprep.subr.bf16.mxu0 0
      %1088 = vmatpush1.bf16.msra.mxu0 0
      %1089 = vmatprep.subr.bf16.mxu0 0
      %1090 = vmatpush1.bf16.msra.mxu0 0
      %1091 = vmatprep.subr.bf16.mxu0 0
      %1092 = vmatpush1.bf16.msra.mxu0 0
      %1093 = vmatprep.mubr.bf16.mxu0 0
      %1094 = vmatmul.mubr.bf16.gmra.mrb[0].mxu0 %v1014
      %v1095 = vpop.f32.mrb[0].mxu0
      %v1096 = vadd.f32 0.0, %v1095
      %v1097 = vpop.f32.mrb[0].mxu0
      %v1098 = vpop.f32.mrb[0].mxu0
      %v1099 = vadd.f32 0.0, %v1098
      %v1100 = vpop.f32.mrb[0].mxu0
      %1101 = vmatprep.mubr.bf16.mxu0 0
      %1102 = vmatmul.mubr.bf16.gmra.mrb[0].mxu0 %v1017
      %v1103 = vpop.f32.mrb[0].mxu0
      %v1104 = vadd.f32 0.0, %v1103
      %v1105 = vpop.f32.mrb[0].mxu0
      %v1106 = vpop.f32.mrb[0].mxu0
      %v1107 = vadd.f32 0.0, %v1106
      %v1108 = vpop.f32.mrb[0].mxu0
      %1109 = vmatprep.mubr.bf16.mxu0 0
      %1110 = vmatmul.mubr.bf16.gmra.mrb[0].mxu0 %v1020
      %v1111 = vpop.f32.mrb[0].mxu0
      %v1112 = vadd.f32 0.0, %v1111
      %v1113 = vpop.f32.mrb[0].mxu0
      %v1114 = vpop.f32.mrb[0].mxu0
      %v1115 = vadd.f32 0.0, %v1114
      %v1116 = vpop.f32.mrb[0].mxu0
      %1117 = vmatprep.mubr.bf16.mxu0 0
      %1118 = vmatmul.mubr.bf16.gmra.mrb[0].mxu0 %v1023
      %v1119 = vpop.f32.mrb[0].mxu0
      %v1120 = vadd.f32 0.0, %v1119
      %v1121 = vpop.f32.mrb[0].mxu0
      %v1122 = vpop.f32.mrb[0].mxu0
      %v1123 = vadd.f32 0.0, %v1122
      %v1124 = vpop.f32.mrb[0].mxu0
      %1125 = vmatprep.mubr.bf16.mxu0 0
      %1126 = vmatmul.mubr.bf16.gmra.mrb[0].mxu0 %v1026
      %v1127 = vpop.f32.mrb[0].mxu0
      %v1128 = vadd.f32 0.0, %v1127
      %v1129 = vpop.f32.mrb[0].mxu0
      %v1130 = vpop.f32.mrb[0].mxu0
      %v1131 = vadd.f32 0.0, %v1130
      %v1132 = vpop.f32.mrb[0].mxu0
      %1133 = vmatprep.mubr.bf16.mxu0 0
      %1134 = vmatmul.mubr.bf16.gmra.mrb[0].mxu0 %v1029
      %v1135 = vpop.f32.mrb[0].mxu0
      %v1136 = vadd.f32 0.0, %v1135
      %v1137 = vpop.f32.mrb[0].mxu0
      %v1138 = vpop.f32.mrb[0].mxu0
      %v1139 = vadd.f32 0.0, %v1138
      %v1140 = vpop.f32.mrb[0].mxu0
      %1141 = vmatprep.mubr.bf16.mxu0 0
      %1142 = vmatmul.mubr.bf16.gmra.mrb[0].mxu0 %v1032
      %v1143 = vpop.f32.mrb[0].mxu0
      %v1144 = vadd.f32 0.0, %v1143
      %v1145 = vpop.f32.mrb[0].mxu0
      %v1146 = vpop.f32.mrb[0].mxu0
      %v1147 = vadd.f32 0.0, %v1146
      %v1148 = vpop.f32.mrb[0].mxu0
      %1149 = vmatprep.mubr.bf16.mxu0 0
      %1150 = vmatmul.mubr.bf16.gmra.mrb[0].mxu0 %v1035
      %v1151 = vpop.f32.mrb[0].mxu0
      %v1152 = vadd.f32 0.0, %v1151
      %v1153 = vpop.f32.mrb[0].mxu0
      %v1154 = vpop.f32.mrb[0].mxu0
      %v1155 = vadd.f32 0.0, %v1154
      %v1156 = vpop.f32.mrb[0].mxu0
      %1157 = vmatprep.mubr.bf16.mxu0 0
      %1158 = vmatmul.mubr.bf16.gmra.mrb[0].mxu0 %v1038
      %v1159 = vpop.f32.mrb[0].mxu0
      %v1160 = vadd.f32 0.0, %v1159
      %v1161 = vpop.f32.mrb[0].mxu0
      %v1162 = vpop.f32.mrb[0].mxu0
      %v1163 = vadd.f32 0.0, %v1162
      %v1164 = vpop.f32.mrb[0].mxu0
      %1165 = vmatprep.mubr.bf16.mxu0 0
      %1166 = vmatmul.mubr.bf16.gmra.mrb[0].mxu0 %v1041
      %v1167 = vpop.f32.mrb[0].mxu0
      %v1168 = vadd.f32 0.0, %v1167
      %v1169 = vpop.f32.mrb[0].mxu0
      %v1170 = vpop.f32.mrb[0].mxu0
      %v1171 = vadd.f32 0.0, %v1170
      %v1172 = vpop.f32.mrb[0].mxu0
      %1173 = vmatprep.mubr.bf16.mxu0 0
      %1174 = vmatmul.mubr.bf16.gmra.mrb[0].mxu0 %v1044
      %v1175 = vpop.f32.mrb[0].mxu0
      %v1176 = vadd.f32 0.0, %v1175
      %v1177 = vpop.f32.mrb[0].mxu0
      %v1178 = vpop.f32.mrb[0].mxu0
      %v1179 = vadd.f32 0.0, %v1178
      %v1180 = vpop.f32.mrb[0].mxu0
      %1181 = vmatprep.mubr.bf16.mxu0 0
      %1182 = vmatmul.mubr.bf16.gmra.mrb[0].mxu0 %v1047
      %v1183 = vpop.f32.mrb[0].mxu0
      %v1184 = vadd.f32 0.0, %v1183
      %v1185 = vpop.f32.mrb[0].mxu0
      %v1186 = vpop.f32.mrb[0].mxu0
      %v1187 = vadd.f32 0.0, %v1186
      %v1188 = vpop.f32.mrb[0].mxu0
      %1189 = vmatprep.mubr.bf16.mxu0 0
      %1190 = vmatmul.mubr.bf16.gmra.mrb[0].mxu0 %v1050
      %v1191 = vpop.f32.mrb[0].mxu0
      %v1192 = vadd.f32 0.0, %v1191
      %v1193 = vpop.f32.mrb[0].mxu0
      %v1194 = vpop.f32.mrb[0].mxu0
      %v1195 = vadd.f32 0.0, %v1194
      %v1196 = vpop.f32.mrb[0].mxu0
      %1197 = vmatprep.mubr.bf16.mxu0 0
      %1198 = vmatmul.mubr.bf16.gmra.mrb[0].mxu0 %v1053
      %v1199 = vpop.f32.mrb[0].mxu0
      %v1200 = vadd.f32 0.0, %v1199
      %v1201 = vpop.f32.mrb[0].mxu0
      %v1202 = vpop.f32.mrb[0].mxu0
      %v1203 = vadd.f32 0.0, %v1202
      %v1204 = vpop.f32.mrb[0].mxu0
      %1205 = vmatprep.mubr.bf16.mxu0 0
      %1206 = vmatmul.mubr.bf16.gmra.mrb[0].mxu0 %v1056
      %v1207 = vpop.f32.mrb[0].mxu0
      %v1208 = vadd.f32 0.0, %v1207
      %v1209 = vpop.f32.mrb[0].mxu0
      %v1210 = vpop.f32.mrb[0].mxu0
      %v1211 = vadd.f32 0.0, %v1210
      %v1212 = vpop.f32.mrb[0].mxu0
      %1213 = vmatprep.mubr.bf16.mxu0 0
      %1214 = vmatmul.mubr.bf16.gmra.mrb[0].mxu0 %v1059
      %v1215 = vpop.f32.mrb[0].mxu0
      %v1216 = vadd.f32 0.0, %v1215
      %v1217 = vpop.f32.mrb[0].mxu0
      %v1218 = vpop.f32.mrb[0].mxu0
      %v1219 = vadd.f32 0.0, %v1218
      %v1220 = vpop.f32.mrb[0].mxu0
      %1221 = vdwg.mxu0
      %v1222 = vadd.f32 %v900, %v1096
      %v1223 = vadd.f32 %v901, %v1099
      %v1224 = vadd.f32 %v902, %v1104
      %v1225 = vadd.f32 %v903, %v1107
      %v1226 = vadd.f32 %v904, %v1112
      %v1227 = vadd.f32 %v905, %v1115
      %v1228 = vadd.f32 %v906, %v1120
      %v1229 = vadd.f32 %v907, %v1123
      %v1230 = vadd.f32 %v908, %v1128
      %v1231 = vadd.f32 %v909, %v1131
      %v1232 = vadd.f32 %v910, %v1136
      %v1233 = vadd.f32 %v911, %v1139
      %v1234 = vadd.f32 %v912, %v1144
      %v1235 = vadd.f32 %v913, %v1147
      %v1236 = vadd.f32 %v914, %v1152
      %v1237 = vadd.f32 %v915, %v1155
      %v1238 = vadd.f32 %v916, %v1160
      %v1239 = vadd.f32 %v917, %v1163
      %v1240 = vadd.f32 %v918, %v1168
      %v1241 = vadd.f32 %v919, %v1171
      %v1242 = vadd.f32 %v920, %v1176
      %v1243 = vadd.f32 %v921, %v1179
      %v1244 = vadd.f32 %v922, %v1184
      %v1245 = vadd.f32 %v923, %v1187
      %v1246 = vadd.f32 %v924, %v1192
      %v1247 = vadd.f32 %v925, %v1195
      %v1248 = vadd.f32 %v926, %v1200
      %v1249 = vadd.f32 %v927, %v1203
      %v1250 = vadd.f32 %v928, %v1208
      %v1251 = vadd.f32 %v929, %v1211
      %v1252 = vadd.f32 %v930, %v1216
      %v1253 = vadd.f32 %v931, %v1219
      %s1254 = scalar_lea.vmem %s273, 24
      %v1255 = vld [vmem:[%s1254] sm:$0xff]
      %v1256 = vld [vmem:[%s1254 + $0x8] sm:$0xff]
      %v1257 = vld [vmem:[%s1254 + $0x18] sm:$0xff]
      %v1258 = vld [vmem:[%s1254 + $0x20] sm:$0xff]
      %v1259 = vld [vmem:[%s1254 + $0x30] sm:$0xff]
      %v1260 = vld [vmem:[%s1254 + $0x38] sm:$0xff]
      %v1261 = vld [vmem:[%s1254 + $0x48] sm:$0xff]
      %v1262 = vld [vmem:[%s1254 + $0x50] sm:$0xff]
      %v1263 = vld [vmem:[%s1254 + $0x60] sm:$0xff]
      %v1264 = vld [vmem:[%s1254 + $0x68] sm:$0xff]
      %v1265 = vld [vmem:[%s1254 + $0x78] sm:$0xff]
      %v1266 = vld [vmem:[%s1254 + $0x80] sm:$0xff]
      %v1267 = vld [vmem:[%s1254 + $0x90] sm:$0xff]
      %v1268 = vld [vmem:[%s1254 + $0x98] sm:$0xff]
      %v1269 = vld [vmem:[%s1254 + $0xa8] sm:$0xff]
      %v1270 = vld [vmem:[%s1254 + $0xb0] sm:$0xff]
      %v1271 = vld [vmem:[%s1254 + $0xc0] sm:$0xff]
      %v1272 = vld [vmem:[%s1254 + $0xc8] sm:$0xff]
      %v1273 = vld [vmem:[%s1254 + $0xd8] sm:$0xff]
      %v1274 = vld [vmem:[%s1254 + $0xe0] sm:$0xff]
      %v1275 = vld [vmem:[%s1254 + $0xf0] sm:$0xff]
      %v1276 = vld [vmem:[%s1254 + $0xf8] sm:$0xff]
      %v1277 = vld [vmem:[%s1254 + $0x108] sm:$0xff]
      %v1278 = vld [vmem:[%s1254 + $0x110] sm:$0xff]
      %v1279 = vld [vmem:[%s1254 + $0x120] sm:$0xff]
      %v1280 = vld [vmem:[%s1254 + $0x128] sm:$0xff]
      %v1281 = vld [vmem:[%s1254 + $0x138] sm:$0xff]
      %v1282 = vld [vmem:[%s1254 + $0x140] sm:$0xff]
      %v1283 = vld [vmem:[%s1254 + $0x150] sm:$0xff]
      %v1284 = vld [vmem:[%s1254 + $0x158] sm:$0xff]
      %v1285 = vld [vmem:[%s1254 + $0x168] sm:$0xff]
      %v1286 = vld [vmem:[%s1254 + $0x170] sm:$0xff]
      %v1287 = vpack.c.bf16 %v1256, %v1255
      %v1288 = vpack.c.bf16 %v1258, %v1257
      %v1289 = vpack.c.bf16 %v1260, %v1259
      %v1290 = vpack.c.bf16 %v1262, %v1261
      %v1291 = vpack.c.bf16 %v1264, %v1263
      %v1292 = vpack.c.bf16 %v1266, %v1265
      %v1293 = vpack.c.bf16 %v1268, %v1267
      %v1294 = vpack.c.bf16 %v1270, %v1269
      %v1295 = vpack.c.bf16 %v1272, %v1271
      %v1296 = vpack.c.bf16 %v1274, %v1273
      %v1297 = vpack.c.bf16 %v1276, %v1275
      %v1298 = vpack.c.bf16 %v1278, %v1277
      %v1299 = vpack.c.bf16 %v1280, %v1279
      %v1300 = vpack.c.bf16 %v1282, %v1281
      %v1301 = vpack.c.bf16 %v1284, %v1283
      %v1302 = vpack.c.bf16 %v1286, %v1285
      %s1303 = scalar_lea.vmem %s1, 96
      %v1304 = vld [vmem:[%s1303] sm:$0xf]
      %v1305 = vld [vmem:[%s1303 + $0x4] sm:$0xf]
      %v1306 = vld [vmem:[%s1303 + $0x8] sm:$0xf]
      %v1307 = vld [vmem:[%s1303 + $0xc] sm:$0xf]
      %v1308 = vld [vmem:[%s1303 + $0x10] sm:$0xf]
      %v1309 = vld [vmem:[%s1303 + $0x14] sm:$0xf]
      %v1310 = vld [vmem:[%s1303 + $0x18] sm:$0xf]
      %v1311 = vld [vmem:[%s1303 + $0x1c] sm:$0xf]
      %v1320 = vunpack.c.l.b16 %v1304
      %v1321 = vunpack.c.l.b16 %v1305
      %v1322 = vunpack.c.l.b16 %v1306
      %v1323 = vunpack.c.l.b16 %v1307
      %v1324 = vunpack.c.l.b16 %v1308
      %v1325 = vunpack.c.l.b16 %v1309
      %v1326 = vunpack.c.l.b16 %v1310
      %v1327 = vunpack.c.l.b16 %v1311
      %v1328 = vpack.c.b16 %v1321, %v1320
      %v1329 = vpack.c.b16 %v1323, %v1322
      %v1330 = vpack.c.b16 %v1325, %v1324
      %v1331 = vpack.c.b16 %v1327, %v1326
      %v1337 = vsel %vm368, %v1287, 0
      %v1340 = vsel %vm368, %v1288, 0
      %v1343 = vsel %vm368, %v1289, 0
      %v1346 = vsel %vm368, %v1290, 0
      %v1349 = vsel %vm368, %v1291, 0
      %v1352 = vsel %vm368, %v1292, 0
      %v1355 = vsel %vm368, %v1293, 0
      %v1358 = vsel %vm368, %v1294, 0
      %v1361 = vsel %vm368, %v1295, 0
      %v1364 = vsel %vm368, %v1296, 0
      %v1367 = vsel %vm368, %v1297, 0
      %v1370 = vsel %vm368, %v1298, 0
      %v1373 = vsel %vm368, %v1299, 0
      %v1376 = vsel %vm368, %v1300, 0
      %v1379 = vsel %vm368, %v1301, 0
      %v1382 = vsel %vm368, %v1302, 0
      %1384 = vmatprep.subr.bf16.mxu0 0
      %1385 = vmatpush1.bf16.msra.mxu0 %v1328
      %1386 = vmatprep.subr.bf16.mxu0 0
      %1387 = vmatpush1.bf16.msra.mxu0 %v1329
      %1388 = vmatprep.subr.bf16.mxu0 0
      %1389 = vmatpush1.bf16.msra.mxu0 %v1330
      %1390 = vmatprep.subr.bf16.mxu0 0
      %1391 = vmatpush1.bf16.msra.mxu0 %v1331
      %1392 = vmatprep.subr.bf16.mxu0 0
      %1393 = vmatpush1.bf16.msra.mxu0 0
      %1394 = vmatprep.subr.bf16.mxu0 0
      %1395 = vmatpush1.bf16.msra.mxu0 0
      %1396 = vmatprep.subr.bf16.mxu0 0
      %1397 = vmatpush1.bf16.msra.mxu0 0
      %1398 = vmatprep.subr.bf16.mxu0 0
      %1399 = vmatpush1.bf16.msra.mxu0 0
      %1400 = vmatprep.subr.bf16.mxu0 0
      %1401 = vmatpush1.bf16.msra.mxu0 0
      %1402 = vmatprep.subr.bf16.mxu0 0
      %1403 = vmatpush1.bf16.msra.mxu0 0
      %1404 = vmatprep.subr.bf16.mxu0 0
      %1405 = vmatpush1.bf16.msra.mxu0 0
      %1406 = vmatprep.subr.bf16.mxu0 0
      %1407 = vmatpush1.bf16.msra.mxu0 0
      %1408 = vmatprep.subr.bf16.mxu0 0
      %1409 = vmatpush1.bf16.msra.mxu0 0
      %1410 = vmatprep.subr.bf16.mxu0 0
      %1411 = vmatpush1.bf16.msra.mxu0 0
      %1412 = vmatprep.subr.bf16.mxu0 0
      %1413 = vmatpush1.bf16.msra.mxu0 0
      %1414 = vmatprep.subr.bf16.mxu0 0
      %1415 = vmatpush1.bf16.msra.mxu0 0
      %1416 = vmatprep.mubr.bf16.mxu0 0
      %1417 = vmatmul.mubr.bf16.gmra.mrb[0].mxu0 %v1337
      %v1418 = vpop.f32.mrb[0].mxu0
      %v1419 = vadd.f32 0.0, %v1418
      %v1420 = vpop.f32.mrb[0].mxu0
      %v1421 = vpop.f32.mrb[0].mxu0
      %v1422 = vadd.f32 0.0, %v1421
      %v1423 = vpop.f32.mrb[0].mxu0
      %1424 = vmatprep.mubr.bf16.mxu0 0
      %1425 = vmatmul.mubr.bf16.gmra.mrb[0].mxu0 %v1340
      %v1426 = vpop.f32.mrb[0].mxu0
      %v1427 = vadd.f32 0.0, %v1426
      %v1428 = vpop.f32.mrb[0].mxu0
      %v1429 = vpop.f32.mrb[0].mxu0
      %v1430 = vadd.f32 0.0, %v1429
      %v1431 = vpop.f32.mrb[0].mxu0
      %1432 = vmatprep.mubr.bf16.mxu0 0
      %1433 = vmatmul.mubr.bf16.gmra.mrb[0].mxu0 %v1343
      %v1434 = vpop.f32.mrb[0].mxu0
      %v1435 = vadd.f32 0.0, %v1434
      %v1436 = vpop.f32.mrb[0].mxu0
      %v1437 = vpop.f32.mrb[0].mxu0
      %v1438 = vadd.f32 0.0, %v1437
      %v1439 = vpop.f32.mrb[0].mxu0
      %1440 = vmatprep.mubr.bf16.mxu0 0
      %1441 = vmatmul.mubr.bf16.gmra.mrb[0].mxu0 %v1346
      %v1442 = vpop.f32.mrb[0].mxu0
      %v1443 = vadd.f32 0.0, %v1442
      %v1444 = vpop.f32.mrb[0].mxu0
      %v1445 = vpop.f32.mrb[0].mxu0
      %v1446 = vadd.f32 0.0, %v1445
      %v1447 = vpop.f32.mrb[0].mxu0
      %1448 = vmatprep.mubr.bf16.mxu0 0
      %1449 = vmatmul.mubr.bf16.gmra.mrb[0].mxu0 %v1349
      %v1450 = vpop.f32.mrb[0].mxu0
      %v1451 = vadd.f32 0.0, %v1450
      %v1452 = vpop.f32.mrb[0].mxu0
      %v1453 = vpop.f32.mrb[0].mxu0
      %v1454 = vadd.f32 0.0, %v1453
      %v1455 = vpop.f32.mrb[0].mxu0
      %1456 = vmatprep.mubr.bf16.mxu0 0
      %1457 = vmatmul.mubr.bf16.gmra.mrb[0].mxu0 %v1352
      %v1458 = vpop.f32.mrb[0].mxu0
      %v1459 = vadd.f32 0.0, %v1458
      %v1460 = vpop.f32.mrb[0].mxu0
      %v1461 = vpop.f32.mrb[0].mxu0
      %v1462 = vadd.f32 0.0, %v1461
      %v1463 = vpop.f32.mrb[0].mxu0
      %1464 = vmatprep.mubr.bf16.mxu0 0
      %1465 = vmatmul.mubr.bf16.gmra.mrb[0].mxu0 %v1355
      %v1466 = vpop.f32.mrb[0].mxu0
      %v1467 = vadd.f32 0.0, %v1466
      %v1468 = vpop.f32.mrb[0].mxu0
      %v1469 = vpop.f32.mrb[0].mxu0
      %v1470 = vadd.f32 0.0, %v1469
      %v1471 = vpop.f32.mrb[0].mxu0
      %1472 = vmatprep.mubr.bf16.mxu0 0
      %1473 = vmatmul.mubr.bf16.gmra.mrb[0].mxu0 %v1358
      %v1474 = vpop.f32.mrb[0].mxu0
      %v1475 = vadd.f32 0.0, %v1474
      %v1476 = vpop.f32.mrb[0].mxu0
      %v1477 = vpop.f32.mrb[0].mxu0
      %v1478 = vadd.f32 0.0, %v1477
      %v1479 = vpop.f32.mrb[0].mxu0
      %1480 = vmatprep.mubr.bf16.mxu0 0
      %1481 = vmatmul.mubr.bf16.gmra.mrb[0].mxu0 %v1361
      %v1482 = vpop.f32.mrb[0].mxu0
      %v1483 = vadd.f32 0.0, %v1482
      %v1484 = vpop.f32.mrb[0].mxu0
      %v1485 = vpop.f32.mrb[0].mxu0
      %v1486 = vadd.f32 0.0, %v1485
      %v1487 = vpop.f32.mrb[0].mxu0
      %1488 = vmatprep.mubr.bf16.mxu0 0
      %1489 = vmatmul.mubr.bf16.gmra.mrb[0].mxu0 %v1364
      %v1490 = vpop.f32.mrb[0].mxu0
      %v1491 = vadd.f32 0.0, %v1490
      %v1492 = vpop.f32.mrb[0].mxu0
      %v1493 = vpop.f32.mrb[0].mxu0
      %v1494 = vadd.f32 0.0, %v1493
      %v1495 = vpop.f32.mrb[0].mxu0
      %1496 = vmatprep.mubr.bf16.mxu0 0
      %1497 = vmatmul.mubr.bf16.gmra.mrb[0].mxu0 %v1367
      %v1498 = vpop.f32.mrb[0].mxu0
      %v1499 = vadd.f32 0.0, %v1498
      %v1500 = vpop.f32.mrb[0].mxu0
      %v1501 = vpop.f32.mrb[0].mxu0
      %v1502 = vadd.f32 0.0, %v1501
      %v1503 = vpop.f32.mrb[0].mxu0
      %1504 = vmatprep.mubr.bf16.mxu0 0
      %1505 = vmatmul.mubr.bf16.gmra.mrb[0].mxu0 %v1370
      %v1506 = vpop.f32.mrb[0].mxu0
      %v1507 = vadd.f32 0.0, %v1506
      %v1508 = vpop.f32.mrb[0].mxu0
      %v1509 = vpop.f32.mrb[0].mxu0
      %v1510 = vadd.f32 0.0, %v1509
      %v1511 = vpop.f32.mrb[0].mxu0
      %1512 = vmatprep.mubr.bf16.mxu0 0
      %1513 = vmatmul.mubr.bf16.gmra.mrb[0].mxu0 %v1373
      %v1514 = vpop.f32.mrb[0].mxu0
      %v1515 = vadd.f32 0.0, %v1514
      %v1516 = vpop.f32.mrb[0].mxu0
      %v1517 = vpop.f32.mrb[0].mxu0
      %v1518 = vadd.f32 0.0, %v1517
      %v1519 = vpop.f32.mrb[0].mxu0
      %1520 = vmatprep.mubr.bf16.mxu0 0
      %1521 = vmatmul.mubr.bf16.gmra.mrb[0].mxu0 %v1376
      %v1522 = vpop.f32.mrb[0].mxu0
      %v1523 = vadd.f32 0.0, %v1522
      %v1524 = vpop.f32.mrb[0].mxu0
      %v1525 = vpop.f32.mrb[0].mxu0
      %v1526 = vadd.f32 0.0, %v1525
      %v1527 = vpop.f32.mrb[0].mxu0
      %1528 = vmatprep.mubr.bf16.mxu0 0
      %1529 = vmatmul.mubr.bf16.gmra.mrb[0].mxu0 %v1379
      %v1530 = vpop.f32.mrb[0].mxu0
      %v1531 = vadd.f32 0.0, %v1530
      %v1532 = vpop.f32.mrb[0].mxu0
      %v1533 = vpop.f32.mrb[0].mxu0
      %v1534 = vadd.f32 0.0, %v1533
      %v1535 = vpop.f32.mrb[0].mxu0
      %1536 = vmatprep.mubr.bf16.mxu0 0
      %1537 = vmatmul.mubr.bf16.gmra.mrb[0].mxu0 %v1382
      %v1538 = vpop.f32.mrb[0].mxu0
      %v1539 = vadd.f32 0.0, %v1538
      %v1540 = vpop.f32.mrb[0].mxu0
      %v1541 = vpop.f32.mrb[0].mxu0
      %v1542 = vadd.f32 0.0, %v1541
      %v1543 = vpop.f32.mrb[0].mxu0
      %1544 = vdwg.mxu0
      %v1545 = vadd.f32 %v1222, %v1419
      %v1546 = vadd.f32 %v1223, %v1422
      %v1547 = vadd.f32 %v1224, %v1427
      %v1548 = vadd.f32 %v1225, %v1430
      %v1549 = vadd.f32 %v1226, %v1435
      %v1550 = vadd.f32 %v1227, %v1438
      %v1551 = vadd.f32 %v1228, %v1443
      %v1552 = vadd.f32 %v1229, %v1446
      %v1553 = vadd.f32 %v1230, %v1451
      %v1554 = vadd.f32 %v1231, %v1454
      %v1555 = vadd.f32 %v1232, %v1459
      %v1556 = vadd.f32 %v1233, %v1462
      %v1557 = vadd.f32 %v1234, %v1467
      %v1558 = vadd.f32 %v1235, %v1470
      %v1559 = vadd.f32 %v1236, %v1475
      %v1560 = vadd.f32 %v1237, %v1478
      %v1561 = vadd.f32 %v1238, %v1483
      %v1562 = vadd.f32 %v1239, %v1486
      %v1563 = vadd.f32 %v1240, %v1491
      %v1564 = vadd.f32 %v1241, %v1494
      %v1565 = vadd.f32 %v1242, %v1499
      %v1566 = vadd.f32 %v1243, %v1502
      %v1567 = vadd.f32 %v1244, %v1507
      %v1568 = vadd.f32 %v1245, %v1510
      %v1569 = vadd.f32 %v1246, %v1515
      %v1570 = vadd.f32 %v1247, %v1518
      %v1571 = vadd.f32 %v1248, %v1523
      %v1572 = vadd.f32 %v1249, %v1526
      %v1573 = vadd.f32 %v1250, %v1531
      %v1574 = vadd.f32 %v1251, %v1534
      %v1575 = vadd.f32 %v1252, %v1539
      %v1576 = vadd.f32 %v1253, %v1542
      %v1577 = vld [vmem:[%s1254 + $0x1] sm:$0xff]
      %v1578 = vld [vmem:[%s1254 + $0x9] sm:$0xff]
      %v1579 = vld [vmem:[%s1254 + $0x19] sm:$0xff]
      %v1580 = vld [vmem:[%s1254 + $0x21] sm:$0xff]
      %v1581 = vld [vmem:[%s1254 + $0x31] sm:$0xff]
      %v1582 = vld [vmem:[%s1254 + $0x39] sm:$0xff]
      %v1583 = vld [vmem:[%s1254 + $0x49] sm:$0xff]
      %v1584 = vld [vmem:[%s1254 + $0x51] sm:$0xff]
      %v1585 = vld [vmem:[%s1254 + $0x61] sm:$0xff]
      %v1586 = vld [vmem:[%s1254 + $0x69] sm:$0xff]
      %v1587 = vld [vmem:[%s1254 + $0x79] sm:$0xff]
      %v1588 = vld [vmem:[%s1254 + $0x81] sm:$0xff]
      %v1589 = vld [vmem:[%s1254 + $0x91] sm:$0xff]
      %v1590 = vld [vmem:[%s1254 + $0x99] sm:$0xff]
      %v1591 = vld [vmem:[%s1254 + $0xa9] sm:$0xff]
      %v1592 = vld [vmem:[%s1254 + $0xb1] sm:$0xff]
      %v1593 = vld [vmem:[%s1254 + $0xc1] sm:$0xff]
      %v1594 = vld [vmem:[%s1254 + $0xc9] sm:$0xff]
      %v1595 = vld [vmem:[%s1254 + $0xd9] sm:$0xff]
      %v1596 = vld [vmem:[%s1254 + $0xe1] sm:$0xff]
      %v1597 = vld [vmem:[%s1254 + $0xf1] sm:$0xff]
      %v1598 = vld [vmem:[%s1254 + $0xf9] sm:$0xff]
      %v1599 = vld [vmem:[%s1254 + $0x109] sm:$0xff]
      %v1600 = vld [vmem:[%s1254 + $0x111] sm:$0xff]
      %v1601 = vld [vmem:[%s1254 + $0x121] sm:$0xff]
      %v1602 = vld [vmem:[%s1254 + $0x129] sm:$0xff]
      %v1603 = vld [vmem:[%s1254 + $0x139] sm:$0xff]
      %v1604 = vld [vmem:[%s1254 + $0x141] sm:$0xff]
      %v1605 = vld [vmem:[%s1254 + $0x151] sm:$0xff]
      %v1606 = vld [vmem:[%s1254 + $0x159] sm:$0xff]
      %v1607 = vld [vmem:[%s1254 + $0x169] sm:$0xff]
      %v1608 = vld [vmem:[%s1254 + $0x171] sm:$0xff]
      %v1609 = vpack.c.bf16 %v1578, %v1577
      %v1610 = vpack.c.bf16 %v1580, %v1579
      %v1611 = vpack.c.bf16 %v1582, %v1581
      %v1612 = vpack.c.bf16 %v1584, %v1583
      %v1613 = vpack.c.bf16 %v1586, %v1585
      %v1614 = vpack.c.bf16 %v1588, %v1587
      %v1615 = vpack.c.bf16 %v1590, %v1589
      %v1616 = vpack.c.bf16 %v1592, %v1591
      %v1617 = vpack.c.bf16 %v1594, %v1593
      %v1618 = vpack.c.bf16 %v1596, %v1595
      %v1619 = vpack.c.bf16 %v1598, %v1597
      %v1620 = vpack.c.bf16 %v1600, %v1599
      %v1621 = vpack.c.bf16 %v1602, %v1601
      %v1622 = vpack.c.bf16 %v1604, %v1603
      %v1623 = vpack.c.bf16 %v1606, %v1605
      %v1624 = vpack.c.bf16 %v1608, %v1607
      %s1625 = scalar_lea.vmem %s1, 128
      %v1626 = vld [vmem:[%s1625] sm:$0xf]
      %v1627 = vld [vmem:[%s1625 + $0x4] sm:$0xf]
      %v1628 = vld [vmem:[%s1625 + $0x8] sm:$0xf]
      %v1629 = vld [vmem:[%s1625 + $0xc] sm:$0xf]
      %v1630 = vld [vmem:[%s1625 + $0x10] sm:$0xf]
      %v1631 = vld [vmem:[%s1625 + $0x14] sm:$0xf]
      %v1632 = vld [vmem:[%s1625 + $0x18] sm:$0xf]
      %v1633 = vld [vmem:[%s1625 + $0x1c] sm:$0xf]
      %v1642 = vunpack.c.l.b16 %v1626
      %v1643 = vunpack.c.l.b16 %v1627
      %v1644 = vunpack.c.l.b16 %v1628
      %v1645 = vunpack.c.l.b16 %v1629
      %v1646 = vunpack.c.l.b16 %v1630
      %v1647 = vunpack.c.l.b16 %v1631
      %v1648 = vunpack.c.l.b16 %v1632
      %v1649 = vunpack.c.l.b16 %v1633
      %v1650 = vpack.c.b16 %v1643, %v1642
      %v1651 = vpack.c.b16 %v1645, %v1644
      %v1652 = vpack.c.b16 %v1647, %v1646
      %v1653 = vpack.c.b16 %v1649, %v1648
      %v1659 = vsel %vm368, %v1609, 0
      %v1662 = vsel %vm368, %v1610, 0
      %v1665 = vsel %vm368, %v1611, 0
      %v1668 = vsel %vm368, %v1612, 0
      %v1671 = vsel %vm368, %v1613, 0
      %v1674 = vsel %vm368, %v1614, 0
      %v1677 = vsel %vm368, %v1615, 0
      %v1680 = vsel %vm368, %v1616, 0
      %v1683 = vsel %vm368, %v1617, 0
      %v1686 = vsel %vm368, %v1618, 0
      %v1689 = vsel %vm368, %v1619, 0
      %v1692 = vsel %vm368, %v1620, 0
      %v1695 = vsel %vm368, %v1621, 0
      %v1698 = vsel %vm368, %v1622, 0
      %v1701 = vsel %vm368, %v1623, 0
      %v1704 = vsel %vm368, %v1624, 0
      %1706 = vmatprep.subr.bf16.mxu0 0
      %1707 = vmatpush1.bf16.msra.mxu0 %v1650
      %1708 = vmatprep.subr.bf16.mxu0 0
      %1709 = vmatpush1.bf16.msra.mxu0 %v1651
      %1710 = vmatprep.subr.bf16.mxu0 0
      %1711 = vmatpush1.bf16.msra.mxu0 %v1652
      %1712 = vmatprep.subr.bf16.mxu0 0
      %1713 = vmatpush1.bf16.msra.mxu0 %v1653
      %1714 = vmatprep.subr.bf16.mxu0 0
      %1715 = vmatpush1.bf16.msra.mxu0 0
      %1716 = vmatprep.subr.bf16.mxu0 0
      %1717 = vmatpush1.bf16.msra.mxu0 0
      %1718 = vmatprep.subr.bf16.mxu0 0
      %1719 = vmatpush1.bf16.msra.mxu0 0
      %1720 = vmatprep.subr.bf16.mxu0 0
      %1721 = vmatpush1.bf16.msra.mxu0 0
      %1722 = vmatprep.subr.bf16.mxu0 0
      %1723 = vmatpush1.bf16.msra.mxu0 0
      %1724 = vmatprep.subr.bf16.mxu0 0
      %1725 = vmatpush1.bf16.msra.mxu0 0
      %1726 = vmatprep.subr.bf16.mxu0 0
      %1727 = vmatpush1.bf16.msra.mxu0 0
      %1728 = vmatprep.subr.bf16.mxu0 0
      %1729 = vmatpush1.bf16.msra.mxu0 0
      %1730 = vmatprep.subr.bf16.mxu0 0
      %1731 = vmatpush1.bf16.msra.mxu0 0
      %1732 = vmatprep.subr.bf16.mxu0 0
      %1733 = vmatpush1.bf16.msra.mxu0 0
      %1734 = vmatprep.subr.bf16.mxu0 0
      %1735 = vmatpush1.bf16.msra.mxu0 0
      %1736 = vmatprep.subr.bf16.mxu0 0
      %1737 = vmatpush1.bf16.msra.mxu0 0
      %1738 = vmatprep.mubr.bf16.mxu0 0
      %1739 = vmatmul.mubr.bf16.gmra.mrb[0].mxu0 %v1659
      %v1740 = vpop.f32.mrb[0].mxu0
      %v1741 = vadd.f32 0.0, %v1740
      %v1742 = vpop.f32.mrb[0].mxu0
      %v1743 = vpop.f32.mrb[0].mxu0
      %v1744 = vadd.f32 0.0, %v1743
      %v1745 = vpop.f32.mrb[0].mxu0
      %1746 = vmatprep.mubr.bf16.mxu0 0
      %1747 = vmatmul.mubr.bf16.gmra.mrb[0].mxu0 %v1662
      %v1748 = vpop.f32.mrb[0].mxu0
      %v1749 = vadd.f32 0.0, %v1748
      %v1750 = vpop.f32.mrb[0].mxu0
      %v1751 = vpop.f32.mrb[0].mxu0
      %v1752 = vadd.f32 0.0, %v1751
      %v1753 = vpop.f32.mrb[0].mxu0
      %1754 = vmatprep.mubr.bf16.mxu0 0
      %1755 = vmatmul.mubr.bf16.gmra.mrb[0].mxu0 %v1665
      %v1756 = vpop.f32.mrb[0].mxu0
      %v1757 = vadd.f32 0.0, %v1756
      %v1758 = vpop.f32.mrb[0].mxu0
      %v1759 = vpop.f32.mrb[0].mxu0
      %v1760 = vadd.f32 0.0, %v1759
      %v1761 = vpop.f32.mrb[0].mxu0
      %1762 = vmatprep.mubr.bf16.mxu0 0
      %1763 = vmatmul.mubr.bf16.gmra.mrb[0].mxu0 %v1668
      %v1764 = vpop.f32.mrb[0].mxu0
      %v1765 = vadd.f32 0.0, %v1764
      %v1766 = vpop.f32.mrb[0].mxu0
      %v1767 = vpop.f32.mrb[0].mxu0
      %v1768 = vadd.f32 0.0, %v1767
      %v1769 = vpop.f32.mrb[0].mxu0
      %1770 = vmatprep.mubr.bf16.mxu0 0
      %1771 = vmatmul.mubr.bf16.gmra.mrb[0].mxu0 %v1671
      %v1772 = vpop.f32.mrb[0].mxu0
      %v1773 = vadd.f32 0.0, %v1772
      %v1774 = vpop.f32.mrb[0].mxu0
      %v1775 = vpop.f32.mrb[0].mxu0
      %v1776 = vadd.f32 0.0, %v1775
      %v1777 = vpop.f32.mrb[0].mxu0
      %1778 = vmatprep.mubr.bf16.mxu0 0
      %1779 = vmatmul.mubr.bf16.gmra.mrb[0].mxu0 %v1674
      %v1780 = vpop.f32.mrb[0].mxu0
      %v1781 = vadd.f32 0.0, %v1780
      %v1782 = vpop.f32.mrb[0].mxu0
      %v1783 = vpop.f32.mrb[0].mxu0
      %v1784 = vadd.f32 0.0, %v1783
      %v1785 = vpop.f32.mrb[0].mxu0
      %1786 = vmatprep.mubr.bf16.mxu0 0
      %1787 = vmatmul.mubr.bf16.gmra.mrb[0].mxu0 %v1677
      %v1788 = vpop.f32.mrb[0].mxu0
      %v1789 = vadd.f32 0.0, %v1788
      %v1790 = vpop.f32.mrb[0].mxu0
      %v1791 = vpop.f32.mrb[0].mxu0
      %v1792 = vadd.f32 0.0, %v1791
      %v1793 = vpop.f32.mrb[0].mxu0
      %1794 = vmatprep.mubr.bf16.mxu0 0
      %1795 = vmatmul.mubr.bf16.gmra.mrb[0].mxu0 %v1680
      %v1796 = vpop.f32.mrb[0].mxu0
      %v1797 = vadd.f32 0.0, %v1796
      %v1798 = vpop.f32.mrb[0].mxu0
      %v1799 = vpop.f32.mrb[0].mxu0
      %v1800 = vadd.f32 0.0, %v1799
      %v1801 = vpop.f32.mrb[0].mxu0
      %1802 = vmatprep.mubr.bf16.mxu0 0
      %1803 = vmatmul.mubr.bf16.gmra.mrb[0].mxu0 %v1683
      %v1804 = vpop.f32.mrb[0].mxu0
      %v1805 = vadd.f32 0.0, %v1804
      %v1806 = vpop.f32.mrb[0].mxu0
      %v1807 = vpop.f32.mrb[0].mxu0
      %v1808 = vadd.f32 0.0, %v1807
      %v1809 = vpop.f32.mrb[0].mxu0
      %1810 = vmatprep.mubr.bf16.mxu0 0
      %1811 = vmatmul.mubr.bf16.gmra.mrb[0].mxu0 %v1686
      %v1812 = vpop.f32.mrb[0].mxu0
      %v1813 = vadd.f32 0.0, %v1812
      %v1814 = vpop.f32.mrb[0].mxu0
      %v1815 = vpop.f32.mrb[0].mxu0
      %v1816 = vadd.f32 0.0, %v1815
      %v1817 = vpop.f32.mrb[0].mxu0
      %1818 = vmatprep.mubr.bf16.mxu0 0
      %1819 = vmatmul.mubr.bf16.gmra.mrb[0].mxu0 %v1689
      %v1820 = vpop.f32.mrb[0].mxu0
      %v1821 = vadd.f32 0.0, %v1820
      %v1822 = vpop.f32.mrb[0].mxu0
      %v1823 = vpop.f32.mrb[0].mxu0
      %v1824 = vadd.f32 0.0, %v1823
      %v1825 = vpop.f32.mrb[0].mxu0
      %1826 = vmatprep.mubr.bf16.mxu0 0
      %1827 = vmatmul.mubr.bf16.gmra.mrb[0].mxu0 %v1692
      %v1828 = vpop.f32.mrb[0].mxu0
      %v1829 = vadd.f32 0.0, %v1828
      %v1830 = vpop.f32.mrb[0].mxu0
      %v1831 = vpop.f32.mrb[0].mxu0
      %v1832 = vadd.f32 0.0, %v1831
      %v1833 = vpop.f32.mrb[0].mxu0
      %1834 = vmatprep.mubr.bf16.mxu0 0
      %1835 = vmatmul.mubr.bf16.gmra.mrb[0].mxu0 %v1695
      %v1836 = vpop.f32.mrb[0].mxu0
      %v1837 = vadd.f32 0.0, %v1836
      %v1838 = vpop.f32.mrb[0].mxu0
      %v1839 = vpop.f32.mrb[0].mxu0
      %v1840 = vadd.f32 0.0, %v1839
      %v1841 = vpop.f32.mrb[0].mxu0
      %1842 = vmatprep.mubr.bf16.mxu0 0
      %1843 = vmatmul.mubr.bf16.gmra.mrb[0].mxu0 %v1698
      %v1844 = vpop.f32.mrb[0].mxu0
      %v1845 = vadd.f32 0.0, %v1844
      %v1846 = vpop.f32.mrb[0].mxu0
      %v1847 = vpop.f32.mrb[0].mxu0
      %v1848 = vadd.f32 0.0, %v1847
      %v1849 = vpop.f32.mrb[0].mxu0
      %1850 = vmatprep.mubr.bf16.mxu0 0
      %1851 = vmatmul.mubr.bf16.gmra.mrb[0].mxu0 %v1701
      %v1852 = vpop.f32.mrb[0].mxu0
      %v1853 = vadd.f32 0.0, %v1852
      %v1854 = vpop.f32.mrb[0].mxu0
      %v1855 = vpop.f32.mrb[0].mxu0
      %v1856 = vadd.f32 0.0, %v1855
      %v1857 = vpop.f32.mrb[0].mxu0
      %1858 = vmatprep.mubr.bf16.mxu0 0
      %1859 = vmatmul.mubr.bf16.gmra.mrb[0].mxu0 %v1704
      %v1860 = vpop.f32.mrb[0].mxu0
      %v1861 = vadd.f32 0.0, %v1860
      %v1862 = vpop.f32.mrb[0].mxu0
      %v1863 = vpop.f32.mrb[0].mxu0
      %v1864 = vadd.f32 0.0, %v1863
      %v1865 = vpop.f32.mrb[0].mxu0
      %1866 = vdwg.mxu0
      %v1867 = vadd.f32 %v1545, %v1741
      %v1868 = vadd.f32 %v1546, %v1744
      %v1869 = vadd.f32 %v1547, %v1749
      %v1870 = vadd.f32 %v1548, %v1752
      %v1871 = vadd.f32 %v1549, %v1757
      %v1872 = vadd.f32 %v1550, %v1760
      %v1873 = vadd.f32 %v1551, %v1765
      %v1874 = vadd.f32 %v1552, %v1768
      %v1875 = vadd.f32 %v1553, %v1773
      %v1876 = vadd.f32 %v1554, %v1776
      %v1877 = vadd.f32 %v1555, %v1781
      %v1878 = vadd.f32 %v1556, %v1784
      %v1879 = vadd.f32 %v1557, %v1789
      %v1880 = vadd.f32 %v1558, %v1792
      %v1881 = vadd.f32 %v1559, %v1797
      %v1882 = vadd.f32 %v1560, %v1800
      %v1883 = vadd.f32 %v1561, %v1805
      %v1884 = vadd.f32 %v1562, %v1808
      %v1885 = vadd.f32 %v1563, %v1813
      %v1886 = vadd.f32 %v1564, %v1816
      %v1887 = vadd.f32 %v1565, %v1821
      %v1888 = vadd.f32 %v1566, %v1824
      %v1889 = vadd.f32 %v1567, %v1829
      %v1890 = vadd.f32 %v1568, %v1832
      %v1891 = vadd.f32 %v1569, %v1837
      %v1892 = vadd.f32 %v1570, %v1840
      %v1893 = vadd.f32 %v1571, %v1845
      %v1894 = vadd.f32 %v1572, %v1848
      %v1895 = vadd.f32 %v1573, %v1853
      %v1896 = vadd.f32 %v1574, %v1856
      %v1897 = vadd.f32 %v1575, %v1861
      %v1898 = vadd.f32 %v1576, %v1864
      %v1899 = vld [vmem:[%s1254 + $0x2] sm:$0xff]
      %v1900 = vld [vmem:[%s1254 + $0xa] sm:$0xff]
      %v1901 = vld [vmem:[%s1254 + $0x1a] sm:$0xff]
      %v1902 = vld [vmem:[%s1254 + $0x22] sm:$0xff]
      %v1903 = vld [vmem:[%s1254 + $0x32] sm:$0xff]
      %v1904 = vld [vmem:[%s1254 + $0x3a] sm:$0xff]
      %v1905 = vld [vmem:[%s1254 + $0x4a] sm:$0xff]
      %v1906 = vld [vmem:[%s1254 + $0x52] sm:$0xff]
      %v1907 = vld [vmem:[%s1254 + $0x62] sm:$0xff]
      %v1908 = vld [vmem:[%s1254 + $0x6a] sm:$0xff]
      %v1909 = vld [vmem:[%s1254 + $0x7a] sm:$0xff]
      %v1910 = vld [vmem:[%s1254 + $0x82] sm:$0xff]
      %v1911 = vld [vmem:[%s1254 + $0x92] sm:$0xff]
      %v1912 = vld [vmem:[%s1254 + $0x9a] sm:$0xff]
      %v1913 = vld [vmem:[%s1254 + $0xaa] sm:$0xff]
      %v1914 = vld [vmem:[%s1254 + $0xb2] sm:$0xff]
      %v1915 = vld [vmem:[%s1254 + $0xc2] sm:$0xff]
      %v1916 = vld [vmem:[%s1254 + $0xca] sm:$0xff]
      %v1917 = vld [vmem:[%s1254 + $0xda] sm:$0xff]
      %v1918 = vld [vmem:[%s1254 + $0xe2] sm:$0xff]
      %v1919 = vld [vmem:[%s1254 + $0xf2] sm:$0xff]
      %v1920 = vld [vmem:[%s1254 + $0xfa] sm:$0xff]
      %v1921 = vld [vmem:[%s1254 + $0x10a] sm:$0xff]
      %v1922 = vld [vmem:[%s1254 + $0x112] sm:$0xff]
      %v1923 = vld [vmem:[%s1254 + $0x122] sm:$0xff]
      %v1924 = vld [vmem:[%s1254 + $0x12a] sm:$0xff]
      %v1925 = vld [vmem:[%s1254 + $0x13a] sm:$0xff]
      %v1926 = vld [vmem:[%s1254 + $0x142] sm:$0xff]
      %v1927 = vld [vmem:[%s1254 + $0x152] sm:$0xff]
      %v1928 = vld [vmem:[%s1254 + $0x15a] sm:$0xff]
      %v1929 = vld [vmem:[%s1254 + $0x16a] sm:$0xff]
      %v1930 = vld [vmem:[%s1254 + $0x172] sm:$0xff]
      %v1931 = vpack.c.bf16 %v1900, %v1899
      %v1932 = vpack.c.bf16 %v1902, %v1901
      %v1933 = vpack.c.bf16 %v1904, %v1903
      %v1934 = vpack.c.bf16 %v1906, %v1905
      %v1935 = vpack.c.bf16 %v1908, %v1907
      %v1936 = vpack.c.bf16 %v1910, %v1909
      %v1937 = vpack.c.bf16 %v1912, %v1911
      %v1938 = vpack.c.bf16 %v1914, %v1913
      %v1939 = vpack.c.bf16 %v1916, %v1915
      %v1940 = vpack.c.bf16 %v1918, %v1917
      %v1941 = vpack.c.bf16 %v1920, %v1919
      %v1942 = vpack.c.bf16 %v1922, %v1921
      %v1943 = vpack.c.bf16 %v1924, %v1923
      %v1944 = vpack.c.bf16 %v1926, %v1925
      %v1945 = vpack.c.bf16 %v1928, %v1927
      %v1946 = vpack.c.bf16 %v1930, %v1929
      %s1947 = scalar_lea.vmem %s1, 160
      %v1948 = vld [vmem:[%s1947] sm:$0xf]
      %v1949 = vld [vmem:[%s1947 + $0x4] sm:$0xf]
      %v1950 = vld [vmem:[%s1947 + $0x8] sm:$0xf]
      %v1951 = vld [vmem:[%s1947 + $0xc] sm:$0xf]
      %v1952 = vld [vmem:[%s1947 + $0x10] sm:$0xf]
      %v1953 = vld [vmem:[%s1947 + $0x14] sm:$0xf]
      %v1954 = vld [vmem:[%s1947 + $0x18] sm:$0xf]
      %v1955 = vld [vmem:[%s1947 + $0x1c] sm:$0xf]
      %v1964 = vunpack.c.l.b16 %v1948
      %v1965 = vunpack.c.l.b16 %v1949
      %v1966 = vunpack.c.l.b16 %v1950
      %v1967 = vunpack.c.l.b16 %v1951
      %v1968 = vunpack.c.l.b16 %v1952
      %v1969 = vunpack.c.l.b16 %v1953
      %v1970 = vunpack.c.l.b16 %v1954
      %v1971 = vunpack.c.l.b16 %v1955
      %v1972 = vpack.c.b16 %v1965, %v1964
      %v1973 = vpack.c.b16 %v1967, %v1966
      %v1974 = vpack.c.b16 %v1969, %v1968
      %v1975 = vpack.c.b16 %v1971, %v1970
      %v1981 = vsel %vm368, %v1931, 0
      %v1984 = vsel %vm368, %v1932, 0
      %v1987 = vsel %vm368, %v1933, 0
      %v1990 = vsel %vm368, %v1934, 0
      %v1993 = vsel %vm368, %v1935, 0
      %v1996 = vsel %vm368, %v1936, 0
      %v1999 = vsel %vm368, %v1937, 0
      %v2002 = vsel %vm368, %v1938, 0
      %v2005 = vsel %vm368, %v1939, 0
      %v2008 = vsel %vm368, %v1940, 0
      %v2011 = vsel %vm368, %v1941, 0
      %v2014 = vsel %vm368, %v1942, 0
      %v2017 = vsel %vm368, %v1943, 0
      %v2020 = vsel %vm368, %v1944, 0
      %v2023 = vsel %vm368, %v1945, 0
      %v2026 = vsel %vm368, %v1946, 0
      %2028 = vmatprep.subr.bf16.mxu0 0
      %2029 = vmatpush1.bf16.msra.mxu0 %v1972
      %2030 = vmatprep.subr.bf16.mxu0 0
      %2031 = vmatpush1.bf16.msra.mxu0 %v1973
      %2032 = vmatprep.subr.bf16.mxu0 0
      %2033 = vmatpush1.bf16.msra.mxu0 %v1974
      %2034 = vmatprep.subr.bf16.mxu0 0
      %2035 = vmatpush1.bf16.msra.mxu0 %v1975
      %2036 = vmatprep.subr.bf16.mxu0 0
      %2037 = vmatpush1.bf16.msra.mxu0 0
      %2038 = vmatprep.subr.bf16.mxu0 0
      %2039 = vmatpush1.bf16.msra.mxu0 0
      %2040 = vmatprep.subr.bf16.mxu0 0
      %2041 = vmatpush1.bf16.msra.mxu0 0
      %2042 = vmatprep.subr.bf16.mxu0 0
      %2043 = vmatpush1.bf16.msra.mxu0 0
      %2044 = vmatprep.subr.bf16.mxu0 0
      %2045 = vmatpush1.bf16.msra.mxu0 0
      %2046 = vmatprep.subr.bf16.mxu0 0
      %2047 = vmatpush1.bf16.msra.mxu0 0
      %2048 = vmatprep.subr.bf16.mxu0 0
      %2049 = vmatpush1.bf16.msra.mxu0 0
      %2050 = vmatprep.subr.bf16.mxu0 0
      %2051 = vmatpush1.bf16.msra.mxu0 0
      %2052 = vmatprep.subr.bf16.mxu0 0
      %2053 = vmatpush1.bf16.msra.mxu0 0
      %2054 = vmatprep.subr.bf16.mxu0 0
      %2055 = vmatpush1.bf16.msra.mxu0 0
      %2056 = vmatprep.subr.bf16.mxu0 0
      %2057 = vmatpush1.bf16.msra.mxu0 0
      %2058 = vmatprep.subr.bf16.mxu0 0
      %2059 = vmatpush1.bf16.msra.mxu0 0
      %2060 = vmatprep.mubr.bf16.mxu0 0
      %2061 = vmatmul.mubr.bf16.gmra.mrb[0].mxu0 %v1981
      %v2062 = vpop.f32.mrb[0].mxu0
      %v2063 = vadd.f32 0.0, %v2062
      %v2064 = vpop.f32.mrb[0].mxu0
      %v2065 = vpop.f32.mrb[0].mxu0
      %v2066 = vadd.f32 0.0, %v2065
      %v2067 = vpop.f32.mrb[0].mxu0
      %2068 = vmatprep.mubr.bf16.mxu0 0
      %2069 = vmatmul.mubr.bf16.gmra.mrb[0].mxu0 %v1984
      %v2070 = vpop.f32.mrb[0].mxu0
      %v2071 = vadd.f32 0.0, %v2070
      %v2072 = vpop.f32.mrb[0].mxu0
      %v2073 = vpop.f32.mrb[0].mxu0
      %v2074 = vadd.f32 0.0, %v2073
      %v2075 = vpop.f32.mrb[0].mxu0
      %2076 = vmatprep.mubr.bf16.mxu0 0
      %2077 = vmatmul.mubr.bf16.gmra.mrb[0].mxu0 %v1987
      %v2078 = vpop.f32.mrb[0].mxu0
      %v2079 = vadd.f32 0.0, %v2078
      %v2080 = vpop.f32.mrb[0].mxu0
      %v2081 = vpop.f32.mrb[0].mxu0
      %v2082 = vadd.f32 0.0, %v2081
      %v2083 = vpop.f32.mrb[0].mxu0
      %2084 = vmatprep.mubr.bf16.mxu0 0
      %2085 = vmatmul.mubr.bf16.gmra.mrb[0].mxu0 %v1990
      %v2086 = vpop.f32.mrb[0].mxu0
      %v2087 = vadd.f32 0.0, %v2086
      %v2088 = vpop.f32.mrb[0].mxu0
      %v2089 = vpop.f32.mrb[0].mxu0
      %v2090 = vadd.f32 0.0, %v2089
      %v2091 = vpop.f32.mrb[0].mxu0
      %2092 = vmatprep.mubr.bf16.mxu0 0
      %2093 = vmatmul.mubr.bf16.gmra.mrb[0].mxu0 %v1993
      %v2094 = vpop.f32.mrb[0].mxu0
      %v2095 = vadd.f32 0.0, %v2094
      %v2096 = vpop.f32.mrb[0].mxu0
      %v2097 = vpop.f32.mrb[0].mxu0
      %v2098 = vadd.f32 0.0, %v2097
      %v2099 = vpop.f32.mrb[0].mxu0
      %2100 = vmatprep.mubr.bf16.mxu0 0
      %2101 = vmatmul.mubr.bf16.gmra.mrb[0].mxu0 %v1996
      %v2102 = vpop.f32.mrb[0].mxu0
      %v2103 = vadd.f32 0.0, %v2102
      %v2104 = vpop.f32.mrb[0].mxu0
      %v2105 = vpop.f32.mrb[0].mxu0
      %v2106 = vadd.f32 0.0, %v2105
      %v2107 = vpop.f32.mrb[0].mxu0
      %2108 = vmatprep.mubr.bf16.mxu0 0
      %2109 = vmatmul.mubr.bf16.gmra.mrb[0].mxu0 %v1999
      %v2110 = vpop.f32.mrb[0].mxu0
      %v2111 = vadd.f32 0.0, %v2110
      %v2112 = vpop.f32.mrb[0].mxu0
      %v2113 = vpop.f32.mrb[0].mxu0
      %v2114 = vadd.f32 0.0, %v2113
      %v2115 = vpop.f32.mrb[0].mxu0
      %2116 = vmatprep.mubr.bf16.mxu0 0
      %2117 = vmatmul.mubr.bf16.gmra.mrb[0].mxu0 %v2002
      %v2118 = vpop.f32.mrb[0].mxu0
      %v2119 = vadd.f32 0.0, %v2118
      %v2120 = vpop.f32.mrb[0].mxu0
      %v2121 = vpop.f32.mrb[0].mxu0
      %v2122 = vadd.f32 0.0, %v2121
      %v2123 = vpop.f32.mrb[0].mxu0
      %2124 = vmatprep.mubr.bf16.mxu0 0
      %2125 = vmatmul.mubr.bf16.gmra.mrb[0].mxu0 %v2005
      %v2126 = vpop.f32.mrb[0].mxu0
      %v2127 = vadd.f32 0.0, %v2126
      %v2128 = vpop.f32.mrb[0].mxu0
      %v2129 = vpop.f32.mrb[0].mxu0
      %v2130 = vadd.f32 0.0, %v2129
      %v2131 = vpop.f32.mrb[0].mxu0
      %2132 = vmatprep.mubr.bf16.mxu0 0
      %2133 = vmatmul.mubr.bf16.gmra.mrb[0].mxu0 %v2008
      %v2134 = vpop.f32.mrb[0].mxu0
      %v2135 = vadd.f32 0.0, %v2134
      %v2136 = vpop.f32.mrb[0].mxu0
      %v2137 = vpop.f32.mrb[0].mxu0
      %v2138 = vadd.f32 0.0, %v2137
      %v2139 = vpop.f32.mrb[0].mxu0
      %2140 = vmatprep.mubr.bf16.mxu0 0
      %2141 = vmatmul.mubr.bf16.gmra.mrb[0].mxu0 %v2011
      %v2142 = vpop.f32.mrb[0].mxu0
      %v2143 = vadd.f32 0.0, %v2142
      %v2144 = vpop.f32.mrb[0].mxu0
      %v2145 = vpop.f32.mrb[0].mxu0
      %v2146 = vadd.f32 0.0, %v2145
      %v2147 = vpop.f32.mrb[0].mxu0
      %2148 = vmatprep.mubr.bf16.mxu0 0
      %2149 = vmatmul.mubr.bf16.gmra.mrb[0].mxu0 %v2014
      %v2150 = vpop.f32.mrb[0].mxu0
      %v2151 = vadd.f32 0.0, %v2150
      %v2152 = vpop.f32.mrb[0].mxu0
      %v2153 = vpop.f32.mrb[0].mxu0
      %v2154 = vadd.f32 0.0, %v2153
      %v2155 = vpop.f32.mrb[0].mxu0
      %2156 = vmatprep.mubr.bf16.mxu0 0
      %2157 = vmatmul.mubr.bf16.gmra.mrb[0].mxu0 %v2017
      %v2158 = vpop.f32.mrb[0].mxu0
      %v2159 = vadd.f32 0.0, %v2158
      %v2160 = vpop.f32.mrb[0].mxu0
      %v2161 = vpop.f32.mrb[0].mxu0
      %v2162 = vadd.f32 0.0, %v2161
      %v2163 = vpop.f32.mrb[0].mxu0
      %2164 = vmatprep.mubr.bf16.mxu0 0
      %2165 = vmatmul.mubr.bf16.gmra.mrb[0].mxu0 %v2020
      %v2166 = vpop.f32.mrb[0].mxu0
      %v2167 = vadd.f32 0.0, %v2166
      %v2168 = vpop.f32.mrb[0].mxu0
      %v2169 = vpop.f32.mrb[0].mxu0
      %v2170 = vadd.f32 0.0, %v2169
      %v2171 = vpop.f32.mrb[0].mxu0
      %2172 = vmatprep.mubr.bf16.mxu0 0
      %2173 = vmatmul.mubr.bf16.gmra.mrb[0].mxu0 %v2023
      %v2174 = vpop.f32.mrb[0].mxu0
      %v2175 = vadd.f32 0.0, %v2174
      %v2176 = vpop.f32.mrb[0].mxu0
      %v2177 = vpop.f32.mrb[0].mxu0
      %v2178 = vadd.f32 0.0, %v2177
      %v2179 = vpop.f32.mrb[0].mxu0
      %2180 = vmatprep.mubr.bf16.mxu0 0
      %2181 = vmatmul.mubr.bf16.gmra.mrb[0].mxu0 %v2026
      %v2182 = vpop.f32.mrb[0].mxu0
      %v2183 = vadd.f32 0.0, %v2182
      %v2184 = vpop.f32.mrb[0].mxu0
      %v2185 = vpop.f32.mrb[0].mxu0
      %v2186 = vadd.f32 0.0, %v2185
      %v2187 = vpop.f32.mrb[0].mxu0
      %2188 = vdwg.mxu0
      %v2189 = vadd.f32 %v1867, %v2063
      %v2190 = vadd.f32 %v1868, %v2066
      %v2191 = vadd.f32 %v1869, %v2071
      %v2192 = vadd.f32 %v1870, %v2074
      %v2193 = vadd.f32 %v1871, %v2079
      %v2194 = vadd.f32 %v1872, %v2082
      %v2195 = vadd.f32 %v1873, %v2087
      %v2196 = vadd.f32 %v1874, %v2090
      %v2197 = vadd.f32 %v1875, %v2095
      %v2198 = vadd.f32 %v1876, %v2098
      %v2199 = vadd.f32 %v1877, %v2103
      %v2200 = vadd.f32 %v1878, %v2106
      %v2201 = vadd.f32 %v1879, %v2111
      %v2202 = vadd.f32 %v1880, %v2114
      %v2203 = vadd.f32 %v1881, %v2119
      %v2204 = vadd.f32 %v1882, %v2122
      %v2205 = vadd.f32 %v1883, %v2127
      %v2206 = vadd.f32 %v1884, %v2130
      %v2207 = vadd.f32 %v1885, %v2135
      %v2208 = vadd.f32 %v1886, %v2138
      %v2209 = vadd.f32 %v1887, %v2143
      %v2210 = vadd.f32 %v1888, %v2146
      %v2211 = vadd.f32 %v1889, %v2151
      %v2212 = vadd.f32 %v1890, %v2154
      %v2213 = vadd.f32 %v1891, %v2159
      %v2214 = vadd.f32 %v1892, %v2162
      %v2215 = vadd.f32 %v1893, %v2167
      %v2216 = vadd.f32 %v1894, %v2170
      %v2217 = vadd.f32 %v1895, %v2175
      %v2218 = vadd.f32 %v1896, %v2178
      %v2219 = vadd.f32 %v1897, %v2183
      %v2220 = vadd.f32 %v1898, %v2186
      %s2221 = scalar_lea.vmem %s273, 48
      %v2222 = vld [vmem:[%s2221] sm:$0xff]
      %v2223 = vld [vmem:[%s2221 + $0x8] sm:$0xff]
      %v2224 = vld [vmem:[%s2221 + $0x18] sm:$0xff]
      %v2225 = vld [vmem:[%s2221 + $0x20] sm:$0xff]
      %v2226 = vld [vmem:[%s2221 + $0x30] sm:$0xff]
      %v2227 = vld [vmem:[%s2221 + $0x38] sm:$0xff]
      %v2228 = vld [vmem:[%s2221 + $0x48] sm:$0xff]
      %v2229 = vld [vmem:[%s2221 + $0x50] sm:$0xff]
      %v2230 = vld [vmem:[%s2221 + $0x60] sm:$0xff]
      %v2231 = vld [vmem:[%s2221 + $0x68] sm:$0xff]
      %v2232 = vld [vmem:[%s2221 + $0x78] sm:$0xff]
      %v2233 = vld [vmem:[%s2221 + $0x80] sm:$0xff]
      %v2234 = vld [vmem:[%s2221 + $0x90] sm:$0xff]
      %v2235 = vld [vmem:[%s2221 + $0x98] sm:$0xff]
      %v2236 = vld [vmem:[%s2221 + $0xa8] sm:$0xff]
      %v2237 = vld [vmem:[%s2221 + $0xb0] sm:$0xff]
      %v2238 = vld [vmem:[%s2221 + $0xc0] sm:$0xff]
      %v2239 = vld [vmem:[%s2221 + $0xc8] sm:$0xff]
      %v2240 = vld [vmem:[%s2221 + $0xd8] sm:$0xff]
      %v2241 = vld [vmem:[%s2221 + $0xe0] sm:$0xff]
      %v2242 = vld [vmem:[%s2221 + $0xf0] sm:$0xff]
      %v2243 = vld [vmem:[%s2221 + $0xf8] sm:$0xff]
      %v2244 = vld [vmem:[%s2221 + $0x108] sm:$0xff]
      %v2245 = vld [vmem:[%s2221 + $0x110] sm:$0xff]
      %v2246 = vld [vmem:[%s2221 + $0x120] sm:$0xff]
      %v2247 = vld [vmem:[%s2221 + $0x128] sm:$0xff]
      %v2248 = vld [vmem:[%s2221 + $0x138] sm:$0xff]
      %v2249 = vld [vmem:[%s2221 + $0x140] sm:$0xff]
      %v2250 = vld [vmem:[%s2221 + $0x150] sm:$0xff]
      %v2251 = vld [vmem:[%s2221 + $0x158] sm:$0xff]
      %v2252 = vld [vmem:[%s2221 + $0x168] sm:$0xff]
      %v2253 = vld [vmem:[%s2221 + $0x170] sm:$0xff]
      %v2254 = vpack.c.bf16 %v2223, %v2222
      %v2255 = vpack.c.bf16 %v2225, %v2224
      %v2256 = vpack.c.bf16 %v2227, %v2226
      %v2257 = vpack.c.bf16 %v2229, %v2228
      %v2258 = vpack.c.bf16 %v2231, %v2230
      %v2259 = vpack.c.bf16 %v2233, %v2232
      %v2260 = vpack.c.bf16 %v2235, %v2234
      %v2261 = vpack.c.bf16 %v2237, %v2236
      %v2262 = vpack.c.bf16 %v2239, %v2238
      %v2263 = vpack.c.bf16 %v2241, %v2240
      %v2264 = vpack.c.bf16 %v2243, %v2242
      %v2265 = vpack.c.bf16 %v2245, %v2244
      %v2266 = vpack.c.bf16 %v2247, %v2246
      %v2267 = vpack.c.bf16 %v2249, %v2248
      %v2268 = vpack.c.bf16 %v2251, %v2250
      %v2269 = vpack.c.bf16 %v2253, %v2252
      %s2270 = scalar_lea.vmem %s1, 192
      %v2271 = vld [vmem:[%s2270] sm:$0xf]
      %v2272 = vld [vmem:[%s2270 + $0x4] sm:$0xf]
      %v2273 = vld [vmem:[%s2270 + $0x8] sm:$0xf]
      %v2274 = vld [vmem:[%s2270 + $0xc] sm:$0xf]
      %v2275 = vld [vmem:[%s2270 + $0x10] sm:$0xf]
      %v2276 = vld [vmem:[%s2270 + $0x14] sm:$0xf]
      %v2277 = vld [vmem:[%s2270 + $0x18] sm:$0xf]
      %v2278 = vld [vmem:[%s2270 + $0x1c] sm:$0xf]
      %v2287 = vunpack.c.l.b16 %v2271
      %v2288 = vunpack.c.l.b16 %v2272
      %v2289 = vunpack.c.l.b16 %v2273
      %v2290 = vunpack.c.l.b16 %v2274
      %v2291 = vunpack.c.l.b16 %v2275
      %v2292 = vunpack.c.l.b16 %v2276
      %v2293 = vunpack.c.l.b16 %v2277
      %v2294 = vunpack.c.l.b16 %v2278
      %v2295 = vpack.c.b16 %v2288, %v2287
      %v2296 = vpack.c.b16 %v2290, %v2289
      %v2297 = vpack.c.b16 %v2292, %v2291
      %v2298 = vpack.c.b16 %v2294, %v2293
      %v2304 = vsel %vm368, %v2254, 0
      %v2307 = vsel %vm368, %v2255, 0
      %v2310 = vsel %vm368, %v2256, 0
      %v2313 = vsel %vm368, %v2257, 0
      %v2316 = vsel %vm368, %v2258, 0
      %v2319 = vsel %vm368, %v2259, 0
      %v2322 = vsel %vm368, %v2260, 0
      %v2325 = vsel %vm368, %v2261, 0
      %v2328 = vsel %vm368, %v2262, 0
      %v2331 = vsel %vm368, %v2263, 0
      %v2334 = vsel %vm368, %v2264, 0
      %v2337 = vsel %vm368, %v2265, 0
      %v2340 = vsel %vm368, %v2266, 0
      %v2343 = vsel %vm368, %v2267, 0
      %v2346 = vsel %vm368, %v2268, 0
      %v2349 = vsel %vm368, %v2269, 0
      %2351 = vmatprep.subr.bf16.mxu0 0
      %2352 = vmatpush1.bf16.msra.mxu0 %v2295
      %2353 = vmatprep.subr.bf16.mxu0 0
      %2354 = vmatpush1.bf16.msra.mxu0 %v2296
      %2355 = vmatprep.subr.bf16.mxu0 0
      %2356 = vmatpush1.bf16.msra.mxu0 %v2297
      %2357 = vmatprep.subr.bf16.mxu0 0
      %2358 = vmatpush1.bf16.msra.mxu0 %v2298
      %2359 = vmatprep.subr.bf16.mxu0 0
      %2360 = vmatpush1.bf16.msra.mxu0 0
      %2361 = vmatprep.subr.bf16.mxu0 0
      %2362 = vmatpush1.bf16.msra.mxu0 0
      %2363 = vmatprep.subr.bf16.mxu0 0
      %2364 = vmatpush1.bf16.msra.mxu0 0
      %2365 = vmatprep.subr.bf16.mxu0 0
      %2366 = vmatpush1.bf16.msra.mxu0 0
      %2367 = vmatprep.subr.bf16.mxu0 0
      %2368 = vmatpush1.bf16.msra.mxu0 0
      %2369 = vmatprep.subr.bf16.mxu0 0
      %2370 = vmatpush1.bf16.msra.mxu0 0
      %2371 = vmatprep.subr.bf16.mxu0 0
      %2372 = vmatpush1.bf16.msra.mxu0 0
      %2373 = vmatprep.subr.bf16.mxu0 0
      %2374 = vmatpush1.bf16.msra.mxu0 0
      %2375 = vmatprep.subr.bf16.mxu0 0
      %2376 = vmatpush1.bf16.msra.mxu0 0
      %2377 = vmatprep.subr.bf16.mxu0 0
      %2378 = vmatpush1.bf16.msra.mxu0 0
      %2379 = vmatprep.subr.bf16.mxu0 0
      %2380 = vmatpush1.bf16.msra.mxu0 0
      %2381 = vmatprep.subr.bf16.mxu0 0
      %2382 = vmatpush1.bf16.msra.mxu0 0
      %2383 = vmatprep.mubr.bf16.mxu0 0
      %2384 = vmatmul.mubr.bf16.gmra.mrb[0].mxu0 %v2304
      %v2385 = vpop.f32.mrb[0].mxu0
      %v2386 = vadd.f32 0.0, %v2385
      %v2387 = vpop.f32.mrb[0].mxu0
      %v2388 = vpop.f32.mrb[0].mxu0
      %v2389 = vadd.f32 0.0, %v2388
      %v2390 = vpop.f32.mrb[0].mxu0
      %2391 = vmatprep.mubr.bf16.mxu0 0
      %2392 = vmatmul.mubr.bf16.gmra.mrb[0].mxu0 %v2307
      %v2393 = vpop.f32.mrb[0].mxu0
      %v2394 = vadd.f32 0.0, %v2393
      %v2395 = vpop.f32.mrb[0].mxu0
      %v2396 = vpop.f32.mrb[0].mxu0
      %v2397 = vadd.f32 0.0, %v2396
      %v2398 = vpop.f32.mrb[0].mxu0
      %2399 = vmatprep.mubr.bf16.mxu0 0
      %2400 = vmatmul.mubr.bf16.gmra.mrb[0].mxu0 %v2310
      %v2401 = vpop.f32.mrb[0].mxu0
      %v2402 = vadd.f32 0.0, %v2401
      %v2403 = vpop.f32.mrb[0].mxu0
      %v2404 = vpop.f32.mrb[0].mxu0
      %v2405 = vadd.f32 0.0, %v2404
      %v2406 = vpop.f32.mrb[0].mxu0
      %2407 = vmatprep.mubr.bf16.mxu0 0
      %2408 = vmatmul.mubr.bf16.gmra.mrb[0].mxu0 %v2313
      %v2409 = vpop.f32.mrb[0].mxu0
      %v2410 = vadd.f32 0.0, %v2409
      %v2411 = vpop.f32.mrb[0].mxu0
      %v2412 = vpop.f32.mrb[0].mxu0
      %v2413 = vadd.f32 0.0, %v2412
      %v2414 = vpop.f32.mrb[0].mxu0
      %2415 = vmatprep.mubr.bf16.mxu0 0
      %2416 = vmatmul.mubr.bf16.gmra.mrb[0].mxu0 %v2316
      %v2417 = vpop.f32.mrb[0].mxu0
      %v2418 = vadd.f32 0.0, %v2417
      %v2419 = vpop.f32.mrb[0].mxu0
      %v2420 = vpop.f32.mrb[0].mxu0
      %v2421 = vadd.f32 0.0, %v2420
      %v2422 = vpop.f32.mrb[0].mxu0
      %2423 = vmatprep.mubr.bf16.mxu0 0
      %2424 = vmatmul.mubr.bf16.gmra.mrb[0].mxu0 %v2319
      %v2425 = vpop.f32.mrb[0].mxu0
      %v2426 = vadd.f32 0.0, %v2425
      %v2427 = vpop.f32.mrb[0].mxu0
      %v2428 = vpop.f32.mrb[0].mxu0
      %v2429 = vadd.f32 0.0, %v2428
      %v2430 = vpop.f32.mrb[0].mxu0
      %2431 = vmatprep.mubr.bf16.mxu0 0
      %2432 = vmatmul.mubr.bf16.gmra.mrb[0].mxu0 %v2322
      %v2433 = vpop.f32.mrb[0].mxu0
      %v2434 = vadd.f32 0.0, %v2433
      %v2435 = vpop.f32.mrb[0].mxu0
      %v2436 = vpop.f32.mrb[0].mxu0
      %v2437 = vadd.f32 0.0, %v2436
      %v2438 = vpop.f32.mrb[0].mxu0
      %2439 = vmatprep.mubr.bf16.mxu0 0
      %2440 = vmatmul.mubr.bf16.gmra.mrb[0].mxu0 %v2325
      %v2441 = vpop.f32.mrb[0].mxu0
      %v2442 = vadd.f32 0.0, %v2441
      %v2443 = vpop.f32.mrb[0].mxu0
      %v2444 = vpop.f32.mrb[0].mxu0
      %v2445 = vadd.f32 0.0, %v2444
      %v2446 = vpop.f32.mrb[0].mxu0
      %2447 = vmatprep.mubr.bf16.mxu0 0
      %2448 = vmatmul.mubr.bf16.gmra.mrb[0].mxu0 %v2328
      %v2449 = vpop.f32.mrb[0].mxu0
      %v2450 = vadd.f32 0.0, %v2449
      %v2451 = vpop.f32.mrb[0].mxu0
      %v2452 = vpop.f32.mrb[0].mxu0
      %v2453 = vadd.f32 0.0, %v2452
      %v2454 = vpop.f32.mrb[0].mxu0
      %2455 = vmatprep.mubr.bf16.mxu0 0
      %2456 = vmatmul.mubr.bf16.gmra.mrb[0].mxu0 %v2331
      %v2457 = vpop.f32.mrb[0].mxu0
      %v2458 = vadd.f32 0.0, %v2457
      %v2459 = vpop.f32.mrb[0].mxu0
      %v2460 = vpop.f32.mrb[0].mxu0
      %v2461 = vadd.f32 0.0, %v2460
      %v2462 = vpop.f32.mrb[0].mxu0
      %2463 = vmatprep.mubr.bf16.mxu0 0
      %2464 = vmatmul.mubr.bf16.gmra.mrb[0].mxu0 %v2334
      %v2465 = vpop.f32.mrb[0].mxu0
      %v2466 = vadd.f32 0.0, %v2465
      %v2467 = vpop.f32.mrb[0].mxu0
      %v2468 = vpop.f32.mrb[0].mxu0
      %v2469 = vadd.f32 0.0, %v2468
      %v2470 = vpop.f32.mrb[0].mxu0
      %2471 = vmatprep.mubr.bf16.mxu0 0
      %2472 = vmatmul.mubr.bf16.gmra.mrb[0].mxu0 %v2337
      %v2473 = vpop.f32.mrb[0].mxu0
      %v2474 = vadd.f32 0.0, %v2473
      %v2475 = vpop.f32.mrb[0].mxu0
      %v2476 = vpop.f32.mrb[0].mxu0
      %v2477 = vadd.f32 0.0, %v2476
      %v2478 = vpop.f32.mrb[0].mxu0
      %2479 = vmatprep.mubr.bf16.mxu0 0
      %2480 = vmatmul.mubr.bf16.gmra.mrb[0].mxu0 %v2340
      %v2481 = vpop.f32.mrb[0].mxu0
      %v2482 = vadd.f32 0.0, %v2481
      %v2483 = vpop.f32.mrb[0].mxu0
      %v2484 = vpop.f32.mrb[0].mxu0
      %v2485 = vadd.f32 0.0, %v2484
      %v2486 = vpop.f32.mrb[0].mxu0
      %2487 = vmatprep.mubr.bf16.mxu0 0
      %2488 = vmatmul.mubr.bf16.gmra.mrb[0].mxu0 %v2343
      %v2489 = vpop.f32.mrb[0].mxu0
      %v2490 = vadd.f32 0.0, %v2489
      %v2491 = vpop.f32.mrb[0].mxu0
      %v2492 = vpop.f32.mrb[0].mxu0
      %v2493 = vadd.f32 0.0, %v2492
      %v2494 = vpop.f32.mrb[0].mxu0
      %2495 = vmatprep.mubr.bf16.mxu0 0
      %2496 = vmatmul.mubr.bf16.gmra.mrb[0].mxu0 %v2346
      %v2497 = vpop.f32.mrb[0].mxu0
      %v2498 = vadd.f32 0.0, %v2497
      %v2499 = vpop.f32.mrb[0].mxu0
      %v2500 = vpop.f32.mrb[0].mxu0
      %v2501 = vadd.f32 0.0, %v2500
      %v2502 = vpop.f32.mrb[0].mxu0
      %2503 = vmatprep.mubr.bf16.mxu0 0
      %2504 = vmatmul.mubr.bf16.gmra.mrb[0].mxu0 %v2349
      %v2505 = vpop.f32.mrb[0].mxu0
      %v2506 = vadd.f32 0.0, %v2505
      %v2507 = vpop.f32.mrb[0].mxu0
      %v2508 = vpop.f32.mrb[0].mxu0
      %v2509 = vadd.f32 0.0, %v2508
      %v2510 = vpop.f32.mrb[0].mxu0
      %2511 = vdwg.mxu0
      %v2512 = vadd.f32 %v2189, %v2386
      %v2513 = vadd.f32 %v2190, %v2389
      %v2514 = vadd.f32 %v2191, %v2394
      %v2515 = vadd.f32 %v2192, %v2397
      %v2516 = vadd.f32 %v2193, %v2402
      %v2517 = vadd.f32 %v2194, %v2405
      %v2518 = vadd.f32 %v2195, %v2410
      %v2519 = vadd.f32 %v2196, %v2413
      %v2520 = vadd.f32 %v2197, %v2418
      %v2521 = vadd.f32 %v2198, %v2421
      %v2522 = vadd.f32 %v2199, %v2426
      %v2523 = vadd.f32 %v2200, %v2429
      %v2524 = vadd.f32 %v2201, %v2434
      %v2525 = vadd.f32 %v2202, %v2437
      %v2526 = vadd.f32 %v2203, %v2442
      %v2527 = vadd.f32 %v2204, %v2445
      %v2528 = vadd.f32 %v2205, %v2450
      %v2529 = vadd.f32 %v2206, %v2453
      %v2530 = vadd.f32 %v2207, %v2458
      %v2531 = vadd.f32 %v2208, %v2461
      %v2532 = vadd.f32 %v2209, %v2466
      %v2533 = vadd.f32 %v2210, %v2469
      %v2534 = vadd.f32 %v2211, %v2474
      %v2535 = vadd.f32 %v2212, %v2477
      %v2536 = vadd.f32 %v2213, %v2482
      %v2537 = vadd.f32 %v2214, %v2485
      %v2538 = vadd.f32 %v2215, %v2490
      %v2539 = vadd.f32 %v2216, %v2493
      %v2540 = vadd.f32 %v2217, %v2498
      %v2541 = vadd.f32 %v2218, %v2501
      %v2542 = vadd.f32 %v2219, %v2506
      %v2543 = vadd.f32 %v2220, %v2509
      %v2544 = vld [vmem:[%s2221 + $0x1] sm:$0xff]
      %v2545 = vld [vmem:[%s2221 + $0x9] sm:$0xff]
      %v2546 = vld [vmem:[%s2221 + $0x19] sm:$0xff]
      %v2547 = vld [vmem:[%s2221 + $0x21] sm:$0xff]
      %v2548 = vld [vmem:[%s2221 + $0x31] sm:$0xff]
      %v2549 = vld [vmem:[%s2221 + $0x39] sm:$0xff]
      %v2550 = vld [vmem:[%s2221 + $0x49] sm:$0xff]
      %v2551 = vld [vmem:[%s2221 + $0x51] sm:$0xff]
      %v2552 = vld [vmem:[%s2221 + $0x61] sm:$0xff]
      %v2553 = vld [vmem:[%s2221 + $0x69] sm:$0xff]
      %v2554 = vld [vmem:[%s2221 + $0x79] sm:$0xff]
      %v2555 = vld [vmem:[%s2221 + $0x81] sm:$0xff]
      %v2556 = vld [vmem:[%s2221 + $0x91] sm:$0xff]
      %v2557 = vld [vmem:[%s2221 + $0x99] sm:$0xff]
      %v2558 = vld [vmem:[%s2221 + $0xa9] sm:$0xff]
      %v2559 = vld [vmem:[%s2221 + $0xb1] sm:$0xff]
      %v2560 = vld [vmem:[%s2221 + $0xc1] sm:$0xff]
      %v2561 = vld [vmem:[%s2221 + $0xc9] sm:$0xff]
      %v2562 = vld [vmem:[%s2221 + $0xd9] sm:$0xff]
      %v2563 = vld [vmem:[%s2221 + $0xe1] sm:$0xff]
      %v2564 = vld [vmem:[%s2221 + $0xf1] sm:$0xff]
      %v2565 = vld [vmem:[%s2221 + $0xf9] sm:$0xff]
      %v2566 = vld [vmem:[%s2221 + $0x109] sm:$0xff]
      %v2567 = vld [vmem:[%s2221 + $0x111] sm:$0xff]
      %v2568 = vld [vmem:[%s2221 + $0x121] sm:$0xff]
      %v2569 = vld [vmem:[%s2221 + $0x129] sm:$0xff]
      %v2570 = vld [vmem:[%s2221 + $0x139] sm:$0xff]
      %v2571 = vld [vmem:[%s2221 + $0x141] sm:$0xff]
      %v2572 = vld [vmem:[%s2221 + $0x151] sm:$0xff]
      %v2573 = vld [vmem:[%s2221 + $0x159] sm:$0xff]
      %v2574 = vld [vmem:[%s2221 + $0x169] sm:$0xff]
      %v2575 = vld [vmem:[%s2221 + $0x171] sm:$0xff]
      %v2576 = vpack.c.bf16 %v2545, %v2544
      %v2577 = vpack.c.bf16 %v2547, %v2546
      %v2578 = vpack.c.bf16 %v2549, %v2548
      %v2579 = vpack.c.bf16 %v2551, %v2550
      %v2580 = vpack.c.bf16 %v2553, %v2552
      %v2581 = vpack.c.bf16 %v2555, %v2554
      %v2582 = vpack.c.bf16 %v2557, %v2556
      %v2583 = vpack.c.bf16 %v2559, %v2558
      %v2584 = vpack.c.bf16 %v2561, %v2560
      %v2585 = vpack.c.bf16 %v2563, %v2562
      %v2586 = vpack.c.bf16 %v2565, %v2564
      %v2587 = vpack.c.bf16 %v2567, %v2566
      %v2588 = vpack.c.bf16 %v2569, %v2568
      %v2589 = vpack.c.bf16 %v2571, %v2570
      %v2590 = vpack.c.bf16 %v2573, %v2572
      %v2591 = vpack.c.bf16 %v2575, %v2574
      %s2592 = scalar_lea.vmem %s1, 224
      %v2593 = vld [vmem:[%s2592] sm:$0xf]
      %v2594 = vld [vmem:[%s2592 + $0x4] sm:$0xf]
      %v2595 = vld [vmem:[%s2592 + $0x8] sm:$0xf]
      %v2596 = vld [vmem:[%s2592 + $0xc] sm:$0xf]
      %v2597 = vld [vmem:[%s2592 + $0x10] sm:$0xf]
      %v2598 = vld [vmem:[%s2592 + $0x14] sm:$0xf]
      %v2599 = vld [vmem:[%s2592 + $0x18] sm:$0xf]
      %v2600 = vld [vmem:[%s2592 + $0x1c] sm:$0xf]
      %v2609 = vunpack.c.l.b16 %v2593
      %v2610 = vunpack.c.l.b16 %v2594
      %v2611 = vunpack.c.l.b16 %v2595
      %v2612 = vunpack.c.l.b16 %v2596
      %v2613 = vunpack.c.l.b16 %v2597
      %v2614 = vunpack.c.l.b16 %v2598
      %v2615 = vunpack.c.l.b16 %v2599
      %v2616 = vunpack.c.l.b16 %v2600
      %v2617 = vpack.c.b16 %v2610, %v2609
      %v2618 = vpack.c.b16 %v2612, %v2611
      %v2619 = vpack.c.b16 %v2614, %v2613
      %v2620 = vpack.c.b16 %v2616, %v2615
      %v2626 = vsel %vm368, %v2576, 0
      %v2629 = vsel %vm368, %v2577, 0
      %v2632 = vsel %vm368, %v2578, 0
      %v2635 = vsel %vm368, %v2579, 0
      %v2638 = vsel %vm368, %v2580, 0
      %v2641 = vsel %vm368, %v2581, 0
      %v2644 = vsel %vm368, %v2582, 0
      %v2647 = vsel %vm368, %v2583, 0
      %v2650 = vsel %vm368, %v2584, 0
      %v2653 = vsel %vm368, %v2585, 0
      %v2656 = vsel %vm368, %v2586, 0
      %v2659 = vsel %vm368, %v2587, 0
      %v2662 = vsel %vm368, %v2588, 0
      %v2665 = vsel %vm368, %v2589, 0
      %v2668 = vsel %vm368, %v2590, 0
      %v2671 = vsel %vm368, %v2591, 0
      %2673 = vmatprep.subr.bf16.mxu0 0
      %2674 = vmatpush1.bf16.msra.mxu0 %v2617
      %2675 = vmatprep.subr.bf16.mxu0 0
      %2676 = vmatpush1.bf16.msra.mxu0 %v2618
      %2677 = vmatprep.subr.bf16.mxu0 0
      %2678 = vmatpush1.bf16.msra.mxu0 %v2619
      %2679 = vmatprep.subr.bf16.mxu0 0
      %2680 = vmatpush1.bf16.msra.mxu0 %v2620
      %2681 = vmatprep.subr.bf16.mxu0 0
      %2682 = vmatpush1.bf16.msra.mxu0 0
      %2683 = vmatprep.subr.bf16.mxu0 0
      %2684 = vmatpush1.bf16.msra.mxu0 0
      %2685 = vmatprep.subr.bf16.mxu0 0
      %2686 = vmatpush1.bf16.msra.mxu0 0
      %2687 = vmatprep.subr.bf16.mxu0 0
      %2688 = vmatpush1.bf16.msra.mxu0 0
      %2689 = vmatprep.subr.bf16.mxu0 0
      %2690 = vmatpush1.bf16.msra.mxu0 0
      %2691 = vmatprep.subr.bf16.mxu0 0
      %2692 = vmatpush1.bf16.msra.mxu0 0
      %2693 = vmatprep.subr.bf16.mxu0 0
      %2694 = vmatpush1.bf16.msra.mxu0 0
      %2695 = vmatprep.subr.bf16.mxu0 0
      %2696 = vmatpush1.bf16.msra.mxu0 0
      %2697 = vmatprep.subr.bf16.mxu0 0
      %2698 = vmatpush1.bf16.msra.mxu0 0
      %2699 = vmatprep.subr.bf16.mxu0 0
      %2700 = vmatpush1.bf16.msra.mxu0 0
      %2701 = vmatprep.subr.bf16.mxu0 0
      %2702 = vmatpush1.bf16.msra.mxu0 0
      %2703 = vmatprep.subr.bf16.mxu0 0
      %2704 = vmatpush1.bf16.msra.mxu0 0
      %2705 = vmatprep.mubr.bf16.mxu0 0
      %2706 = vmatmul.mubr.bf16.gmra.mrb[0].mxu0 %v2626
      %v2707 = vpop.f32.mrb[0].mxu0
      %v2708 = vadd.f32 0.0, %v2707
      %v2709 = vpop.f32.mrb[0].mxu0
      %v2710 = vpop.f32.mrb[0].mxu0
      %v2711 = vadd.f32 0.0, %v2710
      %v2712 = vpop.f32.mrb[0].mxu0
      %2713 = vmatprep.mubr.bf16.mxu0 0
      %2714 = vmatmul.mubr.bf16.gmra.mrb[0].mxu0 %v2629
      %v2715 = vpop.f32.mrb[0].mxu0
      %v2716 = vadd.f32 0.0, %v2715
      %v2717 = vpop.f32.mrb[0].mxu0
      %v2718 = vpop.f32.mrb[0].mxu0
      %v2719 = vadd.f32 0.0, %v2718
      %v2720 = vpop.f32.mrb[0].mxu0
      %2721 = vmatprep.mubr.bf16.mxu0 0
      %2722 = vmatmul.mubr.bf16.gmra.mrb[0].mxu0 %v2632
      %v2723 = vpop.f32.mrb[0].mxu0
      %v2724 = vadd.f32 0.0, %v2723
      %v2725 = vpop.f32.mrb[0].mxu0
      %v2726 = vpop.f32.mrb[0].mxu0
      %v2727 = vadd.f32 0.0, %v2726
      %v2728 = vpop.f32.mrb[0].mxu0
      %2729 = vmatprep.mubr.bf16.mxu0 0
      %2730 = vmatmul.mubr.bf16.gmra.mrb[0].mxu0 %v2635
      %v2731 = vpop.f32.mrb[0].mxu0
      %v2732 = vadd.f32 0.0, %v2731
      %v2733 = vpop.f32.mrb[0].mxu0
      %v2734 = vpop.f32.mrb[0].mxu0
      %v2735 = vadd.f32 0.0, %v2734
      %v2736 = vpop.f32.mrb[0].mxu0
      %2737 = vmatprep.mubr.bf16.mxu0 0
      %2738 = vmatmul.mubr.bf16.gmra.mrb[0].mxu0 %v2638
      %v2739 = vpop.f32.mrb[0].mxu0
      %v2740 = vadd.f32 0.0, %v2739
      %v2741 = vpop.f32.mrb[0].mxu0
      %v2742 = vpop.f32.mrb[0].mxu0
      %v2743 = vadd.f32 0.0, %v2742
      %v2744 = vpop.f32.mrb[0].mxu0
      %2745 = vmatprep.mubr.bf16.mxu0 0
      %2746 = vmatmul.mubr.bf16.gmra.mrb[0].mxu0 %v2641
      %v2747 = vpop.f32.mrb[0].mxu0
      %v2748 = vadd.f32 0.0, %v2747
      %v2749 = vpop.f32.mrb[0].mxu0
      %v2750 = vpop.f32.mrb[0].mxu0
      %v2751 = vadd.f32 0.0, %v2750
      %v2752 = vpop.f32.mrb[0].mxu0
      %2753 = vmatprep.mubr.bf16.mxu0 0
      %2754 = vmatmul.mubr.bf16.gmra.mrb[0].mxu0 %v2644
      %v2755 = vpop.f32.mrb[0].mxu0
      %v2756 = vadd.f32 0.0, %v2755
      %v2757 = vpop.f32.mrb[0].mxu0
      %v2758 = vpop.f32.mrb[0].mxu0
      %v2759 = vadd.f32 0.0, %v2758
      %v2760 = vpop.f32.mrb[0].mxu0
      %2761 = vmatprep.mubr.bf16.mxu0 0
      %2762 = vmatmul.mubr.bf16.gmra.mrb[0].mxu0 %v2647
      %v2763 = vpop.f32.mrb[0].mxu0
      %v2764 = vadd.f32 0.0, %v2763
      %v2765 = vpop.f32.mrb[0].mxu0
      %v2766 = vpop.f32.mrb[0].mxu0
      %v2767 = vadd.f32 0.0, %v2766
      %v2768 = vpop.f32.mrb[0].mxu0
      %2769 = vmatprep.mubr.bf16.mxu0 0
      %2770 = vmatmul.mubr.bf16.gmra.mrb[0].mxu0 %v2650
      %v2771 = vpop.f32.mrb[0].mxu0
      %v2772 = vadd.f32 0.0, %v2771
      %v2773 = vpop.f32.mrb[0].mxu0
      %v2774 = vpop.f32.mrb[0].mxu0
      %v2775 = vadd.f32 0.0, %v2774
      %v2776 = vpop.f32.mrb[0].mxu0
      %2777 = vmatprep.mubr.bf16.mxu0 0
      %2778 = vmatmul.mubr.bf16.gmra.mrb[0].mxu0 %v2653
      %v2779 = vpop.f32.mrb[0].mxu0
      %v2780 = vadd.f32 0.0, %v2779
      %v2781 = vpop.f32.mrb[0].mxu0
      %v2782 = vpop.f32.mrb[0].mxu0
      %v2783 = vadd.f32 0.0, %v2782
      %v2784 = vpop.f32.mrb[0].mxu0
      %2785 = vmatprep.mubr.bf16.mxu0 0
      %2786 = vmatmul.mubr.bf16.gmra.mrb[0].mxu0 %v2656
      %v2787 = vpop.f32.mrb[0].mxu0
      %v2788 = vadd.f32 0.0, %v2787
      %v2789 = vpop.f32.mrb[0].mxu0
      %v2790 = vpop.f32.mrb[0].mxu0
      %v2791 = vadd.f32 0.0, %v2790
      %v2792 = vpop.f32.mrb[0].mxu0
      %2793 = vmatprep.mubr.bf16.mxu0 0
      %2794 = vmatmul.mubr.bf16.gmra.mrb[0].mxu0 %v2659
      %v2795 = vpop.f32.mrb[0].mxu0
      %v2796 = vadd.f32 0.0, %v2795
      %v2797 = vpop.f32.mrb[0].mxu0
      %v2798 = vpop.f32.mrb[0].mxu0
      %v2799 = vadd.f32 0.0, %v2798
      %v2800 = vpop.f32.mrb[0].mxu0
      %2801 = vmatprep.mubr.bf16.mxu0 0
      %2802 = vmatmul.mubr.bf16.gmra.mrb[0].mxu0 %v2662
      %v2803 = vpop.f32.mrb[0].mxu0
      %v2804 = vadd.f32 0.0, %v2803
      %v2805 = vpop.f32.mrb[0].mxu0
      %v2806 = vpop.f32.mrb[0].mxu0
      %v2807 = vadd.f32 0.0, %v2806
      %v2808 = vpop.f32.mrb[0].mxu0
      %2809 = vmatprep.mubr.bf16.mxu0 0
      %2810 = vmatmul.mubr.bf16.gmra.mrb[0].mxu0 %v2665
      %v2811 = vpop.f32.mrb[0].mxu0
      %v2812 = vadd.f32 0.0, %v2811
      %v2813 = vpop.f32.mrb[0].mxu0
      %v2814 = vpop.f32.mrb[0].mxu0
      %v2815 = vadd.f32 0.0, %v2814
      %v2816 = vpop.f32.mrb[0].mxu0
      %2817 = vmatprep.mubr.bf16.mxu0 0
      %2818 = vmatmul.mubr.bf16.gmra.mrb[0].mxu0 %v2668
      %v2819 = vpop.f32.mrb[0].mxu0
      %v2820 = vadd.f32 0.0, %v2819
      %v2821 = vpop.f32.mrb[0].mxu0
      %v2822 = vpop.f32.mrb[0].mxu0
      %v2823 = vadd.f32 0.0, %v2822
      %v2824 = vpop.f32.mrb[0].mxu0
      %2825 = vmatprep.mubr.bf16.mxu0 0
      %2826 = vmatmul.mubr.bf16.gmra.mrb[0].mxu0 %v2671
      %v2827 = vpop.f32.mrb[0].mxu0
      %v2828 = vadd.f32 0.0, %v2827
      %v2829 = vpop.f32.mrb[0].mxu0
      %v2830 = vpop.f32.mrb[0].mxu0
      %v2831 = vadd.f32 0.0, %v2830
      %v2832 = vpop.f32.mrb[0].mxu0
      %2833 = vdwg.mxu0
      %v2834 = vadd.f32 %v2512, %v2708
      %v2835 = vadd.f32 %v2513, %v2711
      %v2836 = vadd.f32 %v2514, %v2716
      %v2837 = vadd.f32 %v2515, %v2719
      %v2838 = vadd.f32 %v2516, %v2724
      %v2839 = vadd.f32 %v2517, %v2727
      %v2840 = vadd.f32 %v2518, %v2732
      %v2841 = vadd.f32 %v2519, %v2735
      %v2842 = vadd.f32 %v2520, %v2740
      %v2843 = vadd.f32 %v2521, %v2743
      %v2844 = vadd.f32 %v2522, %v2748
      %v2845 = vadd.f32 %v2523, %v2751
      %v2846 = vadd.f32 %v2524, %v2756
      %v2847 = vadd.f32 %v2525, %v2759
      %v2848 = vadd.f32 %v2526, %v2764
      %v2849 = vadd.f32 %v2527, %v2767
      %v2850 = vadd.f32 %v2528, %v2772
      %v2851 = vadd.f32 %v2529, %v2775
      %v2852 = vadd.f32 %v2530, %v2780
      %v2853 = vadd.f32 %v2531, %v2783
      %v2854 = vadd.f32 %v2532, %v2788
      %v2855 = vadd.f32 %v2533, %v2791
      %v2856 = vadd.f32 %v2534, %v2796
      %v2857 = vadd.f32 %v2535, %v2799
      %v2858 = vadd.f32 %v2536, %v2804
      %v2859 = vadd.f32 %v2537, %v2807
      %v2860 = vadd.f32 %v2538, %v2812
      %v2861 = vadd.f32 %v2539, %v2815
      %v2862 = vadd.f32 %v2540, %v2820
      %v2863 = vadd.f32 %v2541, %v2823
      %v2864 = vadd.f32 %v2542, %v2828
      %v2865 = vadd.f32 %v2543, %v2831
      %v2866 = vld [vmem:[%s2221 + $0x2] sm:$0xff]
      %v2867 = vld [vmem:[%s2221 + $0xa] sm:$0xff]
      %v2868 = vld [vmem:[%s2221 + $0x1a] sm:$0xff]
      %v2869 = vld [vmem:[%s2221 + $0x22] sm:$0xff]
      %v2870 = vld [vmem:[%s2221 + $0x32] sm:$0xff]
      %v2871 = vld [vmem:[%s2221 + $0x3a] sm:$0xff]
      %v2872 = vld [vmem:[%s2221 + $0x4a] sm:$0xff]
      %v2873 = vld [vmem:[%s2221 + $0x52] sm:$0xff]
      %v2874 = vld [vmem:[%s2221 + $0x62] sm:$0xff]
      %v2875 = vld [vmem:[%s2221 + $0x6a] sm:$0xff]
      %v2876 = vld [vmem:[%s2221 + $0x7a] sm:$0xff]
      %v2877 = vld [vmem:[%s2221 + $0x82] sm:$0xff]
      %v2878 = vld [vmem:[%s2221 + $0x92] sm:$0xff]
      %v2879 = vld [vmem:[%s2221 + $0x9a] sm:$0xff]
      %v2880 = vld [vmem:[%s2221 + $0xaa] sm:$0xff]
      %v2881 = vld [vmem:[%s2221 + $0xb2] sm:$0xff]
      %v2882 = vld [vmem:[%s2221 + $0xc2] sm:$0xff]
      %v2883 = vld [vmem:[%s2221 + $0xca] sm:$0xff]
      %v2884 = vld [vmem:[%s2221 + $0xda] sm:$0xff]
      %v2885 = vld [vmem:[%s2221 + $0xe2] sm:$0xff]
      %v2886 = vld [vmem:[%s2221 + $0xf2] sm:$0xff]
      %v2887 = vld [vmem:[%s2221 + $0xfa] sm:$0xff]
      %v2888 = vld [vmem:[%s2221 + $0x10a] sm:$0xff]
      %v2889 = vld [vmem:[%s2221 + $0x112] sm:$0xff]
      %v2890 = vld [vmem:[%s2221 + $0x122] sm:$0xff]
      %v2891 = vld [vmem:[%s2221 + $0x12a] sm:$0xff]
      %v2892 = vld [vmem:[%s2221 + $0x13a] sm:$0xff]
      %v2893 = vld [vmem:[%s2221 + $0x142] sm:$0xff]
      %v2894 = vld [vmem:[%s2221 + $0x152] sm:$0xff]
      %v2895 = vld [vmem:[%s2221 + $0x15a] sm:$0xff]
      %v2896 = vld [vmem:[%s2221 + $0x16a] sm:$0xff]
      %v2897 = vld [vmem:[%s2221 + $0x172] sm:$0xff]
      %v2898 = vpack.c.bf16 %v2867, %v2866
      %v2899 = vpack.c.bf16 %v2869, %v2868
      %v2900 = vpack.c.bf16 %v2871, %v2870
      %v2901 = vpack.c.bf16 %v2873, %v2872
      %v2902 = vpack.c.bf16 %v2875, %v2874
      %v2903 = vpack.c.bf16 %v2877, %v2876
      %v2904 = vpack.c.bf16 %v2879, %v2878
      %v2905 = vpack.c.bf16 %v2881, %v2880
      %v2906 = vpack.c.bf16 %v2883, %v2882
      %v2907 = vpack.c.bf16 %v2885, %v2884
      %v2908 = vpack.c.bf16 %v2887, %v2886
      %v2909 = vpack.c.bf16 %v2889, %v2888
      %v2910 = vpack.c.bf16 %v2891, %v2890
      %v2911 = vpack.c.bf16 %v2893, %v2892
      %v2912 = vpack.c.bf16 %v2895, %v2894
      %v2913 = vpack.c.bf16 %v2897, %v2896
      %s2914 = scalar_lea.vmem %s1, 256
      %v2915 = vld [vmem:[%s2914] sm:$0xf]
      %v2916 = vld [vmem:[%s2914 + $0x4] sm:$0xf]
      %v2917 = vld [vmem:[%s2914 + $0x8] sm:$0xf]
      %v2918 = vld [vmem:[%s2914 + $0xc] sm:$0xf]
      %v2919 = vld [vmem:[%s2914 + $0x10] sm:$0xf]
      %v2920 = vld [vmem:[%s2914 + $0x14] sm:$0xf]
      %v2921 = vld [vmem:[%s2914 + $0x18] sm:$0xf]
      %v2922 = vld [vmem:[%s2914 + $0x1c] sm:$0xf]
      %v2931 = vunpack.c.l.b16 %v2915
      %v2932 = vunpack.c.l.b16 %v2916
      %v2933 = vunpack.c.l.b16 %v2917
      %v2934 = vunpack.c.l.b16 %v2918
      %v2935 = vunpack.c.l.b16 %v2919
      %v2936 = vunpack.c.l.b16 %v2920
      %v2937 = vunpack.c.l.b16 %v2921
      %v2938 = vunpack.c.l.b16 %v2922
      %v2939 = vpack.c.b16 %v2932, %v2931
      %v2940 = vpack.c.b16 %v2934, %v2933
      %v2941 = vpack.c.b16 %v2936, %v2935
      %v2942 = vpack.c.b16 %v2938, %v2937
      %v2948 = vsel %vm368, %v2898, 0
      %v2951 = vsel %vm368, %v2899, 0
      %v2954 = vsel %vm368, %v2900, 0
      %v2957 = vsel %vm368, %v2901, 0
      %v2960 = vsel %vm368, %v2902, 0
      %v2963 = vsel %vm368, %v2903, 0
      %v2966 = vsel %vm368, %v2904, 0
      %v2969 = vsel %vm368, %v2905, 0
      %v2972 = vsel %vm368, %v2906, 0
      %v2975 = vsel %vm368, %v2907, 0
      %v2978 = vsel %vm368, %v2908, 0
      %v2981 = vsel %vm368, %v2909, 0
      %v2984 = vsel %vm368, %v2910, 0
      %v2987 = vsel %vm368, %v2911, 0
      %v2990 = vsel %vm368, %v2912, 0
      %v2993 = vsel %vm368, %v2913, 0
      %2995 = vmatprep.subr.bf16.mxu0 0
      %2996 = vmatpush1.bf16.msra.mxu0 %v2939
      %2997 = vmatprep.subr.bf16.mxu0 0
      %2998 = vmatpush1.bf16.msra.mxu0 %v2940
      %2999 = vmatprep.subr.bf16.mxu0 0
      %3000 = vmatpush1.bf16.msra.mxu0 %v2941
      %3001 = vmatprep.subr.bf16.mxu0 0
      %3002 = vmatpush1.bf16.msra.mxu0 %v2942
      %3003 = vmatprep.subr.bf16.mxu0 0
      %3004 = vmatpush1.bf16.msra.mxu0 0
      %3005 = vmatprep.subr.bf16.mxu0 0
      %3006 = vmatpush1.bf16.msra.mxu0 0
      %3007 = vmatprep.subr.bf16.mxu0 0
      %3008 = vmatpush1.bf16.msra.mxu0 0
      %3009 = vmatprep.subr.bf16.mxu0 0
      %3010 = vmatpush1.bf16.msra.mxu0 0
      %3011 = vmatprep.subr.bf16.mxu0 0
      %3012 = vmatpush1.bf16.msra.mxu0 0
      %3013 = vmatprep.subr.bf16.mxu0 0
      %3014 = vmatpush1.bf16.msra.mxu0 0
      %3015 = vmatprep.subr.bf16.mxu0 0
      %3016 = vmatpush1.bf16.msra.mxu0 0
      %3017 = vmatprep.subr.bf16.mxu0 0
      %3018 = vmatpush1.bf16.msra.mxu0 0
      %3019 = vmatprep.subr.bf16.mxu0 0
      %3020 = vmatpush1.bf16.msra.mxu0 0
      %3021 = vmatprep.subr.bf16.mxu0 0
      %3022 = vmatpush1.bf16.msra.mxu0 0
      %3023 = vmatprep.subr.bf16.mxu0 0
      %3024 = vmatpush1.bf16.msra.mxu0 0
      %3025 = vmatprep.subr.bf16.mxu0 0
      %3026 = vmatpush1.bf16.msra.mxu0 0
      %3027 = vmatprep.mubr.bf16.mxu0 0
      %3028 = vmatmul.mubr.bf16.gmra.mrb[0].mxu0 %v2948
      %v3029 = vpop.f32.mrb[0].mxu0
      %v3030 = vadd.f32 0.0, %v3029
      %v3031 = vpop.f32.mrb[0].mxu0
      %v3032 = vpop.f32.mrb[0].mxu0
      %v3033 = vadd.f32 0.0, %v3032
      %v3034 = vpop.f32.mrb[0].mxu0
      %3035 = vmatprep.mubr.bf16.mxu0 0
      %3036 = vmatmul.mubr.bf16.gmra.mrb[0].mxu0 %v2951
      %v3037 = vpop.f32.mrb[0].mxu0
      %v3038 = vadd.f32 0.0, %v3037
      %v3039 = vpop.f32.mrb[0].mxu0
      %v3040 = vpop.f32.mrb[0].mxu0
      %v3041 = vadd.f32 0.0, %v3040
      %v3042 = vpop.f32.mrb[0].mxu0
      %3043 = vmatprep.mubr.bf16.mxu0 0
      %3044 = vmatmul.mubr.bf16.gmra.mrb[0].mxu0 %v2954
      %v3045 = vpop.f32.mrb[0].mxu0
      %v3046 = vadd.f32 0.0, %v3045
      %v3047 = vpop.f32.mrb[0].mxu0
      %v3048 = vpop.f32.mrb[0].mxu0
      %v3049 = vadd.f32 0.0, %v3048
      %v3050 = vpop.f32.mrb[0].mxu0
      %3051 = vmatprep.mubr.bf16.mxu0 0
      %3052 = vmatmul.mubr.bf16.gmra.mrb[0].mxu0 %v2957
      %v3053 = vpop.f32.mrb[0].mxu0
      %v3054 = vadd.f32 0.0, %v3053
      %v3055 = vpop.f32.mrb[0].mxu0
      %v3056 = vpop.f32.mrb[0].mxu0
      %v3057 = vadd.f32 0.0, %v3056
      %v3058 = vpop.f32.mrb[0].mxu0
      %3059 = vmatprep.mubr.bf16.mxu0 0
      %3060 = vmatmul.mubr.bf16.gmra.mrb[0].mxu0 %v2960
      %v3061 = vpop.f32.mrb[0].mxu0
      %v3062 = vadd.f32 0.0, %v3061
      %v3063 = vpop.f32.mrb[0].mxu0
      %v3064 = vpop.f32.mrb[0].mxu0
      %v3065 = vadd.f32 0.0, %v3064
      %v3066 = vpop.f32.mrb[0].mxu0
      %3067 = vmatprep.mubr.bf16.mxu0 0
      %3068 = vmatmul.mubr.bf16.gmra.mrb[0].mxu0 %v2963
      %v3069 = vpop.f32.mrb[0].mxu0
      %v3070 = vadd.f32 0.0, %v3069
      %v3071 = vpop.f32.mrb[0].mxu0
      %v3072 = vpop.f32.mrb[0].mxu0
      %v3073 = vadd.f32 0.0, %v3072
      %v3074 = vpop.f32.mrb[0].mxu0
      %3075 = vmatprep.mubr.bf16.mxu0 0
      %3076 = vmatmul.mubr.bf16.gmra.mrb[0].mxu0 %v2966
      %v3077 = vpop.f32.mrb[0].mxu0
      %v3078 = vadd.f32 0.0, %v3077
      %v3079 = vpop.f32.mrb[0].mxu0
      %v3080 = vpop.f32.mrb[0].mxu0
      %v3081 = vadd.f32 0.0, %v3080
      %v3082 = vpop.f32.mrb[0].mxu0
      %3083 = vmatprep.mubr.bf16.mxu0 0
      %3084 = vmatmul.mubr.bf16.gmra.mrb[0].mxu0 %v2969
      %v3085 = vpop.f32.mrb[0].mxu0
      %v3086 = vadd.f32 0.0, %v3085
      %v3087 = vpop.f32.mrb[0].mxu0
      %v3088 = vpop.f32.mrb[0].mxu0
      %v3089 = vadd.f32 0.0, %v3088
      %v3090 = vpop.f32.mrb[0].mxu0
      %3091 = vmatprep.mubr.bf16.mxu0 0
      %3092 = vmatmul.mubr.bf16.gmra.mrb[0].mxu0 %v2972
      %v3093 = vpop.f32.mrb[0].mxu0
      %v3094 = vadd.f32 0.0, %v3093
      %v3095 = vpop.f32.mrb[0].mxu0
      %v3096 = vpop.f32.mrb[0].mxu0
      %v3097 = vadd.f32 0.0, %v3096
      %v3098 = vpop.f32.mrb[0].mxu0
      %3099 = vmatprep.mubr.bf16.mxu0 0
      %3100 = vmatmul.mubr.bf16.gmra.mrb[0].mxu0 %v2975
      %v3101 = vpop.f32.mrb[0].mxu0
      %v3102 = vadd.f32 0.0, %v3101
      %v3103 = vpop.f32.mrb[0].mxu0
      %v3104 = vpop.f32.mrb[0].mxu0
      %v3105 = vadd.f32 0.0, %v3104
      %v3106 = vpop.f32.mrb[0].mxu0
      %3107 = vmatprep.mubr.bf16.mxu0 0
      %3108 = vmatmul.mubr.bf16.gmra.mrb[0].mxu0 %v2978
      %v3109 = vpop.f32.mrb[0].mxu0
      %v3110 = vadd.f32 0.0, %v3109
      %v3111 = vpop.f32.mrb[0].mxu0
      %v3112 = vpop.f32.mrb[0].mxu0
      %v3113 = vadd.f32 0.0, %v3112
      %v3114 = vpop.f32.mrb[0].mxu0
      %3115 = vmatprep.mubr.bf16.mxu0 0
      %3116 = vmatmul.mubr.bf16.gmra.mrb[0].mxu0 %v2981
      %v3117 = vpop.f32.mrb[0].mxu0
      %v3118 = vadd.f32 0.0, %v3117
      %v3119 = vpop.f32.mrb[0].mxu0
      %v3120 = vpop.f32.mrb[0].mxu0
      %v3121 = vadd.f32 0.0, %v3120
      %v3122 = vpop.f32.mrb[0].mxu0
      %3123 = vmatprep.mubr.bf16.mxu0 0
      %3124 = vmatmul.mubr.bf16.gmra.mrb[0].mxu0 %v2984
      %v3125 = vpop.f32.mrb[0].mxu0
      %v3126 = vadd.f32 0.0, %v3125
      %v3127 = vpop.f32.mrb[0].mxu0
      %v3128 = vpop.f32.mrb[0].mxu0
      %v3129 = vadd.f32 0.0, %v3128
      %v3130 = vpop.f32.mrb[0].mxu0
      %3131 = vmatprep.mubr.bf16.mxu0 0
      %3132 = vmatmul.mubr.bf16.gmra.mrb[0].mxu0 %v2987
      %v3133 = vpop.f32.mrb[0].mxu0
      %v3134 = vadd.f32 0.0, %v3133
      %v3135 = vpop.f32.mrb[0].mxu0
      %v3136 = vpop.f32.mrb[0].mxu0
      %v3137 = vadd.f32 0.0, %v3136
      %v3138 = vpop.f32.mrb[0].mxu0
      %3139 = vmatprep.mubr.bf16.mxu0 0
      %3140 = vmatmul.mubr.bf16.gmra.mrb[0].mxu0 %v2990
      %v3141 = vpop.f32.mrb[0].mxu0
      %v3142 = vadd.f32 0.0, %v3141
      %v3143 = vpop.f32.mrb[0].mxu0
      %v3144 = vpop.f32.mrb[0].mxu0
      %v3145 = vadd.f32 0.0, %v3144
      %v3146 = vpop.f32.mrb[0].mxu0
      %3147 = vmatprep.mubr.bf16.mxu0 0
      %3148 = vmatmul.mubr.bf16.gmra.mrb[0].mxu0 %v2993
      %v3149 = vpop.f32.mrb[0].mxu0
      %v3150 = vadd.f32 0.0, %v3149
      %v3151 = vpop.f32.mrb[0].mxu0
      %v3152 = vpop.f32.mrb[0].mxu0
      %v3153 = vadd.f32 0.0, %v3152
      %v3154 = vpop.f32.mrb[0].mxu0
      %3155 = vdwg.mxu0
      %v3156 = vadd.f32 %v2834, %v3030
      %v3157 = vadd.f32 %v2835, %v3033
      %v3158 = vadd.f32 %v2836, %v3038
      %v3159 = vadd.f32 %v2837, %v3041
      %v3160 = vadd.f32 %v2838, %v3046
      %v3161 = vadd.f32 %v2839, %v3049
      %v3162 = vadd.f32 %v2840, %v3054
      %v3163 = vadd.f32 %v2841, %v3057
      %v3164 = vadd.f32 %v2842, %v3062
      %v3165 = vadd.f32 %v2843, %v3065
      %v3166 = vadd.f32 %v2844, %v3070
      %v3167 = vadd.f32 %v2845, %v3073
      %v3168 = vadd.f32 %v2846, %v3078
      %v3169 = vadd.f32 %v2847, %v3081
      %v3170 = vadd.f32 %v2848, %v3086
      %v3171 = vadd.f32 %v2849, %v3089
      %v3172 = vadd.f32 %v2850, %v3094
      %v3173 = vadd.f32 %v2851, %v3097
      %v3174 = vadd.f32 %v2852, %v3102
      %v3175 = vadd.f32 %v2853, %v3105
      %v3176 = vadd.f32 %v2854, %v3110
      %v3177 = vadd.f32 %v2855, %v3113
      %v3178 = vadd.f32 %v2856, %v3118
      %v3179 = vadd.f32 %v2857, %v3121
      %v3180 = vadd.f32 %v2858, %v3126
      %v3181 = vadd.f32 %v2859, %v3129
      %v3182 = vadd.f32 %v2860, %v3134
      %v3183 = vadd.f32 %v2861, %v3137
      %v3184 = vadd.f32 %v2862, %v3142
      %v3185 = vadd.f32 %v2863, %v3145
      %v3186 = vadd.f32 %v2864, %v3150
      %v3187 = vadd.f32 %v2865, %v3153
      %v3188 = vmax.f32 %v3156, 0.0
      %v3189 = vmax.f32 %v3157, 0.0
      %v3190 = vmax.f32 %v3158, 0.0
      %v3191 = vmax.f32 %v3159, 0.0
      %v3192 = vmax.f32 %v3160, 0.0
      %v3193 = vmax.f32 %v3161, 0.0
      %v3194 = vmax.f32 %v3162, 0.0
      %v3195 = vmax.f32 %v3163, 0.0
      %v3196 = vmax.f32 %v3164, 0.0
      %v3197 = vmax.f32 %v3165, 0.0
      %v3198 = vmax.f32 %v3166, 0.0
      %v3199 = vmax.f32 %v3167, 0.0
      %v3200 = vmax.f32 %v3168, 0.0
      %v3201 = vmax.f32 %v3169, 0.0
      %v3202 = vmax.f32 %v3170, 0.0
      %v3203 = vmax.f32 %v3171, 0.0
      %v3204 = vmax.f32 %v3172, 0.0
      %v3205 = vmax.f32 %v3173, 0.0
      %v3206 = vmax.f32 %v3174, 0.0
      %v3207 = vmax.f32 %v3175, 0.0
      %v3208 = vmax.f32 %v3176, 0.0
      %v3209 = vmax.f32 %v3177, 0.0
      %v3210 = vmax.f32 %v3178, 0.0
      %v3211 = vmax.f32 %v3179, 0.0
      %v3212 = vmax.f32 %v3180, 0.0
      %v3213 = vmax.f32 %v3181, 0.0
      %v3214 = vmax.f32 %v3182, 0.0
      %v3215 = vmax.f32 %v3183, 0.0
      %v3216 = vmax.f32 %v3184, 0.0
      %v3217 = vmax.f32 %v3185, 0.0
      %v3218 = vmax.f32 %v3186, 0.0
      %v3219 = vmax.f32 %v3187, 0.0
      %v3220 = vpack.c.bf16 %v3189, %v3188
      %v3221 = vpack.c.bf16 %v3191, %v3190
      %v3222 = vpack.c.bf16 %v3193, %v3192
      %v3223 = vpack.c.bf16 %v3195, %v3194
      %v3224 = vpack.c.bf16 %v3197, %v3196
      %v3225 = vpack.c.bf16 %v3199, %v3198
      %v3226 = vpack.c.bf16 %v3201, %v3200
      %v3227 = vpack.c.bf16 %v3203, %v3202
      %v3228 = vpack.c.bf16 %v3205, %v3204
      %v3229 = vpack.c.bf16 %v3207, %v3206
      %v3230 = vpack.c.bf16 %v3209, %v3208
      %v3231 = vpack.c.bf16 %v3211, %v3210
      %v3232 = vpack.c.bf16 %v3213, %v3212
      %v3233 = vpack.c.bf16 %v3215, %v3214
      %v3234 = vpack.c.bf16 %v3217, %v3216
      %v3235 = vpack.c.bf16 %v3219, %v3218
      %3236 = vst.msk [vmem:[#allocation2] sm:$0xff] %vm368, 0
      %3237 = vst.msk [vmem:[#allocation2 + $0x8] sm:$0xff] %vm368, 0
      %3238 = vst.msk [vmem:[#allocation2 + $0x10] sm:$0xff] %vm368, 0
      %3239 = vst.msk [vmem:[#allocation2 + $0x18] sm:$0xff] %vm368, 0
      %3240 = vst.msk [vmem:[#allocation2 + $0x20] sm:$0xff] %vm368, 0
      %3241 = vst.msk [vmem:[#allocation2 + $0x28] sm:$0xff] %vm368, 0
      %3242 = vst.msk [vmem:[#allocation2 + $0x30] sm:$0xff] %vm368, 0
      %3243 = vst.msk [vmem:[#allocation2 + $0x38] sm:$0xff] %vm368, 0
      %3244 = vst.msk [vmem:[#allocation2 + $0x40] sm:$0xff] %vm368, 0
      %3245 = vst.msk [vmem:[#allocation2 + $0x48] sm:$0xff] %vm368, 0
      %3246 = vst.msk [vmem:[#allocation2 + $0x50] sm:$0xff] %vm368, 0
      %3247 = vst.msk [vmem:[#allocation2 + $0x58] sm:$0xff] %vm368, 0
      %3248 = vst.msk [vmem:[#allocation2 + $0x60] sm:$0xff] %vm368, 0
      %3249 = vst.msk [vmem:[#allocation2 + $0x68] sm:$0xff] %vm368, 0
      %3250 = vst.msk [vmem:[#allocation2 + $0x70] sm:$0xff] %vm368, 0
      %3251 = vst.msk [vmem:[#allocation2 + $0x78] sm:$0xff] %vm368, 0
      %3252 = vst.msk [vmem:[#allocation2 + $0x80] sm:$0xff] %vm368, 0
      %3253 = vst.msk [vmem:[#allocation2 + $0x88] sm:$0xff] %vm368, 0
      %3254 = vst.msk [vmem:[#allocation2 + $0x90] sm:$0xff] %vm368, 0
      %3255 = vst.msk [vmem:[#allocation2 + $0x98] sm:$0xff] %vm368, 0
      %3256 = vst.msk [vmem:[#allocation2 + $0xa0] sm:$0xff] %vm368, 0
      %3257 = vst.msk [vmem:[#allocation2 + $0xa8] sm:$0xff] %vm368, 0
      %3258 = vst.msk [vmem:[#allocation2 + $0xb0] sm:$0xff] %vm368, 0
      %3259 = vst.msk [vmem:[#allocation2 + $0xb8] sm:$0xff] %vm368, 0
      %3260 = vst.msk [vmem:[#allocation2 + $0xc0] sm:$0xff] %vm368, 0
      %3261 = vst.msk [vmem:[#allocation2 + $0xc8] sm:$0xff] %vm368, 0
      %3262 = vst.msk [vmem:[#allocation2 + $0xd0] sm:$0xff] %vm368, 0
      %3263 = vst.msk [vmem:[#allocation2 + $0xd8] sm:$0xff] %vm368, 0
      %3264 = vst.msk [vmem:[#allocation2 + $0xe0] sm:$0xff] %vm368, 0
      %3265 = vst.msk [vmem:[#allocation2 + $0xe8] sm:$0xff] %vm368, 0
      %3266 = vst.msk [vmem:[#allocation2 + $0xf0] sm:$0xff] %vm368, 0
      %3267 = vst.msk [vmem:[#allocation2 + $0xf8] sm:$0xff] %vm368, 0
      %3268 = vst.msk [vmem:[#allocation2 + $0x100] sm:$0xff] %vm368, 0
      %3269 = vst.msk [vmem:[#allocation2 + $0x108] sm:$0xff] %vm368, 0
      %3270 = vst.msk [vmem:[#allocation2 + $0x110] sm:$0xff] %vm368, 0
      %3271 = vst.msk [vmem:[#allocation2 + $0x118] sm:$0xff] %vm368, 0
      %v3288 = vrot.slane %v3220, 4
      %v3289 = vrot.slane %v3221, 4
      %v3290 = vrot.slane %v3222, 4
      %v3291 = vrot.slane %v3223, 4
      %v3292 = vrot.slane %v3224, 4
      %v3293 = vrot.slane %v3225, 4
      %v3294 = vrot.slane %v3226, 4
      %v3295 = vrot.slane %v3227, 4
      %v3296 = vrot.slane %v3228, 4
      %v3297 = vrot.slane %v3229, 4
      %v3298 = vrot.slane %v3230, 4
      %v3299 = vrot.slane %v3231, 4
      %v3300 = vrot.slane %v3232, 4
      %v3301 = vrot.slane %v3233, 4
      %v3302 = vrot.slane %v3234, 4
      %v3303 = vrot.slane %v3235, 4
      %s3320 = scalar_lea.vmem [#allocation2], 16
      %vm3321 = vcmask 523268
      %3322 = vst.msk [vmem:[%s3320] sm:$0xf0] %vm3321, %v3288
      %vm3323 = vcmask 519168
      %3324 = vst.msk [vmem:[%s3320 + $0x8] sm:$0xf] %vm3323, %v3288
      %3325 = vst.msk [vmem:[%s3320 + $0x10] sm:$0xf0] %vm3321, %v3289
      %3326 = vst.msk [vmem:[%s3320 + $0x18] sm:$0xf] %vm3323, %v3289
      %3327 = vst.msk [vmem:[%s3320 + $0x20] sm:$0xf0] %vm3321, %v3290
      %3328 = vst.msk [vmem:[%s3320 + $0x28] sm:$0xf] %vm3323, %v3290
      %3329 = vst.msk [vmem:[%s3320 + $0x30] sm:$0xf0] %vm3321, %v3291
      %3330 = vst.msk [vmem:[%s3320 + $0x38] sm:$0xf] %vm3323, %v3291
      %3331 = vst.msk [vmem:[%s3320 + $0x40] sm:$0xf0] %vm3321, %v3292
      %3332 = vst.msk [vmem:[%s3320 + $0x48] sm:$0xf] %vm3323, %v3292
      %3333 = vst.msk [vmem:[%s3320 + $0x50] sm:$0xf0] %vm3321, %v3293
      %3334 = vst.msk [vmem:[%s3320 + $0x58] sm:$0xf] %vm3323, %v3293
      %3335 = vst.msk [vmem:[%s3320 + $0x60] sm:$0xf0] %vm3321, %v3294
      %3336 = vst.msk [vmem:[%s3320 + $0x68] sm:$0xf] %vm3323, %v3294
      %3337 = vst.msk [vmem:[%s3320 + $0x70] sm:$0xf0] %vm3321, %v3295
      %3338 = vst.msk [vmem:[%s3320 + $0x78] sm:$0xf] %vm3323, %v3295
      %3339 = vst.msk [vmem:[%s3320 + $0x80] sm:$0xf0] %vm3321, %v3296
      %3340 = vst.msk [vmem:[%s3320 + $0x88] sm:$0xf] %vm3323, %v3296
      %3341 = vst.msk [vmem:[%s3320 + $0x90] sm:$0xf0] %vm3321, %v3297
      %3342 = vst.msk [vmem:[%s3320 + $0x98] sm:$0xf] %vm3323, %v3297
      %3343 = vst.msk [vmem:[%s3320 + $0xa0] sm:$0xf0] %vm3321, %v3298
      %3344 = vst.msk [vmem:[%s3320 + $0xa8] sm:$0xf] %vm3323, %v3298
      %3345 = vst.msk [vmem:[%s3320 + $0xb0] sm:$0xf0] %vm3321, %v3299
      %3346 = vst.msk [vmem:[%s3320 + $0xb8] sm:$0xf] %vm3323, %v3299
      %3347 = vst.msk [vmem:[%s3320 + $0xc0] sm:$0xf0] %vm3321, %v3300
      %3348 = vst.msk [vmem:[%s3320 + $0xc8] sm:$0xf] %vm3323, %v3300
      %3349 = vst.msk [vmem:[%s3320 + $0xd0] sm:$0xf0] %vm3321, %v3301
      %3350 = vst.msk [vmem:[%s3320 + $0xd8] sm:$0xf] %vm3323, %v3301
      %3351 = vst.msk [vmem:[%s3320 + $0xe0] sm:$0xf0] %vm3321, %v3302
      %3352 = vst.msk [vmem:[%s3320 + $0xe8] sm:$0xf] %vm3323, %v3302
      %3353 = vst.msk [vmem:[%s3320 + $0xf0] sm:$0xf0] %vm3321, %v3303
      %3354 = vst.msk [vmem:[%s3320 + $0xf8] sm:$0xf] %vm3323, %v3303
      %v3355 = vld [vmem:[%s4] sm:$0x1]
      %v3357 = vlaneseq
      %v3358 = vshrl.u32 %v3357, 7
      %v3359 = vsub.s32 0, %v3358
      %v3360 = vrot.slane %v3355, %v3359
      %v3362 = vadd.f32 %v3360, 0.0
      %v3363 = vld [vmem:[#allocation2] sm:$0xf8]
      %v3364 = vld [vmem:[#allocation2 + $0x8] sm:$0xf]
      %v3365 = vld [vmem:[#allocation2 + $0x10] sm:$0xf8]
      %v3366 = vld [vmem:[#allocation2 + $0x18] sm:$0xf]
      %v3367 = vld [vmem:[#allocation2 + $0x20] sm:$0xf8]
      %v3368 = vld [vmem:[#allocation2 + $0x28] sm:$0xf]
      %v3369 = vld [vmem:[#allocation2 + $0x30] sm:$0xf8]
      %v3370 = vld [vmem:[#allocation2 + $0x38] sm:$0xf]
      %v3371 = vld [vmem:[#allocation2 + $0x40] sm:$0xf8]
      %v3372 = vld [vmem:[#allocation2 + $0x48] sm:$0xf]
      %v3373 = vld [vmem:[#allocation2 + $0x50] sm:$0xf8]
      %v3374 = vld [vmem:[#allocation2 + $0x58] sm:$0xf]
      %v3375 = vld [vmem:[#allocation2 + $0x60] sm:$0xf8]
      %v3376 = vld [vmem:[#allocation2 + $0x68] sm:$0xf]
      %v3377 = vld [vmem:[#allocation2 + $0x70] sm:$0xf8]
      %v3378 = vld [vmem:[#allocation2 + $0x78] sm:$0xf]
      %v3379 = vld [vmem:[#allocation2 + $0x80] sm:$0xf8]
      %v3380 = vld [vmem:[#allocation2 + $0x88] sm:$0xf]
      %v3381 = vld [vmem:[#allocation2 + $0x90] sm:$0xf8]
      %v3382 = vld [vmem:[#allocation2 + $0x98] sm:$0xf]
      %v3383 = vld [vmem:[#allocation2 + $0xa0] sm:$0xf8]
      %v3384 = vld [vmem:[#allocation2 + $0xa8] sm:$0xf]
      %v3385 = vld [vmem:[#allocation2 + $0xb0] sm:$0xf8]
      %v3386 = vld [vmem:[#allocation2 + $0xb8] sm:$0xf]
      %v3387 = vld [vmem:[#allocation2 + $0xc0] sm:$0xf8]
      %v3388 = vld [vmem:[#allocation2 + $0xc8] sm:$0xf]
      %v3389 = vld [vmem:[#allocation2 + $0xd0] sm:$0xf8]
      %v3390 = vld [vmem:[#allocation2 + $0xd8] sm:$0xf]
      %v3391 = vld [vmem:[#allocation2 + $0xe0] sm:$0xf8]
      %v3392 = vld [vmem:[#allocation2 + $0xe8] sm:$0xf]
      %v3393 = vld [vmem:[#allocation2 + $0xf0] sm:$0xf8]
      %v3394 = vld [vmem:[#allocation2 + $0xf8] sm:$0xf]
      %vm3395 = vsmask.f32 4352
      %v3397 = vshrl.u32 %v3363, 16
      %v3399 = vrot.slane %v3397, 3
      %v3400 = vshll.u32 %v3363, 16
      %v3402 = vrot.slane %v3400, 4
      %v3403 = vor.u32 %v3399, %v3402
      %v3405 = vshrl.u32 %v3364, 16
      %v3407 = vrot.slane %v3405, 3
      %v3408 = vshll.u32 %v3364, 16
      %v3410 = vrot.slane %v3408, 4
      %v3411 = vor.u32 %v3407, %v3410
      %v3412 = vsel %vm3395, %v3403, %v3411
      %v3414 = vshrl.u32 %v3365, 16
      %v3416 = vrot.slane %v3414, 3
      %v3417 = vshll.u32 %v3365, 16
      %v3419 = vrot.slane %v3417, 4
      %v3420 = vor.u32 %v3416, %v3419
      %v3422 = vshrl.u32 %v3366, 16
      %v3424 = vrot.slane %v3422, 3
      %v3425 = vshll.u32 %v3366, 16
      %v3427 = vrot.slane %v3425, 4
      %v3428 = vor.u32 %v3424, %v3427
      %v3429 = vsel %vm3395, %v3420, %v3428
      %v3431 = vshrl.u32 %v3367, 16
      %v3433 = vrot.slane %v3431, 3
      %v3434 = vshll.u32 %v3367, 16
      %v3436 = vrot.slane %v3434, 4
      %v3437 = vor.u32 %v3433, %v3436
      %v3439 = vshrl.u32 %v3368, 16
      %v3441 = vrot.slane %v3439, 3
      %v3442 = vshll.u32 %v3368, 16
      %v3444 = vrot.slane %v3442, 4
      %v3445 = vor.u32 %v3441, %v3444
      %v3446 = vsel %vm3395, %v3437, %v3445
      %v3448 = vshrl.u32 %v3369, 16
      %v3450 = vrot.slane %v3448, 3
      %v3451 = vshll.u32 %v3369, 16
      %v3453 = vrot.slane %v3451, 4
      %v3454 = vor.u32 %v3450, %v3453
      %v3456 = vshrl.u32 %v3370, 16
      %v3458 = vrot.slane %v3456, 3
      %v3459 = vshll.u32 %v3370, 16
      %v3461 = vrot.slane %v3459, 4
      %v3462 = vor.u32 %v3458, %v3461
      %v3463 = vsel %vm3395, %v3454, %v3462
      %v3465 = vshrl.u32 %v3371, 16
      %v3467 = vrot.slane %v3465, 3
      %v3468 = vshll.u32 %v3371, 16
      %v3470 = vrot.slane %v3468, 4
      %v3471 = vor.u32 %v3467, %v3470
      %v3473 = vshrl.u32 %v3372, 16
      %v3475 = vrot.slane %v3473, 3
      %v3476 = vshll.u32 %v3372, 16
      %v3478 = vrot.slane %v3476, 4
      %v3479 = vor.u32 %v3475, %v3478
      %v3480 = vsel %vm3395, %v3471, %v3479
      %v3482 = vshrl.u32 %v3373, 16
      %v3484 = vrot.slane %v3482, 3
      %v3485 = vshll.u32 %v3373, 16
      %v3487 = vrot.slane %v3485, 4
      %v3488 = vor.u32 %v3484, %v3487
      %v3490 = vshrl.u32 %v3374, 16
      %v3492 = vrot.slane %v3490, 3
      %v3493 = vshll.u32 %v3374, 16
      %v3495 = vrot.slane %v3493, 4
      %v3496 = vor.u32 %v3492, %v3495
      %v3497 = vsel %vm3395, %v3488, %v3496
      %v3499 = vshrl.u32 %v3375, 16
      %v3501 = vrot.slane %v3499, 3
      %v3502 = vshll.u32 %v3375, 16
      %v3504 = vrot.slane %v3502, 4
      %v3505 = vor.u32 %v3501, %v3504
      %v3507 = vshrl.u32 %v3376, 16
      %v3509 = vrot.slane %v3507, 3
      %v3510 = vshll.u32 %v3376, 16
      %v3512 = vrot.slane %v3510, 4
      %v3513 = vor.u32 %v3509, %v3512
      %v3514 = vsel %vm3395, %v3505, %v3513
      %v3516 = vshrl.u32 %v3377, 16
      %v3518 = vrot.slane %v3516, 3
      %v3519 = vshll.u32 %v3377, 16
      %v3521 = vrot.slane %v3519, 4
      %v3522 = vor.u32 %v3518, %v3521
      %v3524 = vshrl.u32 %v3378, 16
      %v3526 = vrot.slane %v3524, 3
      %v3527 = vshll.u32 %v3378, 16
      %v3529 = vrot.slane %v3527, 4
      %v3530 = vor.u32 %v3526, %v3529
      %v3531 = vsel %vm3395, %v3522, %v3530
      %v3533 = vshrl.u32 %v3379, 16
      %v3535 = vrot.slane %v3533, 3
      %v3536 = vshll.u32 %v3379, 16
      %v3538 = vrot.slane %v3536, 4
      %v3539 = vor.u32 %v3535, %v3538
      %v3541 = vshrl.u32 %v3380, 16
      %v3543 = vrot.slane %v3541, 3
      %v3544 = vshll.u32 %v3380, 16
      %v3546 = vrot.slane %v3544, 4
      %v3547 = vor.u32 %v3543, %v3546
      %v3548 = vsel %vm3395, %v3539, %v3547
      %v3550 = vshrl.u32 %v3381, 16
      %v3552 = vrot.slane %v3550, 3
      %v3553 = vshll.u32 %v3381, 16
      %v3555 = vrot.slane %v3553, 4
      %v3556 = vor.u32 %v3552, %v3555
      %v3558 = vshrl.u32 %v3382, 16
      %v3560 = vrot.slane %v3558, 3
      %v3561 = vshll.u32 %v3382, 16
      %v3563 = vrot.slane %v3561, 4
      %v3564 = vor.u32 %v3560, %v3563
      %v3565 = vsel %vm3395, %v3556, %v3564
      %v3567 = vshrl.u32 %v3383, 16
      %v3569 = vrot.slane %v3567, 3
      %v3570 = vshll.u32 %v3383, 16
      %v3572 = vrot.slane %v3570, 4
      %v3573 = vor.u32 %v3569, %v3572
      %v3575 = vshrl.u32 %v3384, 16
      %v3577 = vrot.slane %v3575, 3
      %v3578 = vshll.u32 %v3384, 16
      %v3580 = vrot.slane %v3578, 4
      %v3581 = vor.u32 %v3577, %v3580
      %v3582 = vsel %vm3395, %v3573, %v3581
      %v3584 = vshrl.u32 %v3385, 16
      %v3586 = vrot.slane %v3584, 3
      %v3587 = vshll.u32 %v3385, 16
      %v3589 = vrot.slane %v3587, 4
      %v3590 = vor.u32 %v3586, %v3589
      %v3592 = vshrl.u32 %v3386, 16
      %v3594 = vrot.slane %v3592, 3
      %v3595 = vshll.u32 %v3386, 16
      %v3597 = vrot.slane %v3595, 4
      %v3598 = vor.u32 %v3594, %v3597
      %v3599 = vsel %vm3395, %v3590, %v3598
      %v3601 = vshrl.u32 %v3387, 16
      %v3603 = vrot.slane %v3601, 3
      %v3604 = vshll.u32 %v3387, 16
      %v3606 = vrot.slane %v3604, 4
      %v3607 = vor.u32 %v3603, %v3606
      %v3609 = vshrl.u32 %v3388, 16
      %v3611 = vrot.slane %v3609, 3
      %v3612 = vshll.u32 %v3388, 16
      %v3614 = vrot.slane %v3612, 4
      %v3615 = vor.u32 %v3611, %v3614
      %v3616 = vsel %vm3395, %v3607, %v3615
      %v3618 = vshrl.u32 %v3389, 16
      %v3620 = vrot.slane %v3618, 3
      %v3621 = vshll.u32 %v3389, 16
      %v3623 = vrot.slane %v3621, 4
      %v3624 = vor.u32 %v3620, %v3623
      %v3626 = vshrl.u32 %v3390, 16
      %v3628 = vrot.slane %v3626, 3
      %v3629 = vshll.u32 %v3390, 16
      %v3631 = vrot.slane %v3629, 4
      %v3632 = vor.u32 %v3628, %v3631
      %v3633 = vsel %vm3395, %v3624, %v3632
      %v3635 = vshrl.u32 %v3391, 16
      %v3637 = vrot.slane %v3635, 3
      %v3638 = vshll.u32 %v3391, 16
      %v3640 = vrot.slane %v3638, 4
      %v3641 = vor.u32 %v3637, %v3640
      %v3643 = vshrl.u32 %v3392, 16
      %v3645 = vrot.slane %v3643, 3
      %v3646 = vshll.u32 %v3392, 16
      %v3648 = vrot.slane %v3646, 4
      %v3649 = vor.u32 %v3645, %v3648
      %v3650 = vsel %vm3395, %v3641, %v3649
      %v3652 = vshrl.u32 %v3393, 16
      %v3654 = vrot.slane %v3652, 3
      %v3655 = vshll.u32 %v3393, 16
      %v3657 = vrot.slane %v3655, 4
      %v3658 = vor.u32 %v3654, %v3657
      %v3660 = vshrl.u32 %v3394, 16
      %v3662 = vrot.slane %v3660, 3
      %v3663 = vshll.u32 %v3394, 16
      %v3665 = vrot.slane %v3663, 4
      %v3666 = vor.u32 %v3662, %v3665
      %v3667 = vsel %vm3395, %v3658, %v3666
      %v3668 = vld [vmem:[%s3] sm:$0xf]
      %v3669 = vld [vmem:[%s3 + $0x4] sm:$0xf]
      %v3670 = vld [vmem:[%s3 + $0x8] sm:$0xf]
      %v3671 = vld [vmem:[%s3 + $0xc] sm:$0xf]
      %v3672 = vld [vmem:[%s3 + $0x10] sm:$0xf]
      %v3673 = vld [vmem:[%s3 + $0x14] sm:$0xf]
      %v3674 = vld [vmem:[%s3 + $0x18] sm:$0xf]
      %v3675 = vld [vmem:[%s3 + $0x1c] sm:$0xf]
      %v3684 = vunpack.c.l.b16 %v3668
      %v3685 = vunpack.c.l.b16 %v3669
      %v3686 = vunpack.c.l.b16 %v3670
      %v3687 = vunpack.c.l.b16 %v3671
      %v3688 = vunpack.c.l.b16 %v3672
      %v3689 = vunpack.c.l.b16 %v3673
      %v3690 = vunpack.c.l.b16 %v3674
      %v3691 = vunpack.c.l.b16 %v3675
      %v3692 = vpack.c.b16 %v3685, %v3684
      %v3693 = vpack.c.b16 %v3687, %v3686
      %v3694 = vpack.c.b16 %v3689, %v3688
      %v3695 = vpack.c.b16 %v3691, %v3690
      %v3701 = vsel %vm368, %v3412, 0
      %v3704 = vsel %vm368, %v3429, 0
      %v3707 = vsel %vm368, %v3446, 0
      %v3710 = vsel %vm368, %v3463, 0
      %v3713 = vsel %vm368, %v3480, 0
      %v3716 = vsel %vm368, %v3497, 0
      %v3719 = vsel %vm368, %v3514, 0
      %v3722 = vsel %vm368, %v3531, 0
      %v3725 = vsel %vm368, %v3548, 0
      %v3728 = vsel %vm368, %v3565, 0
      %v3731 = vsel %vm368, %v3582, 0
      %v3734 = vsel %vm368, %v3599, 0
      %v3737 = vsel %vm368, %v3616, 0
      %v3740 = vsel %vm368, %v3633, 0
      %v3743 = vsel %vm368, %v3650, 0
      %v3746 = vsel %vm368, %v3667, 0
      %3748 = vmatprep.subr.bf16.mxu0 0
      %3749 = vmatpush1.bf16.msra.mxu0 %v3692
      %3750 = vmatprep.subr.bf16.mxu0 0
      %3751 = vmatpush1.bf16.msra.mxu0 %v3693
      %3752 = vmatprep.subr.bf16.mxu0 0
      %3753 = vmatpush1.bf16.msra.mxu0 %v3694
      %3754 = vmatprep.subr.bf16.mxu0 0
      %3755 = vmatpush1.bf16.msra.mxu0 %v3695
      %3756 = vmatprep.subr.bf16.mxu0 0
      %3757 = vmatpush1.bf16.msra.mxu0 0
      %3758 = vmatprep.subr.bf16.mxu0 0
      %3759 = vmatpush1.bf16.msra.mxu0 0
      %3760 = vmatprep.subr.bf16.mxu0 0
      %3761 = vmatpush1.bf16.msra.mxu0 0
      %3762 = vmatprep.subr.bf16.mxu0 0
      %3763 = vmatpush1.bf16.msra.mxu0 0
      %3764 = vmatprep.subr.bf16.mxu0 0
      %3765 = vmatpush1.bf16.msra.mxu0 0
      %3766 = vmatprep.subr.bf16.mxu0 0
      %3767 = vmatpush1.bf16.msra.mxu0 0
      %3768 = vmatprep.subr.bf16.mxu0 0
      %3769 = vmatpush1.bf16.msra.mxu0 0
      %3770 = vmatprep.subr.bf16.mxu0 0
      %3771 = vmatpush1.bf16.msra.mxu0 0
      %3772 = vmatprep.subr.bf16.mxu0 0
      %3773 = vmatpush1.bf16.msra.mxu0 0
      %3774 = vmatprep.subr.bf16.mxu0 0
      %3775 = vmatpush1.bf16.msra.mxu0 0
      %3776 = vmatprep.subr.bf16.mxu0 0
      %3777 = vmatpush1.bf16.msra.mxu0 0
      %3778 = vmatprep.subr.bf16.mxu0 0
      %3779 = vmatpush1.bf16.msra.mxu0 0
      %3780 = vmatprep.mubr.bf16.mxu0 0
      %3781 = vmatmul.mubr.bf16.gmra.mrb[0].mxu0 %v3701
      %v3782 = vpop.f32.mrb[0].mxu0
      %v3783 = vadd.f32 0.0, %v3782
      %v3784 = vpop.f32.mrb[0].mxu0
      %v3785 = vpop.f32.mrb[0].mxu0
      %v3786 = vadd.f32 0.0, %v3785
      %v3787 = vpop.f32.mrb[0].mxu0
      %3788 = vmatprep.mubr.bf16.mxu0 0
      %3789 = vmatmul.mubr.bf16.gmra.mrb[0].mxu0 %v3704
      %v3790 = vpop.f32.mrb[0].mxu0
      %v3791 = vadd.f32 0.0, %v3790
      %v3792 = vpop.f32.mrb[0].mxu0
      %v3793 = vpop.f32.mrb[0].mxu0
      %v3794 = vadd.f32 0.0, %v3793
      %v3795 = vpop.f32.mrb[0].mxu0
      %3796 = vmatprep.mubr.bf16.mxu0 0
      %3797 = vmatmul.mubr.bf16.gmra.mrb[0].mxu0 %v3707
      %v3798 = vpop.f32.mrb[0].mxu0
      %v3799 = vadd.f32 0.0, %v3798
      %v3800 = vpop.f32.mrb[0].mxu0
      %v3801 = vpop.f32.mrb[0].mxu0
      %v3802 = vadd.f32 0.0, %v3801
      %v3803 = vpop.f32.mrb[0].mxu0
      %3804 = vmatprep.mubr.bf16.mxu0 0
      %3805 = vmatmul.mubr.bf16.gmra.mrb[0].mxu0 %v3710
      %v3806 = vpop.f32.mrb[0].mxu0
      %v3807 = vadd.f32 0.0, %v3806
      %v3808 = vpop.f32.mrb[0].mxu0
      %v3809 = vpop.f32.mrb[0].mxu0
      %v3810 = vadd.f32 0.0, %v3809
      %v3811 = vpop.f32.mrb[0].mxu0
      %3812 = vmatprep.mubr.bf16.mxu0 0
      %3813 = vmatmul.mubr.bf16.gmra.mrb[0].mxu0 %v3713
      %v3814 = vpop.f32.mrb[0].mxu0
      %v3815 = vadd.f32 0.0, %v3814
      %v3816 = vpop.f32.mrb[0].mxu0
      %v3817 = vpop.f32.mrb[0].mxu0
      %v3818 = vadd.f32 0.0, %v3817
      %v3819 = vpop.f32.mrb[0].mxu0
      %3820 = vmatprep.mubr.bf16.mxu0 0
      %3821 = vmatmul.mubr.bf16.gmra.mrb[0].mxu0 %v3716
      %v3822 = vpop.f32.mrb[0].mxu0
      %v3823 = vadd.f32 0.0, %v3822
      %v3824 = vpop.f32.mrb[0].mxu0
      %v3825 = vpop.f32.mrb[0].mxu0
      %v3826 = vadd.f32 0.0, %v3825
      %v3827 = vpop.f32.mrb[0].mxu0
      %3828 = vmatprep.mubr.bf16.mxu0 0
      %3829 = vmatmul.mubr.bf16.gmra.mrb[0].mxu0 %v3719
      %v3830 = vpop.f32.mrb[0].mxu0
      %v3831 = vadd.f32 0.0, %v3830
      %v3832 = vpop.f32.mrb[0].mxu0
      %v3833 = vpop.f32.mrb[0].mxu0
      %v3834 = vadd.f32 0.0, %v3833
      %v3835 = vpop.f32.mrb[0].mxu0
      %3836 = vmatprep.mubr.bf16.mxu0 0
      %3837 = vmatmul.mubr.bf16.gmra.mrb[0].mxu0 %v3722
      %v3838 = vpop.f32.mrb[0].mxu0
      %v3839 = vadd.f32 0.0, %v3838
      %v3840 = vpop.f32.mrb[0].mxu0
      %v3841 = vpop.f32.mrb[0].mxu0
      %v3842 = vadd.f32 0.0, %v3841
      %v3843 = vpop.f32.mrb[0].mxu0
      %3844 = vmatprep.mubr.bf16.mxu0 0
      %3845 = vmatmul.mubr.bf16.gmra.mrb[0].mxu0 %v3725
      %v3846 = vpop.f32.mrb[0].mxu0
      %v3847 = vadd.f32 0.0, %v3846
      %v3848 = vpop.f32.mrb[0].mxu0
      %v3849 = vpop.f32.mrb[0].mxu0
      %v3850 = vadd.f32 0.0, %v3849
      %v3851 = vpop.f32.mrb[0].mxu0
      %3852 = vmatprep.mubr.bf16.mxu0 0
      %3853 = vmatmul.mubr.bf16.gmra.mrb[0].mxu0 %v3728
      %v3854 = vpop.f32.mrb[0].mxu0
      %v3855 = vadd.f32 0.0, %v3854
      %v3856 = vpop.f32.mrb[0].mxu0
      %v3857 = vpop.f32.mrb[0].mxu0
      %v3858 = vadd.f32 0.0, %v3857
      %v3859 = vpop.f32.mrb[0].mxu0
      %3860 = vmatprep.mubr.bf16.mxu0 0
      %3861 = vmatmul.mubr.bf16.gmra.mrb[0].mxu0 %v3731
      %v3862 = vpop.f32.mrb[0].mxu0
      %v3863 = vadd.f32 0.0, %v3862
      %v3864 = vpop.f32.mrb[0].mxu0
      %v3865 = vpop.f32.mrb[0].mxu0
      %v3866 = vadd.f32 0.0, %v3865
      %v3867 = vpop.f32.mrb[0].mxu0
      %3868 = vmatprep.mubr.bf16.mxu0 0
      %3869 = vmatmul.mubr.bf16.gmra.mrb[0].mxu0 %v3734
      %v3870 = vpop.f32.mrb[0].mxu0
      %v3871 = vadd.f32 0.0, %v3870
      %v3872 = vpop.f32.mrb[0].mxu0
      %v3873 = vpop.f32.mrb[0].mxu0
      %v3874 = vadd.f32 0.0, %v3873
      %v3875 = vpop.f32.mrb[0].mxu0
      %3876 = vmatprep.mubr.bf16.mxu0 0
      %3877 = vmatmul.mubr.bf16.gmra.mrb[0].mxu0 %v3737
      %v3878 = vpop.f32.mrb[0].mxu0
      %v3879 = vadd.f32 0.0, %v3878
      %v3880 = vpop.f32.mrb[0].mxu0
      %v3881 = vpop.f32.mrb[0].mxu0
      %v3882 = vadd.f32 0.0, %v3881
      %v3883 = vpop.f32.mrb[0].mxu0
      %3884 = vmatprep.mubr.bf16.mxu0 0
      %3885 = vmatmul.mubr.bf16.gmra.mrb[0].mxu0 %v3740
      %v3886 = vpop.f32.mrb[0].mxu0
      %v3887 = vadd.f32 0.0, %v3886
      %v3888 = vpop.f32.mrb[0].mxu0
      %v3889 = vpop.f32.mrb[0].mxu0
      %v3890 = vadd.f32 0.0, %v3889
      %v3891 = vpop.f32.mrb[0].mxu0
      %3892 = vmatprep.mubr.bf16.mxu0 0
      %3893 = vmatmul.mubr.bf16.gmra.mrb[0].mxu0 %v3743
      %v3894 = vpop.f32.mrb[0].mxu0
      %v3895 = vadd.f32 0.0, %v3894
      %v3896 = vpop.f32.mrb[0].mxu0
      %v3897 = vpop.f32.mrb[0].mxu0
      %v3898 = vadd.f32 0.0, %v3897
      %v3899 = vpop.f32.mrb[0].mxu0
      %3900 = vmatprep.mubr.bf16.mxu0 0
      %3901 = vmatmul.mubr.bf16.gmra.mrb[0].mxu0 %v3746
      %v3902 = vpop.f32.mrb[0].mxu0
      %v3903 = vadd.f32 0.0, %v3902
      %v3904 = vpop.f32.mrb[0].mxu0
      %v3905 = vpop.f32.mrb[0].mxu0
      %v3906 = vadd.f32 0.0, %v3905
      %v3907 = vpop.f32.mrb[0].mxu0
      %3908 = vdwg.mxu0
      %v3909 = vadd.f32 %v3362, %v3783
      %v3910 = vadd.f32 %v3362, %v3786
      %v3911 = vadd.f32 %v3362, %v3791
      %v3912 = vadd.f32 %v3362, %v3794
      %v3913 = vadd.f32 %v3362, %v3799
      %v3914 = vadd.f32 %v3362, %v3802
      %v3915 = vadd.f32 %v3362, %v3807
      %v3916 = vadd.f32 %v3362, %v3810
      %v3917 = vadd.f32 %v3362, %v3815
      %v3918 = vadd.f32 %v3362, %v3818
      %v3919 = vadd.f32 %v3362, %v3823
      %v3920 = vadd.f32 %v3362, %v3826
      %v3921 = vadd.f32 %v3362, %v3831
      %v3922 = vadd.f32 %v3362, %v3834
      %v3923 = vadd.f32 %v3362, %v3839
      %v3924 = vadd.f32 %v3362, %v3842
      %v3925 = vadd.f32 %v3362, %v3847
      %v3926 = vadd.f32 %v3362, %v3850
      %v3927 = vadd.f32 %v3362, %v3855
      %v3928 = vadd.f32 %v3362, %v3858
      %v3929 = vadd.f32 %v3362, %v3863
      %v3930 = vadd.f32 %v3362, %v3866
      %v3931 = vadd.f32 %v3362, %v3871
      %v3932 = vadd.f32 %v3362, %v3874
      %v3933 = vadd.f32 %v3362, %v3879
      %v3934 = vadd.f32 %v3362, %v3882
      %v3935 = vadd.f32 %v3362, %v3887
      %v3936 = vadd.f32 %v3362, %v3890
      %v3937 = vadd.f32 %v3362, %v3895
      %v3938 = vadd.f32 %v3362, %v3898
      %v3939 = vadd.f32 %v3362, %v3903
      %v3940 = vadd.f32 %v3362, %v3906
      %v3941 = vld [vmem:[#allocation2] sm:$0xf0]
      %v3942 = vld [vmem:[#allocation2 + $0x10] sm:$0xf0]
      %v3943 = vld [vmem:[#allocation2 + $0x20] sm:$0xf0]
      %v3944 = vld [vmem:[#allocation2 + $0x30] sm:$0xf0]
      %v3945 = vld [vmem:[#allocation2 + $0x40] sm:$0xf0]
      %v3946 = vld [vmem:[#allocation2 + $0x50] sm:$0xf0]
      %v3947 = vld [vmem:[#allocation2 + $0x60] sm:$0xf0]
      %v3948 = vld [vmem:[#allocation2 + $0x70] sm:$0xf0]
      %v3949 = vld [vmem:[#allocation2 + $0x80] sm:$0xf0]
      %v3950 = vld [vmem:[#allocation2 + $0x90] sm:$0xf0]
      %v3951 = vld [vmem:[#allocation2 + $0xa0] sm:$0xf0]
      %v3952 = vld [vmem:[#allocation2 + $0xb0] sm:$0xf0]
      %v3953 = vld [vmem:[#allocation2 + $0xc0] sm:$0xf0]
      %v3954 = vld [vmem:[#allocation2 + $0xd0] sm:$0xf0]
      %v3955 = vld [vmem:[#allocation2 + $0xe0] sm:$0xf0]
      %v3956 = vld [vmem:[#allocation2 + $0xf0] sm:$0xf0]
      %vm3989 = vcmask 1043456
      %v3990 = vrot.slane %v3941, 4
      %v3991 = vrot.slane %v3364, 4
      %v3992 = vsel %vm3989, %v3990, %v3991
      %v3993 = vrot.slane %v3942, 4
      %v3994 = vrot.slane %v3366, 4
      %v3995 = vsel %vm3989, %v3993, %v3994
      %v3996 = vrot.slane %v3943, 4
      %v3997 = vrot.slane %v3368, 4
      %v3998 = vsel %vm3989, %v3996, %v3997
      %v3999 = vrot.slane %v3944, 4
      %v4000 = vrot.slane %v3370, 4
      %v4001 = vsel %vm3989, %v3999, %v4000
      %v4002 = vrot.slane %v3945, 4
      %v4003 = vrot.slane %v3372, 4
      %v4004 = vsel %vm3989, %v4002, %v4003
      %v4005 = vrot.slane %v3946, 4
      %v4006 = vrot.slane %v3374, 4
      %v4007 = vsel %vm3989, %v4005, %v4006
      %v4008 = vrot.slane %v3947, 4
      %v4009 = vrot.slane %v3376, 4
      %v4010 = vsel %vm3989, %v4008, %v4009
      %v4011 = vrot.slane %v3948, 4
      %v4012 = vrot.slane %v3378, 4
      %v4013 = vsel %vm3989, %v4011, %v4012
      %v4014 = vrot.slane %v3949, 4
      %v4015 = vrot.slane %v3380, 4
      %v4016 = vsel %vm3989, %v4014, %v4015
      %v4017 = vrot.slane %v3950, 4
      %v4018 = vrot.slane %v3382, 4
      %v4019 = vsel %vm3989, %v4017, %v4018
      %v4020 = vrot.slane %v3951, 4
      %v4021 = vrot.slane %v3384, 4
      %v4022 = vsel %vm3989, %v4020, %v4021
      %v4023 = vrot.slane %v3952, 4
      %v4024 = vrot.slane %v3386, 4
      %v4025 = vsel %vm3989, %v4023, %v4024
      %v4026 = vrot.slane %v3953, 4
      %v4027 = vrot.slane %v3388, 4
      %v4028 = vsel %vm3989, %v4026, %v4027
      %v4029 = vrot.slane %v3954, 4
      %v4030 = vrot.slane %v3390, 4
      %v4031 = vsel %vm3989, %v4029, %v4030
      %v4032 = vrot.slane %v3955, 4
      %v4033 = vrot.slane %v3392, 4
      %v4034 = vsel %vm3989, %v4032, %v4033
      %v4035 = vrot.slane %v3956, 4
      %v4036 = vrot.slane %v3394, 4
      %v4037 = vsel %vm3989, %v4035, %v4036
      %s4038 = scalar_lea.vmem %s3, 32
      %v4039 = vld [vmem:[%s4038] sm:$0xf]
      %v4040 = vld [vmem:[%s4038 + $0x4] sm:$0xf]
      %v4041 = vld [vmem:[%s4038 + $0x8] sm:$0xf]
      %v4042 = vld [vmem:[%s4038 + $0xc] sm:$0xf]
      %v4043 = vld [vmem:[%s4038 + $0x10] sm:$0xf]
      %v4044 = vld [vmem:[%s4038 + $0x14] sm:$0xf]
      %v4045 = vld [vmem:[%s4038 + $0x18] sm:$0xf]
      %v4046 = vld [vmem:[%s4038 + $0x1c] sm:$0xf]
      %v4055 = vunpack.c.l.b16 %v4039
      %v4056 = vunpack.c.l.b16 %v4040
      %v4057 = vunpack.c.l.b16 %v4041
      %v4058 = vunpack.c.l.b16 %v4042
      %v4059 = vunpack.c.l.b16 %v4043
      %v4060 = vunpack.c.l.b16 %v4044
      %v4061 = vunpack.c.l.b16 %v4045
      %v4062 = vunpack.c.l.b16 %v4046
      %v4063 = vpack.c.b16 %v4056, %v4055
      %v4064 = vpack.c.b16 %v4058, %v4057
      %v4065 = vpack.c.b16 %v4060, %v4059
      %v4066 = vpack.c.b16 %v4062, %v4061
      %v4072 = vsel %vm368, %v3992, 0
      %v4075 = vsel %vm368, %v3995, 0
      %v4078 = vsel %vm368, %v3998, 0
      %v4081 = vsel %vm368, %v4001, 0
      %v4084 = vsel %vm368, %v4004, 0
      %v4087 = vsel %vm368, %v4007, 0
      %v4090 = vsel %vm368, %v4010, 0
      %v4093 = vsel %vm368, %v4013, 0
      %v4096 = vsel %vm368, %v4016, 0
      %v4099 = vsel %vm368, %v4019, 0
      %v4102 = vsel %vm368, %v4022, 0
      %v4105 = vsel %vm368, %v4025, 0
      %v4108 = vsel %vm368, %v4028, 0
      %v4111 = vsel %vm368, %v4031, 0
      %v4114 = vsel %vm368, %v4034, 0
      %v4117 = vsel %vm368, %v4037, 0
      %4119 = vmatprep.subr.bf16.mxu0 0
      %4120 = vmatpush1.bf16.msra.mxu0 %v4063
      %4121 = vmatprep.subr.bf16.mxu0 0
      %4122 = vmatpush1.bf16.msra.mxu0 %v4064
      %4123 = vmatprep.subr.bf16.mxu0 0
      %4124 = vmatpush1.bf16.msra.mxu0 %v4065
      %4125 = vmatprep.subr.bf16.mxu0 0
      %4126 = vmatpush1.bf16.msra.mxu0 %v4066
      %4127 = vmatprep.subr.bf16.mxu0 0
      %4128 = vmatpush1.bf16.msra.mxu0 0
      %4129 = vmatprep.subr.bf16.mxu0 0
      %4130 = vmatpush1.bf16.msra.mxu0 0
      %4131 = vmatprep.subr.bf16.mxu0 0
      %4132 = vmatpush1.bf16.msra.mxu0 0
      %4133 = vmatprep.subr.bf16.mxu0 0
      %4134 = vmatpush1.bf16.msra.mxu0 0
      %4135 = vmatprep.subr.bf16.mxu0 0
      %4136 = vmatpush1.bf16.msra.mxu0 0
      %4137 = vmatprep.subr.bf16.mxu0 0
      %4138 = vmatpush1.bf16.msra.mxu0 0
      %4139 = vmatprep.subr.bf16.mxu0 0
      %4140 = vmatpush1.bf16.msra.mxu0 0
      %4141 = vmatprep.subr.bf16.mxu0 0
      %4142 = vmatpush1.bf16.msra.mxu0 0
      %4143 = vmatprep.subr.bf16.mxu0 0
      %4144 = vmatpush1.bf16.msra.mxu0 0
      %4145 = vmatprep.subr.bf16.mxu0 0
      %4146 = vmatpush1.bf16.msra.mxu0 0
      %4147 = vmatprep.subr.bf16.mxu0 0
      %4148 = vmatpush1.bf16.msra.mxu0 0
      %4149 = vmatprep.subr.bf16.mxu0 0
      %4150 = vmatpush1.bf16.msra.mxu0 0
      %4151 = vmatprep.mubr.bf16.mxu0 0
      %4152 = vmatmul.mubr.bf16.gmra.mrb[0].mxu0 %v4072
      %v4153 = vpop.f32.mrb[0].mxu0
      %v4154 = vadd.f32 0.0, %v4153
      %v4155 = vpop.f32.mrb[0].mxu0
      %v4156 = vpop.f32.mrb[0].mxu0
      %v4157 = vadd.f32 0.0, %v4156
      %v4158 = vpop.f32.mrb[0].mxu0
      %4159 = vmatprep.mubr.bf16.mxu0 0
      %4160 = vmatmul.mubr.bf16.gmra.mrb[0].mxu0 %v4075
      %v4161 = vpop.f32.mrb[0].mxu0
      %v4162 = vadd.f32 0.0, %v4161
      %v4163 = vpop.f32.mrb[0].mxu0
      %v4164 = vpop.f32.mrb[0].mxu0
      %v4165 = vadd.f32 0.0, %v4164
      %v4166 = vpop.f32.mrb[0].mxu0
      %4167 = vmatprep.mubr.bf16.mxu0 0
      %4168 = vmatmul.mubr.bf16.gmra.mrb[0].mxu0 %v4078
      %v4169 = vpop.f32.mrb[0].mxu0
      %v4170 = vadd.f32 0.0, %v4169
      %v4171 = vpop.f32.mrb[0].mxu0
      %v4172 = vpop.f32.mrb[0].mxu0
      %v4173 = vadd.f32 0.0, %v4172
      %v4174 = vpop.f32.mrb[0].mxu0
      %4175 = vmatprep.mubr.bf16.mxu0 0
      %4176 = vmatmul.mubr.bf16.gmra.mrb[0].mxu0 %v4081
      %v4177 = vpop.f32.mrb[0].mxu0
      %v4178 = vadd.f32 0.0, %v4177
      %v4179 = vpop.f32.mrb[0].mxu0
      %v4180 = vpop.f32.mrb[0].mxu0
      %v4181 = vadd.f32 0.0, %v4180
      %v4182 = vpop.f32.mrb[0].mxu0
      %4183 = vmatprep.mubr.bf16.mxu0 0
      %4184 = vmatmul.mubr.bf16.gmra.mrb[0].mxu0 %v4084
      %v4185 = vpop.f32.mrb[0].mxu0
      %v4186 = vadd.f32 0.0, %v4185
      %v4187 = vpop.f32.mrb[0].mxu0
      %v4188 = vpop.f32.mrb[0].mxu0
      %v4189 = vadd.f32 0.0, %v4188
      %v4190 = vpop.f32.mrb[0].mxu0
      %4191 = vmatprep.mubr.bf16.mxu0 0
      %4192 = vmatmul.mubr.bf16.gmra.mrb[0].mxu0 %v4087
      %v4193 = vpop.f32.mrb[0].mxu0
      %v4194 = vadd.f32 0.0, %v4193
      %v4195 = vpop.f32.mrb[0].mxu0
      %v4196 = vpop.f32.mrb[0].mxu0
      %v4197 = vadd.f32 0.0, %v4196
      %v4198 = vpop.f32.mrb[0].mxu0
      %4199 = vmatprep.mubr.bf16.mxu0 0
      %4200 = vmatmul.mubr.bf16.gmra.mrb[0].mxu0 %v4090
      %v4201 = vpop.f32.mrb[0].mxu0
      %v4202 = vadd.f32 0.0, %v4201
      %v4203 = vpop.f32.mrb[0].mxu0
      %v4204 = vpop.f32.mrb[0].mxu0
      %v4205 = vadd.f32 0.0, %v4204
      %v4206 = vpop.f32.mrb[0].mxu0
      %4207 = vmatprep.mubr.bf16.mxu0 0
      %4208 = vmatmul.mubr.bf16.gmra.mrb[0].mxu0 %v4093
      %v4209 = vpop.f32.mrb[0].mxu0
      %v4210 = vadd.f32 0.0, %v4209
      %v4211 = vpop.f32.mrb[0].mxu0
      %v4212 = vpop.f32.mrb[0].mxu0
      %v4213 = vadd.f32 0.0, %v4212
      %v4214 = vpop.f32.mrb[0].mxu0
      %4215 = vmatprep.mubr.bf16.mxu0 0
      %4216 = vmatmul.mubr.bf16.gmra.mrb[0].mxu0 %v4096
      %v4217 = vpop.f32.mrb[0].mxu0
      %v4218 = vadd.f32 0.0, %v4217
      %v4219 = vpop.f32.mrb[0].mxu0
      %v4220 = vpop.f32.mrb[0].mxu0
      %v4221 = vadd.f32 0.0, %v4220
      %v4222 = vpop.f32.mrb[0].mxu0
      %4223 = vmatprep.mubr.bf16.mxu0 0
      %4224 = vmatmul.mubr.bf16.gmra.mrb[0].mxu0 %v4099
      %v4225 = vpop.f32.mrb[0].mxu0
      %v4226 = vadd.f32 0.0, %v4225
      %v4227 = vpop.f32.mrb[0].mxu0
      %v4228 = vpop.f32.mrb[0].mxu0
      %v4229 = vadd.f32 0.0, %v4228
      %v4230 = vpop.f32.mrb[0].mxu0
      %4231 = vmatprep.mubr.bf16.mxu0 0
      %4232 = vmatmul.mubr.bf16.gmra.mrb[0].mxu0 %v4102
      %v4233 = vpop.f32.mrb[0].mxu0
      %v4234 = vadd.f32 0.0, %v4233
      %v4235 = vpop.f32.mrb[0].mxu0
      %v4236 = vpop.f32.mrb[0].mxu0
      %v4237 = vadd.f32 0.0, %v4236
      %v4238 = vpop.f32.mrb[0].mxu0
      %4239 = vmatprep.mubr.bf16.mxu0 0
      %4240 = vmatmul.mubr.bf16.gmra.mrb[0].mxu0 %v4105
      %v4241 = vpop.f32.mrb[0].mxu0
      %v4242 = vadd.f32 0.0, %v4241
      %v4243 = vpop.f32.mrb[0].mxu0
      %v4244 = vpop.f32.mrb[0].mxu0
      %v4245 = vadd.f32 0.0, %v4244
      %v4246 = vpop.f32.mrb[0].mxu0
      %4247 = vmatprep.mubr.bf16.mxu0 0
      %4248 = vmatmul.mubr.bf16.gmra.mrb[0].mxu0 %v4108
      %v4249 = vpop.f32.mrb[0].mxu0
      %v4250 = vadd.f32 0.0, %v4249
      %v4251 = vpop.f32.mrb[0].mxu0
      %v4252 = vpop.f32.mrb[0].mxu0
      %v4253 = vadd.f32 0.0, %v4252
      %v4254 = vpop.f32.mrb[0].mxu0
      %4255 = vmatprep.mubr.bf16.mxu0 0
      %4256 = vmatmul.mubr.bf16.gmra.mrb[0].mxu0 %v4111
      %v4257 = vpop.f32.mrb[0].mxu0
      %v4258 = vadd.f32 0.0, %v4257
      %v4259 = vpop.f32.mrb[0].mxu0
      %v4260 = vpop.f32.mrb[0].mxu0
      %v4261 = vadd.f32 0.0, %v4260
      %v4262 = vpop.f32.mrb[0].mxu0
      %4263 = vmatprep.mubr.bf16.mxu0 0
      %4264 = vmatmul.mubr.bf16.gmra.mrb[0].mxu0 %v4114
      %v4265 = vpop.f32.mrb[0].mxu0
      %v4266 = vadd.f32 0.0, %v4265
      %v4267 = vpop.f32.mrb[0].mxu0
      %v4268 = vpop.f32.mrb[0].mxu0
      %v4269 = vadd.f32 0.0, %v4268
      %v4270 = vpop.f32.mrb[0].mxu0
      %4271 = vmatprep.mubr.bf16.mxu0 0
      %4272 = vmatmul.mubr.bf16.gmra.mrb[0].mxu0 %v4117
      %v4273 = vpop.f32.mrb[0].mxu0
      %v4274 = vadd.f32 0.0, %v4273
      %v4275 = vpop.f32.mrb[0].mxu0
      %v4276 = vpop.f32.mrb[0].mxu0
      %v4277 = vadd.f32 0.0, %v4276
      %v4278 = vpop.f32.mrb[0].mxu0
      %4279 = vdwg.mxu0
      %v4280 = vadd.f32 %v3909, %v4154
      %v4281 = vadd.f32 %v3910, %v4157
      %v4282 = vadd.f32 %v3911, %v4162
      %v4283 = vadd.f32 %v3912, %v4165
      %v4284 = vadd.f32 %v3913, %v4170
      %v4285 = vadd.f32 %v3914, %v4173
      %v4286 = vadd.f32 %v3915, %v4178
      %v4287 = vadd.f32 %v3916, %v4181
      %v4288 = vadd.f32 %v3917, %v4186
      %v4289 = vadd.f32 %v3918, %v4189
      %v4290 = vadd.f32 %v3919, %v4194
      %v4291 = vadd.f32 %v3920, %v4197
      %v4292 = vadd.f32 %v3921, %v4202
      %v4293 = vadd.f32 %v3922, %v4205
      %v4294 = vadd.f32 %v3923, %v4210
      %v4295 = vadd.f32 %v3924, %v4213
      %v4296 = vadd.f32 %v3925, %v4218
      %v4297 = vadd.f32 %v3926, %v4221
      %v4298 = vadd.f32 %v3927, %v4226
      %v4299 = vadd.f32 %v3928, %v4229
      %v4300 = vadd.f32 %v3929, %v4234
      %v4301 = vadd.f32 %v3930, %v4237
      %v4302 = vadd.f32 %v3931, %v4242
      %v4303 = vadd.f32 %v3932, %v4245
      %v4304 = vadd.f32 %v3933, %v4250
      %v4305 = vadd.f32 %v3934, %v4253
      %v4306 = vadd.f32 %v3935, %v4258
      %v4307 = vadd.f32 %v3936, %v4261
      %v4308 = vadd.f32 %v3937, %v4266
      %v4309 = vadd.f32 %v3938, %v4269
      %v4310 = vadd.f32 %v3939, %v4274
      %v4311 = vadd.f32 %v3940, %v4277
      %v4312 = vld [vmem:[#allocation2 + $0x8] sm:$0x1f]
      %v4313 = vld [vmem:[#allocation2 + $0x18] sm:$0x1f]
      %v4314 = vld [vmem:[#allocation2 + $0x28] sm:$0x1f]
      %v4315 = vld [vmem:[#allocation2 + $0x38] sm:$0x1f]
      %v4316 = vld [vmem:[#allocation2 + $0x48] sm:$0x1f]
      %v4317 = vld [vmem:[#allocation2 + $0x58] sm:$0x1f]
      %v4318 = vld [vmem:[#allocation2 + $0x68] sm:$0x1f]
      %v4319 = vld [vmem:[#allocation2 + $0x78] sm:$0x1f]
      %v4320 = vld [vmem:[#allocation2 + $0x88] sm:$0x1f]
      %v4321 = vld [vmem:[#allocation2 + $0x98] sm:$0x1f]
      %v4322 = vld [vmem:[#allocation2 + $0xa8] sm:$0x1f]
      %v4323 = vld [vmem:[#allocation2 + $0xb8] sm:$0x1f]
      %v4324 = vld [vmem:[#allocation2 + $0xc8] sm:$0x1f]
      %v4325 = vld [vmem:[#allocation2 + $0xd8] sm:$0x1f]
      %v4326 = vld [vmem:[#allocation2 + $0xe8] sm:$0x1f]
      %v4327 = vld [vmem:[#allocation2 + $0xf8] sm:$0x1f]
      %vm4328 = vsmask.f32 3328
      %v4330 = vshrl.u32 %v3941, 16
      %v4332 = vrot.slane %v4330, 4
      %v4333 = vshll.u32 %v3941, 16
      %v4335 = vrot.slane %v4333, 5
      %v4336 = vor.u32 %v4332, %v4335
      %v4338 = vshrl.u32 %v4312, 16
      %v4340 = vrot.slane %v4338, 4
      %v4341 = vshll.u32 %v4312, 16
      %v4343 = vrot.slane %v4341, 5
      %v4344 = vor.u32 %v4340, %v4343
      %v4345 = vsel %vm4328, %v4336, %v4344
      %v4347 = vshrl.u32 %v3942, 16
      %v4349 = vrot.slane %v4347, 4
      %v4350 = vshll.u32 %v3942, 16
      %v4352 = vrot.slane %v4350, 5
      %v4353 = vor.u32 %v4349, %v4352
      %v4355 = vshrl.u32 %v4313, 16
      %v4357 = vrot.slane %v4355, 4
      %v4358 = vshll.u32 %v4313, 16
      %v4360 = vrot.slane %v4358, 5
      %v4361 = vor.u32 %v4357, %v4360
      %v4362 = vsel %vm4328, %v4353, %v4361
      %v4364 = vshrl.u32 %v3943, 16
      %v4366 = vrot.slane %v4364, 4
      %v4367 = vshll.u32 %v3943, 16
      %v4369 = vrot.slane %v4367, 5
      %v4370 = vor.u32 %v4366, %v4369
      %v4372 = vshrl.u32 %v4314, 16
      %v4374 = vrot.slane %v4372, 4
      %v4375 = vshll.u32 %v4314, 16
      %v4377 = vrot.slane %v4375, 5
      %v4378 = vor.u32 %v4374, %v4377
      %v4379 = vsel %vm4328, %v4370, %v4378
      %v4381 = vshrl.u32 %v3944, 16
      %v4383 = vrot.slane %v4381, 4
      %v4384 = vshll.u32 %v3944, 16
      %v4386 = vrot.slane %v4384, 5
      %v4387 = vor.u32 %v4383, %v4386
      %v4389 = vshrl.u32 %v4315, 16
      %v4391 = vrot.slane %v4389, 4
      %v4392 = vshll.u32 %v4315, 16
      %v4394 = vrot.slane %v4392, 5
      %v4395 = vor.u32 %v4391, %v4394
      %v4396 = vsel %vm4328, %v4387, %v4395
      %v4398 = vshrl.u32 %v3945, 16
      %v4400 = vrot.slane %v4398, 4
      %v4401 = vshll.u32 %v3945, 16
      %v4403 = vrot.slane %v4401, 5
      %v4404 = vor.u32 %v4400, %v4403
      %v4406 = vshrl.u32 %v4316, 16
      %v4408 = vrot.slane %v4406, 4
      %v4409 = vshll.u32 %v4316, 16
      %v4411 = vrot.slane %v4409, 5
      %v4412 = vor.u32 %v4408, %v4411
      %v4413 = vsel %vm4328, %v4404, %v4412
      %v4415 = vshrl.u32 %v3946, 16
      %v4417 = vrot.slane %v4415, 4
      %v4418 = vshll.u32 %v3946, 16
      %v4420 = vrot.slane %v4418, 5
      %v4421 = vor.u32 %v4417, %v4420
      %v4423 = vshrl.u32 %v4317, 16
      %v4425 = vrot.slane %v4423, 4
      %v4426 = vshll.u32 %v4317, 16
      %v4428 = vrot.slane %v4426, 5
      %v4429 = vor.u32 %v4425, %v4428
      %v4430 = vsel %vm4328, %v4421, %v4429
      %v4432 = vshrl.u32 %v3947, 16
      %v4434 = vrot.slane %v4432, 4
      %v4435 = vshll.u32 %v3947, 16
      %v4437 = vrot.slane %v4435, 5
      %v4438 = vor.u32 %v4434, %v4437
      %v4440 = vshrl.u32 %v4318, 16
      %v4442 = vrot.slane %v4440, 4
      %v4443 = vshll.u32 %v4318, 16
      %v4445 = vrot.slane %v4443, 5
      %v4446 = vor.u32 %v4442, %v4445
      %v4447 = vsel %vm4328, %v4438, %v4446
      %v4449 = vshrl.u32 %v3948, 16
      %v4451 = vrot.slane %v4449, 4
      %v4452 = vshll.u32 %v3948, 16
      %v4454 = vrot.slane %v4452, 5
      %v4455 = vor.u32 %v4451, %v4454
      %v4457 = vshrl.u32 %v4319, 16
      %v4459 = vrot.slane %v4457, 4
      %v4460 = vshll.u32 %v4319, 16
      %v4462 = vrot.slane %v4460, 5
      %v4463 = vor.u32 %v4459, %v4462
      %v4464 = vsel %vm4328, %v4455, %v4463
      %v4466 = vshrl.u32 %v3949, 16
      %v4468 = vrot.slane %v4466, 4
      %v4469 = vshll.u32 %v3949, 16
      %v4471 = vrot.slane %v4469, 5
      %v4472 = vor.u32 %v4468, %v4471
      %v4474 = vshrl.u32 %v4320, 16
      %v4476 = vrot.slane %v4474, 4
      %v4477 = vshll.u32 %v4320, 16
      %v4479 = vrot.slane %v4477, 5
      %v4480 = vor.u32 %v4476, %v4479
      %v4481 = vsel %vm4328, %v4472, %v4480
      %v4483 = vshrl.u32 %v3950, 16
      %v4485 = vrot.slane %v4483, 4
      %v4486 = vshll.u32 %v3950, 16
      %v4488 = vrot.slane %v4486, 5
      %v4489 = vor.u32 %v4485, %v4488
      %v4491 = vshrl.u32 %v4321, 16
      %v4493 = vrot.slane %v4491, 4
      %v4494 = vshll.u32 %v4321, 16
      %v4496 = vrot.slane %v4494, 5
      %v4497 = vor.u32 %v4493, %v4496
      %v4498 = vsel %vm4328, %v4489, %v4497
      %v4500 = vshrl.u32 %v3951, 16
      %v4502 = vrot.slane %v4500, 4
      %v4503 = vshll.u32 %v3951, 16
      %v4505 = vrot.slane %v4503, 5
      %v4506 = vor.u32 %v4502, %v4505
      %v4508 = vshrl.u32 %v4322, 16
      %v4510 = vrot.slane %v4508, 4
      %v4511 = vshll.u32 %v4322, 16
      %v4513 = vrot.slane %v4511, 5
      %v4514 = vor.u32 %v4510, %v4513
      %v4515 = vsel %vm4328, %v4506, %v4514
      %v4517 = vshrl.u32 %v3952, 16
      %v4519 = vrot.slane %v4517, 4
      %v4520 = vshll.u32 %v3952, 16
      %v4522 = vrot.slane %v4520, 5
      %v4523 = vor.u32 %v4519, %v4522
      %v4525 = vshrl.u32 %v4323, 16
      %v4527 = vrot.slane %v4525, 4
      %v4528 = vshll.u32 %v4323, 16
      %v4530 = vrot.slane %v4528, 5
      %v4531 = vor.u32 %v4527, %v4530
      %v4532 = vsel %vm4328, %v4523, %v4531
      %v4534 = vshrl.u32 %v3953, 16
      %v4536 = vrot.slane %v4534, 4
      %v4537 = vshll.u32 %v3953, 16
      %v4539 = vrot.slane %v4537, 5
      %v4540 = vor.u32 %v4536, %v4539
      %v4542 = vshrl.u32 %v4324, 16
      %v4544 = vrot.slane %v4542, 4
      %v4545 = vshll.u32 %v4324, 16
      %v4547 = vrot.slane %v4545, 5
      %v4548 = vor.u32 %v4544, %v4547
      %v4549 = vsel %vm4328, %v4540, %v4548
      %v4551 = vshrl.u32 %v3954, 16
      %v4553 = vrot.slane %v4551, 4
      %v4554 = vshll.u32 %v3954, 16
      %v4556 = vrot.slane %v4554, 5
      %v4557 = vor.u32 %v4553, %v4556
      %v4559 = vshrl.u32 %v4325, 16
      %v4561 = vrot.slane %v4559, 4
      %v4562 = vshll.u32 %v4325, 16
      %v4564 = vrot.slane %v4562, 5
      %v4565 = vor.u32 %v4561, %v4564
      %v4566 = vsel %vm4328, %v4557, %v4565
      %v4568 = vshrl.u32 %v3955, 16
      %v4570 = vrot.slane %v4568, 4
      %v4571 = vshll.u32 %v3955, 16
      %v4573 = vrot.slane %v4571, 5
      %v4574 = vor.u32 %v4570, %v4573
      %v4576 = vshrl.u32 %v4326, 16
      %v4578 = vrot.slane %v4576, 4
      %v4579 = vshll.u32 %v4326, 16
      %v4581 = vrot.slane %v4579, 5
      %v4582 = vor.u32 %v4578, %v4581
      %v4583 = vsel %vm4328, %v4574, %v4582
      %v4585 = vshrl.u32 %v3956, 16
      %v4587 = vrot.slane %v4585, 4
      %v4588 = vshll.u32 %v3956, 16
      %v4590 = vrot.slane %v4588, 5
      %v4591 = vor.u32 %v4587, %v4590
      %v4593 = vshrl.u32 %v4327, 16
      %v4595 = vrot.slane %v4593, 4
      %v4596 = vshll.u32 %v4327, 16
      %v4598 = vrot.slane %v4596, 5
      %v4599 = vor.u32 %v4595, %v4598
      %v4600 = vsel %vm4328, %v4591, %v4599
      %s4601 = scalar_lea.vmem %s3, 64
      %v4602 = vld [vmem:[%s4601] sm:$0xf]
      %v4603 = vld [vmem:[%s4601 + $0x4] sm:$0xf]
      %v4604 = vld [vmem:[%s4601 + $0x8] sm:$0xf]
      %v4605 = vld [vmem:[%s4601 + $0xc] sm:$0xf]
      %v4606 = vld [vmem:[%s4601 + $0x10] sm:$0xf]
      %v4607 = vld [vmem:[%s4601 + $0x14] sm:$0xf]
      %v4608 = vld [vmem:[%s4601 + $0x18] sm:$0xf]
      %v4609 = vld [vmem:[%s4601 + $0x1c] sm:$0xf]
      %v4618 = vunpack.c.l.b16 %v4602
      %v4619 = vunpack.c.l.b16 %v4603
      %v4620 = vunpack.c.l.b16 %v4604
      %v4621 = vunpack.c.l.b16 %v4605
      %v4622 = vunpack.c.l.b16 %v4606
      %v4623 = vunpack.c.l.b16 %v4607
      %v4624 = vunpack.c.l.b16 %v4608
      %v4625 = vunpack.c.l.b16 %v4609
      %v4626 = vpack.c.b16 %v4619, %v4618
      %v4627 = vpack.c.b16 %v4621, %v4620
      %v4628 = vpack.c.b16 %v4623, %v4622
      %v4629 = vpack.c.b16 %v4625, %v4624
      %v4635 = vsel %vm368, %v4345, 0
      %v4638 = vsel %vm368, %v4362, 0
      %v4641 = vsel %vm368, %v4379, 0
      %v4644 = vsel %vm368, %v4396, 0
      %v4647 = vsel %vm368, %v4413, 0
      %v4650 = vsel %vm368, %v4430, 0
      %v4653 = vsel %vm368, %v4447, 0
      %v4656 = vsel %vm368, %v4464, 0
      %v4659 = vsel %vm368, %v4481, 0
      %v4662 = vsel %vm368, %v4498, 0
      %v4665 = vsel %vm368, %v4515, 0
      %v4668 = vsel %vm368, %v4532, 0
      %v4671 = vsel %vm368, %v4549, 0
      %v4674 = vsel %vm368, %v4566, 0
      %v4677 = vsel %vm368, %v4583, 0
      %v4680 = vsel %vm368, %v4600, 0
      %4682 = vmatprep.subr.bf16.mxu0 0
      %4683 = vmatpush1.bf16.msra.mxu0 %v4626
      %4684 = vmatprep.subr.bf16.mxu0 0
      %4685 = vmatpush1.bf16.msra.mxu0 %v4627
      %4686 = vmatprep.subr.bf16.mxu0 0
      %4687 = vmatpush1.bf16.msra.mxu0 %v4628
      %4688 = vmatprep.subr.bf16.mxu0 0
      %4689 = vmatpush1.bf16.msra.mxu0 %v4629
      %4690 = vmatprep.subr.bf16.mxu0 0
      %4691 = vmatpush1.bf16.msra.mxu0 0
      %4692 = vmatprep.subr.bf16.mxu0 0
      %4693 = vmatpush1.bf16.msra.mxu0 0
      %4694 = vmatprep.subr.bf16.mxu0 0
      %4695 = vmatpush1.bf16.msra.mxu0 0
      %4696 = vmatprep.subr.bf16.mxu0 0
      %4697 = vmatpush1.bf16.msra.mxu0 0
      %4698 = vmatprep.subr.bf16.mxu0 0
      %4699 = vmatpush1.bf16.msra.mxu0 0
      %4700 = vmatprep.subr.bf16.mxu0 0
      %4701 = vmatpush1.bf16.msra.mxu0 0
      %4702 = vmatprep.subr.bf16.mxu0 0
      %4703 = vmatpush1.bf16.msra.mxu0 0
      %4704 = vmatprep.subr.bf16.mxu0 0
      %4705 = vmatpush1.bf16.msra.mxu0 0
      %4706 = vmatprep.subr.bf16.mxu0 0
      %4707 = vmatpush1.bf16.msra.mxu0 0
      %4708 = vmatprep.subr.bf16.mxu0 0
      %4709 = vmatpush1.bf16.msra.mxu0 0
      %4710 = vmatprep.subr.bf16.mxu0 0
      %4711 = vmatpush1.bf16.msra.mxu0 0
      %4712 = vmatprep.subr.bf16.mxu0 0
      %4713 = vmatpush1.bf16.msra.mxu0 0
      %4714 = vmatprep.mubr.bf16.mxu0 0
      %4715 = vmatmul.mubr.bf16.gmra.mrb[0].mxu0 %v4635
      %v4716 = vpop.f32.mrb[0].mxu0
      %v4717 = vadd.f32 0.0, %v4716
      %v4718 = vpop.f32.mrb[0].mxu0
      %v4719 = vpop.f32.mrb[0].mxu0
      %v4720 = vadd.f32 0.0, %v4719
      %v4721 = vpop.f32.mrb[0].mxu0
      %4722 = vmatprep.mubr.bf16.mxu0 0
      %4723 = vmatmul.mubr.bf16.gmra.mrb[0].mxu0 %v4638
      %v4724 = vpop.f32.mrb[0].mxu0
      %v4725 = vadd.f32 0.0, %v4724
      %v4726 = vpop.f32.mrb[0].mxu0
      %v4727 = vpop.f32.mrb[0].mxu0
      %v4728 = vadd.f32 0.0, %v4727
      %v4729 = vpop.f32.mrb[0].mxu0
      %4730 = vmatprep.mubr.bf16.mxu0 0
      %4731 = vmatmul.mubr.bf16.gmra.mrb[0].mxu0 %v4641
      %v4732 = vpop.f32.mrb[0].mxu0
      %v4733 = vadd.f32 0.0, %v4732
      %v4734 = vpop.f32.mrb[0].mxu0
      %v4735 = vpop.f32.mrb[0].mxu0
      %v4736 = vadd.f32 0.0, %v4735
      %v4737 = vpop.f32.mrb[0].mxu0
      %4738 = vmatprep.mubr.bf16.mxu0 0
      %4739 = vmatmul.mubr.bf16.gmra.mrb[0].mxu0 %v4644
      %v4740 = vpop.f32.mrb[0].mxu0
      %v4741 = vadd.f32 0.0, %v4740
      %v4742 = vpop.f32.mrb[0].mxu0
      %v4743 = vpop.f32.mrb[0].mxu0
      %v4744 = vadd.f32 0.0, %v4743
      %v4745 = vpop.f32.mrb[0].mxu0
      %4746 = vmatprep.mubr.bf16.mxu0 0
      %4747 = vmatmul.mubr.bf16.gmra.mrb[0].mxu0 %v4647
      %v4748 = vpop.f32.mrb[0].mxu0
      %v4749 = vadd.f32 0.0, %v4748
      %v4750 = vpop.f32.mrb[0].mxu0
      %v4751 = vpop.f32.mrb[0].mxu0
      %v4752 = vadd.f32 0.0, %v4751
      %v4753 = vpop.f32.mrb[0].mxu0
      %4754 = vmatprep.mubr.bf16.mxu0 0
      %4755 = vmatmul.mubr.bf16.gmra.mrb[0].mxu0 %v4650
      %v4756 = vpop.f32.mrb[0].mxu0
      %v4757 = vadd.f32 0.0, %v4756
      %v4758 = vpop.f32.mrb[0].mxu0
      %v4759 = vpop.f32.mrb[0].mxu0
      %v4760 = vadd.f32 0.0, %v4759
      %v4761 = vpop.f32.mrb[0].mxu0
      %4762 = vmatprep.mubr.bf16.mxu0 0
      %4763 = vmatmul.mubr.bf16.gmra.mrb[0].mxu0 %v4653
      %v4764 = vpop.f32.mrb[0].mxu0
      %v4765 = vadd.f32 0.0, %v4764
      %v4766 = vpop.f32.mrb[0].mxu0
      %v4767 = vpop.f32.mrb[0].mxu0
      %v4768 = vadd.f32 0.0, %v4767
      %v4769 = vpop.f32.mrb[0].mxu0
      %4770 = vmatprep.mubr.bf16.mxu0 0
      %4771 = vmatmul.mubr.bf16.gmra.mrb[0].mxu0 %v4656
      %v4772 = vpop.f32.mrb[0].mxu0
      %v4773 = vadd.f32 0.0, %v4772
      %v4774 = vpop.f32.mrb[0].mxu0
      %v4775 = vpop.f32.mrb[0].mxu0
      %v4776 = vadd.f32 0.0, %v4775
      %v4777 = vpop.f32.mrb[0].mxu0
      %4778 = vmatprep.mubr.bf16.mxu0 0
      %4779 = vmatmul.mubr.bf16.gmra.mrb[0].mxu0 %v4659
      %v4780 = vpop.f32.mrb[0].mxu0
      %v4781 = vadd.f32 0.0, %v4780
      %v4782 = vpop.f32.mrb[0].mxu0
      %v4783 = vpop.f32.mrb[0].mxu0
      %v4784 = vadd.f32 0.0, %v4783
      %v4785 = vpop.f32.mrb[0].mxu0
      %4786 = vmatprep.mubr.bf16.mxu0 0
      %4787 = vmatmul.mubr.bf16.gmra.mrb[0].mxu0 %v4662
      %v4788 = vpop.f32.mrb[0].mxu0
      %v4789 = vadd.f32 0.0, %v4788
      %v4790 = vpop.f32.mrb[0].mxu0
      %v4791 = vpop.f32.mrb[0].mxu0
      %v4792 = vadd.f32 0.0, %v4791
      %v4793 = vpop.f32.mrb[0].mxu0
      %4794 = vmatprep.mubr.bf16.mxu0 0
      %4795 = vmatmul.mubr.bf16.gmra.mrb[0].mxu0 %v4665
      %v4796 = vpop.f32.mrb[0].mxu0
      %v4797 = vadd.f32 0.0, %v4796
      %v4798 = vpop.f32.mrb[0].mxu0
      %v4799 = vpop.f32.mrb[0].mxu0
      %v4800 = vadd.f32 0.0, %v4799
      %v4801 = vpop.f32.mrb[0].mxu0
      %4802 = vmatprep.mubr.bf16.mxu0 0
      %4803 = vmatmul.mubr.bf16.gmra.mrb[0].mxu0 %v4668
      %v4804 = vpop.f32.mrb[0].mxu0
      %v4805 = vadd.f32 0.0, %v4804
      %v4806 = vpop.f32.mrb[0].mxu0
      %v4807 = vpop.f32.mrb[0].mxu0
      %v4808 = vadd.f32 0.0, %v4807
      %v4809 = vpop.f32.mrb[0].mxu0
      %4810 = vmatprep.mubr.bf16.mxu0 0
      %4811 = vmatmul.mubr.bf16.gmra.mrb[0].mxu0 %v4671
      %v4812 = vpop.f32.mrb[0].mxu0
      %v4813 = vadd.f32 0.0, %v4812
      %v4814 = vpop.f32.mrb[0].mxu0
      %v4815 = vpop.f32.mrb[0].mxu0
      %v4816 = vadd.f32 0.0, %v4815
      %v4817 = vpop.f32.mrb[0].mxu0
      %4818 = vmatprep.mubr.bf16.mxu0 0
      %4819 = vmatmul.mubr.bf16.gmra.mrb[0].mxu0 %v4674
      %v4820 = vpop.f32.mrb[0].mxu0
      %v4821 = vadd.f32 0.0, %v4820
      %v4822 = vpop.f32.mrb[0].mxu0
      %v4823 = vpop.f32.mrb[0].mxu0
      %v4824 = vadd.f32 0.0, %v4823
      %v4825 = vpop.f32.mrb[0].mxu0
      %4826 = vmatprep.mubr.bf16.mxu0 0
      %4827 = vmatmul.mubr.bf16.gmra.mrb[0].mxu0 %v4677
      %v4828 = vpop.f32.mrb[0].mxu0
      %v4829 = vadd.f32 0.0, %v4828
      %v4830 = vpop.f32.mrb[0].mxu0
      %v4831 = vpop.f32.mrb[0].mxu0
      %v4832 = vadd.f32 0.0, %v4831
      %v4833 = vpop.f32.mrb[0].mxu0
      %4834 = vmatprep.mubr.bf16.mxu0 0
      %4835 = vmatmul.mubr.bf16.gmra.mrb[0].mxu0 %v4680
      %v4836 = vpop.f32.mrb[0].mxu0
      %v4837 = vadd.f32 0.0, %v4836
      %v4838 = vpop.f32.mrb[0].mxu0
      %v4839 = vpop.f32.mrb[0].mxu0
      %v4840 = vadd.f32 0.0, %v4839
      %v4841 = vpop.f32.mrb[0].mxu0
      %4842 = vdwg.mxu0
      %v4843 = vadd.f32 %v4280, %v4717
      %v4844 = vadd.f32 %v4281, %v4720
      %v4845 = vadd.f32 %v4282, %v4725
      %v4846 = vadd.f32 %v4283, %v4728
      %v4847 = vadd.f32 %v4284, %v4733
      %v4848 = vadd.f32 %v4285, %v4736
      %v4849 = vadd.f32 %v4286, %v4741
      %v4850 = vadd.f32 %v4287, %v4744
      %v4851 = vadd.f32 %v4288, %v4749
      %v4852 = vadd.f32 %v4289, %v4752
      %v4853 = vadd.f32 %v4290, %v4757
      %v4854 = vadd.f32 %v4291, %v4760
      %v4855 = vadd.f32 %v4292, %v4765
      %v4856 = vadd.f32 %v4293, %v4768
      %v4857 = vadd.f32 %v4294, %v4773
      %v4858 = vadd.f32 %v4295, %v4776
      %v4859 = vadd.f32 %v4296, %v4781
      %v4860 = vadd.f32 %v4297, %v4784
      %v4861 = vadd.f32 %v4298, %v4789
      %v4862 = vadd.f32 %v4299, %v4792
      %v4863 = vadd.f32 %v4300, %v4797
      %v4864 = vadd.f32 %v4301, %v4800
      %v4865 = vadd.f32 %v4302, %v4805
      %v4866 = vadd.f32 %v4303, %v4808
      %v4867 = vadd.f32 %v4304, %v4813
      %v4868 = vadd.f32 %v4305, %v4816
      %v4869 = vadd.f32 %v4306, %v4821
      %v4870 = vadd.f32 %v4307, %v4824
      %v4871 = vadd.f32 %v4308, %v4829
      %v4872 = vadd.f32 %v4309, %v4832
      %v4873 = vadd.f32 %v4310, %v4837
      %v4874 = vadd.f32 %v4311, %v4840
      %v4875 = vld [vmem:[%s3320] sm:$0xf8]
      %v4876 = vld [vmem:[%s3320 + $0x8] sm:$0xf]
      %v4877 = vld [vmem:[%s3320 + $0x10] sm:$0xf8]
      %v4878 = vld [vmem:[%s3320 + $0x18] sm:$0xf]
      %v4879 = vld [vmem:[%s3320 + $0x20] sm:$0xf8]
      %v4880 = vld [vmem:[%s3320 + $0x28] sm:$0xf]
      %v4881 = vld [vmem:[%s3320 + $0x30] sm:$0xf8]
      %v4882 = vld [vmem:[%s3320 + $0x38] sm:$0xf]
      %v4883 = vld [vmem:[%s3320 + $0x40] sm:$0xf8]
      %v4884 = vld [vmem:[%s3320 + $0x48] sm:$0xf]
      %v4885 = vld [vmem:[%s3320 + $0x50] sm:$0xf8]
      %v4886 = vld [vmem:[%s3320 + $0x58] sm:$0xf]
      %v4887 = vld [vmem:[%s3320 + $0x60] sm:$0xf8]
      %v4888 = vld [vmem:[%s3320 + $0x68] sm:$0xf]
      %v4889 = vld [vmem:[%s3320 + $0x70] sm:$0xf8]
      %v4890 = vld [vmem:[%s3320 + $0x78] sm:$0xf]
      %v4891 = vld [vmem:[%s3320 + $0x80] sm:$0xf8]
      %v4892 = vld [vmem:[%s3320 + $0x88] sm:$0xf]
      %v4893 = vld [vmem:[%s3320 + $0x90] sm:$0xf8]
      %v4894 = vld [vmem:[%s3320 + $0x98] sm:$0xf]
      %v4895 = vld [vmem:[%s3320 + $0xa0] sm:$0xf8]
      %v4896 = vld [vmem:[%s3320 + $0xa8] sm:$0xf]
      %v4897 = vld [vmem:[%s3320 + $0xb0] sm:$0xf8]
      %v4898 = vld [vmem:[%s3320 + $0xb8] sm:$0xf]
      %v4899 = vld [vmem:[%s3320 + $0xc0] sm:$0xf8]
      %v4900 = vld [vmem:[%s3320 + $0xc8] sm:$0xf]
      %v4901 = vld [vmem:[%s3320 + $0xd0] sm:$0xf8]
      %v4902 = vld [vmem:[%s3320 + $0xd8] sm:$0xf]
      %v4903 = vld [vmem:[%s3320 + $0xe0] sm:$0xf8]
      %v4904 = vld [vmem:[%s3320 + $0xe8] sm:$0xf]
      %v4905 = vld [vmem:[%s3320 + $0xf0] sm:$0xf8]
      %v4906 = vld [vmem:[%s3320 + $0xf8] sm:$0xf]
      %v4908 = vshrl.u32 %v4875, 16
      %v4910 = vrot.slane %v4908, 3
      %v4911 = vshll.u32 %v4875, 16
      %v4913 = vrot.slane %v4911, 4
      %v4914 = vor.u32 %v4910, %v4913
      %v4916 = vshrl.u32 %v4876, 16
      %v4918 = vrot.slane %v4916, 3
      %v4919 = vshll.u32 %v4876, 16
      %v4921 = vrot.slane %v4919, 4
      %v4922 = vor.u32 %v4918, %v4921
      %v4923 = vsel %vm3395, %v4914, %v4922
      %v4925 = vshrl.u32 %v4877, 16
      %v4927 = vrot.slane %v4925, 3
      %v4928 = vshll.u32 %v4877, 16
      %v4930 = vrot.slane %v4928, 4
      %v4931 = vor.u32 %v4927, %v4930
      %v4933 = vshrl.u32 %v4878, 16
      %v4935 = vrot.slane %v4933, 3
      %v4936 = vshll.u32 %v4878, 16
      %v4938 = vrot.slane %v4936, 4
      %v4939 = vor.u32 %v4935, %v4938
      %v4940 = vsel %vm3395, %v4931, %v4939
      %v4942 = vshrl.u32 %v4879, 16
      %v4944 = vrot.slane %v4942, 3
      %v4945 = vshll.u32 %v4879, 16
      %v4947 = vrot.slane %v4945, 4
      %v4948 = vor.u32 %v4944, %v4947
      %v4950 = vshrl.u32 %v4880, 16
      %v4952 = vrot.slane %v4950, 3
      %v4953 = vshll.u32 %v4880, 16
      %v4955 = vrot.slane %v4953, 4
      %v4956 = vor.u32 %v4952, %v4955
      %v4957 = vsel %vm3395, %v4948, %v4956
      %v4959 = vshrl.u32 %v4881, 16
      %v4961 = vrot.slane %v4959, 3
      %v4962 = vshll.u32 %v4881, 16
      %v4964 = vrot.slane %v4962, 4
      %v4965 = vor.u32 %v4961, %v4964
      %v4967 = vshrl.u32 %v4882, 16
      %v4969 = vrot.slane %v4967, 3
      %v4970 = vshll.u32 %v4882, 16
      %v4972 = vrot.slane %v4970, 4
      %v4973 = vor.u32 %v4969, %v4972
      %v4974 = vsel %vm3395, %v4965, %v4973
      %v4976 = vshrl.u32 %v4883, 16
      %v4978 = vrot.slane %v4976, 3
      %v4979 = vshll.u32 %v4883, 16
      %v4981 = vrot.slane %v4979, 4
      %v4982 = vor.u32 %v4978, %v4981
      %v4984 = vshrl.u32 %v4884, 16
      %v4986 = vrot.slane %v4984, 3
      %v4987 = vshll.u32 %v4884, 16
      %v4989 = vrot.slane %v4987, 4
      %v4990 = vor.u32 %v4986, %v4989
      %v4991 = vsel %vm3395, %v4982, %v4990
      %v4993 = vshrl.u32 %v4885, 16
      %v4995 = vrot.slane %v4993, 3
      %v4996 = vshll.u32 %v4885, 16
      %v4998 = vrot.slane %v4996, 4
      %v4999 = vor.u32 %v4995, %v4998
      %v5001 = vshrl.u32 %v4886, 16
      %v5003 = vrot.slane %v5001, 3
      %v5004 = vshll.u32 %v4886, 16
      %v5006 = vrot.slane %v5004, 4
      %v5007 = vor.u32 %v5003, %v5006
      %v5008 = vsel %vm3395, %v4999, %v5007
      %v5010 = vshrl.u32 %v4887, 16
      %v5012 = vrot.slane %v5010, 3
      %v5013 = vshll.u32 %v4887, 16
      %v5015 = vrot.slane %v5013, 4
      %v5016 = vor.u32 %v5012, %v5015
      %v5018 = vshrl.u32 %v4888, 16
      %v5020 = vrot.slane %v5018, 3
      %v5021 = vshll.u32 %v4888, 16
      %v5023 = vrot.slane %v5021, 4
      %v5024 = vor.u32 %v5020, %v5023
      %v5025 = vsel %vm3395, %v5016, %v5024
      %v5027 = vshrl.u32 %v4889, 16
      %v5029 = vrot.slane %v5027, 3
      %v5030 = vshll.u32 %v4889, 16
      %v5032 = vrot.slane %v5030, 4
      %v5033 = vor.u32 %v5029, %v5032
      %v5035 = vshrl.u32 %v4890, 16
      %v5037 = vrot.slane %v5035, 3
      %v5038 = vshll.u32 %v4890, 16
      %v5040 = vrot.slane %v5038, 4
      %v5041 = vor.u32 %v5037, %v5040
      %v5042 = vsel %vm3395, %v5033, %v5041
      %v5044 = vshrl.u32 %v4891, 16
      %v5046 = vrot.slane %v5044, 3
      %v5047 = vshll.u32 %v4891, 16
      %v5049 = vrot.slane %v5047, 4
      %v5050 = vor.u32 %v5046, %v5049
      %v5052 = vshrl.u32 %v4892, 16
      %v5054 = vrot.slane %v5052, 3
      %v5055 = vshll.u32 %v4892, 16
      %v5057 = vrot.slane %v5055, 4
      %v5058 = vor.u32 %v5054, %v5057
      %v5059 = vsel %vm3395, %v5050, %v5058
      %v5061 = vshrl.u32 %v4893, 16
      %v5063 = vrot.slane %v5061, 3
      %v5064 = vshll.u32 %v4893, 16
      %v5066 = vrot.slane %v5064, 4
      %v5067 = vor.u32 %v5063, %v5066
      %v5069 = vshrl.u32 %v4894, 16
      %v5071 = vrot.slane %v5069, 3
      %v5072 = vshll.u32 %v4894, 16
      %v5074 = vrot.slane %v5072, 4
      %v5075 = vor.u32 %v5071, %v5074
      %v5076 = vsel %vm3395, %v5067, %v5075
      %v5078 = vshrl.u32 %v4895, 16
      %v5080 = vrot.slane %v5078, 3
      %v5081 = vshll.u32 %v4895, 16
      %v5083 = vrot.slane %v5081, 4
      %v5084 = vor.u32 %v5080, %v5083
      %v5086 = vshrl.u32 %v4896, 16
      %v5088 = vrot.slane %v5086, 3
      %v5089 = vshll.u32 %v4896, 16
      %v5091 = vrot.slane %v5089, 4
      %v5092 = vor.u32 %v5088, %v5091
      %v5093 = vsel %vm3395, %v5084, %v5092
      %v5095 = vshrl.u32 %v4897, 16
      %v5097 = vrot.slane %v5095, 3
      %v5098 = vshll.u32 %v4897, 16
      %v5100 = vrot.slane %v5098, 4
      %v5101 = vor.u32 %v5097, %v5100
      %v5103 = vshrl.u32 %v4898, 16
      %v5105 = vrot.slane %v5103, 3
      %v5106 = vshll.u32 %v4898, 16
      %v5108 = vrot.slane %v5106, 4
      %v5109 = vor.u32 %v5105, %v5108
      %v5110 = vsel %vm3395, %v5101, %v5109
      %v5112 = vshrl.u32 %v4899, 16
      %v5114 = vrot.slane %v5112, 3
      %v5115 = vshll.u32 %v4899, 16
      %v5117 = vrot.slane %v5115, 4
      %v5118 = vor.u32 %v5114, %v5117
      %v5120 = vshrl.u32 %v4900, 16
      %v5122 = vrot.slane %v5120, 3
      %v5123 = vshll.u32 %v4900, 16
      %v5125 = vrot.slane %v5123, 4
      %v5126 = vor.u32 %v5122, %v5125
      %v5127 = vsel %vm3395, %v5118, %v5126
      %v5129 = vshrl.u32 %v4901, 16
      %v5131 = vrot.slane %v5129, 3
      %v5132 = vshll.u32 %v4901, 16
      %v5134 = vrot.slane %v5132, 4
      %v5135 = vor.u32 %v5131, %v5134
      %v5137 = vshrl.u32 %v4902, 16
      %v5139 = vrot.slane %v5137, 3
      %v5140 = vshll.u32 %v4902, 16
      %v5142 = vrot.slane %v5140, 4
      %v5143 = vor.u32 %v5139, %v5142
      %v5144 = vsel %vm3395, %v5135, %v5143
      %v5146 = vshrl.u32 %v4903, 16
      %v5148 = vrot.slane %v5146, 3
      %v5149 = vshll.u32 %v4903, 16
      %v5151 = vrot.slane %v5149, 4
      %v5152 = vor.u32 %v5148, %v5151
      %v5154 = vshrl.u32 %v4904, 16
      %v5156 = vrot.slane %v5154, 3
      %v5157 = vshll.u32 %v4904, 16
      %v5159 = vrot.slane %v5157, 4
      %v5160 = vor.u32 %v5156, %v5159
      %v5161 = vsel %vm3395, %v5152, %v5160
      %v5163 = vshrl.u32 %v4905, 16
      %v5165 = vrot.slane %v5163, 3
      %v5166 = vshll.u32 %v4905, 16
      %v5168 = vrot.slane %v5166, 4
      %v5169 = vor.u32 %v5165, %v5168
      %v5171 = vshrl.u32 %v4906, 16
      %v5173 = vrot.slane %v5171, 3
      %v5174 = vshll.u32 %v4906, 16
      %v5176 = vrot.slane %v5174, 4
      %v5177 = vor.u32 %v5173, %v5176
      %v5178 = vsel %vm3395, %v5169, %v5177
      %s5179 = scalar_lea.vmem %s3, 96
      %v5180 = vld [vmem:[%s5179] sm:$0xf]
      %v5181 = vld [vmem:[%s5179 + $0x4] sm:$0xf]
      %v5182 = vld [vmem:[%s5179 + $0x8] sm:$0xf]
      %v5183 = vld [vmem:[%s5179 + $0xc] sm:$0xf]
      %v5184 = vld [vmem:[%s5179 + $0x10] sm:$0xf]
      %v5185 = vld [vmem:[%s5179 + $0x14] sm:$0xf]
      %v5186 = vld [vmem:[%s5179 + $0x18] sm:$0xf]
      %v5187 = vld [vmem:[%s5179 + $0x1c] sm:$0xf]
      %v5196 = vunpack.c.l.b16 %v5180
      %v5197 = vunpack.c.l.b16 %v5181
      %v5198 = vunpack.c.l.b16 %v5182
      %v5199 = vunpack.c.l.b16 %v5183
      %v5200 = vunpack.c.l.b16 %v5184
      %v5201 = vunpack.c.l.b16 %v5185
      %v5202 = vunpack.c.l.b16 %v5186
      %v5203 = vunpack.c.l.b16 %v5187
      %v5204 = vpack.c.b16 %v5197, %v5196
      %v5205 = vpack.c.b16 %v5199, %v5198
      %v5206 = vpack.c.b16 %v5201, %v5200
      %v5207 = vpack.c.b16 %v5203, %v5202
      %v5213 = vsel %vm368, %v4923, 0
      %v5216 = vsel %vm368, %v4940, 0
      %v5219 = vsel %vm368, %v4957, 0
      %v5222 = vsel %vm368, %v4974, 0
      %v5225 = vsel %vm368, %v4991, 0
      %v5228 = vsel %vm368, %v5008, 0
      %v5231 = vsel %vm368, %v5025, 0
      %v5234 = vsel %vm368, %v5042, 0
      %v5237 = vsel %vm368, %v5059, 0
      %v5240 = vsel %vm368, %v5076, 0
      %v5243 = vsel %vm368, %v5093, 0
      %v5246 = vsel %vm368, %v5110, 0
      %v5249 = vsel %vm368, %v5127, 0
      %v5252 = vsel %vm368, %v5144, 0
      %v5255 = vsel %vm368, %v5161, 0
      %v5258 = vsel %vm368, %v5178, 0
      %5260 = vmatprep.subr.bf16.mxu0 0
      %5261 = vmatpush1.bf16.msra.mxu0 %v5204
      %5262 = vmatprep.subr.bf16.mxu0 0
      %5263 = vmatpush1.bf16.msra.mxu0 %v5205
      %5264 = vmatprep.subr.bf16.mxu0 0
      %5265 = vmatpush1.bf16.msra.mxu0 %v5206
      %5266 = vmatprep.subr.bf16.mxu0 0
      %5267 = vmatpush1.bf16.msra.mxu0 %v5207
      %5268 = vmatprep.subr.bf16.mxu0 0
      %5269 = vmatpush1.bf16.msra.mxu0 0
      %5270 = vmatprep.subr.bf16.mxu0 0
      %5271 = vmatpush1.bf16.msra.mxu0 0
      %5272 = vmatprep.subr.bf16.mxu0 0
      %5273 = vmatpush1.bf16.msra.mxu0 0
      %5274 = vmatprep.subr.bf16.mxu0 0
      %5275 = vmatpush1.bf16.msra.mxu0 0
      %5276 = vmatprep.subr.bf16.mxu0 0
      %5277 = vmatpush1.bf16.msra.mxu0 0
      %5278 = vmatprep.subr.bf16.mxu0 0
      %5279 = vmatpush1.bf16.msra.mxu0 0
      %5280 = vmatprep.subr.bf16.mxu0 0
      %5281 = vmatpush1.bf16.msra.mxu0 0
      %5282 = vmatprep.subr.bf16.mxu0 0
      %5283 = vmatpush1.bf16.msra.mxu0 0
      %5284 = vmatprep.subr.bf16.mxu0 0
      %5285 = vmatpush1.bf16.msra.mxu0 0
      %5286 = vmatprep.subr.bf16.mxu0 0
      %5287 = vmatpush1.bf16.msra.mxu0 0
      %5288 = vmatprep.subr.bf16.mxu0 0
      %5289 = vmatpush1.bf16.msra.mxu0 0
      %5290 = vmatprep.subr.bf16.mxu0 0
      %5291 = vmatpush1.bf16.msra.mxu0 0
      %5292 = vmatprep.mubr.bf16.mxu0 0
      %5293 = vmatmul.mubr.bf16.gmra.mrb[0].mxu0 %v5213
      %v5294 = vpop.f32.mrb[0].mxu0
      %v5295 = vadd.f32 0.0, %v5294
      %v5296 = vpop.f32.mrb[0].mxu0
      %v5297 = vpop.f32.mrb[0].mxu0
      %v5298 = vadd.f32 0.0, %v5297
      %v5299 = vpop.f32.mrb[0].mxu0
      %5300 = vmatprep.mubr.bf16.mxu0 0
      %5301 = vmatmul.mubr.bf16.gmra.mrb[0].mxu0 %v5216
      %v5302 = vpop.f32.mrb[0].mxu0
      %v5303 = vadd.f32 0.0, %v5302
      %v5304 = vpop.f32.mrb[0].mxu0
      %v5305 = vpop.f32.mrb[0].mxu0
      %v5306 = vadd.f32 0.0, %v5305
      %v5307 = vpop.f32.mrb[0].mxu0
      %5308 = vmatprep.mubr.bf16.mxu0 0
      %5309 = vmatmul.mubr.bf16.gmra.mrb[0].mxu0 %v5219
      %v5310 = vpop.f32.mrb[0].mxu0
      %v5311 = vadd.f32 0.0, %v5310
      %v5312 = vpop.f32.mrb[0].mxu0
      %v5313 = vpop.f32.mrb[0].mxu0
      %v5314 = vadd.f32 0.0, %v5313
      %v5315 = vpop.f32.mrb[0].mxu0
      %5316 = vmatprep.mubr.bf16.mxu0 0
      %5317 = vmatmul.mubr.bf16.gmra.mrb[0].mxu0 %v5222
      %v5318 = vpop.f32.mrb[0].mxu0
      %v5319 = vadd.f32 0.0, %v5318
      %v5320 = vpop.f32.mrb[0].mxu0
      %v5321 = vpop.f32.mrb[0].mxu0
      %v5322 = vadd.f32 0.0, %v5321
      %v5323 = vpop.f32.mrb[0].mxu0
      %5324 = vmatprep.mubr.bf16.mxu0 0
      %5325 = vmatmul.mubr.bf16.gmra.mrb[0].mxu0 %v5225
      %v5326 = vpop.f32.mrb[0].mxu0
      %v5327 = vadd.f32 0.0, %v5326
      %v5328 = vpop.f32.mrb[0].mxu0
      %v5329 = vpop.f32.mrb[0].mxu0
      %v5330 = vadd.f32 0.0, %v5329
      %v5331 = vpop.f32.mrb[0].mxu0
      %5332 = vmatprep.mubr.bf16.mxu0 0
      %5333 = vmatmul.mubr.bf16.gmra.mrb[0].mxu0 %v5228
      %v5334 = vpop.f32.mrb[0].mxu0
      %v5335 = vadd.f32 0.0, %v5334
      %v5336 = vpop.f32.mrb[0].mxu0
      %v5337 = vpop.f32.mrb[0].mxu0
      %v5338 = vadd.f32 0.0, %v5337
      %v5339 = vpop.f32.mrb[0].mxu0
      %5340 = vmatprep.mubr.bf16.mxu0 0
      %5341 = vmatmul.mubr.bf16.gmra.mrb[0].mxu0 %v5231
      %v5342 = vpop.f32.mrb[0].mxu0
      %v5343 = vadd.f32 0.0, %v5342
      %v5344 = vpop.f32.mrb[0].mxu0
      %v5345 = vpop.f32.mrb[0].mxu0
      %v5346 = vadd.f32 0.0, %v5345
      %v5347 = vpop.f32.mrb[0].mxu0
      %5348 = vmatprep.mubr.bf16.mxu0 0
      %5349 = vmatmul.mubr.bf16.gmra.mrb[0].mxu0 %v5234
      %v5350 = vpop.f32.mrb[0].mxu0
      %v5351 = vadd.f32 0.0, %v5350
      %v5352 = vpop.f32.mrb[0].mxu0
      %v5353 = vpop.f32.mrb[0].mxu0
      %v5354 = vadd.f32 0.0, %v5353
      %v5355 = vpop.f32.mrb[0].mxu0
      %5356 = vmatprep.mubr.bf16.mxu0 0
      %5357 = vmatmul.mubr.bf16.gmra.mrb[0].mxu0 %v5237
      %v5358 = vpop.f32.mrb[0].mxu0
      %v5359 = vadd.f32 0.0, %v5358
      %v5360 = vpop.f32.mrb[0].mxu0
      %v5361 = vpop.f32.mrb[0].mxu0
      %v5362 = vadd.f32 0.0, %v5361
      %v5363 = vpop.f32.mrb[0].mxu0
      %5364 = vmatprep.mubr.bf16.mxu0 0
      %5365 = vmatmul.mubr.bf16.gmra.mrb[0].mxu0 %v5240
      %v5366 = vpop.f32.mrb[0].mxu0
      %v5367 = vadd.f32 0.0, %v5366
      %v5368 = vpop.f32.mrb[0].mxu0
      %v5369 = vpop.f32.mrb[0].mxu0
      %v5370 = vadd.f32 0.0, %v5369
      %v5371 = vpop.f32.mrb[0].mxu0
      %5372 = vmatprep.mubr.bf16.mxu0 0
      %5373 = vmatmul.mubr.bf16.gmra.mrb[0].mxu0 %v5243
      %v5374 = vpop.f32.mrb[0].mxu0
      %v5375 = vadd.f32 0.0, %v5374
      %v5376 = vpop.f32.mrb[0].mxu0
      %v5377 = vpop.f32.mrb[0].mxu0
      %v5378 = vadd.f32 0.0, %v5377
      %v5379 = vpop.f32.mrb[0].mxu0
      %5380 = vmatprep.mubr.bf16.mxu0 0
      %5381 = vmatmul.mubr.bf16.gmra.mrb[0].mxu0 %v5246
      %v5382 = vpop.f32.mrb[0].mxu0
      %v5383 = vadd.f32 0.0, %v5382
      %v5384 = vpop.f32.mrb[0].mxu0
      %v5385 = vpop.f32.mrb[0].mxu0
      %v5386 = vadd.f32 0.0, %v5385
      %v5387 = vpop.f32.mrb[0].mxu0
      %5388 = vmatprep.mubr.bf16.mxu0 0
      %5389 = vmatmul.mubr.bf16.gmra.mrb[0].mxu0 %v5249
      %v5390 = vpop.f32.mrb[0].mxu0
      %v5391 = vadd.f32 0.0, %v5390
      %v5392 = vpop.f32.mrb[0].mxu0
      %v5393 = vpop.f32.mrb[0].mxu0
      %v5394 = vadd.f32 0.0, %v5393
      %v5395 = vpop.f32.mrb[0].mxu0
      %5396 = vmatprep.mubr.bf16.mxu0 0
      %5397 = vmatmul.mubr.bf16.gmra.mrb[0].mxu0 %v5252
      %v5398 = vpop.f32.mrb[0].mxu0
      %v5399 = vadd.f32 0.0, %v5398
      %v5400 = vpop.f32.mrb[0].mxu0
      %v5401 = vpop.f32.mrb[0].mxu0
      %v5402 = vadd.f32 0.0, %v5401
      %v5403 = vpop.f32.mrb[0].mxu0
      %5404 = vmatprep.mubr.bf16.mxu0 0
      %5405 = vmatmul.mubr.bf16.gmra.mrb[0].mxu0 %v5255
      %v5406 = vpop.f32.mrb[0].mxu0
      %v5407 = vadd.f32 0.0, %v5406
      %v5408 = vpop.f32.mrb[0].mxu0
      %v5409 = vpop.f32.mrb[0].mxu0
      %v5410 = vadd.f32 0.0, %v5409
      %v5411 = vpop.f32.mrb[0].mxu0
      %5412 = vmatprep.mubr.bf16.mxu0 0
      %5413 = vmatmul.mubr.bf16.gmra.mrb[0].mxu0 %v5258
      %v5414 = vpop.f32.mrb[0].mxu0
      %v5415 = vadd.f32 0.0, %v5414
      %v5416 = vpop.f32.mrb[0].mxu0
      %v5417 = vpop.f32.mrb[0].mxu0
      %v5418 = vadd.f32 0.0, %v5417
      %v5419 = vpop.f32.mrb[0].mxu0
      %5420 = vdwg.mxu0
      %v5421 = vadd.f32 %v4843, %v5295
      %v5422 = vadd.f32 %v4844, %v5298
      %v5423 = vadd.f32 %v4845, %v5303
      %v5424 = vadd.f32 %v4846, %v5306
      %v5425 = vadd.f32 %v4847, %v5311
      %v5426 = vadd.f32 %v4848, %v5314
      %v5427 = vadd.f32 %v4849, %v5319
      %v5428 = vadd.f32 %v4850, %v5322
      %v5429 = vadd.f32 %v4851, %v5327
      %v5430 = vadd.f32 %v4852, %v5330
      %v5431 = vadd.f32 %v4853, %v5335
      %v5432 = vadd.f32 %v4854, %v5338
      %v5433 = vadd.f32 %v4855, %v5343
      %v5434 = vadd.f32 %v4856, %v5346
      %v5435 = vadd.f32 %v4857, %v5351
      %v5436 = vadd.f32 %v4858, %v5354
      %v5437 = vadd.f32 %v4859, %v5359
      %v5438 = vadd.f32 %v4860, %v5362
      %v5439 = vadd.f32 %v4861, %v5367
      %v5440 = vadd.f32 %v4862, %v5370
      %v5441 = vadd.f32 %v4863, %v5375
      %v5442 = vadd.f32 %v4864, %v5378
      %v5443 = vadd.f32 %v4865, %v5383
      %v5444 = vadd.f32 %v4866, %v5386
      %v5445 = vadd.f32 %v4867, %v5391
      %v5446 = vadd.f32 %v4868, %v5394
      %v5447 = vadd.f32 %v4869, %v5399
      %v5448 = vadd.f32 %v4870, %v5402
      %v5449 = vadd.f32 %v4871, %v5407
      %v5450 = vadd.f32 %v4872, %v5410
      %v5451 = vadd.f32 %v4873, %v5415
      %v5452 = vadd.f32 %v4874, %v5418
      %v5453 = vld [vmem:[%s3320] sm:$0xf0]
      %v5454 = vld [vmem:[%s3320 + $0x10] sm:$0xf0]
      %v5455 = vld [vmem:[%s3320 + $0x20] sm:$0xf0]
      %v5456 = vld [vmem:[%s3320 + $0x30] sm:$0xf0]
      %v5457 = vld [vmem:[%s3320 + $0x40] sm:$0xf0]
      %v5458 = vld [vmem:[%s3320 + $0x50] sm:$0xf0]
      %v5459 = vld [vmem:[%s3320 + $0x60] sm:$0xf0]
      %v5460 = vld [vmem:[%s3320 + $0x70] sm:$0xf0]
      %v5461 = vld [vmem:[%s3320 + $0x80] sm:$0xf0]
      %v5462 = vld [vmem:[%s3320 + $0x90] sm:$0xf0]
      %v5463 = vld [vmem:[%s3320 + $0xa0] sm:$0xf0]
      %v5464 = vld [vmem:[%s3320 + $0xb0] sm:$0xf0]
      %v5465 = vld [vmem:[%s3320 + $0xc0] sm:$0xf0]
      %v5466 = vld [vmem:[%s3320 + $0xd0] sm:$0xf0]
      %v5467 = vld [vmem:[%s3320 + $0xe0] sm:$0xf0]
      %v5468 = vld [vmem:[%s3320 + $0xf0] sm:$0xf0]
      %v5501 = vrot.slane %v5453, 4
      %v5502 = vrot.slane %v4876, 4
      %v5503 = vsel %vm3989, %v5501, %v5502
      %v5504 = vrot.slane %v5454, 4
      %v5505 = vrot.slane %v4878, 4
      %v5506 = vsel %vm3989, %v5504, %v5505
      %v5507 = vrot.slane %v5455, 4
      %v5508 = vrot.slane %v4880, 4
      %v5509 = vsel %vm3989, %v5507, %v5508
      %v5510 = vrot.slane %v5456, 4
      %v5511 = vrot.slane %v4882, 4
      %v5512 = vsel %vm3989, %v5510, %v5511
      %v5513 = vrot.slane %v5457, 4
      %v5514 = vrot.slane %v4884, 4
      %v5515 = vsel %vm3989, %v5513, %v5514
      %v5516 = vrot.slane %v5458, 4
      %v5517 = vrot.slane %v4886, 4
      %v5518 = vsel %vm3989, %v5516, %v5517
      %v5519 = vrot.slane %v5459, 4
      %v5520 = vrot.slane %v4888, 4
      %v5521 = vsel %vm3989, %v5519, %v5520
      %v5522 = vrot.slane %v5460, 4
      %v5523 = vrot.slane %v4890, 4
      %v5524 = vsel %vm3989, %v5522, %v5523
      %v5525 = vrot.slane %v5461, 4
      %v5526 = vrot.slane %v4892, 4
      %v5527 = vsel %vm3989, %v5525, %v5526
      %v5528 = vrot.slane %v5462, 4
      %v5529 = vrot.slane %v4894, 4
      %v5530 = vsel %vm3989, %v5528, %v5529
      %v5531 = vrot.slane %v5463, 4
      %v5532 = vrot.slane %v4896, 4
      %v5533 = vsel %vm3989, %v5531, %v5532
      %v5534 = vrot.slane %v5464, 4
      %v5535 = vrot.slane %v4898, 4
      %v5536 = vsel %vm3989, %v5534, %v5535
      %v5537 = vrot.slane %v5465, 4
      %v5538 = vrot.slane %v4900, 4
      %v5539 = vsel %vm3989, %v5537, %v5538
      %v5540 = vrot.slane %v5466, 4
      %v5541 = vrot.slane %v4902, 4
      %v5542 = vsel %vm3989, %v5540, %v5541
      %v5543 = vrot.slane %v5467, 4
      %v5544 = vrot.slane %v4904, 4
      %v5545 = vsel %vm3989, %v5543, %v5544
      %v5546 = vrot.slane %v5468, 4
      %v5547 = vrot.slane %v4906, 4
      %v5548 = vsel %vm3989, %v5546, %v5547
      %s5549 = scalar_lea.vmem %s3, 128
      %v5550 = vld [vmem:[%s5549] sm:$0xf]
      %v5551 = vld [vmem:[%s5549 + $0x4] sm:$0xf]
      %v5552 = vld [vmem:[%s5549 + $0x8] sm:$0xf]
      %v5553 = vld [vmem:[%s5549 + $0xc] sm:$0xf]
      %v5554 = vld [vmem:[%s5549 + $0x10] sm:$0xf]
      %v5555 = vld [vmem:[%s5549 + $0x14] sm:$0xf]
      %v5556 = vld [vmem:[%s5549 + $0x18] sm:$0xf]
      %v5557 = vld [vmem:[%s5549 + $0x1c] sm:$0xf]
      %v5566 = vunpack.c.l.b16 %v5550
      %v5567 = vunpack.c.l.b16 %v5551
      %v5568 = vunpack.c.l.b16 %v5552
      %v5569 = vunpack.c.l.b16 %v5553
      %v5570 = vunpack.c.l.b16 %v5554
      %v5571 = vunpack.c.l.b16 %v5555
      %v5572 = vunpack.c.l.b16 %v5556
      %v5573 = vunpack.c.l.b16 %v5557
      %v5574 = vpack.c.b16 %v5567, %v5566
      %v5575 = vpack.c.b16 %v5569, %v5568
      %v5576 = vpack.c.b16 %v5571, %v5570
      %v5577 = vpack.c.b16 %v5573, %v5572
      %v5583 = vsel %vm368, %v5503, 0
      %v5586 = vsel %vm368, %v5506, 0
      %v5589 = vsel %vm368, %v5509, 0
      %v5592 = vsel %vm368, %v5512, 0
      %v5595 = vsel %vm368, %v5515, 0
      %v5598 = vsel %vm368, %v5518, 0
      %v5601 = vsel %vm368, %v5521, 0
      %v5604 = vsel %vm368, %v5524, 0
      %v5607 = vsel %vm368, %v5527, 0
      %v5610 = vsel %vm368, %v5530, 0
      %v5613 = vsel %vm368, %v5533, 0
      %v5616 = vsel %vm368, %v5536, 0
      %v5619 = vsel %vm368, %v5539, 0
      %v5622 = vsel %vm368, %v5542, 0
      %v5625 = vsel %vm368, %v5545, 0
      %v5628 = vsel %vm368, %v5548, 0
      %5630 = vmatprep.subr.bf16.mxu0 0
      %5631 = vmatpush1.bf16.msra.mxu0 %v5574
      %5632 = vmatprep.subr.bf16.mxu0 0
      %5633 = vmatpush1.bf16.msra.mxu0 %v5575
      %5634 = vmatprep.subr.bf16.mxu0 0
      %5635 = vmatpush1.bf16.msra.mxu0 %v5576
      %5636 = vmatprep.subr.bf16.mxu0 0
      %5637 = vmatpush1.bf16.msra.mxu0 %v5577
      %5638 = vmatprep.subr.bf16.mxu0 0
      %5639 = vmatpush1.bf16.msra.mxu0 0
      %5640 = vmatprep.subr.bf16.mxu0 0
      %5641 = vmatpush1.bf16.msra.mxu0 0
      %5642 = vmatprep.subr.bf16.mxu0 0
      %5643 = vmatpush1.bf16.msra.mxu0 0
      %5644 = vmatprep.subr.bf16.mxu0 0
      %5645 = vmatpush1.bf16.msra.mxu0 0
      %5646 = vmatprep.subr.bf16.mxu0 0
      %5647 = vmatpush1.bf16.msra.mxu0 0
      %5648 = vmatprep.subr.bf16.mxu0 0
      %5649 = vmatpush1.bf16.msra.mxu0 0
      %5650 = vmatprep.subr.bf16.mxu0 0
      %5651 = vmatpush1.bf16.msra.mxu0 0
      %5652 = vmatprep.subr.bf16.mxu0 0
      %5653 = vmatpush1.bf16.msra.mxu0 0
      %5654 = vmatprep.subr.bf16.mxu0 0
      %5655 = vmatpush1.bf16.msra.mxu0 0
      %5656 = vmatprep.subr.bf16.mxu0 0
      %5657 = vmatpush1.bf16.msra.mxu0 0
      %5658 = vmatprep.subr.bf16.mxu0 0
      %5659 = vmatpush1.bf16.msra.mxu0 0
      %5660 = vmatprep.subr.bf16.mxu0 0
      %5661 = vmatpush1.bf16.msra.mxu0 0
      %5662 = vmatprep.mubr.bf16.mxu0 0
      %5663 = vmatmul.mubr.bf16.gmra.mrb[0].mxu0 %v5583
      %v5664 = vpop.f32.mrb[0].mxu0
      %v5665 = vadd.f32 0.0, %v5664
      %v5666 = vpop.f32.mrb[0].mxu0
      %v5667 = vpop.f32.mrb[0].mxu0
      %v5668 = vadd.f32 0.0, %v5667
      %v5669 = vpop.f32.mrb[0].mxu0
      %5670 = vmatprep.mubr.bf16.mxu0 0
      %5671 = vmatmul.mubr.bf16.gmra.mrb[0].mxu0 %v5586
      %v5672 = vpop.f32.mrb[0].mxu0
      %v5673 = vadd.f32 0.0, %v5672
      %v5674 = vpop.f32.mrb[0].mxu0
      %v5675 = vpop.f32.mrb[0].mxu0
      %v5676 = vadd.f32 0.0, %v5675
      %v5677 = vpop.f32.mrb[0].mxu0
      %5678 = vmatprep.mubr.bf16.mxu0 0
      %5679 = vmatmul.mubr.bf16.gmra.mrb[0].mxu0 %v5589
      %v5680 = vpop.f32.mrb[0].mxu0
      %v5681 = vadd.f32 0.0, %v5680
      %v5682 = vpop.f32.mrb[0].mxu0
      %v5683 = vpop.f32.mrb[0].mxu0
      %v5684 = vadd.f32 0.0, %v5683
      %v5685 = vpop.f32.mrb[0].mxu0
      %5686 = vmatprep.mubr.bf16.mxu0 0
      %5687 = vmatmul.mubr.bf16.gmra.mrb[0].mxu0 %v5592
      %v5688 = vpop.f32.mrb[0].mxu0
      %v5689 = vadd.f32 0.0, %v5688
      %v5690 = vpop.f32.mrb[0].mxu0
      %v5691 = vpop.f32.mrb[0].mxu0
      %v5692 = vadd.f32 0.0, %v5691
      %v5693 = vpop.f32.mrb[0].mxu0
      %5694 = vmatprep.mubr.bf16.mxu0 0
      %5695 = vmatmul.mubr.bf16.gmra.mrb[0].mxu0 %v5595
      %v5696 = vpop.f32.mrb[0].mxu0
      %v5697 = vadd.f32 0.0, %v5696
      %v5698 = vpop.f32.mrb[0].mxu0
      %v5699 = vpop.f32.mrb[0].mxu0
      %v5700 = vadd.f32 0.0, %v5699
      %v5701 = vpop.f32.mrb[0].mxu0
      %5702 = vmatprep.mubr.bf16.mxu0 0
      %5703 = vmatmul.mubr.bf16.gmra.mrb[0].mxu0 %v5598
      %v5704 = vpop.f32.mrb[0].mxu0
      %v5705 = vadd.f32 0.0, %v5704
      %v5706 = vpop.f32.mrb[0].mxu0
      %v5707 = vpop.f32.mrb[0].mxu0
      %v5708 = vadd.f32 0.0, %v5707
      %v5709 = vpop.f32.mrb[0].mxu0
      %5710 = vmatprep.mubr.bf16.mxu0 0
      %5711 = vmatmul.mubr.bf16.gmra.mrb[0].mxu0 %v5601
      %v5712 = vpop.f32.mrb[0].mxu0
      %v5713 = vadd.f32 0.0, %v5712
      %v5714 = vpop.f32.mrb[0].mxu0
      %v5715 = vpop.f32.mrb[0].mxu0
      %v5716 = vadd.f32 0.0, %v5715
      %v5717 = vpop.f32.mrb[0].mxu0
      %5718 = vmatprep.mubr.bf16.mxu0 0
      %5719 = vmatmul.mubr.bf16.gmra.mrb[0].mxu0 %v5604
      %v5720 = vpop.f32.mrb[0].mxu0
      %v5721 = vadd.f32 0.0, %v5720
      %v5722 = vpop.f32.mrb[0].mxu0
      %v5723 = vpop.f32.mrb[0].mxu0
      %v5724 = vadd.f32 0.0, %v5723
      %v5725 = vpop.f32.mrb[0].mxu0
      %5726 = vmatprep.mubr.bf16.mxu0 0
      %5727 = vmatmul.mubr.bf16.gmra.mrb[0].mxu0 %v5607
      %v5728 = vpop.f32.mrb[0].mxu0
      %v5729 = vadd.f32 0.0, %v5728
      %v5730 = vpop.f32.mrb[0].mxu0
      %v5731 = vpop.f32.mrb[0].mxu0
      %v5732 = vadd.f32 0.0, %v5731
      %v5733 = vpop.f32.mrb[0].mxu0
      %5734 = vmatprep.mubr.bf16.mxu0 0
      %5735 = vmatmul.mubr.bf16.gmra.mrb[0].mxu0 %v5610
      %v5736 = vpop.f32.mrb[0].mxu0
      %v5737 = vadd.f32 0.0, %v5736
      %v5738 = vpop.f32.mrb[0].mxu0
      %v5739 = vpop.f32.mrb[0].mxu0
      %v5740 = vadd.f32 0.0, %v5739
      %v5741 = vpop.f32.mrb[0].mxu0
      %5742 = vmatprep.mubr.bf16.mxu0 0
      %5743 = vmatmul.mubr.bf16.gmra.mrb[0].mxu0 %v5613
      %v5744 = vpop.f32.mrb[0].mxu0
      %v5745 = vadd.f32 0.0, %v5744
      %v5746 = vpop.f32.mrb[0].mxu0
      %v5747 = vpop.f32.mrb[0].mxu0
      %v5748 = vadd.f32 0.0, %v5747
      %v5749 = vpop.f32.mrb[0].mxu0
      %5750 = vmatprep.mubr.bf16.mxu0 0
      %5751 = vmatmul.mubr.bf16.gmra.mrb[0].mxu0 %v5616
      %v5752 = vpop.f32.mrb[0].mxu0
      %v5753 = vadd.f32 0.0, %v5752
      %v5754 = vpop.f32.mrb[0].mxu0
      %v5755 = vpop.f32.mrb[0].mxu0
      %v5756 = vadd.f32 0.0, %v5755
      %v5757 = vpop.f32.mrb[0].mxu0
      %5758 = vmatprep.mubr.bf16.mxu0 0
      %5759 = vmatmul.mubr.bf16.gmra.mrb[0].mxu0 %v5619
      %v5760 = vpop.f32.mrb[0].mxu0
      %v5761 = vadd.f32 0.0, %v5760
      %v5762 = vpop.f32.mrb[0].mxu0
      %v5763 = vpop.f32.mrb[0].mxu0
      %v5764 = vadd.f32 0.0, %v5763
      %v5765 = vpop.f32.mrb[0].mxu0
      %5766 = vmatprep.mubr.bf16.mxu0 0
      %5767 = vmatmul.mubr.bf16.gmra.mrb[0].mxu0 %v5622
      %v5768 = vpop.f32.mrb[0].mxu0
      %v5769 = vadd.f32 0.0, %v5768
      %v5770 = vpop.f32.mrb[0].mxu0
      %v5771 = vpop.f32.mrb[0].mxu0
      %v5772 = vadd.f32 0.0, %v5771
      %v5773 = vpop.f32.mrb[0].mxu0
      %5774 = vmatprep.mubr.bf16.mxu0 0
      %5775 = vmatmul.mubr.bf16.gmra.mrb[0].mxu0 %v5625
      %v5776 = vpop.f32.mrb[0].mxu0
      %v5777 = vadd.f32 0.0, %v5776
      %v5778 = vpop.f32.mrb[0].mxu0
      %v5779 = vpop.f32.mrb[0].mxu0
      %v5780 = vadd.f32 0.0, %v5779
      %v5781 = vpop.f32.mrb[0].mxu0
      %5782 = vmatprep.mubr.bf16.mxu0 0
      %5783 = vmatmul.mubr.bf16.gmra.mrb[0].mxu0 %v5628
      %v5784 = vpop.f32.mrb[0].mxu0
      %v5785 = vadd.f32 0.0, %v5784
      %v5786 = vpop.f32.mrb[0].mxu0
      %v5787 = vpop.f32.mrb[0].mxu0
      %v5788 = vadd.f32 0.0, %v5787
      %v5789 = vpop.f32.mrb[0].mxu0
      %5790 = vdwg.mxu0
      %v5791 = vadd.f32 %v5421, %v5665
      %v5792 = vadd.f32 %v5422, %v5668
      %v5793 = vadd.f32 %v5423, %v5673
      %v5794 = vadd.f32 %v5424, %v5676
      %v5795 = vadd.f32 %v5425, %v5681
      %v5796 = vadd.f32 %v5426, %v5684
      %v5797 = vadd.f32 %v5427, %v5689
      %v5798 = vadd.f32 %v5428, %v5692
      %v5799 = vadd.f32 %v5429, %v5697
      %v5800 = vadd.f32 %v5430, %v5700
      %v5801 = vadd.f32 %v5431, %v5705
      %v5802 = vadd.f32 %v5432, %v5708
      %v5803 = vadd.f32 %v5433, %v5713
      %v5804 = vadd.f32 %v5434, %v5716
      %v5805 = vadd.f32 %v5435, %v5721
      %v5806 = vadd.f32 %v5436, %v5724
      %v5807 = vadd.f32 %v5437, %v5729
      %v5808 = vadd.f32 %v5438, %v5732
      %v5809 = vadd.f32 %v5439, %v5737
      %v5810 = vadd.f32 %v5440, %v5740
      %v5811 = vadd.f32 %v5441, %v5745
      %v5812 = vadd.f32 %v5442, %v5748
      %v5813 = vadd.f32 %v5443, %v5753
      %v5814 = vadd.f32 %v5444, %v5756
      %v5815 = vadd.f32 %v5445, %v5761
      %v5816 = vadd.f32 %v5446, %v5764
      %v5817 = vadd.f32 %v5447, %v5769
      %v5818 = vadd.f32 %v5448, %v5772
      %v5819 = vadd.f32 %v5449, %v5777
      %v5820 = vadd.f32 %v5450, %v5780
      %v5821 = vadd.f32 %v5451, %v5785
      %v5822 = vadd.f32 %v5452, %v5788
      %v5823 = vld [vmem:[%s3320 + $0x8] sm:$0x1f]
      %v5824 = vld [vmem:[%s3320 + $0x18] sm:$0x1f]
      %v5825 = vld [vmem:[%s3320 + $0x28] sm:$0x1f]
      %v5826 = vld [vmem:[%s3320 + $0x38] sm:$0x1f]
      %v5827 = vld [vmem:[%s3320 + $0x48] sm:$0x1f]
      %v5828 = vld [vmem:[%s3320 + $0x58] sm:$0x1f]
      %v5829 = vld [vmem:[%s3320 + $0x68] sm:$0x1f]
      %v5830 = vld [vmem:[%s3320 + $0x78] sm:$0x1f]
      %v5831 = vld [vmem:[%s3320 + $0x88] sm:$0x1f]
      %v5832 = vld [vmem:[%s3320 + $0x98] sm:$0x1f]
      %v5833 = vld [vmem:[%s3320 + $0xa8] sm:$0x1f]
      %v5834 = vld [vmem:[%s3320 + $0xb8] sm:$0x1f]
      %v5835 = vld [vmem:[%s3320 + $0xc8] sm:$0x1f]
      %v5836 = vld [vmem:[%s3320 + $0xd8] sm:$0x1f]
      %v5837 = vld [vmem:[%s3320 + $0xe8] sm:$0x1f]
      %v5838 = vld [vmem:[%s3320 + $0xf8] sm:$0x1f]
      %v5840 = vshrl.u32 %v5453, 16
      %v5842 = vrot.slane %v5840, 4
      %v5843 = vshll.u32 %v5453, 16
      %v5845 = vrot.slane %v5843, 5
      %v5846 = vor.u32 %v5842, %v5845
      %v5848 = vshrl.u32 %v5823, 16
      %v5850 = vrot.slane %v5848, 4
      %v5851 = vshll.u32 %v5823, 16
      %v5853 = vrot.slane %v5851, 5
      %v5854 = vor.u32 %v5850, %v5853
      %v5855 = vsel %vm4328, %v5846, %v5854
      %v5857 = vshrl.u32 %v5454, 16
      %v5859 = vrot.slane %v5857, 4
      %v5860 = vshll.u32 %v5454, 16
      %v5862 = vrot.slane %v5860, 5
      %v5863 = vor.u32 %v5859, %v5862
      %v5865 = vshrl.u32 %v5824, 16
      %v5867 = vrot.slane %v5865, 4
      %v5868 = vshll.u32 %v5824, 16
      %v5870 = vrot.slane %v5868, 5
      %v5871 = vor.u32 %v5867, %v5870
      %v5872 = vsel %vm4328, %v5863, %v5871
      %v5874 = vshrl.u32 %v5455, 16
      %v5876 = vrot.slane %v5874, 4
      %v5877 = vshll.u32 %v5455, 16
      %v5879 = vrot.slane %v5877, 5
      %v5880 = vor.u32 %v5876, %v5879
      %v5882 = vshrl.u32 %v5825, 16
      %v5884 = vrot.slane %v5882, 4
      %v5885 = vshll.u32 %v5825, 16
      %v5887 = vrot.slane %v5885, 5
      %v5888 = vor.u32 %v5884, %v5887
      %v5889 = vsel %vm4328, %v5880, %v5888
      %v5891 = vshrl.u32 %v5456, 16
      %v5893 = vrot.slane %v5891, 4
      %v5894 = vshll.u32 %v5456, 16
      %v5896 = vrot.slane %v5894, 5
      %v5897 = vor.u32 %v5893, %v5896
      %v5899 = vshrl.u32 %v5826, 16
      %v5901 = vrot.slane %v5899, 4
      %v5902 = vshll.u32 %v5826, 16
      %v5904 = vrot.slane %v5902, 5
      %v5905 = vor.u32 %v5901, %v5904
      %v5906 = vsel %vm4328, %v5897, %v5905
      %v5908 = vshrl.u32 %v5457, 16
      %v5910 = vrot.slane %v5908, 4
      %v5911 = vshll.u32 %v5457, 16
      %v5913 = vrot.slane %v5911, 5
      %v5914 = vor.u32 %v5910, %v5913
      %v5916 = vshrl.u32 %v5827, 16
      %v5918 = vrot.slane %v5916, 4
      %v5919 = vshll.u32 %v5827, 16
      %v5921 = vrot.slane %v5919, 5
      %v5922 = vor.u32 %v5918, %v5921
      %v5923 = vsel %vm4328, %v5914, %v5922
      %v5925 = vshrl.u32 %v5458, 16
      %v5927 = vrot.slane %v5925, 4
      %v5928 = vshll.u32 %v5458, 16
      %v5930 = vrot.slane %v5928, 5
      %v5931 = vor.u32 %v5927, %v5930
      %v5933 = vshrl.u32 %v5828, 16
      %v5935 = vrot.slane %v5933, 4
      %v5936 = vshll.u32 %v5828, 16
      %v5938 = vrot.slane %v5936, 5
      %v5939 = vor.u32 %v5935, %v5938
      %v5940 = vsel %vm4328, %v5931, %v5939
      %v5942 = vshrl.u32 %v5459, 16
      %v5944 = vrot.slane %v5942, 4
      %v5945 = vshll.u32 %v5459, 16
      %v5947 = vrot.slane %v5945, 5
      %v5948 = vor.u32 %v5944, %v5947
      %v5950 = vshrl.u32 %v5829, 16
      %v5952 = vrot.slane %v5950, 4
      %v5953 = vshll.u32 %v5829, 16
      %v5955 = vrot.slane %v5953, 5
      %v5956 = vor.u32 %v5952, %v5955
      %v5957 = vsel %vm4328, %v5948, %v5956
      %v5959 = vshrl.u32 %v5460, 16
      %v5961 = vrot.slane %v5959, 4
      %v5962 = vshll.u32 %v5460, 16
      %v5964 = vrot.slane %v5962, 5
      %v5965 = vor.u32 %v5961, %v5964
      %v5967 = vshrl.u32 %v5830, 16
      %v5969 = vrot.slane %v5967, 4
      %v5970 = vshll.u32 %v5830, 16
      %v5972 = vrot.slane %v5970, 5
      %v5973 = vor.u32 %v5969, %v5972
      %v5974 = vsel %vm4328, %v5965, %v5973
      %v5976 = vshrl.u32 %v5461, 16
      %v5978 = vrot.slane %v5976, 4
      %v5979 = vshll.u32 %v5461, 16
      %v5981 = vrot.slane %v5979, 5
      %v5982 = vor.u32 %v5978, %v5981
      %v5984 = vshrl.u32 %v5831, 16
      %v5986 = vrot.slane %v5984, 4
      %v5987 = vshll.u32 %v5831, 16
      %v5989 = vrot.slane %v5987, 5
      %v5990 = vor.u32 %v5986, %v5989
      %v5991 = vsel %vm4328, %v5982, %v5990
      %v5993 = vshrl.u32 %v5462, 16
      %v5995 = vrot.slane %v5993, 4
      %v5996 = vshll.u32 %v5462, 16
      %v5998 = vrot.slane %v5996, 5
      %v5999 = vor.u32 %v5995, %v5998
      %v6001 = vshrl.u32 %v5832, 16
      %v6003 = vrot.slane %v6001, 4
      %v6004 = vshll.u32 %v5832, 16
      %v6006 = vrot.slane %v6004, 5
      %v6007 = vor.u32 %v6003, %v6006
      %v6008 = vsel %vm4328, %v5999, %v6007
      %v6010 = vshrl.u32 %v5463, 16
      %v6012 = vrot.slane %v6010, 4
      %v6013 = vshll.u32 %v5463, 16
      %v6015 = vrot.slane %v6013, 5
      %v6016 = vor.u32 %v6012, %v6015
      %v6018 = vshrl.u32 %v5833, 16
      %v6020 = vrot.slane %v6018, 4
      %v6021 = vshll.u32 %v5833, 16
      %v6023 = vrot.slane %v6021, 5
      %v6024 = vor.u32 %v6020, %v6023
      %v6025 = vsel %vm4328, %v6016, %v6024
      %v6027 = vshrl.u32 %v5464, 16
      %v6029 = vrot.slane %v6027, 4
      %v6030 = vshll.u32 %v5464, 16
      %v6032 = vrot.slane %v6030, 5
      %v6033 = vor.u32 %v6029, %v6032
      %v6035 = vshrl.u32 %v5834, 16
      %v6037 = vrot.slane %v6035, 4
      %v6038 = vshll.u32 %v5834, 16
      %v6040 = vrot.slane %v6038, 5
      %v6041 = vor.u32 %v6037, %v6040
      %v6042 = vsel %vm4328, %v6033, %v6041
      %v6044 = vshrl.u32 %v5465, 16
      %v6046 = vrot.slane %v6044, 4
      %v6047 = vshll.u32 %v5465, 16
      %v6049 = vrot.slane %v6047, 5
      %v6050 = vor.u32 %v6046, %v6049
      %v6052 = vshrl.u32 %v5835, 16
      %v6054 = vrot.slane %v6052, 4
      %v6055 = vshll.u32 %v5835, 16
      %v6057 = vrot.slane %v6055, 5
      %v6058 = vor.u32 %v6054, %v6057
      %v6059 = vsel %vm4328, %v6050, %v6058
      %v6061 = vshrl.u32 %v5466, 16
      %v6063 = vrot.slane %v6061, 4
      %v6064 = vshll.u32 %v5466, 16
      %v6066 = vrot.slane %v6064, 5
      %v6067 = vor.u32 %v6063, %v6066
      %v6069 = vshrl.u32 %v5836, 16
      %v6071 = vrot.slane %v6069, 4
      %v6072 = vshll.u32 %v5836, 16
      %v6074 = vrot.slane %v6072, 5
      %v6075 = vor.u32 %v6071, %v6074
      %v6076 = vsel %vm4328, %v6067, %v6075
      %v6078 = vshrl.u32 %v5467, 16
      %v6080 = vrot.slane %v6078, 4
      %v6081 = vshll.u32 %v5467, 16
      %v6083 = vrot.slane %v6081, 5
      %v6084 = vor.u32 %v6080, %v6083
      %v6086 = vshrl.u32 %v5837, 16
      %v6088 = vrot.slane %v6086, 4
      %v6089 = vshll.u32 %v5837, 16
      %v6091 = vrot.slane %v6089, 5
      %v6092 = vor.u32 %v6088, %v6091
      %v6093 = vsel %vm4328, %v6084, %v6092
      %v6095 = vshrl.u32 %v5468, 16
      %v6097 = vrot.slane %v6095, 4
      %v6098 = vshll.u32 %v5468, 16
      %v6100 = vrot.slane %v6098, 5
      %v6101 = vor.u32 %v6097, %v6100
      %v6103 = vshrl.u32 %v5838, 16
      %v6105 = vrot.slane %v6103, 4
      %v6106 = vshll.u32 %v5838, 16
      %v6108 = vrot.slane %v6106, 5
      %v6109 = vor.u32 %v6105, %v6108
      %v6110 = vsel %vm4328, %v6101, %v6109
      %s6111 = scalar_lea.vmem %s3, 160
      %v6112 = vld [vmem:[%s6111] sm:$0xf]
      %v6113 = vld [vmem:[%s6111 + $0x4] sm:$0xf]
      %v6114 = vld [vmem:[%s6111 + $0x8] sm:$0xf]
      %v6115 = vld [vmem:[%s6111 + $0xc] sm:$0xf]
      %v6116 = vld [vmem:[%s6111 + $0x10] sm:$0xf]
      %v6117 = vld [vmem:[%s6111 + $0x14] sm:$0xf]
      %v6118 = vld [vmem:[%s6111 + $0x18] sm:$0xf]
      %v6119 = vld [vmem:[%s6111 + $0x1c] sm:$0xf]
      %v6128 = vunpack.c.l.b16 %v6112
      %v6129 = vunpack.c.l.b16 %v6113
      %v6130 = vunpack.c.l.b16 %v6114
      %v6131 = vunpack.c.l.b16 %v6115
      %v6132 = vunpack.c.l.b16 %v6116
      %v6133 = vunpack.c.l.b16 %v6117
      %v6134 = vunpack.c.l.b16 %v6118
      %v6135 = vunpack.c.l.b16 %v6119
      %v6136 = vpack.c.b16 %v6129, %v6128
      %v6137 = vpack.c.b16 %v6131, %v6130
      %v6138 = vpack.c.b16 %v6133, %v6132
      %v6139 = vpack.c.b16 %v6135, %v6134
      %v6145 = vsel %vm368, %v5855, 0
      %v6148 = vsel %vm368, %v5872, 0
      %v6151 = vsel %vm368, %v5889, 0
      %v6154 = vsel %vm368, %v5906, 0
      %v6157 = vsel %vm368, %v5923, 0
      %v6160 = vsel %vm368, %v5940, 0
      %v6163 = vsel %vm368, %v5957, 0
      %v6166 = vsel %vm368, %v5974, 0
      %v6169 = vsel %vm368, %v5991, 0
      %v6172 = vsel %vm368, %v6008, 0
      %v6175 = vsel %vm368, %v6025, 0
      %v6178 = vsel %vm368, %v6042, 0
      %v6181 = vsel %vm368, %v6059, 0
      %v6184 = vsel %vm368, %v6076, 0
      %v6187 = vsel %vm368, %v6093, 0
      %v6190 = vsel %vm368, %v6110, 0
      %6192 = vmatprep.subr.bf16.mxu0 0
      %6193 = vmatpush1.bf16.msra.mxu0 %v6136
      %6194 = vmatprep.subr.bf16.mxu0 0
      %6195 = vmatpush1.bf16.msra.mxu0 %v6137
      %6196 = vmatprep.subr.bf16.mxu0 0
      %6197 = vmatpush1.bf16.msra.mxu0 %v6138
      %6198 = vmatprep.subr.bf16.mxu0 0
      %6199 = vmatpush1.bf16.msra.mxu0 %v6139
      %6200 = vmatprep.subr.bf16.mxu0 0
      %6201 = vmatpush1.bf16.msra.mxu0 0
      %6202 = vmatprep.subr.bf16.mxu0 0
      %6203 = vmatpush1.bf16.msra.mxu0 0
      %6204 = vmatprep.subr.bf16.mxu0 0
      %6205 = vmatpush1.bf16.msra.mxu0 0
      %6206 = vmatprep.subr.bf16.mxu0 0
      %6207 = vmatpush1.bf16.msra.mxu0 0
      %6208 = vmatprep.subr.bf16.mxu0 0
      %6209 = vmatpush1.bf16.msra.mxu0 0
      %6210 = vmatprep.subr.bf16.mxu0 0
      %6211 = vmatpush1.bf16.msra.mxu0 0
      %6212 = vmatprep.subr.bf16.mxu0 0
      %6213 = vmatpush1.bf16.msra.mxu0 0
      %6214 = vmatprep.subr.bf16.mxu0 0
      %6215 = vmatpush1.bf16.msra.mxu0 0
      %6216 = vmatprep.subr.bf16.mxu0 0
      %6217 = vmatpush1.bf16.msra.mxu0 0
      %6218 = vmatprep.subr.bf16.mxu0 0
      %6219 = vmatpush1.bf16.msra.mxu0 0
      %6220 = vmatprep.subr.bf16.mxu0 0
      %6221 = vmatpush1.bf16.msra.mxu0 0
      %6222 = vmatprep.subr.bf16.mxu0 0
      %6223 = vmatpush1.bf16.msra.mxu0 0
      %6224 = vmatprep.mubr.bf16.mxu0 0
      %6225 = vmatmul.mubr.bf16.gmra.mrb[0].mxu0 %v6145
      %v6226 = vpop.f32.mrb[0].mxu0
      %v6227 = vadd.f32 0.0, %v6226
      %v6228 = vpop.f32.mrb[0].mxu0
      %v6229 = vpop.f32.mrb[0].mxu0
      %v6230 = vadd.f32 0.0, %v6229
      %v6231 = vpop.f32.mrb[0].mxu0
      %6232 = vmatprep.mubr.bf16.mxu0 0
      %6233 = vmatmul.mubr.bf16.gmra.mrb[0].mxu0 %v6148
      %v6234 = vpop.f32.mrb[0].mxu0
      %v6235 = vadd.f32 0.0, %v6234
      %v6236 = vpop.f32.mrb[0].mxu0
      %v6237 = vpop.f32.mrb[0].mxu0
      %v6238 = vadd.f32 0.0, %v6237
      %v6239 = vpop.f32.mrb[0].mxu0
      %6240 = vmatprep.mubr.bf16.mxu0 0
      %6241 = vmatmul.mubr.bf16.gmra.mrb[0].mxu0 %v6151
      %v6242 = vpop.f32.mrb[0].mxu0
      %v6243 = vadd.f32 0.0, %v6242
      %v6244 = vpop.f32.mrb[0].mxu0
      %v6245 = vpop.f32.mrb[0].mxu0
      %v6246 = vadd.f32 0.0, %v6245
      %v6247 = vpop.f32.mrb[0].mxu0
      %6248 = vmatprep.mubr.bf16.mxu0 0
      %6249 = vmatmul.mubr.bf16.gmra.mrb[0].mxu0 %v6154
      %v6250 = vpop.f32.mrb[0].mxu0
      %v6251 = vadd.f32 0.0, %v6250
      %v6252 = vpop.f32.mrb[0].mxu0
      %v6253 = vpop.f32.mrb[0].mxu0
      %v6254 = vadd.f32 0.0, %v6253
      %v6255 = vpop.f32.mrb[0].mxu0
      %6256 = vmatprep.mubr.bf16.mxu0 0
      %6257 = vmatmul.mubr.bf16.gmra.mrb[0].mxu0 %v6157
      %v6258 = vpop.f32.mrb[0].mxu0
      %v6259 = vadd.f32 0.0, %v6258
      %v6260 = vpop.f32.mrb[0].mxu0
      %v6261 = vpop.f32.mrb[0].mxu0
      %v6262 = vadd.f32 0.0, %v6261
      %v6263 = vpop.f32.mrb[0].mxu0
      %6264 = vmatprep.mubr.bf16.mxu0 0
      %6265 = vmatmul.mubr.bf16.gmra.mrb[0].mxu0 %v6160
      %v6266 = vpop.f32.mrb[0].mxu0
      %v6267 = vadd.f32 0.0, %v6266
      %v6268 = vpop.f32.mrb[0].mxu0
      %v6269 = vpop.f32.mrb[0].mxu0
      %v6270 = vadd.f32 0.0, %v6269
      %v6271 = vpop.f32.mrb[0].mxu0
      %6272 = vmatprep.mubr.bf16.mxu0 0
      %6273 = vmatmul.mubr.bf16.gmra.mrb[0].mxu0 %v6163
      %v6274 = vpop.f32.mrb[0].mxu0
      %v6275 = vadd.f32 0.0, %v6274
      %v6276 = vpop.f32.mrb[0].mxu0
      %v6277 = vpop.f32.mrb[0].mxu0
      %v6278 = vadd.f32 0.0, %v6277
      %v6279 = vpop.f32.mrb[0].mxu0
      %6280 = vmatprep.mubr.bf16.mxu0 0
      %6281 = vmatmul.mubr.bf16.gmra.mrb[0].mxu0 %v6166
      %v6282 = vpop.f32.mrb[0].mxu0
      %v6283 = vadd.f32 0.0, %v6282
      %v6284 = vpop.f32.mrb[0].mxu0
      %v6285 = vpop.f32.mrb[0].mxu0
      %v6286 = vadd.f32 0.0, %v6285
      %v6287 = vpop.f32.mrb[0].mxu0
      %6288 = vmatprep.mubr.bf16.mxu0 0
      %6289 = vmatmul.mubr.bf16.gmra.mrb[0].mxu0 %v6169
      %v6290 = vpop.f32.mrb[0].mxu0
      %v6291 = vadd.f32 0.0, %v6290
      %v6292 = vpop.f32.mrb[0].mxu0
      %v6293 = vpop.f32.mrb[0].mxu0
      %v6294 = vadd.f32 0.0, %v6293
      %v6295 = vpop.f32.mrb[0].mxu0
      %6296 = vmatprep.mubr.bf16.mxu0 0
      %6297 = vmatmul.mubr.bf16.gmra.mrb[0].mxu0 %v6172
      %v6298 = vpop.f32.mrb[0].mxu0
      %v6299 = vadd.f32 0.0, %v6298
      %v6300 = vpop.f32.mrb[0].mxu0
      %v6301 = vpop.f32.mrb[0].mxu0
      %v6302 = vadd.f32 0.0, %v6301
      %v6303 = vpop.f32.mrb[0].mxu0
      %6304 = vmatprep.mubr.bf16.mxu0 0
      %6305 = vmatmul.mubr.bf16.gmra.mrb[0].mxu0 %v6175
      %v6306 = vpop.f32.mrb[0].mxu0
      %v6307 = vadd.f32 0.0, %v6306
      %v6308 = vpop.f32.mrb[0].mxu0
      %v6309 = vpop.f32.mrb[0].mxu0
      %v6310 = vadd.f32 0.0, %v6309
      %v6311 = vpop.f32.mrb[0].mxu0
      %6312 = vmatprep.mubr.bf16.mxu0 0
      %6313 = vmatmul.mubr.bf16.gmra.mrb[0].mxu0 %v6178
      %v6314 = vpop.f32.mrb[0].mxu0
      %v6315 = vadd.f32 0.0, %v6314
      %v6316 = vpop.f32.mrb[0].mxu0
      %v6317 = vpop.f32.mrb[0].mxu0
      %v6318 = vadd.f32 0.0, %v6317
      %v6319 = vpop.f32.mrb[0].mxu0
      %6320 = vmatprep.mubr.bf16.mxu0 0
      %6321 = vmatmul.mubr.bf16.gmra.mrb[0].mxu0 %v6181
      %v6322 = vpop.f32.mrb[0].mxu0
      %v6323 = vadd.f32 0.0, %v6322
      %v6324 = vpop.f32.mrb[0].mxu0
      %v6325 = vpop.f32.mrb[0].mxu0
      %v6326 = vadd.f32 0.0, %v6325
      %v6327 = vpop.f32.mrb[0].mxu0
      %6328 = vmatprep.mubr.bf16.mxu0 0
      %6329 = vmatmul.mubr.bf16.gmra.mrb[0].mxu0 %v6184
      %v6330 = vpop.f32.mrb[0].mxu0
      %v6331 = vadd.f32 0.0, %v6330
      %v6332 = vpop.f32.mrb[0].mxu0
      %v6333 = vpop.f32.mrb[0].mxu0
      %v6334 = vadd.f32 0.0, %v6333
      %v6335 = vpop.f32.mrb[0].mxu0
      %6336 = vmatprep.mubr.bf16.mxu0 0
      %6337 = vmatmul.mubr.bf16.gmra.mrb[0].mxu0 %v6187
      %v6338 = vpop.f32.mrb[0].mxu0
      %v6339 = vadd.f32 0.0, %v6338
      %v6340 = vpop.f32.mrb[0].mxu0
      %v6341 = vpop.f32.mrb[0].mxu0
      %v6342 = vadd.f32 0.0, %v6341
      %v6343 = vpop.f32.mrb[0].mxu0
      %6344 = vmatprep.mubr.bf16.mxu0 0
      %6345 = vmatmul.mubr.bf16.gmra.mrb[0].mxu0 %v6190
      %v6346 = vpop.f32.mrb[0].mxu0
      %v6347 = vadd.f32 0.0, %v6346
      %v6348 = vpop.f32.mrb[0].mxu0
      %v6349 = vpop.f32.mrb[0].mxu0
      %v6350 = vadd.f32 0.0, %v6349
      %v6351 = vpop.f32.mrb[0].mxu0
      %6352 = vdwg.mxu0
      %v6353 = vadd.f32 %v5791, %v6227
      %v6354 = vadd.f32 %v5792, %v6230
      %v6355 = vadd.f32 %v5793, %v6235
      %v6356 = vadd.f32 %v5794, %v6238
      %v6357 = vadd.f32 %v5795, %v6243
      %v6358 = vadd.f32 %v5796, %v6246
      %v6359 = vadd.f32 %v5797, %v6251
      %v6360 = vadd.f32 %v5798, %v6254
      %v6361 = vadd.f32 %v5799, %v6259
      %v6362 = vadd.f32 %v5800, %v6262
      %v6363 = vadd.f32 %v5801, %v6267
      %v6364 = vadd.f32 %v5802, %v6270
      %v6365 = vadd.f32 %v5803, %v6275
      %v6366 = vadd.f32 %v5804, %v6278
      %v6367 = vadd.f32 %v5805, %v6283
      %v6368 = vadd.f32 %v5806, %v6286
      %v6369 = vadd.f32 %v5807, %v6291
      %v6370 = vadd.f32 %v5808, %v6294
      %v6371 = vadd.f32 %v5809, %v6299
      %v6372 = vadd.f32 %v5810, %v6302
      %v6373 = vadd.f32 %v5811, %v6307
      %v6374 = vadd.f32 %v5812, %v6310
      %v6375 = vadd.f32 %v5813, %v6315
      %v6376 = vadd.f32 %v5814, %v6318
      %v6377 = vadd.f32 %v5815, %v6323
      %v6378 = vadd.f32 %v5816, %v6326
      %v6379 = vadd.f32 %v5817, %v6331
      %v6380 = vadd.f32 %v5818, %v6334
      %v6381 = vadd.f32 %v5819, %v6339
      %v6382 = vadd.f32 %v5820, %v6342
      %v6383 = vadd.f32 %v5821, %v6347
      %v6384 = vadd.f32 %v5822, %v6350
      %s6385 = scalar_lea.vmem [#allocation2], 32
      %v6386 = vld [vmem:[%s6385] sm:$0xf8]
      %v6387 = vld [vmem:[%s6385 + $0x8] sm:$0xf]
      %v6388 = vld [vmem:[%s6385 + $0x10] sm:$0xf8]
      %v6389 = vld [vmem:[%s6385 + $0x18] sm:$0xf]
      %v6390 = vld [vmem:[%s6385 + $0x20] sm:$0xf8]
      %v6391 = vld [vmem:[%s6385 + $0x28] sm:$0xf]
      %v6392 = vld [vmem:[%s6385 + $0x30] sm:$0xf8]
      %v6393 = vld [vmem:[%s6385 + $0x38] sm:$0xf]
      %v6394 = vld [vmem:[%s6385 + $0x40] sm:$0xf8]
      %v6395 = vld [vmem:[%s6385 + $0x48] sm:$0xf]
      %v6396 = vld [vmem:[%s6385 + $0x50] sm:$0xf8]
      %v6397 = vld [vmem:[%s6385 + $0x58] sm:$0xf]
      %v6398 = vld [vmem:[%s6385 + $0x60] sm:$0xf8]
      %v6399 = vld [vmem:[%s6385 + $0x68] sm:$0xf]
      %v6400 = vld [vmem:[%s6385 + $0x70] sm:$0xf8]
      %v6401 = vld [vmem:[%s6385 + $0x78] sm:$0xf]
      %v6402 = vld [vmem:[%s6385 + $0x80] sm:$0xf8]
      %v6403 = vld [vmem:[%s6385 + $0x88] sm:$0xf]
      %v6404 = vld [vmem:[%s6385 + $0x90] sm:$0xf8]
      %v6405 = vld [vmem:[%s6385 + $0x98] sm:$0xf]
      %v6406 = vld [vmem:[%s6385 + $0xa0] sm:$0xf8]
      %v6407 = vld [vmem:[%s6385 + $0xa8] sm:$0xf]
      %v6408 = vld [vmem:[%s6385 + $0xb0] sm:$0xf8]
      %v6409 = vld [vmem:[%s6385 + $0xb8] sm:$0xf]
      %v6410 = vld [vmem:[%s6385 + $0xc0] sm:$0xf8]
      %v6411 = vld [vmem:[%s6385 + $0xc8] sm:$0xf]
      %v6412 = vld [vmem:[%s6385 + $0xd0] sm:$0xf8]
      %v6413 = vld [vmem:[%s6385 + $0xd8] sm:$0xf]
      %v6414 = vld [vmem:[%s6385 + $0xe0] sm:$0xf8]
      %v6415 = vld [vmem:[%s6385 + $0xe8] sm:$0xf]
      %v6416 = vld [vmem:[%s6385 + $0xf0] sm:$0xf8]
      %v6417 = vld [vmem:[%s6385 + $0xf8] sm:$0xf]
      %v6419 = vshrl.u32 %v6386, 16
      %v6421 = vrot.slane %v6419, 3
      %v6422 = vshll.u32 %v6386, 16
      %v6424 = vrot.slane %v6422, 4
      %v6425 = vor.u32 %v6421, %v6424
      %v6427 = vshrl.u32 %v6387, 16
      %v6429 = vrot.slane %v6427, 3
      %v6430 = vshll.u32 %v6387, 16
      %v6432 = vrot.slane %v6430, 4
      %v6433 = vor.u32 %v6429, %v6432
      %v6434 = vsel %vm3395, %v6425, %v6433
      %v6436 = vshrl.u32 %v6388, 16
      %v6438 = vrot.slane %v6436, 3
      %v6439 = vshll.u32 %v6388, 16
      %v6441 = vrot.slane %v6439, 4
      %v6442 = vor.u32 %v6438, %v6441
      %v6444 = vshrl.u32 %v6389, 16
      %v6446 = vrot.slane %v6444, 3
      %v6447 = vshll.u32 %v6389, 16
      %v6449 = vrot.slane %v6447, 4
      %v6450 = vor.u32 %v6446, %v6449
      %v6451 = vsel %vm3395, %v6442, %v6450
      %v6453 = vshrl.u32 %v6390, 16
      %v6455 = vrot.slane %v6453, 3
      %v6456 = vshll.u32 %v6390, 16
      %v6458 = vrot.slane %v6456, 4
      %v6459 = vor.u32 %v6455, %v6458
      %v6461 = vshrl.u32 %v6391, 16
      %v6463 = vrot.slane %v6461, 3
      %v6464 = vshll.u32 %v6391, 16
      %v6466 = vrot.slane %v6464, 4
      %v6467 = vor.u32 %v6463, %v6466
      %v6468 = vsel %vm3395, %v6459, %v6467
      %v6470 = vshrl.u32 %v6392, 16
      %v6472 = vrot.slane %v6470, 3
      %v6473 = vshll.u32 %v6392, 16
      %v6475 = vrot.slane %v6473, 4
      %v6476 = vor.u32 %v6472, %v6475
      %v6478 = vshrl.u32 %v6393, 16
      %v6480 = vrot.slane %v6478, 3
      %v6481 = vshll.u32 %v6393, 16
      %v6483 = vrot.slane %v6481, 4
      %v6484 = vor.u32 %v6480, %v6483
      %v6485 = vsel %vm3395, %v6476, %v6484
      %v6487 = vshrl.u32 %v6394, 16
      %v6489 = vrot.slane %v6487, 3
      %v6490 = vshll.u32 %v6394, 16
      %v6492 = vrot.slane %v6490, 4
      %v6493 = vor.u32 %v6489, %v6492
      %v6495 = vshrl.u32 %v6395, 16
      %v6497 = vrot.slane %v6495, 3
      %v6498 = vshll.u32 %v6395, 16
      %v6500 = vrot.slane %v6498, 4
      %v6501 = vor.u32 %v6497, %v6500
      %v6502 = vsel %vm3395, %v6493, %v6501
      %v6504 = vshrl.u32 %v6396, 16
      %v6506 = vrot.slane %v6504, 3
      %v6507 = vshll.u32 %v6396, 16
      %v6509 = vrot.slane %v6507, 4
      %v6510 = vor.u32 %v6506, %v6509
      %v6512 = vshrl.u32 %v6397, 16
      %v6514 = vrot.slane %v6512, 3
      %v6515 = vshll.u32 %v6397, 16
      %v6517 = vrot.slane %v6515, 4
      %v6518 = vor.u32 %v6514, %v6517
      %v6519 = vsel %vm3395, %v6510, %v6518
      %v6521 = vshrl.u32 %v6398, 16
      %v6523 = vrot.slane %v6521, 3
      %v6524 = vshll.u32 %v6398, 16
      %v6526 = vrot.slane %v6524, 4
      %v6527 = vor.u32 %v6523, %v6526
      %v6529 = vshrl.u32 %v6399, 16
      %v6531 = vrot.slane %v6529, 3
      %v6532 = vshll.u32 %v6399, 16
      %v6534 = vrot.slane %v6532, 4
      %v6535 = vor.u32 %v6531, %v6534
      %v6536 = vsel %vm3395, %v6527, %v6535
      %v6538 = vshrl.u32 %v6400, 16
      %v6540 = vrot.slane %v6538, 3
      %v6541 = vshll.u32 %v6400, 16
      %v6543 = vrot.slane %v6541, 4
      %v6544 = vor.u32 %v6540, %v6543
      %v6546 = vshrl.u32 %v6401, 16
      %v6548 = vrot.slane %v6546, 3
      %v6549 = vshll.u32 %v6401, 16
      %v6551 = vrot.slane %v6549, 4
      %v6552 = vor.u32 %v6548, %v6551
      %v6553 = vsel %vm3395, %v6544, %v6552
      %v6555 = vshrl.u32 %v6402, 16
      %v6557 = vrot.slane %v6555, 3
      %v6558 = vshll.u32 %v6402, 16
      %v6560 = vrot.slane %v6558, 4
      %v6561 = vor.u32 %v6557, %v6560
      %v6563 = vshrl.u32 %v6403, 16
      %v6565 = vrot.slane %v6563, 3
      %v6566 = vshll.u32 %v6403, 16
      %v6568 = vrot.slane %v6566, 4
      %v6569 = vor.u32 %v6565, %v6568
      %v6570 = vsel %vm3395, %v6561, %v6569
      %v6572 = vshrl.u32 %v6404, 16
      %v6574 = vrot.slane %v6572, 3
      %v6575 = vshll.u32 %v6404, 16
      %v6577 = vrot.slane %v6575, 4
      %v6578 = vor.u32 %v6574, %v6577
      %v6580 = vshrl.u32 %v6405, 16
      %v6582 = vrot.slane %v6580, 3
      %v6583 = vshll.u32 %v6405, 16
      %v6585 = vrot.slane %v6583, 4
      %v6586 = vor.u32 %v6582, %v6585
      %v6587 = vsel %vm3395, %v6578, %v6586
      %v6589 = vshrl.u32 %v6406, 16
      %v6591 = vrot.slane %v6589, 3
      %v6592 = vshll.u32 %v6406, 16
      %v6594 = vrot.slane %v6592, 4
      %v6595 = vor.u32 %v6591, %v6594
      %v6597 = vshrl.u32 %v6407, 16
      %v6599 = vrot.slane %v6597, 3
      %v6600 = vshll.u32 %v6407, 16
      %v6602 = vrot.slane %v6600, 4
      %v6603 = vor.u32 %v6599, %v6602
      %v6604 = vsel %vm3395, %v6595, %v6603
      %v6606 = vshrl.u32 %v6408, 16
      %v6608 = vrot.slane %v6606, 3
      %v6609 = vshll.u32 %v6408, 16
      %v6611 = vrot.slane %v6609, 4
      %v6612 = vor.u32 %v6608, %v6611
      %v6614 = vshrl.u32 %v6409, 16
      %v6616 = vrot.slane %v6614, 3
      %v6617 = vshll.u32 %v6409, 16
      %v6619 = vrot.slane %v6617, 4
      %v6620 = vor.u32 %v6616, %v6619
      %v6621 = vsel %vm3395, %v6612, %v6620
      %v6623 = vshrl.u32 %v6410, 16
      %v6625 = vrot.slane %v6623, 3
      %v6626 = vshll.u32 %v6410, 16
      %v6628 = vrot.slane %v6626, 4
      %v6629 = vor.u32 %v6625, %v6628
      %v6631 = vshrl.u32 %v6411, 16
      %v6633 = vrot.slane %v6631, 3
      %v6634 = vshll.u32 %v6411, 16
      %v6636 = vrot.slane %v6634, 4
      %v6637 = vor.u32 %v6633, %v6636
      %v6638 = vsel %vm3395, %v6629, %v6637
      %v6640 = vshrl.u32 %v6412, 16
      %v6642 = vrot.slane %v6640, 3
      %v6643 = vshll.u32 %v6412, 16
      %v6645 = vrot.slane %v6643, 4
      %v6646 = vor.u32 %v6642, %v6645
      %v6648 = vshrl.u32 %v6413, 16
      %v6650 = vrot.slane %v6648, 3
      %v6651 = vshll.u32 %v6413, 16
      %v6653 = vrot.slane %v6651, 4
      %v6654 = vor.u32 %v6650, %v6653
      %v6655 = vsel %vm3395, %v6646, %v6654
      %v6657 = vshrl.u32 %v6414, 16
      %v6659 = vrot.slane %v6657, 3
      %v6660 = vshll.u32 %v6414, 16
      %v6662 = vrot.slane %v6660, 4
      %v6663 = vor.u32 %v6659, %v6662
      %v6665 = vshrl.u32 %v6415, 16
      %v6667 = vrot.slane %v6665, 3
      %v6668 = vshll.u32 %v6415, 16
      %v6670 = vrot.slane %v6668, 4
      %v6671 = vor.u32 %v6667, %v6670
      %v6672 = vsel %vm3395, %v6663, %v6671
      %v6674 = vshrl.u32 %v6416, 16
      %v6676 = vrot.slane %v6674, 3
      %v6677 = vshll.u32 %v6416, 16
      %v6679 = vrot.slane %v6677, 4
      %v6680 = vor.u32 %v6676, %v6679
      %v6682 = vshrl.u32 %v6417, 16
      %v6684 = vrot.slane %v6682, 3
      %v6685 = vshll.u32 %v6417, 16
      %v6687 = vrot.slane %v6685, 4
      %v6688 = vor.u32 %v6684, %v6687
      %v6689 = vsel %vm3395, %v6680, %v6688
      %s6690 = scalar_lea.vmem %s3, 192
      %v6691 = vld [vmem:[%s6690] sm:$0xf]
      %v6692 = vld [vmem:[%s6690 + $0x4] sm:$0xf]
      %v6693 = vld [vmem:[%s6690 + $0x8] sm:$0xf]
      %v6694 = vld [vmem:[%s6690 + $0xc] sm:$0xf]
      %v6695 = vld [vmem:[%s6690 + $0x10] sm:$0xf]
      %v6696 = vld [vmem:[%s6690 + $0x14] sm:$0xf]
      %v6697 = vld [vmem:[%s6690 + $0x18] sm:$0xf]
      %v6698 = vld [vmem:[%s6690 + $0x1c] sm:$0xf]
      %v6707 = vunpack.c.l.b16 %v6691
      %v6708 = vunpack.c.l.b16 %v6692
      %v6709 = vunpack.c.l.b16 %v6693
      %v6710 = vunpack.c.l.b16 %v6694
      %v6711 = vunpack.c.l.b16 %v6695
      %v6712 = vunpack.c.l.b16 %v6696
      %v6713 = vunpack.c.l.b16 %v6697
      %v6714 = vunpack.c.l.b16 %v6698
      %v6715 = vpack.c.b16 %v6708, %v6707
      %v6716 = vpack.c.b16 %v6710, %v6709
      %v6717 = vpack.c.b16 %v6712, %v6711
      %v6718 = vpack.c.b16 %v6714, %v6713
      %v6724 = vsel %vm368, %v6434, 0
      %v6727 = vsel %vm368, %v6451, 0
      %v6730 = vsel %vm368, %v6468, 0
      %v6733 = vsel %vm368, %v6485, 0
      %v6736 = vsel %vm368, %v6502, 0
      %v6739 = vsel %vm368, %v6519, 0
      %v6742 = vsel %vm368, %v6536, 0
      %v6745 = vsel %vm368, %v6553, 0
      %v6748 = vsel %vm368, %v6570, 0
      %v6751 = vsel %vm368, %v6587, 0
      %v6754 = vsel %vm368, %v6604, 0
      %v6757 = vsel %vm368, %v6621, 0
      %v6760 = vsel %vm368, %v6638, 0
      %v6763 = vsel %vm368, %v6655, 0
      %v6766 = vsel %vm368, %v6672, 0
      %v6769 = vsel %vm368, %v6689, 0
      %6771 = vmatprep.subr.bf16.mxu0 0
      %6772 = vmatpush1.bf16.msra.mxu0 %v6715
      %6773 = vmatprep.subr.bf16.mxu0 0
      %6774 = vmatpush1.bf16.msra.mxu0 %v6716
      %6775 = vmatprep.subr.bf16.mxu0 0
      %6776 = vmatpush1.bf16.msra.mxu0 %v6717
      %6777 = vmatprep.subr.bf16.mxu0 0
      %6778 = vmatpush1.bf16.msra.mxu0 %v6718
      %6779 = vmatprep.subr.bf16.mxu0 0
      %6780 = vmatpush1.bf16.msra.mxu0 0
      %6781 = vmatprep.subr.bf16.mxu0 0
      %6782 = vmatpush1.bf16.msra.mxu0 0
      %6783 = vmatprep.subr.bf16.mxu0 0
      %6784 = vmatpush1.bf16.msra.mxu0 0
      %6785 = vmatprep.subr.bf16.mxu0 0
      %6786 = vmatpush1.bf16.msra.mxu0 0
      %6787 = vmatprep.subr.bf16.mxu0 0
      %6788 = vmatpush1.bf16.msra.mxu0 0
      %6789 = vmatprep.subr.bf16.mxu0 0
      %6790 = vmatpush1.bf16.msra.mxu0 0
      %6791 = vmatprep.subr.bf16.mxu0 0
      %6792 = vmatpush1.bf16.msra.mxu0 0
      %6793 = vmatprep.subr.bf16.mxu0 0
      %6794 = vmatpush1.bf16.msra.mxu0 0
      %6795 = vmatprep.subr.bf16.mxu0 0
      %6796 = vmatpush1.bf16.msra.mxu0 0
      %6797 = vmatprep.subr.bf16.mxu0 0
      %6798 = vmatpush1.bf16.msra.mxu0 0
      %6799 = vmatprep.subr.bf16.mxu0 0
      %6800 = vmatpush1.bf16.msra.mxu0 0
      %6801 = vmatprep.subr.bf16.mxu0 0
      %6802 = vmatpush1.bf16.msra.mxu0 0
      %6803 = vmatprep.mubr.bf16.mxu0 0
      %6804 = vmatmul.mubr.bf16.gmra.mrb[0].mxu0 %v6724
      %v6805 = vpop.f32.mrb[0].mxu0
      %v6806 = vadd.f32 0.0, %v6805
      %v6807 = vpop.f32.mrb[0].mxu0
      %v6808 = vpop.f32.mrb[0].mxu0
      %v6809 = vadd.f32 0.0, %v6808
      %v6810 = vpop.f32.mrb[0].mxu0
      %6811 = vmatprep.mubr.bf16.mxu0 0
      %6812 = vmatmul.mubr.bf16.gmra.mrb[0].mxu0 %v6727
      %v6813 = vpop.f32.mrb[0].mxu0
      %v6814 = vadd.f32 0.0, %v6813
      %v6815 = vpop.f32.mrb[0].mxu0
      %v6816 = vpop.f32.mrb[0].mxu0
      %v6817 = vadd.f32 0.0, %v6816
      %v6818 = vpop.f32.mrb[0].mxu0
      %6819 = vmatprep.mubr.bf16.mxu0 0
      %6820 = vmatmul.mubr.bf16.gmra.mrb[0].mxu0 %v6730
      %v6821 = vpop.f32.mrb[0].mxu0
      %v6822 = vadd.f32 0.0, %v6821
      %v6823 = vpop.f32.mrb[0].mxu0
      %v6824 = vpop.f32.mrb[0].mxu0
      %v6825 = vadd.f32 0.0, %v6824
      %v6826 = vpop.f32.mrb[0].mxu0
      %6827 = vmatprep.mubr.bf16.mxu0 0
      %6828 = vmatmul.mubr.bf16.gmra.mrb[0].mxu0 %v6733
      %v6829 = vpop.f32.mrb[0].mxu0
      %v6830 = vadd.f32 0.0, %v6829
      %v6831 = vpop.f32.mrb[0].mxu0
      %v6832 = vpop.f32.mrb[0].mxu0
      %v6833 = vadd.f32 0.0, %v6832
      %v6834 = vpop.f32.mrb[0].mxu0
      %6835 = vmatprep.mubr.bf16.mxu0 0
      %6836 = vmatmul.mubr.bf16.gmra.mrb[0].mxu0 %v6736
      %v6837 = vpop.f32.mrb[0].mxu0
      %v6838 = vadd.f32 0.0, %v6837
      %v6839 = vpop.f32.mrb[0].mxu0
      %v6840 = vpop.f32.mrb[0].mxu0
      %v6841 = vadd.f32 0.0, %v6840
      %v6842 = vpop.f32.mrb[0].mxu0
      %6843 = vmatprep.mubr.bf16.mxu0 0
      %6844 = vmatmul.mubr.bf16.gmra.mrb[0].mxu0 %v6739
      %v6845 = vpop.f32.mrb[0].mxu0
      %v6846 = vadd.f32 0.0, %v6845
      %v6847 = vpop.f32.mrb[0].mxu0
      %v6848 = vpop.f32.mrb[0].mxu0
      %v6849 = vadd.f32 0.0, %v6848
      %v6850 = vpop.f32.mrb[0].mxu0
      %6851 = vmatprep.mubr.bf16.mxu0 0
      %6852 = vmatmul.mubr.bf16.gmra.mrb[0].mxu0 %v6742
      %v6853 = vpop.f32.mrb[0].mxu0
      %v6854 = vadd.f32 0.0, %v6853
      %v6855 = vpop.f32.mrb[0].mxu0
      %v6856 = vpop.f32.mrb[0].mxu0
      %v6857 = vadd.f32 0.0, %v6856
      %v6858 = vpop.f32.mrb[0].mxu0
      %6859 = vmatprep.mubr.bf16.mxu0 0
      %6860 = vmatmul.mubr.bf16.gmra.mrb[0].mxu0 %v6745
      %v6861 = vpop.f32.mrb[0].mxu0
      %v6862 = vadd.f32 0.0, %v6861
      %v6863 = vpop.f32.mrb[0].mxu0
      %v6864 = vpop.f32.mrb[0].mxu0
      %v6865 = vadd.f32 0.0, %v6864
      %v6866 = vpop.f32.mrb[0].mxu0
      %6867 = vmatprep.mubr.bf16.mxu0 0
      %6868 = vmatmul.mubr.bf16.gmra.mrb[0].mxu0 %v6748
      %v6869 = vpop.f32.mrb[0].mxu0
      %v6870 = vadd.f32 0.0, %v6869
      %v6871 = vpop.f32.mrb[0].mxu0
      %v6872 = vpop.f32.mrb[0].mxu0
      %v6873 = vadd.f32 0.0, %v6872
      %v6874 = vpop.f32.mrb[0].mxu0
      %6875 = vmatprep.mubr.bf16.mxu0 0
      %6876 = vmatmul.mubr.bf16.gmra.mrb[0].mxu0 %v6751
      %v6877 = vpop.f32.mrb[0].mxu0
      %v6878 = vadd.f32 0.0, %v6877
      %v6879 = vpop.f32.mrb[0].mxu0
      %v6880 = vpop.f32.mrb[0].mxu0
      %v6881 = vadd.f32 0.0, %v6880
      %v6882 = vpop.f32.mrb[0].mxu0
      %6883 = vmatprep.mubr.bf16.mxu0 0
      %6884 = vmatmul.mubr.bf16.gmra.mrb[0].mxu0 %v6754
      %v6885 = vpop.f32.mrb[0].mxu0
      %v6886 = vadd.f32 0.0, %v6885
      %v6887 = vpop.f32.mrb[0].mxu0
      %v6888 = vpop.f32.mrb[0].mxu0
      %v6889 = vadd.f32 0.0, %v6888
      %v6890 = vpop.f32.mrb[0].mxu0
      %6891 = vmatprep.mubr.bf16.mxu0 0
      %6892 = vmatmul.mubr.bf16.gmra.mrb[0].mxu0 %v6757
      %v6893 = vpop.f32.mrb[0].mxu0
      %v6894 = vadd.f32 0.0, %v6893
      %v6895 = vpop.f32.mrb[0].mxu0
      %v6896 = vpop.f32.mrb[0].mxu0
      %v6897 = vadd.f32 0.0, %v6896
      %v6898 = vpop.f32.mrb[0].mxu0
      %6899 = vmatprep.mubr.bf16.mxu0 0
      %6900 = vmatmul.mubr.bf16.gmra.mrb[0].mxu0 %v6760
      %v6901 = vpop.f32.mrb[0].mxu0
      %v6902 = vadd.f32 0.0, %v6901
      %v6903 = vpop.f32.mrb[0].mxu0
      %v6904 = vpop.f32.mrb[0].mxu0
      %v6905 = vadd.f32 0.0, %v6904
      %v6906 = vpop.f32.mrb[0].mxu0
      %6907 = vmatprep.mubr.bf16.mxu0 0
      %6908 = vmatmul.mubr.bf16.gmra.mrb[0].mxu0 %v6763
      %v6909 = vpop.f32.mrb[0].mxu0
      %v6910 = vadd.f32 0.0, %v6909
      %v6911 = vpop.f32.mrb[0].mxu0
      %v6912 = vpop.f32.mrb[0].mxu0
      %v6913 = vadd.f32 0.0, %v6912
      %v6914 = vpop.f32.mrb[0].mxu0
      %6915 = vmatprep.mubr.bf16.mxu0 0
      %6916 = vmatmul.mubr.bf16.gmra.mrb[0].mxu0 %v6766
      %v6917 = vpop.f32.mrb[0].mxu0
      %v6918 = vadd.f32 0.0, %v6917
      %v6919 = vpop.f32.mrb[0].mxu0
      %v6920 = vpop.f32.mrb[0].mxu0
      %v6921 = vadd.f32 0.0, %v6920
      %v6922 = vpop.f32.mrb[0].mxu0
      %6923 = vmatprep.mubr.bf16.mxu0 0
      %6924 = vmatmul.mubr.bf16.gmra.mrb[0].mxu0 %v6769
      %v6925 = vpop.f32.mrb[0].mxu0
      %v6926 = vadd.f32 0.0, %v6925
      %v6927 = vpop.f32.mrb[0].mxu0
      %v6928 = vpop.f32.mrb[0].mxu0
      %v6929 = vadd.f32 0.0, %v6928
      %v6930 = vpop.f32.mrb[0].mxu0
      %6931 = vdwg.mxu0
      %v6932 = vadd.f32 %v6353, %v6806
      %v6933 = vadd.f32 %v6354, %v6809
      %v6934 = vadd.f32 %v6355, %v6814
      %v6935 = vadd.f32 %v6356, %v6817
      %v6936 = vadd.f32 %v6357, %v6822
      %v6937 = vadd.f32 %v6358, %v6825
      %v6938 = vadd.f32 %v6359, %v6830
      %v6939 = vadd.f32 %v6360, %v6833
      %v6940 = vadd.f32 %v6361, %v6838
      %v6941 = vadd.f32 %v6362, %v6841
      %v6942 = vadd.f32 %v6363, %v6846
      %v6943 = vadd.f32 %v6364, %v6849
      %v6944 = vadd.f32 %v6365, %v6854
      %v6945 = vadd.f32 %v6366, %v6857
      %v6946 = vadd.f32 %v6367, %v6862
      %v6947 = vadd.f32 %v6368, %v6865
      %v6948 = vadd.f32 %v6369, %v6870
      %v6949 = vadd.f32 %v6370, %v6873
      %v6950 = vadd.f32 %v6371, %v6878
      %v6951 = vadd.f32 %v6372, %v6881
      %v6952 = vadd.f32 %v6373, %v6886
      %v6953 = vadd.f32 %v6374, %v6889
      %v6954 = vadd.f32 %v6375, %v6894
      %v6955 = vadd.f32 %v6376, %v6897
      %v6956 = vadd.f32 %v6377, %v6902
      %v6957 = vadd.f32 %v6378, %v6905
      %v6958 = vadd.f32 %v6379, %v6910
      %v6959 = vadd.f32 %v6380, %v6913
      %v6960 = vadd.f32 %v6381, %v6918
      %v6961 = vadd.f32 %v6382, %v6921
      %v6962 = vadd.f32 %v6383, %v6926
      %v6963 = vadd.f32 %v6384, %v6929
      %v6964 = vld [vmem:[%s6385] sm:$0xf0]
      %v6965 = vld [vmem:[%s6385 + $0x10] sm:$0xf0]
      %v6966 = vld [vmem:[%s6385 + $0x20] sm:$0xf0]
      %v6967 = vld [vmem:[%s6385 + $0x30] sm:$0xf0]
      %v6968 = vld [vmem:[%s6385 + $0x40] sm:$0xf0]
      %v6969 = vld [vmem:[%s6385 + $0x50] sm:$0xf0]
      %v6970 = vld [vmem:[%s6385 + $0x60] sm:$0xf0]
      %v6971 = vld [vmem:[%s6385 + $0x70] sm:$0xf0]
      %v6972 = vld [vmem:[%s6385 + $0x80] sm:$0xf0]
      %v6973 = vld [vmem:[%s6385 + $0x90] sm:$0xf0]
      %v6974 = vld [vmem:[%s6385 + $0xa0] sm:$0xf0]
      %v6975 = vld [vmem:[%s6385 + $0xb0] sm:$0xf0]
      %v6976 = vld [vmem:[%s6385 + $0xc0] sm:$0xf0]
      %v6977 = vld [vmem:[%s6385 + $0xd0] sm:$0xf0]
      %v6978 = vld [vmem:[%s6385 + $0xe0] sm:$0xf0]
      %v6979 = vld [vmem:[%s6385 + $0xf0] sm:$0xf0]
      %v7012 = vrot.slane %v6964, 4
      %v7013 = vrot.slane %v6387, 4
      %v7014 = vsel %vm3989, %v7012, %v7013
      %v7015 = vrot.slane %v6965, 4
      %v7016 = vrot.slane %v6389, 4
      %v7017 = vsel %vm3989, %v7015, %v7016
      %v7018 = vrot.slane %v6966, 4
      %v7019 = vrot.slane %v6391, 4
      %v7020 = vsel %vm3989, %v7018, %v7019
      %v7021 = vrot.slane %v6967, 4
      %v7022 = vrot.slane %v6393, 4
      %v7023 = vsel %vm3989, %v7021, %v7022
      %v7024 = vrot.slane %v6968, 4
      %v7025 = vrot.slane %v6395, 4
      %v7026 = vsel %vm3989, %v7024, %v7025
      %v7027 = vrot.slane %v6969, 4
      %v7028 = vrot.slane %v6397, 4
      %v7029 = vsel %vm3989, %v7027, %v7028
      %v7030 = vrot.slane %v6970, 4
      %v7031 = vrot.slane %v6399, 4
      %v7032 = vsel %vm3989, %v7030, %v7031
      %v7033 = vrot.slane %v6971, 4
      %v7034 = vrot.slane %v6401, 4
      %v7035 = vsel %vm3989, %v7033, %v7034
      %v7036 = vrot.slane %v6972, 4
      %v7037 = vrot.slane %v6403, 4
      %v7038 = vsel %vm3989, %v7036, %v7037
      %v7039 = vrot.slane %v6973, 4
      %v7040 = vrot.slane %v6405, 4
      %v7041 = vsel %vm3989, %v7039, %v7040
      %v7042 = vrot.slane %v6974, 4
      %v7043 = vrot.slane %v6407, 4
      %v7044 = vsel %vm3989, %v7042, %v7043
      %v7045 = vrot.slane %v6975, 4
      %v7046 = vrot.slane %v6409, 4
      %v7047 = vsel %vm3989, %v7045, %v7046
      %v7048 = vrot.slane %v6976, 4
      %v7049 = vrot.slane %v6411, 4
      %v7050 = vsel %vm3989, %v7048, %v7049
      %v7051 = vrot.slane %v6977, 4
      %v7052 = vrot.slane %v6413, 4
      %v7053 = vsel %vm3989, %v7051, %v7052
      %v7054 = vrot.slane %v6978, 4
      %v7055 = vrot.slane %v6415, 4
      %v7056 = vsel %vm3989, %v7054, %v7055
      %v7057 = vrot.slane %v6979, 4
      %v7058 = vrot.slane %v6417, 4
      %v7059 = vsel %vm3989, %v7057, %v7058
      %s7060 = scalar_lea.vmem %s3, 224
      %v7061 = vld [vmem:[%s7060] sm:$0xf]
      %v7062 = vld [vmem:[%s7060 + $0x4] sm:$0xf]
      %v7063 = vld [vmem:[%s7060 + $0x8] sm:$0xf]
      %v7064 = vld [vmem:[%s7060 + $0xc] sm:$0xf]
      %v7065 = vld [vmem:[%s7060 + $0x10] sm:$0xf]
      %v7066 = vld [vmem:[%s7060 + $0x14] sm:$0xf]
      %v7067 = vld [vmem:[%s7060 + $0x18] sm:$0xf]
      %v7068 = vld [vmem:[%s7060 + $0x1c] sm:$0xf]
      %v7077 = vunpack.c.l.b16 %v7061
      %v7078 = vunpack.c.l.b16 %v7062
      %v7079 = vunpack.c.l.b16 %v7063
      %v7080 = vunpack.c.l.b16 %v7064
      %v7081 = vunpack.c.l.b16 %v7065
      %v7082 = vunpack.c.l.b16 %v7066
      %v7083 = vunpack.c.l.b16 %v7067
      %v7084 = vunpack.c.l.b16 %v7068
      %v7085 = vpack.c.b16 %v7078, %v7077
      %v7086 = vpack.c.b16 %v7080, %v7079
      %v7087 = vpack.c.b16 %v7082, %v7081
      %v7088 = vpack.c.b16 %v7084, %v7083
      %v7094 = vsel %vm368, %v7014, 0
      %v7097 = vsel %vm368, %v7017, 0
      %v7100 = vsel %vm368, %v7020, 0
      %v7103 = vsel %vm368, %v7023, 0
      %v7106 = vsel %vm368, %v7026, 0
      %v7109 = vsel %vm368, %v7029, 0
      %v7112 = vsel %vm368, %v7032, 0
      %v7115 = vsel %vm368, %v7035, 0
      %v7118 = vsel %vm368, %v7038, 0
      %v7121 = vsel %vm368, %v7041, 0
      %v7124 = vsel %vm368, %v7044, 0
      %v7127 = vsel %vm368, %v7047, 0
      %v7130 = vsel %vm368, %v7050, 0
      %v7133 = vsel %vm368, %v7053, 0
      %v7136 = vsel %vm368, %v7056, 0
      %v7139 = vsel %vm368, %v7059, 0
      %7141 = vmatprep.subr.bf16.mxu0 0
      %7142 = vmatpush1.bf16.msra.mxu0 %v7085
      %7143 = vmatprep.subr.bf16.mxu0 0
      %7144 = vmatpush1.bf16.msra.mxu0 %v7086
      %7145 = vmatprep.subr.bf16.mxu0 0
      %7146 = vmatpush1.bf16.msra.mxu0 %v7087
      %7147 = vmatprep.subr.bf16.mxu0 0
      %7148 = vmatpush1.bf16.msra.mxu0 %v7088
      %7149 = vmatprep.subr.bf16.mxu0 0
      %7150 = vmatpush1.bf16.msra.mxu0 0
      %7151 = vmatprep.subr.bf16.mxu0 0
      %7152 = vmatpush1.bf16.msra.mxu0 0
      %7153 = vmatprep.subr.bf16.mxu0 0
      %7154 = vmatpush1.bf16.msra.mxu0 0
      %7155 = vmatprep.subr.bf16.mxu0 0
      %7156 = vmatpush1.bf16.msra.mxu0 0
      %7157 = vmatprep.subr.bf16.mxu0 0
      %7158 = vmatpush1.bf16.msra.mxu0 0
      %7159 = vmatprep.subr.bf16.mxu0 0
      %7160 = vmatpush1.bf16.msra.mxu0 0
      %7161 = vmatprep.subr.bf16.mxu0 0
      %7162 = vmatpush1.bf16.msra.mxu0 0
      %7163 = vmatprep.subr.bf16.mxu0 0
      %7164 = vmatpush1.bf16.msra.mxu0 0
      %7165 = vmatprep.subr.bf16.mxu0 0
      %7166 = vmatpush1.bf16.msra.mxu0 0
      %7167 = vmatprep.subr.bf16.mxu0 0
      %7168 = vmatpush1.bf16.msra.mxu0 0
      %7169 = vmatprep.subr.bf16.mxu0 0
      %7170 = vmatpush1.bf16.msra.mxu0 0
      %7171 = vmatprep.subr.bf16.mxu0 0
      %7172 = vmatpush1.bf16.msra.mxu0 0
      %7173 = vmatprep.mubr.bf16.mxu0 0
      %7174 = vmatmul.mubr.bf16.gmra.mrb[0].mxu0 %v7094
      %v7175 = vpop.f32.mrb[0].mxu0
      %v7176 = vadd.f32 0.0, %v7175
      %v7177 = vpop.f32.mrb[0].mxu0
      %v7178 = vpop.f32.mrb[0].mxu0
      %v7179 = vadd.f32 0.0, %v7178
      %v7180 = vpop.f32.mrb[0].mxu0
      %7181 = vmatprep.mubr.bf16.mxu0 0
      %7182 = vmatmul.mubr.bf16.gmra.mrb[0].mxu0 %v7097
      %v7183 = vpop.f32.mrb[0].mxu0
      %v7184 = vadd.f32 0.0, %v7183
      %v7185 = vpop.f32.mrb[0].mxu0
      %v7186 = vpop.f32.mrb[0].mxu0
      %v7187 = vadd.f32 0.0, %v7186
      %v7188 = vpop.f32.mrb[0].mxu0
      %7189 = vmatprep.mubr.bf16.mxu0 0
      %7190 = vmatmul.mubr.bf16.gmra.mrb[0].mxu0 %v7100
      %v7191 = vpop.f32.mrb[0].mxu0
      %v7192 = vadd.f32 0.0, %v7191
      %v7193 = vpop.f32.mrb[0].mxu0
      %v7194 = vpop.f32.mrb[0].mxu0
      %v7195 = vadd.f32 0.0, %v7194
      %v7196 = vpop.f32.mrb[0].mxu0
      %7197 = vmatprep.mubr.bf16.mxu0 0
      %7198 = vmatmul.mubr.bf16.gmra.mrb[0].mxu0 %v7103
      %v7199 = vpop.f32.mrb[0].mxu0
      %v7200 = vadd.f32 0.0, %v7199
      %v7201 = vpop.f32.mrb[0].mxu0
      %v7202 = vpop.f32.mrb[0].mxu0
      %v7203 = vadd.f32 0.0, %v7202
      %v7204 = vpop.f32.mrb[0].mxu0
      %7205 = vmatprep.mubr.bf16.mxu0 0
      %7206 = vmatmul.mubr.bf16.gmra.mrb[0].mxu0 %v7106
      %v7207 = vpop.f32.mrb[0].mxu0
      %v7208 = vadd.f32 0.0, %v7207
      %v7209 = vpop.f32.mrb[0].mxu0
      %v7210 = vpop.f32.mrb[0].mxu0
      %v7211 = vadd.f32 0.0, %v7210
      %v7212 = vpop.f32.mrb[0].mxu0
      %7213 = vmatprep.mubr.bf16.mxu0 0
      %7214 = vmatmul.mubr.bf16.gmra.mrb[0].mxu0 %v7109
      %v7215 = vpop.f32.mrb[0].mxu0
      %v7216 = vadd.f32 0.0, %v7215
      %v7217 = vpop.f32.mrb[0].mxu0
      %v7218 = vpop.f32.mrb[0].mxu0
      %v7219 = vadd.f32 0.0, %v7218
      %v7220 = vpop.f32.mrb[0].mxu0
      %7221 = vmatprep.mubr.bf16.mxu0 0
      %7222 = vmatmul.mubr.bf16.gmra.mrb[0].mxu0 %v7112
      %v7223 = vpop.f32.mrb[0].mxu0
      %v7224 = vadd.f32 0.0, %v7223
      %v7225 = vpop.f32.mrb[0].mxu0
      %v7226 = vpop.f32.mrb[0].mxu0
      %v7227 = vadd.f32 0.0, %v7226
      %v7228 = vpop.f32.mrb[0].mxu0
      %7229 = vmatprep.mubr.bf16.mxu0 0
      %7230 = vmatmul.mubr.bf16.gmra.mrb[0].mxu0 %v7115
      %v7231 = vpop.f32.mrb[0].mxu0
      %v7232 = vadd.f32 0.0, %v7231
      %v7233 = vpop.f32.mrb[0].mxu0
      %v7234 = vpop.f32.mrb[0].mxu0
      %v7235 = vadd.f32 0.0, %v7234
      %v7236 = vpop.f32.mrb[0].mxu0
      %7237 = vmatprep.mubr.bf16.mxu0 0
      %7238 = vmatmul.mubr.bf16.gmra.mrb[0].mxu0 %v7118
      %v7239 = vpop.f32.mrb[0].mxu0
      %v7240 = vadd.f32 0.0, %v7239
      %v7241 = vpop.f32.mrb[0].mxu0
      %v7242 = vpop.f32.mrb[0].mxu0
      %v7243 = vadd.f32 0.0, %v7242
      %v7244 = vpop.f32.mrb[0].mxu0
      %7245 = vmatprep.mubr.bf16.mxu0 0
      %7246 = vmatmul.mubr.bf16.gmra.mrb[0].mxu0 %v7121
      %v7247 = vpop.f32.mrb[0].mxu0
      %v7248 = vadd.f32 0.0, %v7247
      %v7249 = vpop.f32.mrb[0].mxu0
      %v7250 = vpop.f32.mrb[0].mxu0
      %v7251 = vadd.f32 0.0, %v7250
      %v7252 = vpop.f32.mrb[0].mxu0
      %7253 = vmatprep.mubr.bf16.mxu0 0
      %7254 = vmatmul.mubr.bf16.gmra.mrb[0].mxu0 %v7124
      %v7255 = vpop.f32.mrb[0].mxu0
      %v7256 = vadd.f32 0.0, %v7255
      %v7257 = vpop.f32.mrb[0].mxu0
      %v7258 = vpop.f32.mrb[0].mxu0
      %v7259 = vadd.f32 0.0, %v7258
      %v7260 = vpop.f32.mrb[0].mxu0
      %7261 = vmatprep.mubr.bf16.mxu0 0
      %7262 = vmatmul.mubr.bf16.gmra.mrb[0].mxu0 %v7127
      %v7263 = vpop.f32.mrb[0].mxu0
      %v7264 = vadd.f32 0.0, %v7263
      %v7265 = vpop.f32.mrb[0].mxu0
      %v7266 = vpop.f32.mrb[0].mxu0
      %v7267 = vadd.f32 0.0, %v7266
      %v7268 = vpop.f32.mrb[0].mxu0
      %7269 = vmatprep.mubr.bf16.mxu0 0
      %7270 = vmatmul.mubr.bf16.gmra.mrb[0].mxu0 %v7130
      %v7271 = vpop.f32.mrb[0].mxu0
      %v7272 = vadd.f32 0.0, %v7271
      %v7273 = vpop.f32.mrb[0].mxu0
      %v7274 = vpop.f32.mrb[0].mxu0
      %v7275 = vadd.f32 0.0, %v7274
      %v7276 = vpop.f32.mrb[0].mxu0
      %7277 = vmatprep.mubr.bf16.mxu0 0
      %7278 = vmatmul.mubr.bf16.gmra.mrb[0].mxu0 %v7133
      %v7279 = vpop.f32.mrb[0].mxu0
      %v7280 = vadd.f32 0.0, %v7279
      %v7281 = vpop.f32.mrb[0].mxu0
      %v7282 = vpop.f32.mrb[0].mxu0
      %v7283 = vadd.f32 0.0, %v7282
      %v7284 = vpop.f32.mrb[0].mxu0
      %7285 = vmatprep.mubr.bf16.mxu0 0
      %7286 = vmatmul.mubr.bf16.gmra.mrb[0].mxu0 %v7136
      %v7287 = vpop.f32.mrb[0].mxu0
      %v7288 = vadd.f32 0.0, %v7287
      %v7289 = vpop.f32.mrb[0].mxu0
      %v7290 = vpop.f32.mrb[0].mxu0
      %v7291 = vadd.f32 0.0, %v7290
      %v7292 = vpop.f32.mrb[0].mxu0
      %7293 = vmatprep.mubr.bf16.mxu0 0
      %7294 = vmatmul.mubr.bf16.gmra.mrb[0].mxu0 %v7139
      %v7295 = vpop.f32.mrb[0].mxu0
      %v7296 = vadd.f32 0.0, %v7295
      %v7297 = vpop.f32.mrb[0].mxu0
      %v7298 = vpop.f32.mrb[0].mxu0
      %v7299 = vadd.f32 0.0, %v7298
      %v7300 = vpop.f32.mrb[0].mxu0
      %7301 = vdwg.mxu0
      %v7302 = vadd.f32 %v6932, %v7176
      %v7303 = vadd.f32 %v6933, %v7179
      %v7304 = vadd.f32 %v6934, %v7184
      %v7305 = vadd.f32 %v6935, %v7187
      %v7306 = vadd.f32 %v6936, %v7192
      %v7307 = vadd.f32 %v6937, %v7195
      %v7308 = vadd.f32 %v6938, %v7200
      %v7309 = vadd.f32 %v6939, %v7203
      %v7310 = vadd.f32 %v6940, %v7208
      %v7311 = vadd.f32 %v6941, %v7211
      %v7312 = vadd.f32 %v6942, %v7216
      %v7313 = vadd.f32 %v6943, %v7219
      %v7314 = vadd.f32 %v6944, %v7224
      %v7315 = vadd.f32 %v6945, %v7227
      %v7316 = vadd.f32 %v6946, %v7232
      %v7317 = vadd.f32 %v6947, %v7235
      %v7318 = vadd.f32 %v6948, %v7240
      %v7319 = vadd.f32 %v6949, %v7243
      %v7320 = vadd.f32 %v6950, %v7248
      %v7321 = vadd.f32 %v6951, %v7251
      %v7322 = vadd.f32 %v6952, %v7256
      %v7323 = vadd.f32 %v6953, %v7259
      %v7324 = vadd.f32 %v6954, %v7264
      %v7325 = vadd.f32 %v6955, %v7267
      %v7326 = vadd.f32 %v6956, %v7272
      %v7327 = vadd.f32 %v6957, %v7275
      %v7328 = vadd.f32 %v6958, %v7280
      %v7329 = vadd.f32 %v6959, %v7283
      %v7330 = vadd.f32 %v6960, %v7288
      %v7331 = vadd.f32 %v6961, %v7291
      %v7332 = vadd.f32 %v6962, %v7296
      %v7333 = vadd.f32 %v6963, %v7299
      %v7334 = vld [vmem:[%s6385 + $0x8] sm:$0x1f]
      %v7335 = vld [vmem:[%s6385 + $0x18] sm:$0x1f]
      %v7336 = vld [vmem:[%s6385 + $0x28] sm:$0x1f]
      %v7337 = vld [vmem:[%s6385 + $0x38] sm:$0x1f]
      %v7338 = vld [vmem:[%s6385 + $0x48] sm:$0x1f]
      %v7339 = vld [vmem:[%s6385 + $0x58] sm:$0x1f]
      %v7340 = vld [vmem:[%s6385 + $0x68] sm:$0x1f]
      %v7341 = vld [vmem:[%s6385 + $0x78] sm:$0x1f]
      %v7342 = vld [vmem:[%s6385 + $0x88] sm:$0x1f]
      %v7343 = vld [vmem:[%s6385 + $0x98] sm:$0x1f]
      %v7344 = vld [vmem:[%s6385 + $0xa8] sm:$0x1f]
      %v7345 = vld [vmem:[%s6385 + $0xb8] sm:$0x1f]
      %v7346 = vld [vmem:[%s6385 + $0xc8] sm:$0x1f]
      %v7347 = vld [vmem:[%s6385 + $0xd8] sm:$0x1f]
      %v7348 = vld [vmem:[%s6385 + $0xe8] sm:$0x1f]
      %v7349 = vld [vmem:[%s6385 + $0xf8] sm:$0x1f]
      %v7351 = vshrl.u32 %v6964, 16
      %v7353 = vrot.slane %v7351, 4
      %v7354 = vshll.u32 %v6964, 16
      %v7356 = vrot.slane %v7354, 5
      %v7357 = vor.u32 %v7353, %v7356
      %v7359 = vshrl.u32 %v7334, 16
      %v7361 = vrot.slane %v7359, 4
      %v7362 = vshll.u32 %v7334, 16
      %v7364 = vrot.slane %v7362, 5
      %v7365 = vor.u32 %v7361, %v7364
      %v7366 = vsel %vm4328, %v7357, %v7365
      %v7368 = vshrl.u32 %v6965, 16
      %v7370 = vrot.slane %v7368, 4
      %v7371 = vshll.u32 %v6965, 16
      %v7373 = vrot.slane %v7371, 5
      %v7374 = vor.u32 %v7370, %v7373
      %v7376 = vshrl.u32 %v7335, 16
      %v7378 = vrot.slane %v7376, 4
      %v7379 = vshll.u32 %v7335, 16
      %v7381 = vrot.slane %v7379, 5
      %v7382 = vor.u32 %v7378, %v7381
      %v7383 = vsel %vm4328, %v7374, %v7382
      %v7385 = vshrl.u32 %v6966, 16
      %v7387 = vrot.slane %v7385, 4
      %v7388 = vshll.u32 %v6966, 16
      %v7390 = vrot.slane %v7388, 5
      %v7391 = vor.u32 %v7387, %v7390
      %v7393 = vshrl.u32 %v7336, 16
      %v7395 = vrot.slane %v7393, 4
      %v7396 = vshll.u32 %v7336, 16
      %v7398 = vrot.slane %v7396, 5
      %v7399 = vor.u32 %v7395, %v7398
      %v7400 = vsel %vm4328, %v7391, %v7399
      %v7402 = vshrl.u32 %v6967, 16
      %v7404 = vrot.slane %v7402, 4
      %v7405 = vshll.u32 %v6967, 16
      %v7407 = vrot.slane %v7405, 5
      %v7408 = vor.u32 %v7404, %v7407
      %v7410 = vshrl.u32 %v7337, 16
      %v7412 = vrot.slane %v7410, 4
      %v7413 = vshll.u32 %v7337, 16
      %v7415 = vrot.slane %v7413, 5
      %v7416 = vor.u32 %v7412, %v7415
      %v7417 = vsel %vm4328, %v7408, %v7416
      %v7419 = vshrl.u32 %v6968, 16
      %v7421 = vrot.slane %v7419, 4
      %v7422 = vshll.u32 %v6968, 16
      %v7424 = vrot.slane %v7422, 5
      %v7425 = vor.u32 %v7421, %v7424
      %v7427 = vshrl.u32 %v7338, 16
      %v7429 = vrot.slane %v7427, 4
      %v7430 = vshll.u32 %v7338, 16
      %v7432 = vrot.slane %v7430, 5
      %v7433 = vor.u32 %v7429, %v7432
      %v7434 = vsel %vm4328, %v7425, %v7433
      %v7436 = vshrl.u32 %v6969, 16
      %v7438 = vrot.slane %v7436, 4
      %v7439 = vshll.u32 %v6969, 16
      %v7441 = vrot.slane %v7439, 5
      %v7442 = vor.u32 %v7438, %v7441
      %v7444 = vshrl.u32 %v7339, 16
      %v7446 = vrot.slane %v7444, 4
      %v7447 = vshll.u32 %v7339, 16
      %v7449 = vrot.slane %v7447, 5
      %v7450 = vor.u32 %v7446, %v7449
      %v7451 = vsel %vm4328, %v7442, %v7450
      %v7453 = vshrl.u32 %v6970, 16
      %v7455 = vrot.slane %v7453, 4
      %v7456 = vshll.u32 %v6970, 16
      %v7458 = vrot.slane %v7456, 5
      %v7459 = vor.u32 %v7455, %v7458
      %v7461 = vshrl.u32 %v7340, 16
      %v7463 = vrot.slane %v7461, 4
      %v7464 = vshll.u32 %v7340, 16
      %v7466 = vrot.slane %v7464, 5
      %v7467 = vor.u32 %v7463, %v7466
      %v7468 = vsel %vm4328, %v7459, %v7467
      %v7470 = vshrl.u32 %v6971, 16
      %v7472 = vrot.slane %v7470, 4
      %v7473 = vshll.u32 %v6971, 16
      %v7475 = vrot.slane %v7473, 5
      %v7476 = vor.u32 %v7472, %v7475
      %v7478 = vshrl.u32 %v7341, 16
      %v7480 = vrot.slane %v7478, 4
      %v7481 = vshll.u32 %v7341, 16
      %v7483 = vrot.slane %v7481, 5
      %v7484 = vor.u32 %v7480, %v7483
      %v7485 = vsel %vm4328, %v7476, %v7484
      %v7487 = vshrl.u32 %v6972, 16
      %v7489 = vrot.slane %v7487, 4
      %v7490 = vshll.u32 %v6972, 16
      %v7492 = vrot.slane %v7490, 5
      %v7493 = vor.u32 %v7489, %v7492
      %v7495 = vshrl.u32 %v7342, 16
      %v7497 = vrot.slane %v7495, 4
      %v7498 = vshll.u32 %v7342, 16
      %v7500 = vrot.slane %v7498, 5
      %v7501 = vor.u32 %v7497, %v7500
      %v7502 = vsel %vm4328, %v7493, %v7501
      %v7504 = vshrl.u32 %v6973, 16
      %v7506 = vrot.slane %v7504, 4
      %v7507 = vshll.u32 %v6973, 16
      %v7509 = vrot.slane %v7507, 5
      %v7510 = vor.u32 %v7506, %v7509
      %v7512 = vshrl.u32 %v7343, 16
      %v7514 = vrot.slane %v7512, 4
      %v7515 = vshll.u32 %v7343, 16
      %v7517 = vrot.slane %v7515, 5
      %v7518 = vor.u32 %v7514, %v7517
      %v7519 = vsel %vm4328, %v7510, %v7518
      %v7521 = vshrl.u32 %v6974, 16
      %v7523 = vrot.slane %v7521, 4
      %v7524 = vshll.u32 %v6974, 16
      %v7526 = vrot.slane %v7524, 5
      %v7527 = vor.u32 %v7523, %v7526
      %v7529 = vshrl.u32 %v7344, 16
      %v7531 = vrot.slane %v7529, 4
      %v7532 = vshll.u32 %v7344, 16
      %v7534 = vrot.slane %v7532, 5
      %v7535 = vor.u32 %v7531, %v7534
      %v7536 = vsel %vm4328, %v7527, %v7535
      %v7538 = vshrl.u32 %v6975, 16
      %v7540 = vrot.slane %v7538, 4
      %v7541 = vshll.u32 %v6975, 16
      %v7543 = vrot.slane %v7541, 5
      %v7544 = vor.u32 %v7540, %v7543
      %v7546 = vshrl.u32 %v7345, 16
      %v7548 = vrot.slane %v7546, 4
      %v7549 = vshll.u32 %v7345, 16
      %v7551 = vrot.slane %v7549, 5
      %v7552 = vor.u32 %v7548, %v7551
      %v7553 = vsel %vm4328, %v7544, %v7552
      %v7555 = vshrl.u32 %v6976, 16
      %v7557 = vrot.slane %v7555, 4
      %v7558 = vshll.u32 %v6976, 16
      %v7560 = vrot.slane %v7558, 5
      %v7561 = vor.u32 %v7557, %v7560
      %v7563 = vshrl.u32 %v7346, 16
      %v7565 = vrot.slane %v7563, 4
      %v7566 = vshll.u32 %v7346, 16
      %v7568 = vrot.slane %v7566, 5
      %v7569 = vor.u32 %v7565, %v7568
      %v7570 = vsel %vm4328, %v7561, %v7569
      %v7572 = vshrl.u32 %v6977, 16
      %v7574 = vrot.slane %v7572, 4
      %v7575 = vshll.u32 %v6977, 16
      %v7577 = vrot.slane %v7575, 5
      %v7578 = vor.u32 %v7574, %v7577
      %v7580 = vshrl.u32 %v7347, 16
      %v7582 = vrot.slane %v7580, 4
      %v7583 = vshll.u32 %v7347, 16
      %v7585 = vrot.slane %v7583, 5
      %v7586 = vor.u32 %v7582, %v7585
      %v7587 = vsel %vm4328, %v7578, %v7586
      %v7589 = vshrl.u32 %v6978, 16
      %v7591 = vrot.slane %v7589, 4
      %v7592 = vshll.u32 %v6978, 16
      %v7594 = vrot.slane %v7592, 5
      %v7595 = vor.u32 %v7591, %v7594
      %v7597 = vshrl.u32 %v7348, 16
      %v7599 = vrot.slane %v7597, 4
      %v7600 = vshll.u32 %v7348, 16
      %v7602 = vrot.slane %v7600, 5
      %v7603 = vor.u32 %v7599, %v7602
      %v7604 = vsel %vm4328, %v7595, %v7603
      %v7606 = vshrl.u32 %v6979, 16
      %v7608 = vrot.slane %v7606, 4
      %v7609 = vshll.u32 %v6979, 16
      %v7611 = vrot.slane %v7609, 5
      %v7612 = vor.u32 %v7608, %v7611
      %v7614 = vshrl.u32 %v7349, 16
      %v7616 = vrot.slane %v7614, 4
      %v7617 = vshll.u32 %v7349, 16
      %v7619 = vrot.slane %v7617, 5
      %v7620 = vor.u32 %v7616, %v7619
      %v7621 = vsel %vm4328, %v7612, %v7620
      %s7622 = scalar_lea.vmem %s3, 256
      %v7623 = vld [vmem:[%s7622] sm:$0xf]
      %v7624 = vld [vmem:[%s7622 + $0x4] sm:$0xf]
      %v7625 = vld [vmem:[%s7622 + $0x8] sm:$0xf]
      %v7626 = vld [vmem:[%s7622 + $0xc] sm:$0xf]
      %v7627 = vld [vmem:[%s7622 + $0x10] sm:$0xf]
      %v7628 = vld [vmem:[%s7622 + $0x14] sm:$0xf]
      %v7629 = vld [vmem:[%s7622 + $0x18] sm:$0xf]
      %v7630 = vld [vmem:[%s7622 + $0x1c] sm:$0xf]
      %v7639 = vunpack.c.l.b16 %v7623
      %v7640 = vunpack.c.l.b16 %v7624
      %v7641 = vunpack.c.l.b16 %v7625
      %v7642 = vunpack.c.l.b16 %v7626
      %v7643 = vunpack.c.l.b16 %v7627
      %v7644 = vunpack.c.l.b16 %v7628
      %v7645 = vunpack.c.l.b16 %v7629
      %v7646 = vunpack.c.l.b16 %v7630
      %v7647 = vpack.c.b16 %v7640, %v7639
      %v7648 = vpack.c.b16 %v7642, %v7641
      %v7649 = vpack.c.b16 %v7644, %v7643
      %v7650 = vpack.c.b16 %v7646, %v7645
      %v7656 = vsel %vm368, %v7366, 0
      %v7659 = vsel %vm368, %v7383, 0
      %v7662 = vsel %vm368, %v7400, 0
      %v7665 = vsel %vm368, %v7417, 0
      %v7668 = vsel %vm368, %v7434, 0
      %v7671 = vsel %vm368, %v7451, 0
      %v7674 = vsel %vm368, %v7468, 0
      %v7677 = vsel %vm368, %v7485, 0
      %v7680 = vsel %vm368, %v7502, 0
      %v7683 = vsel %vm368, %v7519, 0
      %v7686 = vsel %vm368, %v7536, 0
      %v7689 = vsel %vm368, %v7553, 0
      %v7692 = vsel %vm368, %v7570, 0
      %v7695 = vsel %vm368, %v7587, 0
      %v7698 = vsel %vm368, %v7604, 0
      %v7701 = vsel %vm368, %v7621, 0
      %7703 = vmatprep.subr.bf16.mxu0 0
      %7704 = vmatpush1.bf16.msra.mxu0 %v7647
      %7705 = vmatprep.subr.bf16.mxu0 0
      %7706 = vmatpush1.bf16.msra.mxu0 %v7648
      %7707 = vmatprep.subr.bf16.mxu0 0
      %7708 = vmatpush1.bf16.msra.mxu0 %v7649
      %7709 = vmatprep.subr.bf16.mxu0 0
      %7710 = vmatpush1.bf16.msra.mxu0 %v7650
      %7711 = vmatprep.subr.bf16.mxu0 0
      %7712 = vmatpush1.bf16.msra.mxu0 0
      %7713 = vmatprep.subr.bf16.mxu0 0
      %7714 = vmatpush1.bf16.msra.mxu0 0
      %7715 = vmatprep.subr.bf16.mxu0 0
      %7716 = vmatpush1.bf16.msra.mxu0 0
      %7717 = vmatprep.subr.bf16.mxu0 0
      %7718 = vmatpush1.bf16.msra.mxu0 0
      %7719 = vmatprep.subr.bf16.mxu0 0
      %7720 = vmatpush1.bf16.msra.mxu0 0
      %7721 = vmatprep.subr.bf16.mxu0 0
      %7722 = vmatpush1.bf16.msra.mxu0 0
      %7723 = vmatprep.subr.bf16.mxu0 0
      %7724 = vmatpush1.bf16.msra.mxu0 0
      %7725 = vmatprep.subr.bf16.mxu0 0
      %7726 = vmatpush1.bf16.msra.mxu0 0
      %7727 = vmatprep.subr.bf16.mxu0 0
      %7728 = vmatpush1.bf16.msra.mxu0 0
      %7729 = vmatprep.subr.bf16.mxu0 0
      %7730 = vmatpush1.bf16.msra.mxu0 0
      %7731 = vmatprep.subr.bf16.mxu0 0
      %7732 = vmatpush1.bf16.msra.mxu0 0
      %7733 = vmatprep.subr.bf16.mxu0 0
      %7734 = vmatpush1.bf16.msra.mxu0 0
      %7735 = vmatprep.mubr.bf16.mxu0 0
      %7736 = vmatmul.mubr.bf16.gmra.mrb[0].mxu0 %v7656
      %v7737 = vpop.f32.mrb[0].mxu0
      %v7738 = vadd.f32 0.0, %v7737
      %v7739 = vpop.f32.mrb[0].mxu0
      %v7740 = vpop.f32.mrb[0].mxu0
      %v7741 = vadd.f32 0.0, %v7740
      %v7742 = vpop.f32.mrb[0].mxu0
      %7743 = vmatprep.mubr.bf16.mxu0 0
      %7744 = vmatmul.mubr.bf16.gmra.mrb[0].mxu0 %v7659
      %v7745 = vpop.f32.mrb[0].mxu0
      %v7746 = vadd.f32 0.0, %v7745
      %v7747 = vpop.f32.mrb[0].mxu0
      %v7748 = vpop.f32.mrb[0].mxu0
      %v7749 = vadd.f32 0.0, %v7748
      %v7750 = vpop.f32.mrb[0].mxu0
      %7751 = vmatprep.mubr.bf16.mxu0 0
      %7752 = vmatmul.mubr.bf16.gmra.mrb[0].mxu0 %v7662
      %v7753 = vpop.f32.mrb[0].mxu0
      %v7754 = vadd.f32 0.0, %v7753
      %v7755 = vpop.f32.mrb[0].mxu0
      %v7756 = vpop.f32.mrb[0].mxu0
      %v7757 = vadd.f32 0.0, %v7756
      %v7758 = vpop.f32.mrb[0].mxu0
      %7759 = vmatprep.mubr.bf16.mxu0 0
      %7760 = vmatmul.mubr.bf16.gmra.mrb[0].mxu0 %v7665
      %v7761 = vpop.f32.mrb[0].mxu0
      %v7762 = vadd.f32 0.0, %v7761
      %v7763 = vpop.f32.mrb[0].mxu0
      %v7764 = vpop.f32.mrb[0].mxu0
      %v7765 = vadd.f32 0.0, %v7764
      %v7766 = vpop.f32.mrb[0].mxu0
      %7767 = vmatprep.mubr.bf16.mxu0 0
      %7768 = vmatmul.mubr.bf16.gmra.mrb[0].mxu0 %v7668
      %v7769 = vpop.f32.mrb[0].mxu0
      %v7770 = vadd.f32 0.0, %v7769
      %v7771 = vpop.f32.mrb[0].mxu0
      %v7772 = vpop.f32.mrb[0].mxu0
      %v7773 = vadd.f32 0.0, %v7772
      %v7774 = vpop.f32.mrb[0].mxu0
      %7775 = vmatprep.mubr.bf16.mxu0 0
      %7776 = vmatmul.mubr.bf16.gmra.mrb[0].mxu0 %v7671
      %v7777 = vpop.f32.mrb[0].mxu0
      %v7778 = vadd.f32 0.0, %v7777
      %v7779 = vpop.f32.mrb[0].mxu0
      %v7780 = vpop.f32.mrb[0].mxu0
      %v7781 = vadd.f32 0.0, %v7780
      %v7782 = vpop.f32.mrb[0].mxu0
      %7783 = vmatprep.mubr.bf16.mxu0 0
      %7784 = vmatmul.mubr.bf16.gmra.mrb[0].mxu0 %v7674
      %v7785 = vpop.f32.mrb[0].mxu0
      %v7786 = vadd.f32 0.0, %v7785
      %v7787 = vpop.f32.mrb[0].mxu0
      %v7788 = vpop.f32.mrb[0].mxu0
      %v7789 = vadd.f32 0.0, %v7788
      %v7790 = vpop.f32.mrb[0].mxu0
      %7791 = vmatprep.mubr.bf16.mxu0 0
      %7792 = vmatmul.mubr.bf16.gmra.mrb[0].mxu0 %v7677
      %v7793 = vpop.f32.mrb[0].mxu0
      %v7794 = vadd.f32 0.0, %v7793
      %v7795 = vpop.f32.mrb[0].mxu0
      %v7796 = vpop.f32.mrb[0].mxu0
      %v7797 = vadd.f32 0.0, %v7796
      %v7798 = vpop.f32.mrb[0].mxu0
      %7799 = vmatprep.mubr.bf16.mxu0 0
      %7800 = vmatmul.mubr.bf16.gmra.mrb[0].mxu0 %v7680
      %v7801 = vpop.f32.mrb[0].mxu0
      %v7802 = vadd.f32 0.0, %v7801
      %v7803 = vpop.f32.mrb[0].mxu0
      %v7804 = vpop.f32.mrb[0].mxu0
      %v7805 = vadd.f32 0.0, %v7804
      %v7806 = vpop.f32.mrb[0].mxu0
      %7807 = vmatprep.mubr.bf16.mxu0 0
      %7808 = vmatmul.mubr.bf16.gmra.mrb[0].mxu0 %v7683
      %v7809 = vpop.f32.mrb[0].mxu0
      %v7810 = vadd.f32 0.0, %v7809
      %v7811 = vpop.f32.mrb[0].mxu0
      %v7812 = vpop.f32.mrb[0].mxu0
      %v7813 = vadd.f32 0.0, %v7812
      %v7814 = vpop.f32.mrb[0].mxu0
      %7815 = vmatprep.mubr.bf16.mxu0 0
      %7816 = vmatmul.mubr.bf16.gmra.mrb[0].mxu0 %v7686
      %v7817 = vpop.f32.mrb[0].mxu0
      %v7818 = vadd.f32 0.0, %v7817
      %v7819 = vpop.f32.mrb[0].mxu0
      %v7820 = vpop.f32.mrb[0].mxu0
      %v7821 = vadd.f32 0.0, %v7820
      %v7822 = vpop.f32.mrb[0].mxu0
      %7823 = vmatprep.mubr.bf16.mxu0 0
      %7824 = vmatmul.mubr.bf16.gmra.mrb[0].mxu0 %v7689
      %v7825 = vpop.f32.mrb[0].mxu0
      %v7826 = vadd.f32 0.0, %v7825
      %v7827 = vpop.f32.mrb[0].mxu0
      %v7828 = vpop.f32.mrb[0].mxu0
      %v7829 = vadd.f32 0.0, %v7828
      %v7830 = vpop.f32.mrb[0].mxu0
      %7831 = vmatprep.mubr.bf16.mxu0 0
      %7832 = vmatmul.mubr.bf16.gmra.mrb[0].mxu0 %v7692
      %v7833 = vpop.f32.mrb[0].mxu0
      %v7834 = vadd.f32 0.0, %v7833
      %v7835 = vpop.f32.mrb[0].mxu0
      %v7836 = vpop.f32.mrb[0].mxu0
      %v7837 = vadd.f32 0.0, %v7836
      %v7838 = vpop.f32.mrb[0].mxu0
      %7839 = vmatprep.mubr.bf16.mxu0 0
      %7840 = vmatmul.mubr.bf16.gmra.mrb[0].mxu0 %v7695
      %v7841 = vpop.f32.mrb[0].mxu0
      %v7842 = vadd.f32 0.0, %v7841
      %v7843 = vpop.f32.mrb[0].mxu0
      %v7844 = vpop.f32.mrb[0].mxu0
      %v7845 = vadd.f32 0.0, %v7844
      %v7846 = vpop.f32.mrb[0].mxu0
      %7847 = vmatprep.mubr.bf16.mxu0 0
      %7848 = vmatmul.mubr.bf16.gmra.mrb[0].mxu0 %v7698
      %v7849 = vpop.f32.mrb[0].mxu0
      %v7850 = vadd.f32 0.0, %v7849
      %v7851 = vpop.f32.mrb[0].mxu0
      %v7852 = vpop.f32.mrb[0].mxu0
      %v7853 = vadd.f32 0.0, %v7852
      %v7854 = vpop.f32.mrb[0].mxu0
      %7855 = vmatprep.mubr.bf16.mxu0 0
      %7856 = vmatmul.mubr.bf16.gmra.mrb[0].mxu0 %v7701
      %v7857 = vpop.f32.mrb[0].mxu0
      %v7858 = vadd.f32 0.0, %v7857
      %v7859 = vpop.f32.mrb[0].mxu0
      %v7860 = vpop.f32.mrb[0].mxu0
      %v7861 = vadd.f32 0.0, %v7860
      %v7862 = vpop.f32.mrb[0].mxu0
      %7863 = vdwg.mxu0
      %v7864 = vadd.f32 %v7302, %v7738
      %v7865 = vadd.f32 %v7303, %v7741
      %v7866 = vadd.f32 %v7304, %v7746
      %v7867 = vadd.f32 %v7305, %v7749
      %v7868 = vadd.f32 %v7306, %v7754
      %v7869 = vadd.f32 %v7307, %v7757
      %v7870 = vadd.f32 %v7308, %v7762
      %v7871 = vadd.f32 %v7309, %v7765
      %v7872 = vadd.f32 %v7310, %v7770
      %v7873 = vadd.f32 %v7311, %v7773
      %v7874 = vadd.f32 %v7312, %v7778
      %v7875 = vadd.f32 %v7313, %v7781
      %v7876 = vadd.f32 %v7314, %v7786
      %v7877 = vadd.f32 %v7315, %v7789
      %v7878 = vadd.f32 %v7316, %v7794
      %v7879 = vadd.f32 %v7317, %v7797
      %v7880 = vadd.f32 %v7318, %v7802
      %v7881 = vadd.f32 %v7319, %v7805
      %v7882 = vadd.f32 %v7320, %v7810
      %v7883 = vadd.f32 %v7321, %v7813
      %v7884 = vadd.f32 %v7322, %v7818
      %v7885 = vadd.f32 %v7323, %v7821
      %v7886 = vadd.f32 %v7324, %v7826
      %v7887 = vadd.f32 %v7325, %v7829
      %v7888 = vadd.f32 %v7326, %v7834
      %v7889 = vadd.f32 %v7327, %v7837
      %v7890 = vadd.f32 %v7328, %v7842
      %v7891 = vadd.f32 %v7329, %v7845
      %v7892 = vadd.f32 %v7330, %v7850
      %v7893 = vadd.f32 %v7331, %v7853
      %v7894 = vadd.f32 %v7332, %v7858
      %v7895 = vadd.f32 %v7333, %v7861
      %v7896 = vmax.f32 %v7864, 0.0
      %v7897 = vmax.f32 %v7865, 0.0
      %v7898 = vmax.f32 %v7866, 0.0
      %v7899 = vmax.f32 %v7867, 0.0
      %v7900 = vmax.f32 %v7868, 0.0
      %v7901 = vmax.f32 %v7869, 0.0
      %v7902 = vmax.f32 %v7870, 0.0
      %v7903 = vmax.f32 %v7871, 0.0
      %v7904 = vmax.f32 %v7872, 0.0
      %v7905 = vmax.f32 %v7873, 0.0
      %v7906 = vmax.f32 %v7874, 0.0
      %v7907 = vmax.f32 %v7875, 0.0
      %v7908 = vmax.f32 %v7876, 0.0
      %v7909 = vmax.f32 %v7877, 0.0
      %v7910 = vmax.f32 %v7878, 0.0
      %v7911 = vmax.f32 %v7879, 0.0
      %v7912 = vmax.f32 %v7880, 0.0
      %v7913 = vmax.f32 %v7881, 0.0
      %v7914 = vmax.f32 %v7882, 0.0
      %v7915 = vmax.f32 %v7883, 0.0
      %v7916 = vmax.f32 %v7884, 0.0
      %v7917 = vmax.f32 %v7885, 0.0
      %v7918 = vmax.f32 %v7886, 0.0
      %v7919 = vmax.f32 %v7887, 0.0
      %v7920 = vmax.f32 %v7888, 0.0
      %v7921 = vmax.f32 %v7889, 0.0
      %v7922 = vmax.f32 %v7890, 0.0
      %v7923 = vmax.f32 %v7891, 0.0
      %v7924 = vmax.f32 %v7892, 0.0
      %v7925 = vmax.f32 %v7893, 0.0
      %v7926 = vmax.f32 %v7894, 0.0
      %v7927 = vmax.f32 %v7895, 0.0
      %v7928 = vpack.c.bf16 %v7897, %v7896
      %v7929 = vpack.c.bf16 %v7899, %v7898
      %v7930 = vpack.c.bf16 %v7901, %v7900
      %v7931 = vpack.c.bf16 %v7903, %v7902
      %v7932 = vpack.c.bf16 %v7905, %v7904
      %v7933 = vpack.c.bf16 %v7907, %v7906
      %v7934 = vpack.c.bf16 %v7909, %v7908
      %v7935 = vpack.c.bf16 %v7911, %v7910
      %v7936 = vpack.c.bf16 %v7913, %v7912
      %v7937 = vpack.c.bf16 %v7915, %v7914
      %v7938 = vpack.c.bf16 %v7917, %v7916
      %v7939 = vpack.c.bf16 %v7919, %v7918
      %v7940 = vpack.c.bf16 %v7921, %v7920
      %v7941 = vpack.c.bf16 %v7923, %v7922
      %v7942 = vpack.c.bf16 %v7925, %v7924
      %v7943 = vpack.c.bf16 %v7927, %v7926
      %v7944 = vld [vmem:[%s5] sm:$0xf]
      %v7945 = vld [vmem:[%s5 + $0x4] sm:$0xf]
      %v7946 = vld [vmem:[%s5 + $0x8] sm:$0xf]
      %v7947 = vld [vmem:[%s5 + $0xc] sm:$0xf]
      %v7948 = vld [vmem:[%s5 + $0x10] sm:$0xf]
      %v7949 = vld [vmem:[%s5 + $0x14] sm:$0xf]
      %v7950 = vld [vmem:[%s5 + $0x18] sm:$0xf]
      %v7951 = vld [vmem:[%s5 + $0x1c] sm:$0xf]
      %v7952 = vld [vmem:[%s6] sm:$0x1]
      %v7954 = vlaneseq
      %v7955 = vshrl.u32 %v7954, 7
      %v7956 = vsub.s32 0, %v7955
      %v7957 = vrot.slane %v7952, %v7956
      %v7967 = vunpack.c.l.b16 %v7944
      %v7968 = vunpack.c.l.b16 %v7945
      %v7969 = vunpack.c.l.b16 %v7946
      %v7970 = vunpack.c.l.b16 %v7947
      %v7971 = vunpack.c.l.b16 %v7948
      %v7972 = vunpack.c.l.b16 %v7949
      %v7973 = vunpack.c.l.b16 %v7950
      %v7974 = vunpack.c.l.b16 %v7951
      %v7975 = vpack.c.b16 %v7968, %v7967
      %v7976 = vpack.c.b16 %v7970, %v7969
      %v7977 = vpack.c.b16 %v7972, %v7971
      %v7978 = vpack.c.b16 %v7974, %v7973
      %v7984 = vsel %vm368, %v7928, 0
      %v7987 = vsel %vm368, %v7929, 0
      %v7990 = vsel %vm368, %v7930, 0
      %v7993 = vsel %vm368, %v7931, 0
      %v7996 = vsel %vm368, %v7932, 0
      %v7999 = vsel %vm368, %v7933, 0
      %v8002 = vsel %vm368, %v7934, 0
      %v8005 = vsel %vm368, %v7935, 0
      %v8008 = vsel %vm368, %v7936, 0
      %v8011 = vsel %vm368, %v7937, 0
      %v8014 = vsel %vm368, %v7938, 0
      %v8017 = vsel %vm368, %v7939, 0
      %v8020 = vsel %vm368, %v7940, 0
      %v8023 = vsel %vm368, %v7941, 0
      %v8026 = vsel %vm368, %v7942, 0
      %v8029 = vsel %vm368, %v7943, 0
      %8031 = vmatprep.subr.bf16.mxu0 0
      %8032 = vmatpush1.bf16.msra.mxu0 %v7975
      %8033 = vmatprep.subr.bf16.mxu0 0
      %8034 = vmatpush1.bf16.msra.mxu0 %v7976
      %8035 = vmatprep.subr.bf16.mxu0 0
      %8036 = vmatpush1.bf16.msra.mxu0 %v7977
      %8037 = vmatprep.subr.bf16.mxu0 0
      %8038 = vmatpush1.bf16.msra.mxu0 %v7978
      %8039 = vmatprep.subr.bf16.mxu0 0
      %8040 = vmatpush1.bf16.msra.mxu0 0
      %8041 = vmatprep.subr.bf16.mxu0 0
      %8042 = vmatpush1.bf16.msra.mxu0 0
      %8043 = vmatprep.subr.bf16.mxu0 0
      %8044 = vmatpush1.bf16.msra.mxu0 0
      %8045 = vmatprep.subr.bf16.mxu0 0
      %8046 = vmatpush1.bf16.msra.mxu0 0
      %8047 = vmatprep.subr.bf16.mxu0 0
      %8048 = vmatpush1.bf16.msra.mxu0 0
      %8049 = vmatprep.subr.bf16.mxu0 0
      %8050 = vmatpush1.bf16.msra.mxu0 0
      %8051 = vmatprep.subr.bf16.mxu0 0
      %8052 = vmatpush1.bf16.msra.mxu0 0
      %8053 = vmatprep.subr.bf16.mxu0 0
      %8054 = vmatpush1.bf16.msra.mxu0 0
      %8055 = vmatprep.subr.bf16.mxu0 0
      %8056 = vmatpush1.bf16.msra.mxu0 0
      %8057 = vmatprep.subr.bf16.mxu0 0
      %8058 = vmatpush1.bf16.msra.mxu0 0
      %8059 = vmatprep.subr.bf16.mxu0 0
      %8060 = vmatpush1.bf16.msra.mxu0 0
      %8061 = vmatprep.subr.bf16.mxu0 0
      %8062 = vmatpush1.bf16.msra.mxu0 0
      %8063 = vmatprep.mubr.bf16.mxu0 0
      %8064 = vmatmul.mubr.bf16.gmra.mrb[0].mxu0 %v7984
      %v8065 = vpop.f32.mrb[0].mxu0
      %v8066 = vadd.f32 %v7957, %v8065
      %v8067 = vpop.f32.mrb[0].mxu0
      %v8068 = vpop.f32.mrb[0].mxu0
      %v8069 = vadd.f32 %v7957, %v8068
      %v8070 = vpop.f32.mrb[0].mxu0
      %8071 = vmatprep.mubr.bf16.mxu0 0
      %8072 = vmatmul.mubr.bf16.gmra.mrb[0].mxu0 %v7987
      %v8073 = vpop.f32.mrb[0].mxu0
      %v8074 = vadd.f32 %v7957, %v8073
      %v8075 = vpop.f32.mrb[0].mxu0
      %v8076 = vpop.f32.mrb[0].mxu0
      %v8077 = vadd.f32 %v7957, %v8076
      %v8078 = vpop.f32.mrb[0].mxu0
      %8079 = vmatprep.mubr.bf16.mxu0 0
      %8080 = vmatmul.mubr.bf16.gmra.mrb[0].mxu0 %v7990
      %v8081 = vpop.f32.mrb[0].mxu0
      %v8082 = vadd.f32 %v7957, %v8081
      %v8083 = vpop.f32.mrb[0].mxu0
      %v8084 = vpop.f32.mrb[0].mxu0
      %v8085 = vadd.f32 %v7957, %v8084
      %v8086 = vpop.f32.mrb[0].mxu0
      %8087 = vmatprep.mubr.bf16.mxu0 0
      %8088 = vmatmul.mubr.bf16.gmra.mrb[0].mxu0 %v7993
      %v8089 = vpop.f32.mrb[0].mxu0
      %v8090 = vadd.f32 %v7957, %v8089
      %v8091 = vpop.f32.mrb[0].mxu0
      %v8092 = vpop.f32.mrb[0].mxu0
      %v8093 = vadd.f32 %v7957, %v8092
      %v8094 = vpop.f32.mrb[0].mxu0
      %8095 = vmatprep.mubr.bf16.mxu0 0
      %8096 = vmatmul.mubr.bf16.gmra.mrb[0].mxu0 %v7996
      %v8097 = vpop.f32.mrb[0].mxu0
      %v8098 = vadd.f32 %v7957, %v8097
      %v8099 = vpop.f32.mrb[0].mxu0
      %v8100 = vpop.f32.mrb[0].mxu0
      %v8101 = vadd.f32 %v7957, %v8100
      %v8102 = vpop.f32.mrb[0].mxu0
      %8103 = vmatprep.mubr.bf16.mxu0 0
      %8104 = vmatmul.mubr.bf16.gmra.mrb[0].mxu0 %v7999
      %v8105 = vpop.f32.mrb[0].mxu0
      %v8106 = vadd.f32 %v7957, %v8105
      %v8107 = vpop.f32.mrb[0].mxu0
      %v8108 = vpop.f32.mrb[0].mxu0
      %v8109 = vadd.f32 %v7957, %v8108
      %v8110 = vpop.f32.mrb[0].mxu0
      %8111 = vmatprep.mubr.bf16.mxu0 0
      %8112 = vmatmul.mubr.bf16.gmra.mrb[0].mxu0 %v8002
      %v8113 = vpop.f32.mrb[0].mxu0
      %v8114 = vadd.f32 %v7957, %v8113
      %v8115 = vpop.f32.mrb[0].mxu0
      %v8116 = vpop.f32.mrb[0].mxu0
      %v8117 = vadd.f32 %v7957, %v8116
      %v8118 = vpop.f32.mrb[0].mxu0
      %8119 = vmatprep.mubr.bf16.mxu0 0
      %8120 = vmatmul.mubr.bf16.gmra.mrb[0].mxu0 %v8005
      %v8121 = vpop.f32.mrb[0].mxu0
      %v8122 = vadd.f32 %v7957, %v8121
      %v8123 = vpop.f32.mrb[0].mxu0
      %v8124 = vpop.f32.mrb[0].mxu0
      %v8125 = vadd.f32 %v7957, %v8124
      %v8126 = vpop.f32.mrb[0].mxu0
      %8127 = vmatprep.mubr.bf16.mxu0 0
      %8128 = vmatmul.mubr.bf16.gmra.mrb[0].mxu0 %v8008
      %v8129 = vpop.f32.mrb[0].mxu0
      %v8130 = vadd.f32 %v7957, %v8129
      %v8131 = vpop.f32.mrb[0].mxu0
      %v8132 = vpop.f32.mrb[0].mxu0
      %v8133 = vadd.f32 %v7957, %v8132
      %v8134 = vpop.f32.mrb[0].mxu0
      %8135 = vmatprep.mubr.bf16.mxu0 0
      %8136 = vmatmul.mubr.bf16.gmra.mrb[0].mxu0 %v8011
      %v8137 = vpop.f32.mrb[0].mxu0
      %v8138 = vadd.f32 %v7957, %v8137
      %v8139 = vpop.f32.mrb[0].mxu0
      %v8140 = vpop.f32.mrb[0].mxu0
      %v8141 = vadd.f32 %v7957, %v8140
      %v8142 = vpop.f32.mrb[0].mxu0
      %8143 = vmatprep.mubr.bf16.mxu0 0
      %8144 = vmatmul.mubr.bf16.gmra.mrb[0].mxu0 %v8014
      %v8145 = vpop.f32.mrb[0].mxu0
      %v8146 = vadd.f32 %v7957, %v8145
      %v8147 = vpop.f32.mrb[0].mxu0
      %v8148 = vpop.f32.mrb[0].mxu0
      %v8149 = vadd.f32 %v7957, %v8148
      %v8150 = vpop.f32.mrb[0].mxu0
      %8151 = vmatprep.mubr.bf16.mxu0 0
      %8152 = vmatmul.mubr.bf16.gmra.mrb[0].mxu0 %v8017
      %v8153 = vpop.f32.mrb[0].mxu0
      %v8154 = vadd.f32 %v7957, %v8153
      %v8155 = vpop.f32.mrb[0].mxu0
      %v8156 = vpop.f32.mrb[0].mxu0
      %v8157 = vadd.f32 %v7957, %v8156
      %v8158 = vpop.f32.mrb[0].mxu0
      %8159 = vmatprep.mubr.bf16.mxu0 0
      %8160 = vmatmul.mubr.bf16.gmra.mrb[0].mxu0 %v8020
      %v8161 = vpop.f32.mrb[0].mxu0
      %v8162 = vadd.f32 %v7957, %v8161
      %v8163 = vpop.f32.mrb[0].mxu0
      %v8164 = vpop.f32.mrb[0].mxu0
      %v8165 = vadd.f32 %v7957, %v8164
      %v8166 = vpop.f32.mrb[0].mxu0
      %8167 = vmatprep.mubr.bf16.mxu0 0
      %8168 = vmatmul.mubr.bf16.gmra.mrb[0].mxu0 %v8023
      %v8169 = vpop.f32.mrb[0].mxu0
      %v8170 = vadd.f32 %v7957, %v8169
      %v8171 = vpop.f32.mrb[0].mxu0
      %v8172 = vpop.f32.mrb[0].mxu0
      %v8173 = vadd.f32 %v7957, %v8172
      %v8174 = vpop.f32.mrb[0].mxu0
      %8175 = vmatprep.mubr.bf16.mxu0 0
      %8176 = vmatmul.mubr.bf16.gmra.mrb[0].mxu0 %v8026
      %v8177 = vpop.f32.mrb[0].mxu0
      %v8178 = vadd.f32 %v7957, %v8177
      %v8179 = vpop.f32.mrb[0].mxu0
      %v8180 = vpop.f32.mrb[0].mxu0
      %v8181 = vadd.f32 %v7957, %v8180
      %v8182 = vpop.f32.mrb[0].mxu0
      %8183 = vmatprep.mubr.bf16.mxu0 0
      %8184 = vmatmul.mubr.bf16.gmra.mrb[0].mxu0 %v8029
      %v8185 = vpop.f32.mrb[0].mxu0
      %v8186 = vadd.f32 %v7957, %v8185
      %v8187 = vpop.f32.mrb[0].mxu0
      %v8188 = vpop.f32.mrb[0].mxu0
      %v8189 = vadd.f32 %v7957, %v8188
      %v8190 = vpop.f32.mrb[0].mxu0
      %8191 = vdwg.mxu0
      %v8192 = vld [vmem:[%s1254 + $0x1] sm:$0xff]
      %v8193 = vld [vmem:[%s1254 + $0x9] sm:$0xff]
      %v8194 = vld [vmem:[%s1254 + $0x19] sm:$0xff]
      %v8195 = vld [vmem:[%s1254 + $0x21] sm:$0xff]
      %v8196 = vld [vmem:[%s1254 + $0x31] sm:$0xff]
      %v8197 = vld [vmem:[%s1254 + $0x39] sm:$0xff]
      %v8198 = vld [vmem:[%s1254 + $0x49] sm:$0xff]
      %v8199 = vld [vmem:[%s1254 + $0x51] sm:$0xff]
      %v8200 = vld [vmem:[%s1254 + $0x61] sm:$0xff]
      %v8201 = vld [vmem:[%s1254 + $0x69] sm:$0xff]
      %v8202 = vld [vmem:[%s1254 + $0x79] sm:$0xff]
      %v8203 = vld [vmem:[%s1254 + $0x81] sm:$0xff]
      %v8204 = vld [vmem:[%s1254 + $0x91] sm:$0xff]
      %v8205 = vld [vmem:[%s1254 + $0x99] sm:$0xff]
      %v8206 = vld [vmem:[%s1254 + $0xa9] sm:$0xff]
      %v8207 = vld [vmem:[%s1254 + $0xb1] sm:$0xff]
      %v8208 = vld [vmem:[%s1254 + $0xc1] sm:$0xff]
      %v8209 = vld [vmem:[%s1254 + $0xc9] sm:$0xff]
      %v8210 = vld [vmem:[%s1254 + $0xd9] sm:$0xff]
      %v8211 = vld [vmem:[%s1254 + $0xe1] sm:$0xff]
      %v8212 = vld [vmem:[%s1254 + $0xf1] sm:$0xff]
      %v8213 = vld [vmem:[%s1254 + $0xf9] sm:$0xff]
      %v8214 = vld [vmem:[%s1254 + $0x109] sm:$0xff]
      %v8215 = vld [vmem:[%s1254 + $0x111] sm:$0xff]
      %v8216 = vld [vmem:[%s1254 + $0x121] sm:$0xff]
      %v8217 = vld [vmem:[%s1254 + $0x129] sm:$0xff]
      %v8218 = vld [vmem:[%s1254 + $0x139] sm:$0xff]
      %v8219 = vld [vmem:[%s1254 + $0x141] sm:$0xff]
      %v8220 = vld [vmem:[%s1254 + $0x151] sm:$0xff]
      %v8221 = vld [vmem:[%s1254 + $0x159] sm:$0xff]
      %v8222 = vld [vmem:[%s1254 + $0x169] sm:$0xff]
      %v8223 = vld [vmem:[%s1254 + $0x171] sm:$0xff]
      %v8224 = vadd.f32 %v8066, %v8192
      %v8225 = vadd.f32 %v8069, %v8193
      %v8226 = vadd.f32 %v8074, %v8194
      %v8227 = vadd.f32 %v8077, %v8195
      %v8228 = vadd.f32 %v8082, %v8196
      %v8229 = vadd.f32 %v8085, %v8197
      %v8230 = vadd.f32 %v8090, %v8198
      %v8231 = vadd.f32 %v8093, %v8199
      %v8232 = vadd.f32 %v8098, %v8200
      %v8233 = vadd.f32 %v8101, %v8201
      %v8234 = vadd.f32 %v8106, %v8202
      %v8235 = vadd.f32 %v8109, %v8203
      %v8236 = vadd.f32 %v8114, %v8204
      %v8237 = vadd.f32 %v8117, %v8205
      %v8238 = vadd.f32 %v8122, %v8206
      %v8239 = vadd.f32 %v8125, %v8207
      %v8240 = vadd.f32 %v8130, %v8208
      %v8241 = vadd.f32 %v8133, %v8209
      %v8242 = vadd.f32 %v8138, %v8210
      %v8243 = vadd.f32 %v8141, %v8211
      %v8244 = vadd.f32 %v8146, %v8212
      %v8245 = vadd.f32 %v8149, %v8213
      %v8246 = vadd.f32 %v8154, %v8214
      %v8247 = vadd.f32 %v8157, %v8215
      %v8248 = vadd.f32 %v8162, %v8216
      %v8249 = vadd.f32 %v8165, %v8217
      %v8250 = vadd.f32 %v8170, %v8218
      %v8251 = vadd.f32 %v8173, %v8219
      %v8252 = vadd.f32 %v8178, %v8220
      %v8253 = vadd.f32 %v8181, %v8221
      %v8254 = vadd.f32 %v8186, %v8222
      %v8255 = vadd.f32 %v8189, %v8223
      %v8256 = vmax.f32 %v8224, 0.0
      %v8257 = vmax.f32 %v8225, 0.0
      %v8258 = vmax.f32 %v8226, 0.0
      %v8259 = vmax.f32 %v8227, 0.0
      %v8260 = vmax.f32 %v8228, 0.0
      %v8261 = vmax.f32 %v8229, 0.0
      %v8262 = vmax.f32 %v8230, 0.0
      %v8263 = vmax.f32 %v8231, 0.0
      %v8264 = vmax.f32 %v8232, 0.0
      %v8265 = vmax.f32 %v8233, 0.0
      %v8266 = vmax.f32 %v8234, 0.0
      %v8267 = vmax.f32 %v8235, 0.0
      %v8268 = vmax.f32 %v8236, 0.0
      %v8269 = vmax.f32 %v8237, 0.0
      %v8270 = vmax.f32 %v8238, 0.0
      %v8271 = vmax.f32 %v8239, 0.0
      %v8272 = vmax.f32 %v8240, 0.0
      %v8273 = vmax.f32 %v8241, 0.0
      %v8274 = vmax.f32 %v8242, 0.0
      %v8275 = vmax.f32 %v8243, 0.0
      %v8276 = vmax.f32 %v8244, 0.0
      %v8277 = vmax.f32 %v8245, 0.0
      %v8278 = vmax.f32 %v8246, 0.0
      %v8279 = vmax.f32 %v8247, 0.0
      %v8280 = vmax.f32 %v8248, 0.0
      %v8281 = vmax.f32 %v8249, 0.0
      %v8282 = vmax.f32 %v8250, 0.0
      %v8283 = vmax.f32 %v8251, 0.0
      %v8284 = vmax.f32 %v8252, 0.0
      %v8285 = vmax.f32 %v8253, 0.0
      %v8286 = vmax.f32 %v8254, 0.0
      %v8287 = vmax.f32 %v8255, 0.0
      %8288 = vst.msk [vmem:[%s278] sm:$0xff] %vm368, %v8256
      %8289 = vst.msk [vmem:[%s278 + $0x8] sm:$0xff] %vm368, %v8257
      %8290 = vst.msk [vmem:[%s278 + $0x10] sm:$0xff] %vm368, %v8258
      %8291 = vst.msk [vmem:[%s278 + $0x18] sm:$0xff] %vm368, %v8259
      %8292 = vst.msk [vmem:[%s278 + $0x20] sm:$0xff] %vm368, %v8260
      %8293 = vst.msk [vmem:[%s278 + $0x28] sm:$0xff] %vm368, %v8261
      %8294 = vst.msk [vmem:[%s278 + $0x30] sm:$0xff] %vm368, %v8262
      %8295 = vst.msk [vmem:[%s278 + $0x38] sm:$0xff] %vm368, %v8263
      %8296 = vst.msk [vmem:[%s278 + $0x40] sm:$0xff] %vm368, %v8264
      %8297 = vst.msk [vmem:[%s278 + $0x48] sm:$0xff] %vm368, %v8265
      %8298 = vst.msk [vmem:[%s278 + $0x50] sm:$0xff] %vm368, %v8266
      %8299 = vst.msk [vmem:[%s278 + $0x58] sm:$0xff] %vm368, %v8267
      %8300 = vst.msk [vmem:[%s278 + $0x60] sm:$0xff] %vm368, %v8268
      %8301 = vst.msk [vmem:[%s278 + $0x68] sm:$0xff] %vm368, %v8269
      %8302 = vst.msk [vmem:[%s278 + $0x70] sm:$0xff] %vm368, %v8270
      %8303 = vst.msk [vmem:[%s278 + $0x78] sm:$0xff] %vm368, %v8271
      %8304 = vst.msk [vmem:[%s278 + $0x80] sm:$0xff] %vm368, %v8272
      %8305 = vst.msk [vmem:[%s278 + $0x88] sm:$0xff] %vm368, %v8273
      %8306 = vst.msk [vmem:[%s278 + $0x90] sm:$0xff] %vm368, %v8274
      %8307 = vst.msk [vmem:[%s278 + $0x98] sm:$0xff] %vm368, %v8275
      %8308 = vst.msk [vmem:[%s278 + $0xa0] sm:$0xff] %vm368, %v8276
      %8309 = vst.msk [vmem:[%s278 + $0xa8] sm:$0xff] %vm368, %v8277
      %8310 = vst.msk [vmem:[%s278 + $0xb0] sm:$0xff] %vm368, %v8278
      %8311 = vst.msk [vmem:[%s278 + $0xb8] sm:$0xff] %vm368, %v8279
      %8312 = vst.msk [vmem:[%s278 + $0xc0] sm:$0xff] %vm368, %v8280
      %8313 = vst.msk [vmem:[%s278 + $0xc8] sm:$0xff] %vm368, %v8281
      %8314 = vst.msk [vmem:[%s278 + $0xd0] sm:$0xff] %vm368, %v8282
      %8315 = vst.msk [vmem:[%s278 + $0xd8] sm:$0xff] %vm368, %v8283
      %8316 = vst.msk [vmem:[%s278 + $0xe0] sm:$0xff] %vm368, %v8284
      %8317 = vst.msk [vmem:[%s278 + $0xe8] sm:$0xff] %vm368, %v8285
      %8318 = vst.msk [vmem:[%s278 + $0xf0] sm:$0xff] %vm368, %v8286
      %8319 = vst.msk [vmem:[%s278 + $0xf8] sm:$0xff] %vm368, %v8287
      %p8320 = scmp.lt.s32.totalorder %s18, 1
      %s8321 = scalar_select %p8320, %s18, 1
      %s8322 = smul.addr %s8321, 32
      %s8323 = smul.addr %s8322, 8
      %s8324 = scalar_lea.vmem %s7, %s8323
      // Predicated region
      $region49: #{block_forward.6} parent=47 // pred_check
        %p8325 = pneg %p188
      $region50: #{block_forward.6} parent=47 // pred_check_branch
        %8327 = sbr.rel (%p8325) target = $region52
      $region51: #{block_forward.6} parent=47 // pred_region
        _
      $region52: #{block_forward.6} parent=47 // pred_fallthru
        _
    $region48: #{block_forward.6} parent=5 // pred_fallthru
      _
    %p8328 = scmp.le.s32.totalorder 2, %s13
    // Predicated region
    $region53: #{block_forward.6} parent=5 // pred_check
      %p8329 = pneg %p8328
    $region54: #{block_forward.6} parent=5 // pred_check_branch
      %8331 = sbr.rel (%p8329) target = $region56
    $region55: #{block_forward.6} parent=5 // pred_region
      %s8332 = ssub.s32 %s13, 2
      // Predicated region
      $region57: #{block_forward.6} parent=55 // pred_check
        %p8333 = pneg %p194
      $region58: #{block_forward.6} parent=55 // pred_check_branch
        %8335 = sbr.rel (%p8333) target = $region60
      $region59: #{block_forward.6} parent=55 // pred_region
        %p8336 = scmp.lt.s32.totalorder %s19, 1
        %s8337 = scalar_select %p8336, %s19, 1
        %s8338 = smul.addr %s8337, 32
        %s8339 = smul.addr %s8338, 8
        %s8340 = scalar_lea.vmem %s7, %s8339
      $region60: #{block_forward.6} parent=55 // pred_fallthru
        _
    $region56: #{block_forward.6} parent=5 // pred_fallthru
      _
  $region6: #{block_forward.6} parent=0 // loop_footer
    %s17 = sadd.s32 1, %s13
  $region7: #{block_forward.6} parent=0 // loop_footer_branch
    %12 = sbr.rel target = $region3
  $region8: #{block_forward.6} parent=0 // loop_exit
    _

</llo_original>
